<compile_context>
chip_gen: v5e
topology: v5e:2x2
jax: 0.10.0
libtpu: 0.0.40
codegen_flags: <defaults>
</compile_context>

<pallas_src>
import math

import numpy as np
import jax
import jax.numpy as jnp
from jax.experimental import pallas as pl
from jax.experimental.pallas import tpu as pltpu

NEG_SLOPE = 0.01     # F.leaky_relu default negative_slope
_C32 = 32            # channel width of every conv layer (conv1 input zero-padded)
_KH = 5              # 5x5 conv kernel

_VMEM = pl.BlockSpec(memory_space=pltpu.MemorySpace.VMEM)


def _gelu(x):
    # TODO(synk): PyTorch F.gelu default is the exact erf form; Mosaic has no
    # erf lowering, so we use the tanh approximation (~1e-3 max abs diff).
    c = math.sqrt(2.0 / math.pi)
    return 0.5 * x * (1.0 + jnp.tanh(c * (x + 0.044715 * x * x * x)))


# ---------------------------------------------------------------------------
# Fused kernel: conv stack (block-Toeplitz matmuls) + MLP head.
# ---------------------------------------------------------------------------
def _resnet_kernel(x_ref, tw_ref, cb_ref, w_in_ref, w1_ref, w2_ref, wh_ref,
                   b_mlp_ref, b_head_ref, out_ref, act_ref, flat_ref):
    N, Hp, WC = act_ref.shape          # (N, H+4, W*32) — lane-dense activation
    H = Hp - 4
    NH = N * H
    A = out_ref.shape[-1] - 1          # action_size (last lane = value)

    # ---- init: zero only the 2-row height halo; interior overwritten below --
    act_ref[:, 0:2, :] = jnp.zeros((N, 2, WC), act_ref.dtype)
    act_ref[:, Hp - 2:Hp, :] = jnp.zeros((N, 2, WC), act_ref.dtype)
    act_ref[:, 2:2 + H, :] = x_ref[...]        # (w, c)-flattened, chan-padded

    # ---- one 5x5 'same' conv + leaky_relu as 5 deep (K = W*32) matmuls ------
    # tw_ref[layer, kh] is a block-Toeplitz (W*32, W*32) matrix: the sum over
    # kw and the width zero-padding are folded into the weight, so there is no
    # im2col buffer and no per-tap relayout. bf16 matmul inputs, f32 everything
    # elementwise.
    def conv_act(layer):
        acc = jnp.zeros((NH, WC), jnp.float32)
        for kh in range(_KH):
            a_kh = act_ref[:, kh:kh + H, :].reshape(NH, WC)
            acc = acc + jnp.dot(a_kh.astype(jnp.bfloat16), tw_ref[layer, kh],
                                preferred_element_type=jnp.float32)
        acc = acc + cb_ref[layer]                       # (1, W*32) tiled bias
        return jnp.maximum(acc, NEG_SLOPE * acc)        # leaky_relu (f32)

    for layer in range(4):
        act_ref[:, 2:2 + H, :] = conv_act(layer).reshape(N, H, WC)

    # ---- last conv layer writes straight into the flattened (h, w, c) buffer
    # (skips the act_ref write-back + re-read; stores are 256-lane aligned) ---
    y = conv_act(4).astype(flat_ref.dtype).reshape(N, H, WC)
    for h in range(H):
        flat_ref[:, h * WC:(h + 1) * WC] = y[:, h, :]

    # ---- MLP head: 3x gelu linear, then policy softmax + value tanh ---------
    h1 = _gelu(jnp.dot(flat_ref[...], w_in_ref[...],
                       preferred_element_type=jnp.float32) + b_mlp_ref[0])
    h2 = _gelu(jnp.dot(h1.astype(jnp.bfloat16), w1_ref[...],
                       preferred_element_type=jnp.float32) + b_mlp_ref[1])
    h3 = _gelu(jnp.dot(h2.astype(jnp.bfloat16), w2_ref[...],
                       preferred_element_type=jnp.float32) + b_mlp_ref[2])
    z = jnp.dot(h3.astype(jnp.bfloat16), wh_ref[...],
                preferred_element_type=jnp.float32) + b_head_ref[...]

    logits = z[:, 0:A]
    logits = logits - jnp.max(logits, axis=-1, keepdims=True)
    e = jnp.exp(logits)
    out_ref[:, 0:A] = e / jnp.sum(e, axis=-1, keepdims=True)      # policy
    out_ref[:, A:A + 1] = jnp.tanh(z[:, A:A + 1])                 # value


# ---------------------------------------------------------------------------
# Wrapper
# ---------------------------------------------------------------------------
def simple_resnet_forward(params, x):
    """x: (N, H, W, C) NHWC float32, or (H, W, C) for a single observation."""
    squeeze = x.ndim == 3
    if squeeze:                              # matches the PyTorch 3-D branch
        x = x[None]
    N, H, W, Cin = x.shape
    A1 = params["b_head"].shape[-1]          # action_size + 1

    # Layout plumbing (not compute): zero-pad channels to 32 and put (w, c)
    # on the lane axis so the in-kernel activation is lane-dense.
    x = jnp.pad(x, ((0, 0), (0, 0), (0, 0), (0, _C32 - Cin)))
    x = x.reshape(N, H, W * _C32).astype(jnp.float32)

    out = pl.pallas_call(
        _resnet_kernel,
        out_shape=jax.ShapeDtypeStruct((N, A1), jnp.float32),
        in_specs=[_VMEM] * 9,
        out_specs=_VMEM,
        scratch_shapes=[
            pltpu.VMEM((N, H + 4, W * _C32), jnp.float32),   # height-halo activation
            pltpu.VMEM((N, H * W * _C32), jnp.bfloat16),     # flattened features
        ],
    )(x, params["tw"], params["cb"], params["w_in"], params["w1"],
      params["w2"], params["wh"], params["b_mlp"], params["b_head"])

    policy, value = out[:, :A1 - 1], out[:, A1 - 1:]
    if squeeze:
        policy, value = policy[0], value[0]
    return policy, value


# ---------------------------------------------------------------------------
# Parameters: synthetic PyTorch-layout init + one-time repack to kernel layout
# ---------------------------------------------------------------------------
def init_params(key, H, W, C, mlp_size, action_size):
    """PyTorch-layout params with U(-1/sqrt(fan_in), 1/sqrt(fan_in)) init."""
    def uni(k, shape, fan_in):
        b = 1.0 / math.sqrt(fan_in)
        return jax.random.uniform(k, shape, jnp.float32, -b, b)

    ks = iter(jax.random.split(key, 20))
    p = {}
    cins = [C, 32, 32, 32, 32]
    for i, cin in enumerate(cins, start=1):
        fan = cin * 25
        p[f"conv{i}_w"] = uni(next(ks), (32, cin, 5, 5), fan)   # (Cout, Cin, kh, kw)
        p[f"conv{i}_b"] = uni(next(ks), (32,), fan)
    din = 32 * H * W
    p["w_in"] = uni(next(ks), (mlp_size, din), din)             # torch Linear (out, in)
    p["b_in"] = uni(next(ks), (mlp_size,), din)
    p["w_mlp1"] = uni(next(ks), (mlp_size, mlp_size), mlp_size)
    p["b_mlp1"] = uni(next(ks), (mlp_size,), mlp_size)
    p["w_mlp2"] = uni(next(ks), (mlp_size, mlp_size), mlp_size)
    p["b_mlp2"] = uni(next(ks), (mlp_size,), mlp_size)
    p["w_policy"] = uni(next(ks), (action_size, mlp_size), mlp_size)
    p["b_policy"] = uni(next(ks), (action_size,), mlp_size)
    p["w_value"] = uni(next(ks), (1, mlp_size), mlp_size)
    p["b_value"] = uni(next(ks), (1,), mlp_size)
    return p


def prepare_params(p, H, W, C):
    """One-time (host-side) repack to the kernel layout:
       * conv taps -> per-(layer, kh) block-Toeplitz (W*32, W*32) bf16 matrices
         (the kw sum and width 'same' zero-padding folded into the weight;
         conv1's <32 input channels land in zero rows),
       * conv biases tiled over w -> (5, 1, W*32) f32,
       * w_in rows permuted from torch's NCHW (c, h, w) flatten order to the
         kernel's (h, w, c) order,
       * MLP / head weights transposed to (in, out) bf16, heads fused.
    """
    WC = W * _C32
    tw = np.zeros((5, _KH, WC, WC), np.float32)
    for i in range(1, 6):
        w = np.asarray(p[f"conv{i}_w"], np.float32)           # (Cout, Cin, 5, 5)
        cin = w.shape[1]
        for kh in range(_KH):
            for w_out in range(W):
                for kw in range(_KH):
                    w_src = w_out + kw - 2                    # 'same' conv, pad=2
                    if 0 <= w_src < W:
                        tw[i - 1, kh,
                           w_src * _C32:w_src * _C32 + cin,
                           w_out * _C32:(w_out + 1) * _C32] = w[:, :, kh, kw].T

    cb = np.stack([np.tile(np.asarray(p[f"conv{i}_b"], np.float32), W)
                   for i in range(1, 6)])[:, None, :]         # (5, 1, W*32)

    # torch flatten on NCHW -> column index c*H*W + h*W + w; reorder to (h,w,c).
    w_in = np.asarray(p["w_in"], np.float32).reshape(-1, _C32, H, W)  # (mlp,c,h,w)
    w_in = np.transpose(w_in, (2, 3, 1, 0)).reshape(H * W * _C32, -1)

    wh = np.concatenate([np.asarray(p["w_policy"], np.float32).T,
                         np.asarray(p["w_value"], np.float32).T], axis=1)   # (mlp, A+1)
    b_mlp = np.stack([np.asarray(p["b_in"]), np.asarray(p["b_mlp1"]),
                      np.asarray(p["b_mlp2"])])[:, None, :]                 # (3, 1, mlp)
    b_head = np.concatenate([np.asarray(p["b_policy"]),
                             np.asarray(p["b_value"])])[None, :]            # (1, A+1)

    return {
        "tw": jnp.asarray(tw, jnp.bfloat16),
        "cb": jnp.asarray(cb, jnp.float32),
        "w_in": jnp.asarray(w_in, jnp.bfloat16),
        "w1": jnp.asarray(np.asarray(p["w_mlp1"], np.float32).T, jnp.bfloat16),
        "w2": jnp.asarray(np.asarray(p["w_mlp2"], np.float32).T, jnp.bfloat16),
        "wh": jnp.asarray(wh, jnp.bfloat16),
        "b_mlp": jnp.asarray(b_mlp, jnp.float32),
        "b_head": jnp.asarray(b_head, jnp.float32),
    }


if __name__ == "__main__":
    # cfg.obs_size[env] = (a, b, c) = (H, W, C); cfg.action_size[env] = 6
    H, W, C = 8, 8, 4
    MLP_SIZE = 32
    ACTION_SIZE = 6
    BATCH = 2

    key = jax.random.PRNGKey(0)
    pkey, xkey = jax.random.split(key)
    torch_layout = init_params(pkey, H, W, C, MLP_SIZE, ACTION_SIZE)
    params = prepare_params(torch_layout, H, W, C)
    x = jax.random.normal(xkey, (BATCH, H, W, C), jnp.float32)

    policy, value = jax.jit(simple_resnet_forward)(params, x)
    jax.block_until_ready((policy, value))

    assert policy.shape == (BATCH, ACTION_SIZE)
    assert value.shape == (BATCH, 1)
    assert bool(jnp.all(jnp.isfinite(policy))) and bool(jnp.all(jnp.isfinite(value)))
    assert bool(jnp.allclose(jnp.sum(policy, axis=-1), 1.0, atol=1e-5))
    print("KERNEL_OK")
</pallas_src>

<mosaic_0001>
module attributes {stable_mosaic.version = 11 : i64} {
  func.func @_resnet_kernel(%arg0: memref<2x8x256xf32, #tpu.memory_space<vmem>>, %arg1: memref<5x5x256x256xbf16, #tpu.memory_space<vmem>>, %arg2: memref<5x1x256xf32, #tpu.memory_space<vmem>>, %arg3: memref<2048x32xbf16, #tpu.memory_space<vmem>>, %arg4: memref<32x32xbf16, #tpu.memory_space<vmem>>, %arg5: memref<32x32xbf16, #tpu.memory_space<vmem>>, %arg6: memref<32x7xbf16, #tpu.memory_space<vmem>>, %arg7: memref<3x1x32xf32, #tpu.memory_space<vmem>>, %arg8: memref<1x7xf32, #tpu.memory_space<vmem>>, %arg9: memref<2x7xf32, #tpu.memory_space<vmem>>, %arg10: memref<2x12x256xf32, #tpu.memory_space<vmem>>, %arg11: memref<2x2048xbf16, #tpu.memory_space<vmem>>) attributes {dimension_semantics = [], scalar_prefetch = 0 : i64, scratch_operands = 2 : i64, tpu.core_type = #tpu.core_type<tc>} {
    %cst = arith.constant 0.000000e+00 : f32
    %0 = vector.broadcast %cst : f32 to vector<2x2x256xf32>
    %c0 = arith.constant 0 : index
    %c0_0 = arith.constant 0 : index
    %c0_1 = arith.constant 0 : index
    %1 = vector.load %arg10[%c0, %c0_0, %c0_1] : memref<2x12x256xf32, #tpu.memory_space<vmem>>, vector<2x2x256xf32>
    tpu.vector_store %arg10[%c0, %c0_0, %c0_1], %0 {strides = array<i32>} : memref<2x12x256xf32, #tpu.memory_space<vmem>>, vector<2x2x256xf32>,
    %cst_2 = arith.constant 0.000000e+00 : f32
    %2 = vector.broadcast %cst_2 : f32 to vector<2x2x256xf32>
    %c0_3 = arith.constant 0 : index
    %c10 = arith.constant 10 : index
    %c0_4 = arith.constant 0 : index
    %3 = vector.load %arg10[%c0_3, %c10, %c0_4] : memref<2x12x256xf32, #tpu.memory_space<vmem>>, vector<2x2x256xf32>
    tpu.vector_store %arg10[%c0_3, %c10, %c0_4], %2 {strides = array<i32>} : memref<2x12x256xf32, #tpu.memory_space<vmem>>, vector<2x2x256xf32>,
    %c0_5 = arith.constant 0 : index
    %c0_6 = arith.constant 0 : index
    %c0_7 = arith.constant 0 : index
    %4 = vector.load %arg0[%c0_5, %c0_6, %c0_7] : memref<2x8x256xf32, #tpu.memory_space<vmem>>, vector<2x8x256xf32>
    %c0_8 = arith.constant 0 : index
    %c2 = arith.constant 2 : index
    %c0_9 = arith.constant 0 : index
    %5 = vector.load %arg10[%c0_8, %c2, %c0_9] : memref<2x12x256xf32, #tpu.memory_space<vmem>>, vector<2x8x256xf32>
    tpu.vector_store %arg10[%c0_8, %c2, %c0_9], %4 {strides = array<i32>} : memref<2x12x256xf32, #tpu.memory_space<vmem>>, vector<2x8x256xf32>,
    %cst_10 = arith.constant 0.000000e+00 : f32
    %6 = vector.broadcast %cst_10 : f32 to vector<16x256xf32>
    %c0_11 = arith.constant 0 : index
    %c0_12 = arith.constant 0 : index
    %c0_13 = arith.constant 0 : index
    %7 = vector.load %arg10[%c0_11, %c0_12, %c0_13] : memref<2x12x256xf32, #tpu.memory_space<vmem>>, vector<2x8x256xf32>
    %8 = vector.shape_cast %7 : vector<2x8x256xf32> to vector<16x256xf32>
    %9 = arith.truncf %8 : vector<16x256xf32> to vector<16x256xbf16>
    %c0_14 = arith.constant 0 : index
    %c0_15 = arith.constant 0 : index
    %c0_16 = arith.constant 0 : index
    %c0_17 = arith.constant 0 : index
    %10 = vector.load %arg1[%c0_14, %c0_15, %c0_16, %c0_17] : memref<5x5x256x256xbf16, #tpu.memory_space<vmem>>, vector<1x1x256x256xbf16>
    %11 = vector.shape_cast %10 : vector<1x1x256x256xbf16> to vector<256x256xbf16>
    %cst_18 = arith.constant dense<0.000000e+00> : vector<16x256xf32>
    %12 = tpu.matmul %9, %11, %cst_18 {dimension_numbers = #tpu.dot_dimension_numbers<[1], [0], [0], [1], [0, 0, 1, 1], [], []>} : vector<16x256xbf16>, vector<256x256xbf16>, vector<16x256xf32> -> vector<16x256xf32>
    %13 = arith.addf %6, %12 : vector<16x256xf32>
    %c0_19 = arith.constant 0 : index
    %c1 = arith.constant 1 : index
    %c0_20 = arith.constant 0 : index
    %14 = vector.load %arg10[%c0_19, %c1, %c0_20] : memref<2x12x256xf32, #tpu.memory_space<vmem>>, vector<2x8x256xf32>
    %15 = vector.shape_cast %14 : vector<2x8x256xf32> to vector<16x256xf32>
    %16 = arith.truncf %15 : vector<16x256xf32> to vector<16x256xbf16>
    %c0_21 = arith.constant 0 : index
    %c1_22 = arith.constant 1 : index
    %c0_23 = arith.constant 0 : index
    %c0_24 = arith.constant 0 : index
    %17 = vector.load %arg1[%c0_21, %c1_22, %c0_23, %c0_24] : memref<5x5x256x256xbf16, #tpu.memory_space<vmem>>, vector<1x1x256x256xbf16>
    %18 = vector.shape_cast %17 : vector<1x1x256x256xbf16> to vector<256x256xbf16>
    %cst_25 = arith.constant dense<0.000000e+00> : vector<16x256xf32>
    %19 = tpu.matmul %16, %18, %cst_25 {dimension_numbers = #tpu.dot_dimension_numbers<[1], [0], [0], [1], [0, 0, 1, 1], [], []>} : vector<16x256xbf16>, vector<256x256xbf16>, vector<16x256xf32> -> vector<16x256xf32>
    %20 = arith.addf %13, %19 : vector<16x256xf32>
    %c0_26 = arith.constant 0 : index
    %c2_27 = arith.constant 2 : index
    %c0_28 = arith.constant 0 : index
    %21 = vector.load %arg10[%c0_26, %c2_27, %c0_28] : memref<2x12x256xf32, #tpu.memory_space<vmem>>, vector<2x8x256xf32>
    %22 = vector.shape_cast %21 : vector<2x8x256xf32> to vector<16x256xf32>
    %23 = arith.truncf %22 : vector<16x256xf32> to vector<16x256xbf16>
    %c0_29 = arith.constant 0 : index
    %c2_30 = arith.constant 2 : index
    %c0_31 = arith.constant 0 : index
    %c0_32 = arith.constant 0 : index
    %24 = vector.load %arg1[%c0_29, %c2_30, %c0_31, %c0_32] : memref<5x5x256x256xbf16, #tpu.memory_space<vmem>>, vector<1x1x256x256xbf16>
    %25 = vector.shape_cast %24 : vector<1x1x256x256xbf16> to vector<256x256xbf16>
    %cst_33 = arith.constant dense<0.000000e+00> : vector<16x256xf32>
    %26 = tpu.matmul %23, %25, %cst_33 {dimension_numbers = #tpu.dot_dimension_numbers<[1], [0], [0], [1], [0, 0, 1, 1], [], []>} : vector<16x256xbf16>, vector<256x256xbf16>, vector<16x256xf32> -> vector<16x256xf32>
    %27 = arith.addf %20, %26 : vector<16x256xf32>
    %c0_34 = arith.constant 0 : index
    %c3 = arith.constant 3 : index
    %c0_35 = arith.constant 0 : index
    %28 = vector.load %arg10[%c0_34, %c3, %c0_35] : memref<2x12x256xf32, #tpu.memory_space<vmem>>, vector<2x8x256xf32>
    %29 = vector.shape_cast %28 : vector<2x8x256xf32> to vector<16x256xf32>
    %30 = arith.truncf %29 : vector<16x256xf32> to vector<16x256xbf16>
    %c0_36 = arith.constant 0 : index
    %c3_37 = arith.constant 3 : index
    %c0_38 = arith.constant 0 : index
    %c0_39 = arith.constant 0 : index
    %31 = vector.load %arg1[%c0_36, %c3_37, %c0_38, %c0_39] : memref<5x5x256x256xbf16, #tpu.memory_space<vmem>>, vector<1x1x256x256xbf16>
    %32 = vector.shape_cast %31 : vector<1x1x256x256xbf16> to vector<256x256xbf16>
    %cst_40 = arith.constant dense<0.000000e+00> : vector<16x256xf32>
    %33 = tpu.matmul %30, %32, %cst_40 {dimension_numbers = #tpu.dot_dimension_numbers<[1], [0], [0], [1], [0, 0, 1, 1], [], []>} : vector<16x256xbf16>, vector<256x256xbf16>, vector<16x256xf32> -> vector<16x256xf32>
    %34 = arith.addf %27, %33 : vector<16x256xf32>
    %c0_41 = arith.constant 0 : index
    %c4 = arith.constant 4 : index
    %c0_42 = arith.constant 0 : index
    %35 = vector.load %arg10[%c0_41, %c4, %c0_42] : memref<2x12x256xf32, #tpu.memory_space<vmem>>, vector<2x8x256xf32>
    %36 = vector.shape_cast %35 : vector<2x8x256xf32> to vector<16x256xf32>
    %37 = arith.truncf %36 : vector<16x256xf32> to vector<16x256xbf16>
    %c0_43 = arith.constant 0 : index
    %c4_44 = arith.constant 4 : index
    %c0_45 = arith.constant 0 : index
    %c0_46 = arith.constant 0 : index
    %38 = vector.load %arg1[%c0_43, %c4_44, %c0_45, %c0_46] : memref<5x5x256x256xbf16, #tpu.memory_space<vmem>>, vector<1x1x256x256xbf16>
    %39 = vector.shape_cast %38 : vector<1x1x256x256xbf16> to vector<256x256xbf16>
    %cst_47 = arith.constant dense<0.000000e+00> : vector<16x256xf32>
    %40 = tpu.matmul %37, %39, %cst_47 {dimension_numbers = #tpu.dot_dimension_numbers<[1], [0], [0], [1], [0, 0, 1, 1], [], []>} : vector<16x256xbf16>, vector<256x256xbf16>, vector<16x256xf32> -> vector<16x256xf32>
    %41 = arith.addf %34, %40 : vector<16x256xf32>
    %c0_48 = arith.constant 0 : index
    %c0_49 = arith.constant 0 : index
    %c0_50 = arith.constant 0 : index
    %42 = vector.load %arg2[%c0_48, %c0_49, %c0_50] : memref<5x1x256xf32, #tpu.memory_space<vmem>>, vector<1x1x256xf32>
    %43 = vector.shape_cast %42 : vector<1x1x256xf32> to vector<1x256xf32>
    %44 = vector.broadcast %43 : vector<1x256xf32> to vector<16x256xf32>
    %45 = arith.addf %41, %44 : vector<16x256xf32>
    %cst_51 = arith.constant 0.00999999977 : f32
    %46 = vector.broadcast %cst_51 : f32 to vector<16x256xf32>
    %47 = arith.mulf %46, %45 : vector<16x256xf32>
    %48 = arith.maximumf %45, %47 : vector<16x256xf32>
    %49 = vector.shape_cast %48 : vector<16x256xf32> to vector<2x8x256xf32>
    %c0_52 = arith.constant 0 : index
    %c2_53 = arith.constant 2 : index
    %c0_54 = arith.constant 0 : index
    %50 = vector.load %arg10[%c0_52, %c2_53, %c0_54] : memref<2x12x256xf32, #tpu.memory_space<vmem>>, vector<2x8x256xf32>
    tpu.vector_store %arg10[%c0_52, %c2_53, %c0_54], %49 {strides = array<i32>} : memref<2x12x256xf32, #tpu.memory_space<vmem>>, vector<2x8x256xf32>,
    %cst_55 = arith.constant 0.000000e+00 : f32
    %51 = vector.broadcast %cst_55 : f32 to vector<16x256xf32>
    %c0_56 = arith.constant 0 : index
    %c0_57 = arith.constant 0 : index
    %c0_58 = arith.constant 0 : index
    %52 = vector.load %arg10[%c0_56, %c0_57, %c0_58] : memref<2x12x256xf32, #tpu.memory_space<vmem>>, vector<2x8x256xf32>
    %53 = vector.shape_cast %52 : vector<2x8x256xf32> to vector<16x256xf32>
    %54 = arith.truncf %53 : vector<16x256xf32> to vector<16x256xbf16>
    %c1_59 = arith.constant 1 : index
    %c0_60 = arith.constant 0 : index
    %c0_61 = arith.constant 0 : index
    %c0_62 = arith.constant 0 : index
    %55 = vector.load %arg1[%c1_59, %c0_60, %c0_61, %c0_62] : memref<5x5x256x256xbf16, #tpu.memory_space<vmem>>, vector<1x1x256x256xbf16>
    %56 = vector.shape_cast %55 : vector<1x1x256x256xbf16> to vector<256x256xbf16>
    %cst_63 = arith.constant dense<0.000000e+00> : vector<16x256xf32>
    %57 = tpu.matmul %54, %56, %cst_63 {dimension_numbers = #tpu.dot_dimension_numbers<[1], [0], [0], [1], [0, 0, 1, 1], [], []>} : vector<16x256xbf16>, vector<256x256xbf16>, vector<16x256xf32> -> vector<16x256xf32>
    %58 = arith.addf %51, %57 : vector<16x256xf32>
    %c0_64 = arith.constant 0 : index
    %c1_65 = arith.constant 1 : index
    %c0_66 = arith.constant 0 : index
    %59 = vector.load %arg10[%c0_64, %c1_65, %c0_66] : memref<2x12x256xf32, #tpu.memory_space<vmem>>, vector<2x8x256xf32>
    %60 = vector.shape_cast %59 : vector<2x8x256xf32> to vector<16x256xf32>
    %61 = arith.truncf %60 : vector<16x256xf32> to vector<16x256xbf16>
    %c1_67 = arith.constant 1 : index
    %c1_68 = arith.constant 1 : index
    %c0_69 = arith.constant 0 : index
    %c0_70 = arith.constant 0 : index
    %62 = vector.load %arg1[%c1_67, %c1_68, %c0_69, %c0_70] : memref<5x5x256x256xbf16, #tpu.memory_space<vmem>>, vector<1x1x256x256xbf16>
    %63 = vector.shape_cast %62 : vector<1x1x256x256xbf16> to vector<256x256xbf16>
    %cst_71 = arith.constant dense<0.000000e+00> : vector<16x256xf32>
    %64 = tpu.matmul %61, %63, %cst_71 {dimension_numbers = #tpu.dot_dimension_numbers<[1], [0], [0], [1], [0, 0, 1, 1], [], []>} : vector<16x256xbf16>, vector<256x256xbf16>, vector<16x256xf32> -> vector<16x256xf32>
    %65 = arith.addf %58, %64 : vector<16x256xf32>
    %c0_72 = arith.constant 0 : index
    %c2_73 = arith.constant 2 : index
    %c0_74 = arith.constant 0 : index
    %66 = vector.load %arg10[%c0_72, %c2_73, %c0_74] : memref<2x12x256xf32, #tpu.memory_space<vmem>>, vector<2x8x256xf32>
    %67 = vector.shape_cast %66 : vector<2x8x256xf32> to vector<16x256xf32>
    %68 = arith.truncf %67 : vector<16x256xf32> to vector<16x256xbf16>
    %c1_75 = arith.constant 1 : index
    %c2_76 = arith.constant 2 : index
    %c0_77 = arith.constant 0 : index
    %c0_78 = arith.constant 0 : index
    %69 = vector.load %arg1[%c1_75, %c2_76, %c0_77, %c0_78] : memref<5x5x256x256xbf16, #tpu.memory_space<vmem>>, vector<1x1x256x256xbf16>
    %70 = vector.shape_cast %69 : vector<1x1x256x256xbf16> to vector<256x256xbf16>
    %cst_79 = arith.constant dense<0.000000e+00> : vector<16x256xf32>
    %71 = tpu.matmul %68, %70, %cst_79 {dimension_numbers = #tpu.dot_dimension_numbers<[1], [0], [0], [1], [0, 0, 1, 1], [], []>} : vector<16x256xbf16>, vector<256x256xbf16>, vector<16x256xf32> -> vector<16x256xf32>
    %72 = arith.addf %65, %71 : vector<16x256xf32>
    %c0_80 = arith.constant 0 : index
    %c3_81 = arith.constant 3 : index
    %c0_82 = arith.constant 0 : index
    %73 = vector.load %arg10[%c0_80, %c3_81, %c0_82] : memref<2x12x256xf32, #tpu.memory_space<vmem>>, vector<2x8x256xf32>
    %74 = vector.shape_cast %73 : vector<2x8x256xf32> to vector<16x256xf32>
    %75 = arith.truncf %74 : vector<16x256xf32> to vector<16x256xbf16>
    %c1_83 = arith.constant 1 : index
    %c3_84 = arith.constant 3 : index
    %c0_85 = arith.constant 0 : index
    %c0_86 = arith.constant 0 : index
    %76 = vector.load %arg1[%c1_83, %c3_84, %c0_85, %c0_86] : memref<5x5x256x256xbf16, #tpu.memory_space<vmem>>, vector<1x1x256x256xbf16>
    %77 = vector.shape_cast %76 : vector<1x1x256x256xbf16> to vector<256x256xbf16>
    %cst_87 = arith.constant dense<0.000000e+00> : vector<16x256xf32>
    %78 = tpu.matmul %75, %77, %cst_87 {dimension_numbers = #tpu.dot_dimension_numbers<[1], [0], [0], [1], [0, 0, 1, 1], [], []>} : vector<16x256xbf16>, vector<256x256xbf16>, vector<16x256xf32> -> vector<16x256xf32>
    %79 = arith.addf %72, %78 : vector<16x256xf32>
    %c0_88 = arith.constant 0 : index
    %c4_89 = arith.constant 4 : index
    %c0_90 = arith.constant 0 : index
    %80 = vector.load %arg10[%c0_88, %c4_89, %c0_90] : memref<2x12x256xf32, #tpu.memory_space<vmem>>, vector<2x8x256xf32>
    %81 = vector.shape_cast %80 : vector<2x8x256xf32> to vector<16x256xf32>
    %82 = arith.truncf %81 : vector<16x256xf32> to vector<16x256xbf16>
    %c1_91 = arith.constant 1 : index
    %c4_92 = arith.constant 4 : index
    %c0_93 = arith.constant 0 : index
    %c0_94 = arith.constant 0 : index
    %83 = vector.load %arg1[%c1_91, %c4_92, %c0_93, %c0_94] : memref<5x5x256x256xbf16, #tpu.memory_space<vmem>>, vector<1x1x256x256xbf16>
    %84 = vector.shape_cast %83 : vector<1x1x256x256xbf16> to vector<256x256xbf16>
    %cst_95 = arith.constant dense<0.000000e+00> : vector<16x256xf32>
    %85 = tpu.matmul %82, %84, %cst_95 {dimension_numbers = #tpu.dot_dimension_numbers<[1], [0], [0], [1], [0, 0, 1, 1], [], []>} : vector<16x256xbf16>, vector<256x256xbf16>, vector<16x256xf32> -> vector<16x256xf32>
    %86 = arith.addf %79, %85 : vector<16x256xf32>
    %c1_96 = arith.constant 1 : index
    %c0_97 = arith.constant 0 : index
    %c0_98 = arith.constant 0 : index
    %87 = vector.load %arg2[%c1_96, %c0_97, %c0_98] : memref<5x1x256xf32, #tpu.memory_space<vmem>>, vector<1x1x256xf32>
    %88 = vector.shape_cast %87 : vector<1x1x256xf32> to vector<1x256xf32>
    %89 = vector.broadcast %88 : vector<1x256xf32> to vector<16x256xf32>
    %90 = arith.addf %86, %89 : vector<16x256xf32>
    %cst_99 = arith.constant 0.00999999977 : f32
    %91 = vector.broadcast %cst_99 : f32 to vector<16x256xf32>
    %92 = arith.mulf %91, %90 : vector<16x256xf32>
    %93 = arith.maximumf %90, %92 : vector<16x256xf32>
    %94 = vector.shape_cast %93 : vector<16x256xf32> to vector<2x8x256xf32>
    %c0_100 = arith.constant 0 : index
    %c2_101 = arith.constant 2 : index
    %c0_102 = arith.constant 0 : index
    %95 = vector.load %arg10[%c0_100, %c2_101, %c0_102] : memref<2x12x256xf32, #tpu.memory_space<vmem>>, vector<2x8x256xf32>
    tpu.vector_store %arg10[%c0_100, %c2_101, %c0_102], %94 {strides = array<i32>} : memref<2x12x256xf32, #tpu.memory_space<vmem>>, vector<2x8x256xf32>,
    %cst_103 = arith.constant 0.000000e+00 : f32
    %96 = vector.broadcast %cst_103 : f32 to vector<16x256xf32>
    %c0_104 = arith.constant 0 : index
    %c0_105 = arith.constant 0 : index
    %c0_106 = arith.constant 0 : index
    %97 = vector.load %arg10[%c0_104, %c0_105, %c0_106] : memref<2x12x256xf32, #tpu.memory_space<vmem>>, vector<2x8x256xf32>
    %98 = vector.shape_cast %97 : vector<2x8x256xf32> to vector<16x256xf32>
    %99 = arith.truncf %98 : vector<16x256xf32> to vector<16x256xbf16>
    %c2_107 = arith.constant 2 : index
    %c0_108 = arith.constant 0 : index
    %c0_109 = arith.constant 0 : index
    %c0_110 = arith.constant 0 : index
    %100 = vector.load %arg1[%c2_107, %c0_108, %c0_109, %c0_110] : memref<5x5x256x256xbf16, #tpu.memory_space<vmem>>, vector<1x1x256x256xbf16>
    %101 = vector.shape_cast %100 : vector<1x1x256x256xbf16> to vector<256x256xbf16>
    %cst_111 = arith.constant dense<0.000000e+00> : vector<16x256xf32>
    %102 = tpu.matmul %99, %101, %cst_111 {dimension_numbers = #tpu.dot_dimension_numbers<[1], [0], [0], [1], [0, 0, 1, 1], [], []>} : vector<16x256xbf16>, vector<256x256xbf16>, vector<16x256xf32> -> vector<16x256xf32>
    %103 = arith.addf %96, %102 : vector<16x256xf32>
    %c0_112 = arith.constant 0 : index
    %c1_113 = arith.constant 1 : index
    %c0_114 = arith.constant 0 : index
    %104 = vector.load %arg10[%c0_112, %c1_113, %c0_114] : memref<2x12x256xf32, #tpu.memory_space<vmem>>, vector<2x8x256xf32>
    %105 = vector.shape_cast %104 : vector<2x8x256xf32> to vector<16x256xf32>
    %106 = arith.truncf %105 : vector<16x256xf32> to vector<16x256xbf16>
    %c2_115 = arith.constant 2 : index
    %c1_116 = arith.constant 1 : index
    %c0_117 = arith.constant 0 : index
    %c0_118 = arith.constant 0 : index
    %107 = vector.load %arg1[%c2_115, %c1_116, %c0_117, %c0_118] : memref<5x5x256x256xbf16, #tpu.memory_space<vmem>>, vector<1x1x256x256xbf16>
    %108 = vector.shape_cast %107 : vector<1x1x256x256xbf16> to vector<256x256xbf16>
    %cst_119 = arith.constant dense<0.000000e+00> : vector<16x256xf32>
    %109 = tpu.matmul %106, %108, %cst_119 {dimension_numbers = #tpu.dot_dimension_numbers<[1], [0], [0], [1], [0, 0, 1, 1], [], []>} : vector<16x256xbf16>, vector<256x256xbf16>, vector<16x256xf32> -> vector<16x256xf32>
    %110 = arith.addf %103, %109 : vector<16x256xf32>
    %c0_120 = arith.constant 0 : index
    %c2_121 = arith.constant 2 : index
    %c0_122 = arith.constant 0 : index
    %111 = vector.load %arg10[%c0_120, %c2_121, %c0_122] : memref<2x12x256xf32, #tpu.memory_space<vmem>>, vector<2x8x256xf32>
    %112 = vector.shape_cast %111 : vector<2x8x256xf32> to vector<16x256xf32>
    %113 = arith.truncf %112 : vector<16x256xf32> to vector<16x256xbf16>
    %c2_123 = arith.constant 2 : index
    %c2_124 = arith.constant 2 : index
    %c0_125 = arith.constant 0 : index
    %c0_126 = arith.constant 0 : index
    %114 = vector.load %arg1[%c2_123, %c2_124, %c0_125, %c0_126] : memref<5x5x256x256xbf16, #tpu.memory_space<vmem>>, vector<1x1x256x256xbf16>
    %115 = vector.shape_cast %114 : vector<1x1x256x256xbf16> to vector<256x256xbf16>
    %cst_127 = arith.constant dense<0.000000e+00> : vector<16x256xf32>
    %116 = tpu.matmul %113, %115, %cst_127 {dimension_numbers = #tpu.dot_dimension_numbers<[1], [0], [0], [1], [0, 0, 1, 1], [], []>} : vector<16x256xbf16>, vector<256x256xbf16>, vector<16x256xf32> -> vector<16x256xf32>
    %117 = arith.addf %110, %116 : vector<16x256xf32>
    %c0_128 = arith.constant 0 : index
    %c3_129 = arith.constant 3 : index
    %c0_130 = arith.constant 0 : index
    %118 = vector.load %arg10[%c0_128, %c3_129, %c0_130] : memref<2x12x256xf32, #tpu.memory_space<vmem>>, vector<2x8x256xf32>
    %119 = vector.shape_cast %118 : vector<2x8x256xf32> to vector<16x256xf32>
    %120 = arith.truncf %119 : vector<16x256xf32> to vector<16x256xbf16>
    %c2_131 = arith.constant 2 : index
    %c3_132 = arith.constant 3 : index
    %c0_133 = arith.constant 0 : index
    %c0_134 = arith.constant 0 : index
    %121 = vector.load %arg1[%c2_131, %c3_132, %c0_133, %c0_134] : memref<5x5x256x256xbf16, #tpu.memory_space<vmem>>, vector<1x1x256x256xbf16>
    %122 = vector.shape_cast %121 : vector<1x1x256x256xbf16> to vector<256x256xbf16>
    %cst_135 = arith.constant dense<0.000000e+00> : vector<16x256xf32>
    %123 = tpu.matmul %120, %122, %cst_135 {dimension_numbers = #tpu.dot_dimension_numbers<[1], [0], [0], [1], [0, 0, 1, 1], [], []>} : vector<16x256xbf16>, vector<256x256xbf16>, vector<16x256xf32> -> vector<16x256xf32>
    %124 = arith.addf %117, %123 : vector<16x256xf32>
    %c0_136 = arith.constant 0 : index
    %c4_137 = arith.constant 4 : index
    %c0_138 = arith.constant 0 : index
    %125 = vector.load %arg10[%c0_136, %c4_137, %c0_138] : memref<2x12x256xf32, #tpu.memory_space<vmem>>, vector<2x8x256xf32>
    %126 = vector.shape_cast %125 : vector<2x8x256xf32> to vector<16x256xf32>
    %127 = arith.truncf %126 : vector<16x256xf32> to vector<16x256xbf16>
    %c2_139 = arith.constant 2 : index
    %c4_140 = arith.constant 4 : index
    %c0_141 = arith.constant 0 : index
    %c0_142 = arith.constant 0 : index
    %128 = vector.load %arg1[%c2_139, %c4_140, %c0_141, %c0_142] : memref<5x5x256x256xbf16, #tpu.memory_space<vmem>>, vector<1x1x256x256xbf16>
    %129 = vector.shape_cast %128 : vector<1x1x256x256xbf16> to vector<256x256xbf16>
    %cst_143 = arith.constant dense<0.000000e+00> : vector<16x256xf32>
    %130 = tpu.matmul %127, %129, %cst_143 {dimension_numbers = #tpu.dot_dimension_numbers<[1], [0], [0], [1], [0, 0, 1, 1], [], []>} : vector<16x256xbf16>, vector<256x256xbf16>, vector<16x256xf32> -> vector<16x256xf32>
    %131 = arith.addf %124, %130 : vector<16x256xf32>
    %c2_144 = arith.constant 2 : index
    %c0_145 = arith.constant 0 : index
    %c0_146 = arith.constant 0 : index
    %132 = vector.load %arg2[%c2_144, %c0_145, %c0_146] : memref<5x1x256xf32, #tpu.memory_space<vmem>>, vector<1x1x256xf32>
    %133 = vector.shape_cast %132 : vector<1x1x256xf32> to vector<1x256xf32>
    %134 = vector.broadcast %133 : vector<1x256xf32> to vector<16x256xf32>
    %135 = arith.addf %131, %134 : vector<16x256xf32>
    %cst_147 = arith.constant 0.00999999977 : f32
    %136 = vector.broadcast %cst_147 : f32 to vector<16x256xf32>
    %137 = arith.mulf %136, %135 : vector<16x256xf32>
    %138 = arith.maximumf %135, %137 : vector<16x256xf32>
    %139 = vector.shape_cast %138 : vector<16x256xf32> to vector<2x8x256xf32>
    %c0_148 = arith.constant 0 : index
    %c2_149 = arith.constant 2 : index
    %c0_150 = arith.constant 0 : index
    %140 = vector.load %arg10[%c0_148, %c2_149, %c0_150] : memref<2x12x256xf32, #tpu.memory_space<vmem>>, vector<2x8x256xf32>
    tpu.vector_store %arg10[%c0_148, %c2_149, %c0_150], %139 {strides = array<i32>} : memref<2x12x256xf32, #tpu.memory_space<vmem>>, vector<2x8x256xf32>,
    %cst_151 = arith.constant 0.000000e+00 : f32
    %141 = vector.broadcast %cst_151 : f32 to vector<16x256xf32>
    %c0_152 = arith.constant 0 : index
    %c0_153 = arith.constant 0 : index
    %c0_154 = arith.constant 0 : index
    %142 = vector.load %arg10[%c0_152, %c0_153, %c0_154] : memref<2x12x256xf32, #tpu.memory_space<vmem>>, vector<2x8x256xf32>
    %143 = vector.shape_cast %142 : vector<2x8x256xf32> to vector<16x256xf32>
    %144 = arith.truncf %143 : vector<16x256xf32> to vector<16x256xbf16>
    %c3_155 = arith.constant 3 : index
    %c0_156 = arith.constant 0 : index
    %c0_157 = arith.constant 0 : index
    %c0_158 = arith.constant 0 : index
    %145 = vector.load %arg1[%c3_155, %c0_156, %c0_157, %c0_158] : memref<5x5x256x256xbf16, #tpu.memory_space<vmem>>, vector<1x1x256x256xbf16>
    %146 = vector.shape_cast %145 : vector<1x1x256x256xbf16> to vector<256x256xbf16>
    %cst_159 = arith.constant dense<0.000000e+00> : vector<16x256xf32>
    %147 = tpu.matmul %144, %146, %cst_159 {dimension_numbers = #tpu.dot_dimension_numbers<[1], [0], [0], [1], [0, 0, 1, 1], [], []>} : vector<16x256xbf16>, vector<256x256xbf16>, vector<16x256xf32> -> vector<16x256xf32>
    %148 = arith.addf %141, %147 : vector<16x256xf32>
    %c0_160 = arith.constant 0 : index
    %c1_161 = arith.constant 1 : index
    %c0_162 = arith.constant 0 : index
    %149 = vector.load %arg10[%c0_160, %c1_161, %c0_162] : memref<2x12x256xf32, #tpu.memory_space<vmem>>, vector<2x8x256xf32>
    %150 = vector.shape_cast %149 : vector<2x8x256xf32> to vector<16x256xf32>
    %151 = arith.truncf %150 : vector<16x256xf32> to vector<16x256xbf16>
    %c3_163 = arith.constant 3 : index
    %c1_164 = arith.constant 1 : index
    %c0_165 = arith.constant 0 : index
    %c0_166 = arith.constant 0 : index
    %152 = vector.load %arg1[%c3_163, %c1_164, %c0_165, %c0_166] : memref<5x5x256x256xbf16, #tpu.memory_space<vmem>>, vector<1x1x256x256xbf16>
    %153 = vector.shape_cast %152 : vector<1x1x256x256xbf16> to vector<256x256xbf16>
    %cst_167 = arith.constant dense<0.000000e+00> : vector<16x256xf32>
    %154 = tpu.matmul %151, %153, %cst_167 {dimension_numbers = #tpu.dot_dimension_numbers<[1], [0], [0], [1], [0, 0, 1, 1], [], []>} : vector<16x256xbf16>, vector<256x256xbf16>, vector<16x256xf32> -> vector<16x256xf32>
    %155 = arith.addf %148, %154 : vector<16x256xf32>
    %c0_168 = arith.constant 0 : index
    %c2_169 = arith.constant 2 : index
    %c0_170 = arith.constant 0 : index
    %156 = vector.load %arg10[%c0_168, %c2_169, %c0_170] : memref<2x12x256xf32, #tpu.memory_space<vmem>>, vector<2x8x256xf32>
    %157 = vector.shape_cast %156 : vector<2x8x256xf32> to vector<16x256xf32>
    %158 = arith.truncf %157 : vector<16x256xf32> to vector<16x256xbf16>
    %c3_171 = arith.constant 3 : index
    %c2_172 = arith.constant 2 : index
    %c0_173 = arith.constant 0 : index
    %c0_174 = arith.constant 0 : index
    %159 = vector.load %arg1[%c3_171, %c2_172, %c0_173, %c0_174] : memref<5x5x256x256xbf16, #tpu.memory_space<vmem>>, vector<1x1x256x256xbf16>
    %160 = vector.shape_cast %159 : vector<1x1x256x256xbf16> to vector<256x256xbf16>
    %cst_175 = arith.constant dense<0.000000e+00> : vector<16x256xf32>
    %161 = tpu.matmul %158, %160, %cst_175 {dimension_numbers = #tpu.dot_dimension_numbers<[1], [0], [0], [1], [0, 0, 1, 1], [], []>} : vector<16x256xbf16>, vector<256x256xbf16>, vector<16x256xf32> -> vector<16x256xf32>
    %162 = arith.addf %155, %161 : vector<16x256xf32>
    %c0_176 = arith.constant 0 : index
    %c3_177 = arith.constant 3 : index
    %c0_178 = arith.constant 0 : index
    %163 = vector.load %arg10[%c0_176, %c3_177, %c0_178] : memref<2x12x256xf32, #tpu.memory_space<vmem>>, vector<2x8x256xf32>
    %164 = vector.shape_cast %163 : vector<2x8x256xf32> to vector<16x256xf32>
    %165 = arith.truncf %164 : vector<16x256xf32> to vector<16x256xbf16>
    %c3_179 = arith.constant 3 : index
    %c3_180 = arith.constant 3 : index
    %c0_181 = arith.constant 0 : index
    %c0_182 = arith.constant 0 : index
    %166 = vector.load %arg1[%c3_179, %c3_180, %c0_181, %c0_182] : memref<5x5x256x256xbf16, #tpu.memory_space<vmem>>, vector<1x1x256x256xbf16>
    %167 = vector.shape_cast %166 : vector<1x1x256x256xbf16> to vector<256x256xbf16>
    %cst_183 = arith.constant dense<0.000000e+00> : vector<16x256xf32>
    %168 = tpu.matmul %165, %167, %cst_183 {dimension_numbers = #tpu.dot_dimension_numbers<[1], [0], [0], [1], [0, 0, 1, 1], [], []>} : vector<16x256xbf16>, vector<256x256xbf16>, vector<16x256xf32> -> vector<16x256xf32>
    %169 = arith.addf %162, %168 : vector<16x256xf32>
    %c0_184 = arith.constant 0 : index
    %c4_185 = arith.constant 4 : index
    %c0_186 = arith.constant 0 : index
    %170 = vector.load %arg10[%c0_184, %c4_185, %c0_186] : memref<2x12x256xf32, #tpu.memory_space<vmem>>, vector<2x8x256xf32>
    %171 = vector.shape_cast %170 : vector<2x8x256xf32> to vector<16x256xf32>
    %172 = arith.truncf %171 : vector<16x256xf32> to vector<16x256xbf16>
    %c3_187 = arith.constant 3 : index
    %c4_188 = arith.constant 4 : index
    %c0_189 = arith.constant 0 : index
    %c0_190 = arith.constant 0 : index
    %173 = vector.load %arg1[%c3_187, %c4_188, %c0_189, %c0_190] : memref<5x5x256x256xbf16, #tpu.memory_space<vmem>>, vector<1x1x256x256xbf16>
    %174 = vector.shape_cast %173 : vector<1x1x256x256xbf16> to vector<256x256xbf16>
    %cst_191 = arith.constant dense<0.000000e+00> : vector<16x256xf32>
    %175 = tpu.matmul %172, %174, %cst_191 {dimension_numbers = #tpu.dot_dimension_numbers<[1], [0], [0], [1], [0, 0, 1, 1], [], []>} : vector<16x256xbf16>, vector<256x256xbf16>, vector<16x256xf32> -> vector<16x256xf32>
    %176 = arith.addf %169, %175 : vector<16x256xf32>
    %c3_192 = arith.constant 3 : index
    %c0_193 = arith.constant 0 : index
    %c0_194 = arith.constant 0 : index
    %177 = vector.load %arg2[%c3_192, %c0_193, %c0_194] : memref<5x1x256xf32, #tpu.memory_space<vmem>>, vector<1x1x256xf32>
    %178 = vector.shape_cast %177 : vector<1x1x256xf32> to vector<1x256xf32>
    %179 = vector.broadcast %178 : vector<1x256xf32> to vector<16x256xf32>
    %180 = arith.addf %176, %179 : vector<16x256xf32>
    %cst_195 = arith.constant 0.00999999977 : f32
    %181 = vector.broadcast %cst_195 : f32 to vector<16x256xf32>
    %182 = arith.mulf %181, %180 : vector<16x256xf32>
    %183 = arith.maximumf %180, %182 : vector<16x256xf32>
    %184 = vector.shape_cast %183 : vector<16x256xf32> to vector<2x8x256xf32>
    %c0_196 = arith.constant 0 : index
    %c2_197 = arith.constant 2 : index
    %c0_198 = arith.constant 0 : index
    %185 = vector.load %arg10[%c0_196, %c2_197, %c0_198] : memref<2x12x256xf32, #tpu.memory_space<vmem>>, vector<2x8x256xf32>
    tpu.vector_store %arg10[%c0_196, %c2_197, %c0_198], %184 {strides = array<i32>} : memref<2x12x256xf32, #tpu.memory_space<vmem>>, vector<2x8x256xf32>,
    %cst_199 = arith.constant 0.000000e+00 : f32
    %186 = vector.broadcast %cst_199 : f32 to vector<16x256xf32>
    %c0_200 = arith.constant 0 : index
    %c0_201 = arith.constant 0 : index
    %c0_202 = arith.constant 0 : index
    %187 = vector.load %arg10[%c0_200, %c0_201, %c0_202] : memref<2x12x256xf32, #tpu.memory_space<vmem>>, vector<2x8x256xf32>
    %188 = vector.shape_cast %187 : vector<2x8x256xf32> to vector<16x256xf32>
    %189 = arith.truncf %188 : vector<16x256xf32> to vector<16x256xbf16>
    %c4_203 = arith.constant 4 : index
    %c0_204 = arith.constant 0 : index
    %c0_205 = arith.constant 0 : index
    %c0_206 = arith.constant 0 : index
    %190 = vector.load %arg1[%c4_203, %c0_204, %c0_205, %c0_206] : memref<5x5x256x256xbf16, #tpu.memory_space<vmem>>, vector<1x1x256x256xbf16>
    %191 = vector.shape_cast %190 : vector<1x1x256x256xbf16> to vector<256x256xbf16>
    %cst_207 = arith.constant dense<0.000000e+00> : vector<16x256xf32>
    %192 = tpu.matmul %189, %191, %cst_207 {dimension_numbers = #tpu.dot_dimension_numbers<[1], [0], [0], [1], [0, 0, 1, 1], [], []>} : vector<16x256xbf16>, vector<256x256xbf16>, vector<16x256xf32> -> vector<16x256xf32>
    %193 = arith.addf %186, %192 : vector<16x256xf32>
    %c0_208 = arith.constant 0 : index
    %c1_209 = arith.constant 1 : index
    %c0_210 = arith.constant 0 : index
    %194 = vector.load %arg10[%c0_208, %c1_209, %c0_210] : memref<2x12x256xf32, #tpu.memory_space<vmem>>, vector<2x8x256xf32>
    %195 = vector.shape_cast %194 : vector<2x8x256xf32> to vector<16x256xf32>
    %196 = arith.truncf %195 : vector<16x256xf32> to vector<16x256xbf16>
    %c4_211 = arith.constant 4 : index
    %c1_212 = arith.constant 1 : index
    %c0_213 = arith.constant 0 : index
    %c0_214 = arith.constant 0 : index
    %197 = vector.load %arg1[%c4_211, %c1_212, %c0_213, %c0_214] : memref<5x5x256x256xbf16, #tpu.memory_space<vmem>>, vector<1x1x256x256xbf16>
    %198 = vector.shape_cast %197 : vector<1x1x256x256xbf16> to vector<256x256xbf16>
    %cst_215 = arith.constant dense<0.000000e+00> : vector<16x256xf32>
    %199 = tpu.matmul %196, %198, %cst_215 {dimension_numbers = #tpu.dot_dimension_numbers<[1], [0], [0], [1], [0, 0, 1, 1], [], []>} : vector<16x256xbf16>, vector<256x256xbf16>, vector<16x256xf32> -> vector<16x256xf32>
    %200 = arith.addf %193, %199 : vector<16x256xf32>
    %c0_216 = arith.constant 0 : index
    %c2_217 = arith.constant 2 : index
    %c0_218 = arith.constant 0 : index
    %201 = vector.load %arg10[%c0_216, %c2_217, %c0_218] : memref<2x12x256xf32, #tpu.memory_space<vmem>>, vector<2x8x256xf32>
    %202 = vector.shape_cast %201 : vector<2x8x256xf32> to vector<16x256xf32>
    %203 = arith.truncf %202 : vector<16x256xf32> to vector<16x256xbf16>
    %c4_219 = arith.constant 4 : index
    %c2_220 = arith.constant 2 : index
    %c0_221 = arith.constant 0 : index
    %c0_222 = arith.constant 0 : index
    %204 = vector.load %arg1[%c4_219, %c2_220, %c0_221, %c0_222] : memref<5x5x256x256xbf16, #tpu.memory_space<vmem>>, vector<1x1x256x256xbf16>
    %205 = vector.shape_cast %204 : vector<1x1x256x256xbf16> to vector<256x256xbf16>
    %cst_223 = arith.constant dense<0.000000e+00> : vector<16x256xf32>
    %206 = tpu.matmul %203, %205, %cst_223 {dimension_numbers = #tpu.dot_dimension_numbers<[1], [0], [0], [1], [0, 0, 1, 1], [], []>} : vector<16x256xbf16>, vector<256x256xbf16>, vector<16x256xf32> -> vector<16x256xf32>
    %207 = arith.addf %200, %206 : vector<16x256xf32>
    %c0_224 = arith.constant 0 : index
    %c3_225 = arith.constant 3 : index
    %c0_226 = arith.constant 0 : index
    %208 = vector.load %arg10[%c0_224, %c3_225, %c0_226] : memref<2x12x256xf32, #tpu.memory_space<vmem>>, vector<2x8x256xf32>
    %209 = vector.shape_cast %208 : vector<2x8x256xf32> to vector<16x256xf32>
    %210 = arith.truncf %209 : vector<16x256xf32> to vector<16x256xbf16>
    %c4_227 = arith.constant 4 : index
    %c3_228 = arith.constant 3 : index
    %c0_229 = arith.constant 0 : index
    %c0_230 = arith.constant 0 : index
    %211 = vector.load %arg1[%c4_227, %c3_228, %c0_229, %c0_230] : memref<5x5x256x256xbf16, #tpu.memory_space<vmem>>, vector<1x1x256x256xbf16>
    %212 = vector.shape_cast %211 : vector<1x1x256x256xbf16> to vector<256x256xbf16>
    %cst_231 = arith.constant dense<0.000000e+00> : vector<16x256xf32>
    %213 = tpu.matmul %210, %212, %cst_231 {dimension_numbers = #tpu.dot_dimension_numbers<[1], [0], [0], [1], [0, 0, 1, 1], [], []>} : vector<16x256xbf16>, vector<256x256xbf16>, vector<16x256xf32> -> vector<16x256xf32>
    %214 = arith.addf %207, %213 : vector<16x256xf32>
    %c0_232 = arith.constant 0 : index
    %c4_233 = arith.constant 4 : index
    %c0_234 = arith.constant 0 : index
    %215 = vector.load %arg10[%c0_232, %c4_233, %c0_234] : memref<2x12x256xf32, #tpu.memory_space<vmem>>, vector<2x8x256xf32>
    %216 = vector.shape_cast %215 : vector<2x8x256xf32> to vector<16x256xf32>
    %217 = arith.truncf %216 : vector<16x256xf32> to vector<16x256xbf16>
    %c4_235 = arith.constant 4 : index
    %c4_236 = arith.constant 4 : index
    %c0_237 = arith.constant 0 : index
    %c0_238 = arith.constant 0 : index
    %218 = vector.load %arg1[%c4_235, %c4_236, %c0_237, %c0_238] : memref<5x5x256x256xbf16, #tpu.memory_space<vmem>>, vector<1x1x256x256xbf16>
    %219 = vector.shape_cast %218 : vector<1x1x256x256xbf16> to vector<256x256xbf16>
    %cst_239 = arith.constant dense<0.000000e+00> : vector<16x256xf32>
    %220 = tpu.matmul %217, %219, %cst_239 {dimension_numbers = #tpu.dot_dimension_numbers<[1], [0], [0], [1], [0, 0, 1, 1], [], []>} : vector<16x256xbf16>, vector<256x256xbf16>, vector<16x256xf32> -> vector<16x256xf32>
    %221 = arith.addf %214, %220 : vector<16x256xf32>
    %c4_240 = arith.constant 4 : index
    %c0_241 = arith.constant 0 : index
    %c0_242 = arith.constant 0 : index
    %222 = vector.load %arg2[%c4_240, %c0_241, %c0_242] : memref<5x1x256xf32, #tpu.memory_space<vmem>>, vector<1x1x256xf32>
    %223 = vector.shape_cast %222 : vector<1x1x256xf32> to vector<1x256xf32>
    %224 = vector.broadcast %223 : vector<1x256xf32> to vector<16x256xf32>
    %225 = arith.addf %221, %224 : vector<16x256xf32>
    %cst_243 = arith.constant 0.00999999977 : f32
    %226 = vector.broadcast %cst_243 : f32 to vector<16x256xf32>
    %227 = arith.mulf %226, %225 : vector<16x256xf32>
    %228 = arith.maximumf %225, %227 : vector<16x256xf32>
    %229 = arith.truncf %228 : vector<16x256xf32> to vector<16x256xbf16>
    %230 = vector.shape_cast %229 : vector<16x256xbf16> to vector<2x8x256xbf16>
    %231 = vector.extract_strided_slice %230 {offsets = [0, 0, 0], sizes = [2, 1, 256], strides = [1, 1, 1]} : vector<2x8x256xbf16> to vector<2x1x256xbf16>
    %232 = vector.shape_cast %231 : vector<2x1x256xbf16> to vector<2x256xbf16>
    %c0_244 = arith.constant 0 : index
    %c0_245 = arith.constant 0 : index
    %233 = vector.load %arg11[%c0_244, %c0_245] : memref<2x2048xbf16, #tpu.memory_space<vmem>>, vector<2x256xbf16>
    tpu.vector_store %arg11[%c0_244, %c0_245], %232 {strides = array<i32>} : memref<2x2048xbf16, #tpu.memory_space<vmem>>, vector<2x256xbf16>,
    %234 = vector.extract_strided_slice %230 {offsets = [0, 1, 0], sizes = [2, 1, 256], strides = [1, 1, 1]} : vector<2x8x256xbf16> to vector<2x1x256xbf16>
    %235 = vector.shape_cast %234 : vector<2x1x256xbf16> to vector<2x256xbf16>
    %c0_246 = arith.constant 0 : index
    %c256 = arith.constant 256 : index
    %236 = vector.load %arg11[%c0_246, %c256] : memref<2x2048xbf16, #tpu.memory_space<vmem>>, vector<2x256xbf16>
    tpu.vector_store %arg11[%c0_246, %c256], %235 {strides = array<i32>} : memref<2x2048xbf16, #tpu.memory_space<vmem>>, vector<2x256xbf16>,
    %237 = vector.extract_strided_slice %230 {offsets = [0, 2, 0], sizes = [2, 1, 256], strides = [1, 1, 1]} : vector<2x8x256xbf16> to vector<2x1x256xbf16>
    %238 = vector.shape_cast %237 : vector<2x1x256xbf16> to vector<2x256xbf16>
    %c0_247 = arith.constant 0 : index
    %c512 = arith.constant 512 : index
    %239 = vector.load %arg11[%c0_247, %c512] : memref<2x2048xbf16, #tpu.memory_space<vmem>>, vector<2x256xbf16>
    tpu.vector_store %arg11[%c0_247, %c512], %238 {strides = array<i32>} : memref<2x2048xbf16, #tpu.memory_space<vmem>>, vector<2x256xbf16>,
    %240 = vector.extract_strided_slice %230 {offsets = [0, 3, 0], sizes = [2, 1, 256], strides = [1, 1, 1]} : vector<2x8x256xbf16> to vector<2x1x256xbf16>
    %241 = vector.shape_cast %240 : vector<2x1x256xbf16> to vector<2x256xbf16>
    %c0_248 = arith.constant 0 : index
    %c768 = arith.constant 768 : index
    %242 = vector.load %arg11[%c0_248, %c768] : memref<2x2048xbf16, #tpu.memory_space<vmem>>, vector<2x256xbf16>
    tpu.vector_store %arg11[%c0_248, %c768], %241 {strides = array<i32>} : memref<2x2048xbf16, #tpu.memory_space<vmem>>, vector<2x256xbf16>,
    %243 = vector.extract_strided_slice %230 {offsets = [0, 4, 0], sizes = [2, 1, 256], strides = [1, 1, 1]} : vector<2x8x256xbf16> to vector<2x1x256xbf16>
    %244 = vector.shape_cast %243 : vector<2x1x256xbf16> to vector<2x256xbf16>
    %c0_249 = arith.constant 0 : index
    %c1024 = arith.constant 1024 : index
    %245 = vector.load %arg11[%c0_249, %c1024] : memref<2x2048xbf16, #tpu.memory_space<vmem>>, vector<2x256xbf16>
    tpu.vector_store %arg11[%c0_249, %c1024], %244 {strides = array<i32>} : memref<2x2048xbf16, #tpu.memory_space<vmem>>, vector<2x256xbf16>,
    %246 = vector.extract_strided_slice %230 {offsets = [0, 5, 0], sizes = [2, 1, 256], strides = [1, 1, 1]} : vector<2x8x256xbf16> to vector<2x1x256xbf16>
    %247 = vector.shape_cast %246 : vector<2x1x256xbf16> to vector<2x256xbf16>
    %c0_250 = arith.constant 0 : index
    %c1280 = arith.constant 1280 : index
    %248 = vector.load %arg11[%c0_250, %c1280] : memref<2x2048xbf16, #tpu.memory_space<vmem>>, vector<2x256xbf16>
    tpu.vector_store %arg11[%c0_250, %c1280], %247 {strides = array<i32>} : memref<2x2048xbf16, #tpu.memory_space<vmem>>, vector<2x256xbf16>,
    %249 = vector.extract_strided_slice %230 {offsets = [0, 6, 0], sizes = [2, 1, 256], strides = [1, 1, 1]} : vector<2x8x256xbf16> to vector<2x1x256xbf16>
    %250 = vector.shape_cast %249 : vector<2x1x256xbf16> to vector<2x256xbf16>
    %c0_251 = arith.constant 0 : index
    %c1536 = arith.constant 1536 : index
    %251 = vector.load %arg11[%c0_251, %c1536] : memref<2x2048xbf16, #tpu.memory_space<vmem>>, vector<2x256xbf16>
    tpu.vector_store %arg11[%c0_251, %c1536], %250 {strides = array<i32>} : memref<2x2048xbf16, #tpu.memory_space<vmem>>, vector<2x256xbf16>,
    %252 = vector.extract_strided_slice %230 {offsets = [0, 7, 0], sizes = [2, 1, 256], strides = [1, 1, 1]} : vector<2x8x256xbf16> to vector<2x1x256xbf16>
    %253 = vector.shape_cast %252 : vector<2x1x256xbf16> to vector<2x256xbf16>
    %c0_252 = arith.constant 0 : index
    %c1792 = arith.constant 1792 : index
    %254 = vector.load %arg11[%c0_252, %c1792] : memref<2x2048xbf16, #tpu.memory_space<vmem>>, vector<2x256xbf16>
    tpu.vector_store %arg11[%c0_252, %c1792], %253 {strides = array<i32>} : memref<2x2048xbf16, #tpu.memory_space<vmem>>, vector<2x256xbf16>,
    %c0_253 = arith.constant 0 : index
    %c0_254 = arith.constant 0 : index
    %255 = vector.load %arg11[%c0_253, %c0_254] : memref<2x2048xbf16, #tpu.memory_space<vmem>>, vector<2x2048xbf16>
    %c0_255 = arith.constant 0 : index
    %c0_256 = arith.constant 0 : index
    %256 = vector.load %arg3[%c0_255, %c0_256] : memref<2048x32xbf16, #tpu.memory_space<vmem>>, vector<2048x32xbf16>
    %cst_257 = arith.constant dense<0.000000e+00> : vector<2x32xf32>
    %257 = tpu.matmul %255, %256, %cst_257 {dimension_numbers = #tpu.dot_dimension_numbers<[1], [0], [0], [1], [0, 0, 1, 1], [], []>} : vector<2x2048xbf16>, vector<2048x32xbf16>, vector<2x32xf32> -> vector<2x32xf32>
    %c0_258 = arith.constant 0 : index
    %c0_259 = arith.constant 0 : index
    %c0_260 = arith.constant 0 : index
    %258 = vector.load %arg7[%c0_258, %c0_259, %c0_260] : memref<3x1x32xf32, #tpu.memory_space<vmem>>, vector<1x1x32xf32>
    %259 = vector.shape_cast %258 : vector<1x1x32xf32> to vector<1x32xf32>
    %260 = vector.broadcast %259 : vector<1x32xf32> to vector<2x32xf32>
    %261 = arith.addf %257, %260 : vector<2x32xf32>
    %cst_261 = arith.constant 5.000000e-01 : f32
    %262 = vector.broadcast %cst_261 : f32 to vector<2x32xf32>
    %263 = arith.mulf %262, %261 : vector<2x32xf32>
    %cst_262 = arith.constant 4.471500e-02 : f32
    %264 = vector.broadcast %cst_262 : f32 to vector<2x32xf32>
    %265 = arith.mulf %264, %261 : vector<2x32xf32>
    %266 = arith.mulf %265, %261 : vector<2x32xf32>
    %267 = arith.mulf %266, %261 : vector<2x32xf32>
    %268 = arith.addf %261, %267 : vector<2x32xf32>
    %cst_263 = arith.constant 0.797884583 : f32
    %269 = vector.broadcast %cst_263 : f32 to vector<2x32xf32>
    %270 = arith.mulf %269, %268 : vector<2x32xf32>
    %271 = math.tanh %270 : vector<2x32xf32>
    %cst_264 = arith.constant 1.000000e+00 : f32
    %272 = vector.broadcast %cst_264 : f32 to vector<2x32xf32>
    %273 = arith.addf %272, %271 : vector<2x32xf32>
    %274 = arith.mulf %263, %273 : vector<2x32xf32>
    %275 = arith.truncf %274 : vector<2x32xf32> to vector<2x32xbf16>
    %c0_265 = arith.constant 0 : index
    %c0_266 = arith.constant 0 : index
    %276 = vector.load %arg4[%c0_265, %c0_266] : memref<32x32xbf16, #tpu.memory_space<vmem>>, vector<32x32xbf16>
    %cst_267 = arith.constant dense<0.000000e+00> : vector<2x32xf32>
    %277 = tpu.matmul %275, %276, %cst_267 {dimension_numbers = #tpu.dot_dimension_numbers<[1], [0], [0], [1], [0, 0, 1, 1], [], []>} : vector<2x32xbf16>, vector<32x32xbf16>, vector<2x32xf32> -> vector<2x32xf32>
    %c1_268 = arith.constant 1 : index
    %c0_269 = arith.constant 0 : index
    %c0_270 = arith.constant 0 : index
    %278 = vector.load %arg7[%c1_268, %c0_269, %c0_270] : memref<3x1x32xf32, #tpu.memory_space<vmem>>, vector<1x1x32xf32>
    %279 = vector.shape_cast %278 : vector<1x1x32xf32> to vector<1x32xf32>
    %280 = vector.broadcast %279 : vector<1x32xf32> to vector<2x32xf32>
    %281 = arith.addf %277, %280 : vector<2x32xf32>
    %cst_271 = arith.constant 5.000000e-01 : f32
    %282 = vector.broadcast %cst_271 : f32 to vector<2x32xf32>
    %283 = arith.mulf %282, %281 : vector<2x32xf32>
    %cst_272 = arith.constant 4.471500e-02 : f32
    %284 = vector.broadcast %cst_272 : f32 to vector<2x32xf32>
    %285 = arith.mulf %284, %281 : vector<2x32xf32>
    %286 = arith.mulf %285, %281 : vector<2x32xf32>
    %287 = arith.mulf %286, %281 : vector<2x32xf32>
    %288 = arith.addf %281, %287 : vector<2x32xf32>
    %cst_273 = arith.constant 0.797884583 : f32
    %289 = vector.broadcast %cst_273 : f32 to vector<2x32xf32>
    %290 = arith.mulf %289, %288 : vector<2x32xf32>
    %291 = math.tanh %290 : vector<2x32xf32>
    %cst_274 = arith.constant 1.000000e+00 : f32
    %292 = vector.broadcast %cst_274 : f32 to vector<2x32xf32>
    %293 = arith.addf %292, %291 : vector<2x32xf32>
    %294 = arith.mulf %283, %293 : vector<2x32xf32>
    %295 = arith.truncf %294 : vector<2x32xf32> to vector<2x32xbf16>
    %c0_275 = arith.constant 0 : index
    %c0_276 = arith.constant 0 : index
    %296 = vector.load %arg5[%c0_275, %c0_276] : memref<32x32xbf16, #tpu.memory_space<vmem>>, vector<32x32xbf16>
    %cst_277 = arith.constant dense<0.000000e+00> : vector<2x32xf32>
    %297 = tpu.matmul %295, %296, %cst_277 {dimension_numbers = #tpu.dot_dimension_numbers<[1], [0], [0], [1], [0, 0, 1, 1], [], []>} : vector<2x32xbf16>, vector<32x32xbf16>, vector<2x32xf32> -> vector<2x32xf32>
    %c2_278 = arith.constant 2 : index
    %c0_279 = arith.constant 0 : index
    %c0_280 = arith.constant 0 : index
    %298 = vector.load %arg7[%c2_278, %c0_279, %c0_280] : memref<3x1x32xf32, #tpu.memory_space<vmem>>, vector<1x1x32xf32>
    %299 = vector.shape_cast %298 : vector<1x1x32xf32> to vector<1x32xf32>
    %300 = vector.broadcast %299 : vector<1x32xf32> to vector<2x32xf32>
    %301 = arith.addf %297, %300 : vector<2x32xf32>
    %cst_281 = arith.constant 5.000000e-01 : f32
    %302 = vector.broadcast %cst_281 : f32 to vector<2x32xf32>
    %303 = arith.mulf %302, %301 : vector<2x32xf32>
    %cst_282 = arith.constant 4.471500e-02 : f32
    %304 = vector.broadcast %cst_282 : f32 to vector<2x32xf32>
    %305 = arith.mulf %304, %301 : vector<2x32xf32>
    %306 = arith.mulf %305, %301 : vector<2x32xf32>
    %307 = arith.mulf %306, %301 : vector<2x32xf32>
    %308 = arith.addf %301, %307 : vector<2x32xf32>
    %cst_283 = arith.constant 0.797884583 : f32
    %309 = vector.broadcast %cst_283 : f32 to vector<2x32xf32>
    %310 = arith.mulf %309, %308 : vector<2x32xf32>
    %311 = math.tanh %310 : vector<2x32xf32>
    %cst_284 = arith.constant 1.000000e+00 : f32
    %312 = vector.broadcast %cst_284 : f32 to vector<2x32xf32>
    %313 = arith.addf %312, %311 : vector<2x32xf32>
    %314 = arith.mulf %303, %313 : vector<2x32xf32>
    %315 = arith.truncf %314 : vector<2x32xf32> to vector<2x32xbf16>
    %c0_285 = arith.constant 0 : index
    %c0_286 = arith.constant 0 : index
    %316 = vector.load %arg6[%c0_285, %c0_286] : memref<32x7xbf16, #tpu.memory_space<vmem>>, vector<32x7xbf16>
    %cst_287 = arith.constant dense<0.000000e+00> : vector<2x7xf32>
    %317 = tpu.matmul %315, %316, %cst_287 {dimension_numbers = #tpu.dot_dimension_numbers<[1], [0], [0], [1], [0, 0, 1, 1], [], []>} : vector<2x32xbf16>, vector<32x7xbf16>, vector<2x7xf32> -> vector<2x7xf32>
    %c0_288 = arith.constant 0 : index
    %c0_289 = arith.constant 0 : index
    %318 = vector.load %arg8[%c0_288, %c0_289] : memref<1x7xf32, #tpu.memory_space<vmem>>, vector<1x7xf32>
    %319 = vector.broadcast %318 : vector<1x7xf32> to vector<2x7xf32>
    %320 = arith.addf %317, %319 : vector<2x7xf32>
    %321 = vector.extract_strided_slice %320 {offsets = [0, 0], sizes = [2, 6], strides = [1, 1]} : vector<2x7xf32> to vector<2x6xf32>
    %cst_290 = arith.constant dense<0xFF800000> : vector<2xf32>
    %322 = vector.multi_reduction <maximumf>, %321, %cst_290 [1] : vector<2x6xf32> to vector<2xf32>
    %323 = vector.shape_cast %322 : vector<2xf32> to vector<2x1xf32>
    %324 = vector.broadcast %323 : vector<2x1xf32> to vector<2x6xf32>
    %325 = arith.subf %321, %324 : vector<2x6xf32>
    %326 = math.exp %325 : vector<2x6xf32>
    %cst_291 = arith.constant dense<0.000000e+00> : vector<2xf32>
    %327 = vector.multi_reduction <add>, %326, %cst_291 [1] : vector<2x6xf32> to vector<2xf32>
    %328 = vector.shape_cast %327 : vector<2xf32> to vector<2x1xf32>
    %329 = vector.broadcast %328 : vector<2x1xf32> to vector<2x6xf32>
    %330 = arith.divf %326, %329 : vector<2x6xf32>
    %c0_292 = arith.constant 0 : index
    %c0_293 = arith.constant 0 : index
    %331 = vector.load %arg9[%c0_292, %c0_293] : memref<2x7xf32, #tpu.memory_space<vmem>>, vector<2x6xf32>
    tpu.vector_store %arg9[%c0_292, %c0_293], %330 {strides = array<i32>} : memref<2x7xf32, #tpu.memory_space<vmem>>, vector<2x6xf32>,
    %332 = vector.extract_strided_slice %320 {offsets = [0, 6], sizes = [2, 1], strides = [1, 1]} : vector<2x7xf32> to vector<2x1xf32>
    %333 = math.tanh %332 : vector<2x1xf32>
    %c0_294 = arith.constant 0 : index
    %c6 = arith.constant 6 : index
    %334 = vector.load %arg9[%c0_294, %c6] : memref<2x7xf32, #tpu.memory_space<vmem>>, vector<2x1xf32>
    tpu.vector_store %arg9[%c0_294, %c6], %333 {strides = array<i32>} : memref<2x7xf32, #tpu.memory_space<vmem>>, vector<2x1xf32>,
    return
  }
}

</mosaic_0001>

<llo_original>
// kernel: simple_resnet_forward.1
$region0: #{simple_resnet_forward.1}
  #allocation0 [shape = 'u32[]', space=smem, size = 0x4, offset = 0x4, fixed_abs, tag = 'smem constant byte address 0x4 - core index']
  #allocation1 [shape = 'u32[72,128]{1,0:T(1,128)}', space=vmem, size = 0x9000, scoped, tag = 'internal scratch']
  #allocation2 [shape = 'f32[2,12,256]{2,1,0:T(8,128)}', space=vmem, size = 0x8000, scoped, tag = 'scratch operand']
  #allocation3 [shape = 'bf16[2,2048]{1,0:T(2,128)(2,1)}', space=vmem, size = 0x2000, scoped, tag = 'scratch operand']
  %s0 = inlined_call_operand.vmem [shape: f32[2,8,256], index: 0, kind: input, shape index: {}]
  %s1 = inlined_call_operand.hbm [shape: bf16[5,5,256,256], index: 1, kind: input, shape index: {}]
  %s2 = inlined_call_operand.hbm [shape: f32[5,1,256], index: 2, kind: input, shape index: {}]
  %s3 = inlined_call_operand.vmem [shape: bf16[2048,32], index: 3, kind: input, shape index: {}]
  %s4 = inlined_call_operand.hbm [shape: bf16[32,32], index: 4, kind: input, shape index: {}]
  %s5 = inlined_call_operand.hbm [shape: bf16[32,32], index: 5, kind: input, shape index: {}]
  %s6 = inlined_call_operand.vmem [shape: bf16[32,7], index: 6, kind: input, shape index: {}]
  %s7 = inlined_call_operand.hbm [shape: f32[3,1,32], index: 7, kind: input, shape index: {}]
  %s8 = inlined_call_operand.hbm [shape: f32[1,7], index: 8, kind: input, shape index: {}]
  %s9 = inlined_call_operand.vmem [shape: f32[2,7], index: 9, kind: output, shape index: {}]
  %s10 = sld [smem:[#allocation0]]
  $region70: #{simple_resnet_forward.1} parent=0
    _
  %s12 = ssub.s32 1, %s10
  %s13 = scalar_select 0, %s12, %s10
  $region1: #{simple_resnet_forward.1} parent=0
    #allocation4 [shape = 'u8[3276800]{0}', space=vmem, size = 0x320000, scoped, tag = 'input window, operand 1, single buffered']
    #allocation5 [shape = 's32[1]{0}', space=sflag, size = 0x4, scoped, tag = 'scoped memory for simple_resnet_forward.1']
    #allocation6 [shape = 'u8[5120]{0}', space=vmem, size = 0x1400, scoped, tag = 'input window, operand 2, single buffered']
    #allocation7 [shape = 's32[1]{0}', space=sflag, size = 0x4, scoped, tag = 'scoped memory for simple_resnet_forward.1']
    #allocation8 [shape = 'u8[8192]{0}', space=vmem, size = 0x2000, scoped, tag = 'input window, operand 4, single buffered']
    #allocation9 [shape = 'u8[8192]{0}', space=vmem, size = 0x2000, scoped, tag = 'input window, operand 5, single buffered']
    #allocation10 [shape = 's32[1]{0}', space=sflag, size = 0x4, scoped, tag = 'scoped memory for simple_resnet_forward.1']
    #allocation11 [shape = 'u8[1536]{0}', space=vmem, size = 0x800, scoped, tag = 'input window, operand 7, single buffered']
    #allocation12 [shape = 'u8[512]{0}', space=vmem, size = 0x400, scoped, tag = 'input window, operand 8, single buffered']
    #allocation13 [shape = 's32[1]{0}', space=sflag, size = 0x4, scoped, tag = 'scoped memory for simple_resnet_forward.1']
    %14 = vsyncpa [#allocation5], 0
    %15 = vsyncpa [#allocation7], 0
    %16 = vsyncpa [#allocation10], 0
    %17 = vsyncpa [#allocation13], 0
    // Predicated region
    $region2: #{simple_resnet_forward.1} parent=1 // pred_check
      _
    $region3: #{simple_resnet_forward.1} parent=1 // pred_check_branch
      %19 = sbr.rel (0) target = $region5
    $region4: #{simple_resnet_forward.1} parent=1 // pred_region
      _
    $region5: #{simple_resnet_forward.1} parent=1 // pred_fallthru
      _
    // Predicated region
    $region6: #{simple_resnet_forward.1} parent=1 // pred_check
      _
    $region7: #{simple_resnet_forward.1} parent=1 // pred_check_branch
      %21 = sbr.rel (0) target = $region9
    $region8: #{simple_resnet_forward.1} parent=1 // pred_region
      %23 = vsyncadd [#allocation5], 0
      %s24 = sshll.u32 %s1, 4
      %s25 = int_to_ptr.hbm [resolvable:$true] %s24
      %s26 = sshll.u32 [#allocation4], 4
      %s27 = int_to_ptr.vmem [resolvable:$true] %s26
      %32 = dma.hbm_to_vmem [thread:$0]  %s25, 102400, %s27, [#allocation5], 128, 128, 8
    $region9: #{simple_resnet_forward.1} parent=1 // pred_fallthru
      _
    // Predicated region
    $region10: #{simple_resnet_forward.1} parent=1 // pred_check
      _
    $region11: #{simple_resnet_forward.1} parent=1 // pred_check_branch
      %34 = sbr.rel (0) target = $region13
    $region12: #{simple_resnet_forward.1} parent=1 // pred_region
      %36 = vsyncadd [#allocation7], 0
      %s37 = sshll.u32 %s2, 4
      %s38 = int_to_ptr.hbm [resolvable:$true] %s37
      %s39 = sshll.u32 [#allocation6], 4
      %s40 = int_to_ptr.vmem [resolvable:$true] %s39
      %45 = dma.hbm_to_vmem [thread:$0]  %s38, 160, %s40, [#allocation7], 32, 32, 2
    $region13: #{simple_resnet_forward.1} parent=1 // pred_fallthru
      _
    // Predicated region
    $region14: #{simple_resnet_forward.1} parent=1 // pred_check
      _
    $region15: #{simple_resnet_forward.1} parent=1 // pred_check_branch
      %47 = sbr.rel (0) target = $region17
    $region16: #{simple_resnet_forward.1} parent=1 // pred_region
      _
    $region17: #{simple_resnet_forward.1} parent=1 // pred_fallthru
      _
    // Predicated region
    $region18: #{simple_resnet_forward.1} parent=1 // pred_check
      _
    $region19: #{simple_resnet_forward.1} parent=1 // pred_check_branch
      %49 = sbr.rel (0) target = $region21
    $region20: #{simple_resnet_forward.1} parent=1 // pred_region
      %51 = vsyncadd [#allocation7], 0
      %s52 = sshll.u32 %s4, 4
      %s53 = int_to_ptr.hbm [resolvable:$true] %s52
      %s54 = sshll.u32 [#allocation8], 4
      %s55 = int_to_ptr.vmem [resolvable:$true] %s54
      %60 = dma.hbm_to_vmem [thread:$0]  %s53, 256, %s55, [#allocation7], 64, 64, 4
    $region21: #{simple_resnet_forward.1} parent=1 // pred_fallthru
      _
    // Predicated region
    $region22: #{simple_resnet_forward.1} parent=1 // pred_check
      _
    $region23: #{simple_resnet_forward.1} parent=1 // pred_check_branch
      %62 = sbr.rel (0) target = $region25
    $region24: #{simple_resnet_forward.1} parent=1 // pred_region
      %64 = vsyncadd [#allocation10], 0
      %s65 = sshll.u32 %s5, 4
      %s66 = int_to_ptr.hbm [resolvable:$true] %s65
      %s67 = sshll.u32 [#allocation9], 4
      %s68 = int_to_ptr.vmem [resolvable:$true] %s67
      %73 = dma.hbm_to_vmem [thread:$0]  %s66, 256, %s68, [#allocation10], 64, 64, 4
    $region25: #{simple_resnet_forward.1} parent=1 // pred_fallthru
      _
    // Predicated region
    $region26: #{simple_resnet_forward.1} parent=1 // pred_check
      _
    $region27: #{simple_resnet_forward.1} parent=1 // pred_check_branch
      %75 = sbr.rel (0) target = $region29
    $region28: #{simple_resnet_forward.1} parent=1 // pred_region
      _
    $region29: #{simple_resnet_forward.1} parent=1 // pred_fallthru
      _
    // Predicated region
    $region30: #{simple_resnet_forward.1} parent=1 // pred_check
      _
    $region31: #{simple_resnet_forward.1} parent=1 // pred_check_branch
      %77 = sbr.rel (0) target = $region33
    $region32: #{simple_resnet_forward.1} parent=1 // pred_region
      %79 = vsyncadd [#allocation10], 0
      %s80 = sshll.u32 %s7, 4
      %s81 = int_to_ptr.hbm [resolvable:$true] %s80
      %s82 = sshll.u32 [#allocation11], 4
      %s83 = int_to_ptr.vmem [resolvable:$true] %s82
      %88 = dma.hbm_to_vmem [thread:$0]  %s81, 48, %s83, [#allocation10], 16, 16, 1
    $region33: #{simple_resnet_forward.1} parent=1 // pred_fallthru
      _
    // Predicated region
    $region34: #{simple_resnet_forward.1} parent=1 // pred_check
      _
    $region35: #{simple_resnet_forward.1} parent=1 // pred_check_branch
      %90 = sbr.rel (0) target = $region37
    $region36: #{simple_resnet_forward.1} parent=1 // pred_region
      %92 = vsyncadd [#allocation13], 0
      %s94 = sshll.u32 %s8, 4
      %s95 = int_to_ptr.hbm [resolvable:$true] %s94
      %s96 = sshll.u32 [#allocation12], 4
      %s97 = int_to_ptr.vmem [resolvable:$true] %s96
      %99 = dma.hbm_to_vmem [thread:$0]  %s95, 16, %s97, [#allocation13]
    $region37: #{simple_resnet_forward.1} parent=1 // pred_fallthru
      _
    // Predicated region
    $region38: #{simple_resnet_forward.1} parent=1 // pred_check
      _
    $region39: #{simple_resnet_forward.1} parent=1 // pred_check_branch
      %101 = sbr.rel (0) target = $region41
    $region40: #{simple_resnet_forward.1} parent=1 // pred_region
      %103 = dma.done [#allocation5], 102400
    $region41: #{simple_resnet_forward.1} parent=1 // pred_fallthru
      _
    // Predicated region
    $region42: #{simple_resnet_forward.1} parent=1 // pred_check
      _
    $region43: #{simple_resnet_forward.1} parent=1 // pred_check_branch
      %105 = sbr.rel (0) target = $region45
    $region44: #{simple_resnet_forward.1} parent=1 // pred_region
      %107 = dma.done [#allocation7], 160
    $region45: #{simple_resnet_forward.1} parent=1 // pred_fallthru
      _
    // Predicated region
    $region46: #{simple_resnet_forward.1} parent=1 // pred_check
      _
    $region47: #{simple_resnet_forward.1} parent=1 // pred_check_branch
      %109 = sbr.rel (0) target = $region49
    $region48: #{simple_resnet_forward.1} parent=1 // pred_region
      %111 = dma.done [#allocation7], 256
    $region49: #{simple_resnet_forward.1} parent=1 // pred_fallthru
      _
    // Predicated region
    $region50: #{simple_resnet_forward.1} parent=1 // pred_check
      _
    $region51: #{simple_resnet_forward.1} parent=1 // pred_check_branch
      %113 = sbr.rel (0) target = $region53
    $region52: #{simple_resnet_forward.1} parent=1 // pred_region
      %115 = dma.done [#allocation10], 256
    $region53: #{simple_resnet_forward.1} parent=1 // pred_fallthru
      _
    // Predicated region
    $region54: #{simple_resnet_forward.1} parent=1 // pred_check
      _
    $region55: #{simple_resnet_forward.1} parent=1 // pred_check_branch
      %117 = sbr.rel (0) target = $region57
    $region56: #{simple_resnet_forward.1} parent=1 // pred_region
      %119 = dma.done [#allocation10], 48
    $region57: #{simple_resnet_forward.1} parent=1 // pred_fallthru
      _
    // Predicated region
    $region58: #{simple_resnet_forward.1} parent=1 // pred_check
      _
    $region59: #{simple_resnet_forward.1} parent=1 // pred_check_branch
      %121 = sbr.rel (0) target = $region61
    $region60: #{simple_resnet_forward.1} parent=1 // pred_region
      %123 = dma.done [#allocation13], 16
    $region61: #{simple_resnet_forward.1} parent=1 // pred_fallthru
      _
    %125 = vst [vmem:[#allocation2] sm:$0x3] 0.0
    %126 = vst [vmem:[#allocation2 + $0x8] sm:$0x3] 0.0
    %127 = vst [vmem:[#allocation2 + $0x20] sm:$0x3] 0.0
    %128 = vst [vmem:[#allocation2 + $0x28] sm:$0x3] 0.0
    %129 = vst [vmem:[#allocation2 + $0x10] sm:$0xc] 0.0
    %130 = vst [vmem:[#allocation2 + $0x18] sm:$0xc] 0.0
    %131 = vst [vmem:[#allocation2 + $0x30] sm:$0xc] 0.0
    %132 = vst [vmem:[#allocation2 + $0x38] sm:$0xc] 0.0
    %v133 = vld [vmem:[%s0] sm:$0xff]
    %v134 = vld [vmem:[%s0 + $0x8] sm:$0xff]
    %v135 = vld [vmem:[%s0 + $0x10] sm:$0xff]
    %v136 = vld [vmem:[%s0 + $0x18] sm:$0xff]
    %v141 = vrot.slane %v133, 6
    %v142 = vrot.slane %v134, 6
    %v143 = vrot.slane %v135, 6
    %v144 = vrot.slane %v136, 6
    %149 = vst [vmem:[#allocation2] sm:$0xfc] %v141
    %150 = vst [vmem:[#allocation2 + $0x8] sm:$0xfc] %v142
    %151 = vst [vmem:[#allocation2 + $0x10] sm:$0x3] %v141
    %152 = vst [vmem:[#allocation2 + $0x18] sm:$0x3] %v142
    %153 = vst [vmem:[#allocation2 + $0x20] sm:$0xfc] %v143
    %154 = vst [vmem:[#allocation2 + $0x28] sm:$0xfc] %v144
    %155 = vst [vmem:[#allocation2 + $0x30] sm:$0x3] %v143
    %156 = vst [vmem:[#allocation2 + $0x38] sm:$0x3] %v144
    %v157 = vld [vmem:[#allocation2] sm:$0xff]
    %v158 = vld [vmem:[#allocation2 + $0x8] sm:$0xff]
    %v159 = vld [vmem:[#allocation2 + $0x20] sm:$0xff]
    %v160 = vld [vmem:[#allocation2 + $0x28] sm:$0xff]
    %v161 = vpack.c.bf16 %v159, %v157
    %v162 = vpack.c.bf16 %v160, %v158
    %v163 = vld [vmem:[#allocation4] sm:$0xff]
    %v164 = vld [vmem:[#allocation4 + $0x8] sm:$0xff]
    %v165 = vld [vmem:[#allocation4 + $0x10] sm:$0xff]
    %v166 = vld [vmem:[#allocation4 + $0x18] sm:$0xff]
    %v167 = vld [vmem:[#allocation4 + $0x20] sm:$0xff]
    %v168 = vld [vmem:[#allocation4 + $0x28] sm:$0xff]
    %v169 = vld [vmem:[#allocation4 + $0x30] sm:$0xff]
    %v170 = vld [vmem:[#allocation4 + $0x38] sm:$0xff]
    %v171 = vld [vmem:[#allocation4 + $0x40] sm:$0xff]
    %v172 = vld [vmem:[#allocation4 + $0x48] sm:$0xff]
    %v173 = vld [vmem:[#allocation4 + $0x50] sm:$0xff]
    %v174 = vld [vmem:[#allocation4 + $0x58] sm:$0xff]
    %v175 = vld [vmem:[#allocation4 + $0x60] sm:$0xff]
    %v176 = vld [vmem:[#allocation4 + $0x68] sm:$0xff]
    %v177 = vld [vmem:[#allocation4 + $0x70] sm:$0xff]
    %v178 = vld [vmem:[#allocation4 + $0x78] sm:$0xff]
    %v179 = vld [vmem:[#allocation4 + $0x80] sm:$0xff]
    %v180 = vld [vmem:[#allocation4 + $0x88] sm:$0xff]
    %v181 = vld [vmem:[#allocation4 + $0x90] sm:$0xff]
    %v182 = vld [vmem:[#allocation4 + $0x98] sm:$0xff]
    %v183 = vld [vmem:[#allocation4 + $0xa0] sm:$0xff]
    %v184 = vld [vmem:[#allocation4 + $0xa8] sm:$0xff]
    %v185 = vld [vmem:[#allocation4 + $0xb0] sm:$0xff]
    %v186 = vld [vmem:[#allocation4 + $0xb8] sm:$0xff]
    %v187 = vld [vmem:[#allocation4 + $0xc0] sm:$0xff]
    %v188 = vld [vmem:[#allocation4 + $0xc8] sm:$0xff]
    %v189 = vld [vmem:[#allocation4 + $0xd0] sm:$0xff]
    %v190 = vld [vmem:[#allocation4 + $0xd8] sm:$0xff]
    %v191 = vld [vmem:[#allocation4 + $0xe0] sm:$0xff]
    %v192 = vld [vmem:[#allocation4 + $0xe8] sm:$0xff]
    %v193 = vld [vmem:[#allocation4 + $0xf0] sm:$0xff]
    %v194 = vld [vmem:[#allocation4 + $0xf8] sm:$0xff]
    %v195 = vld [vmem:[#allocation2] sm:$0xfe]
    %v196 = vld [vmem:[#allocation2 + $0x8] sm:$0xfe]
    %v197 = vld [vmem:[#allocation2 + $0x10] sm:$0x1]
    %v198 = vld [vmem:[#allocation2 + $0x18] sm:$0x1]
    %v199 = vld [vmem:[#allocation2 + $0x20] sm:$0xfe]
    %v200 = vld [vmem:[#allocation2 + $0x28] sm:$0xfe]
    %v201 = vld [vmem:[#allocation2 + $0x30] sm:$0x1]
    %v202 = vld [vmem:[#allocation2 + $0x38] sm:$0x1]
    %vm211 = vcmask 1046528
    %v212 = vrot.slane %v195, 1
    %v213 = vrot.slane %v197, 1
    %v214 = vsel %vm211, %v212, %v213
    %v215 = vrot.slane %v196, 1
    %v216 = vrot.slane %v198, 1
    %v217 = vsel %vm211, %v215, %v216
    %v218 = vrot.slane %v199, 1
    %v219 = vrot.slane %v201, 1
    %v220 = vsel %vm211, %v218, %v219
    %v221 = vrot.slane %v200, 1
    %v222 = vrot.slane %v202, 1
    %v223 = vsel %vm211, %v221, %v222
    %v228 = vpack.c.bf16 %v220, %v214
    %v229 = vpack.c.bf16 %v223, %v217
    %s230 = scalar_lea.vmem [#allocation4], 256
    %v231 = vld [vmem:[%s230] sm:$0xff]
    %v232 = vld [vmem:[%s230 + $0x8] sm:$0xff]
    %v233 = vld [vmem:[%s230 + $0x10] sm:$0xff]
    %v234 = vld [vmem:[%s230 + $0x18] sm:$0xff]
    %v235 = vld [vmem:[%s230 + $0x20] sm:$0xff]
    %v236 = vld [vmem:[%s230 + $0x28] sm:$0xff]
    %v237 = vld [vmem:[%s230 + $0x30] sm:$0xff]
    %v238 = vld [vmem:[%s230 + $0x38] sm:$0xff]
    %v239 = vld [vmem:[%s230 + $0x40] sm:$0xff]
    %v240 = vld [vmem:[%s230 + $0x48] sm:$0xff]
    %v241 = vld [vmem:[%s230 + $0x50] sm:$0xff]
    %v242 = vld [vmem:[%s230 + $0x58] sm:$0xff]
    %v243 = vld [vmem:[%s230 + $0x60] sm:$0xff]
    %v244 = vld [vmem:[%s230 + $0x68] sm:$0xff]
    %v245 = vld [vmem:[%s230 + $0x70] sm:$0xff]
    %v246 = vld [vmem:[%s230 + $0x78] sm:$0xff]
    %v247 = vld [vmem:[%s230 + $0x80] sm:$0xff]
    %v248 = vld [vmem:[%s230 + $0x88] sm:$0xff]
    %v249 = vld [vmem:[%s230 + $0x90] sm:$0xff]
    %v250 = vld [vmem:[%s230 + $0x98] sm:$0xff]
    %v251 = vld [vmem:[%s230 + $0xa0] sm:$0xff]
    %v252 = vld [vmem:[%s230 + $0xa8] sm:$0xff]
    %v253 = vld [vmem:[%s230 + $0xb0] sm:$0xff]
    %v254 = vld [vmem:[%s230 + $0xb8] sm:$0xff]
    %v255 = vld [vmem:[%s230 + $0xc0] sm:$0xff]
    %v256 = vld [vmem:[%s230 + $0xc8] sm:$0xff]
    %v257 = vld [vmem:[%s230 + $0xd0] sm:$0xff]
    %v258 = vld [vmem:[%s230 + $0xd8] sm:$0xff]
    %v259 = vld [vmem:[%s230 + $0xe0] sm:$0xff]
    %v260 = vld [vmem:[%s230 + $0xe8] sm:$0xff]
    %v261 = vld [vmem:[%s230 + $0xf0] sm:$0xff]
    %v262 = vld [vmem:[%s230 + $0xf8] sm:$0xff]
    %v295 = vunpack.c.l.b16 %v231
    %v296 = vunpack.c.h.b16 %v231
    %v297 = vunpack.c.l.b16 %v232
    %v298 = vunpack.c.h.b16 %v232
    %v299 = vunpack.c.l.b16 %v233
    %v300 = vunpack.c.h.b16 %v233
    %v301 = vunpack.c.l.b16 %v234
    %v302 = vunpack.c.h.b16 %v234
    %v303 = vunpack.c.l.b16 %v235
    %v304 = vunpack.c.h.b16 %v235
    %v305 = vunpack.c.l.b16 %v236
    %v306 = vunpack.c.h.b16 %v236
    %v307 = vunpack.c.l.b16 %v237
    %v308 = vunpack.c.h.b16 %v237
    %v309 = vunpack.c.l.b16 %v238
    %v310 = vunpack.c.h.b16 %v238
    %v311 = vunpack.c.l.b16 %v239
    %v312 = vunpack.c.h.b16 %v239
    %v313 = vunpack.c.l.b16 %v240
    %v314 = vunpack.c.h.b16 %v240
    %v315 = vunpack.c.l.b16 %v241
    %v316 = vunpack.c.h.b16 %v241
    %v317 = vunpack.c.l.b16 %v242
    %v318 = vunpack.c.h.b16 %v242
    %v319 = vunpack.c.l.b16 %v243
    %v320 = vunpack.c.h.b16 %v243
    %v321 = vunpack.c.l.b16 %v244
    %v322 = vunpack.c.h.b16 %v244
    %v323 = vunpack.c.l.b16 %v245
    %v324 = vunpack.c.h.b16 %v245
    %v325 = vunpack.c.l.b16 %v246
    %v326 = vunpack.c.h.b16 %v246
    %v327 = vunpack.c.l.b16 %v247
    %v328 = vunpack.c.h.b16 %v247
    %v329 = vunpack.c.l.b16 %v248
    %v330 = vunpack.c.h.b16 %v248
    %v331 = vunpack.c.l.b16 %v249
    %v332 = vunpack.c.h.b16 %v249
    %v333 = vunpack.c.l.b16 %v250
    %v334 = vunpack.c.h.b16 %v250
    %v335 = vunpack.c.l.b16 %v251
    %v336 = vunpack.c.h.b16 %v251
    %v337 = vunpack.c.l.b16 %v252
    %v338 = vunpack.c.h.b16 %v252
    %v339 = vunpack.c.l.b16 %v253
    %v340 = vunpack.c.h.b16 %v253
    %v341 = vunpack.c.l.b16 %v254
    %v342 = vunpack.c.h.b16 %v254
    %v343 = vunpack.c.l.b16 %v255
    %v344 = vunpack.c.h.b16 %v255
    %v345 = vunpack.c.l.b16 %v256
    %v346 = vunpack.c.h.b16 %v256
    %v347 = vunpack.c.l.b16 %v257
    %v348 = vunpack.c.h.b16 %v257
    %v349 = vunpack.c.l.b16 %v258
    %v350 = vunpack.c.h.b16 %v258
    %v351 = vunpack.c.l.b16 %v259
    %v352 = vunpack.c.h.b16 %v259
    %v353 = vunpack.c.l.b16 %v260
    %v354 = vunpack.c.h.b16 %v260
    %v355 = vunpack.c.l.b16 %v261
    %v356 = vunpack.c.h.b16 %v261
    %v357 = vunpack.c.l.b16 %v262
    %v358 = vunpack.c.h.b16 %v262
    %v359 = vpack.c.b16 %v297, %v295
    %v360 = vpack.c.b16 %v298, %v296
    %v361 = vpack.c.b16 %v301, %v299
    %v362 = vpack.c.b16 %v302, %v300
    %v363 = vpack.c.b16 %v305, %v303
    %v364 = vpack.c.b16 %v306, %v304
    %v365 = vpack.c.b16 %v309, %v307
    %v366 = vpack.c.b16 %v310, %v308
    %v367 = vpack.c.b16 %v313, %v311
    %v368 = vpack.c.b16 %v314, %v312
    %v369 = vpack.c.b16 %v317, %v315
    %v370 = vpack.c.b16 %v318, %v316
    %v371 = vpack.c.b16 %v321, %v319
    %v372 = vpack.c.b16 %v322, %v320
    %v373 = vpack.c.b16 %v325, %v323
    %v374 = vpack.c.b16 %v326, %v324
    %v375 = vpack.c.b16 %v329, %v327
    %v376 = vpack.c.b16 %v330, %v328
    %v377 = vpack.c.b16 %v333, %v331
    %v378 = vpack.c.b16 %v334, %v332
    %v379 = vpack.c.b16 %v337, %v335
    %v380 = vpack.c.b16 %v338, %v336
    %v381 = vpack.c.b16 %v341, %v339
    %v382 = vpack.c.b16 %v342, %v340
    %v383 = vpack.c.b16 %v345, %v343
    %v384 = vpack.c.b16 %v346, %v344
    %v385 = vpack.c.b16 %v349, %v347
    %v386 = vpack.c.b16 %v350, %v348
    %v387 = vpack.c.b16 %v353, %v351
    %v388 = vpack.c.b16 %v354, %v352
    %v389 = vpack.c.b16 %v357, %v355
    %v390 = vpack.c.b16 %v358, %v356
    %423 = vmatpush.bf16.msra.mxu0 %v373
    %424 = vmatpush.bf16.msra.mxu0 %v371
    %425 = vmatpush.bf16.msra.mxu0 %v369
    %426 = vmatpush.bf16.msra.mxu0 %v367
    %427 = vmatpush.bf16.msra.mxu0 %v365
    %428 = vmatpush.bf16.msra.mxu0 %v363
    %429 = vmatpush.bf16.msra.mxu0 %v361
    %430 = vmatpush.bf16.msra.mxu0 %v359
    %431 = vmatmul.bf16.gmra.mxu0 %v228
    %v432 = vpop.f32.mrf.mxu0
    %v433 = vadd.f32 0.0, %v432
    %v434 = vpop.f32.mrf.mxu0
    %v435 = vadd.f32 0.0, %v434
    %436 = vdwg.mxu0
    %437 = vmatpush.bf16.msra.mxu0 %v389
    %438 = vmatpush.bf16.msra.mxu0 %v387
    %439 = vmatpush.bf16.msra.mxu0 %v385
    %440 = vmatpush.bf16.msra.mxu0 %v383
    %441 = vmatpush.bf16.msra.mxu0 %v381
    %442 = vmatpush.bf16.msra.mxu0 %v379
    %443 = vmatpush.bf16.msra.mxu0 %v377
    %444 = vmatpush.bf16.msra.mxu0 %v375
    %445 = vmatmul.bf16.gmra.mxu0 %v229
    %v446 = vpop.f32.mrf.mxu0
    %v447 = vadd.f32 %v433, %v446
    %v448 = vpop.f32.mrf.mxu0
    %v449 = vadd.f32 %v435, %v448
    %450 = vdwg.mxu0
    %451 = vmatpush.bf16.msra.mxu0 %v374
    %452 = vmatpush.bf16.msra.mxu0 %v372
    %453 = vmatpush.bf16.msra.mxu0 %v370
    %454 = vmatpush.bf16.msra.mxu0 %v368
    %455 = vmatpush.bf16.msra.mxu0 %v366
    %456 = vmatpush.bf16.msra.mxu0 %v364
    %457 = vmatpush.bf16.msra.mxu0 %v362
    %458 = vmatpush.bf16.msra.mxu0 %v360
    %459 = vmatmul.bf16.gmra.mxu0 %v228
    %v460 = vpop.f32.mrf.mxu0
    %v461 = vadd.f32 0.0, %v460
    %v462 = vpop.f32.mrf.mxu0
    %v463 = vadd.f32 0.0, %v462
    %464 = vdwg.mxu0
    %465 = vmatpush.bf16.msra.mxu0 %v390
    %466 = vmatpush.bf16.msra.mxu0 %v388
    %467 = vmatpush.bf16.msra.mxu0 %v386
    %468 = vmatpush.bf16.msra.mxu0 %v384
    %469 = vmatpush.bf16.msra.mxu0 %v382
    %470 = vmatpush.bf16.msra.mxu0 %v380
    %471 = vmatpush.bf16.msra.mxu0 %v378
    %472 = vmatpush.bf16.msra.mxu0 %v376
    %473 = vmatmul.bf16.gmra.mxu0 %v229
    %v474 = vpop.f32.mrf.mxu0
    %v475 = vadd.f32 %v461, %v474
    %v476 = vpop.f32.mrf.mxu0
    %v477 = vadd.f32 %v463, %v476
    %478 = vdwg.mxu0
    %v511 = vunpack.c.l.b16 %v163
    %v512 = vunpack.c.h.b16 %v163
    %v513 = vunpack.c.l.b16 %v164
    %v514 = vunpack.c.h.b16 %v164
    %v515 = vunpack.c.l.b16 %v165
    %v516 = vunpack.c.h.b16 %v165
    %v517 = vunpack.c.l.b16 %v166
    %v518 = vunpack.c.h.b16 %v166
    %v519 = vunpack.c.l.b16 %v167
    %v520 = vunpack.c.h.b16 %v167
    %v521 = vunpack.c.l.b16 %v168
    %v522 = vunpack.c.h.b16 %v168
    %v523 = vunpack.c.l.b16 %v169
    %v524 = vunpack.c.h.b16 %v169
    %v525 = vunpack.c.l.b16 %v170
    %v526 = vunpack.c.h.b16 %v170
    %v527 = vunpack.c.l.b16 %v171
    %v528 = vunpack.c.h.b16 %v171
    %v529 = vunpack.c.l.b16 %v172
    %v530 = vunpack.c.h.b16 %v172
    %v531 = vunpack.c.l.b16 %v173
    %v532 = vunpack.c.h.b16 %v173
    %v533 = vunpack.c.l.b16 %v174
    %v534 = vunpack.c.h.b16 %v174
    %v535 = vunpack.c.l.b16 %v175
    %v536 = vunpack.c.h.b16 %v175
    %v537 = vunpack.c.l.b16 %v176
    %v538 = vunpack.c.h.b16 %v176
    %v539 = vunpack.c.l.b16 %v177
    %v540 = vunpack.c.h.b16 %v177
    %v541 = vunpack.c.l.b16 %v178
    %v542 = vunpack.c.h.b16 %v178
    %v543 = vunpack.c.l.b16 %v179
    %v544 = vunpack.c.h.b16 %v179
    %v545 = vunpack.c.l.b16 %v180
    %v546 = vunpack.c.h.b16 %v180
    %v547 = vunpack.c.l.b16 %v181
    %v548 = vunpack.c.h.b16 %v181
    %v549 = vunpack.c.l.b16 %v182
    %v550 = vunpack.c.h.b16 %v182
    %v551 = vunpack.c.l.b16 %v183
    %v552 = vunpack.c.h.b16 %v183
    %v553 = vunpack.c.l.b16 %v184
    %v554 = vunpack.c.h.b16 %v184
    %v555 = vunpack.c.l.b16 %v185
    %v556 = vunpack.c.h.b16 %v185
    %v557 = vunpack.c.l.b16 %v186
    %v558 = vunpack.c.h.b16 %v186
    %v559 = vunpack.c.l.b16 %v187
    %v560 = vunpack.c.h.b16 %v187
    %v561 = vunpack.c.l.b16 %v188
    %v562 = vunpack.c.h.b16 %v188
    %v563 = vunpack.c.l.b16 %v189
    %v564 = vunpack.c.h.b16 %v189
    %v565 = vunpack.c.l.b16 %v190
    %v566 = vunpack.c.h.b16 %v190
    %v567 = vunpack.c.l.b16 %v191
    %v568 = vunpack.c.h.b16 %v191
    %v569 = vunpack.c.l.b16 %v192
    %v570 = vunpack.c.h.b16 %v192
    %v571 = vunpack.c.l.b16 %v193
    %v572 = vunpack.c.h.b16 %v193
    %v573 = vunpack.c.l.b16 %v194
    %v574 = vunpack.c.h.b16 %v194
    %v575 = vpack.c.b16 %v513, %v511
    %v576 = vpack.c.b16 %v514, %v512
    %v577 = vpack.c.b16 %v517, %v515
    %v578 = vpack.c.b16 %v518, %v516
    %v579 = vpack.c.b16 %v521, %v519
    %v580 = vpack.c.b16 %v522, %v520
    %v581 = vpack.c.b16 %v525, %v523
    %v582 = vpack.c.b16 %v526, %v524
    %v583 = vpack.c.b16 %v529, %v527
    %v584 = vpack.c.b16 %v530, %v528
    %v585 = vpack.c.b16 %v533, %v531
    %v586 = vpack.c.b16 %v534, %v532
    %v587 = vpack.c.b16 %v537, %v535
    %v588 = vpack.c.b16 %v538, %v536
    %v589 = vpack.c.b16 %v541, %v539
    %v590 = vpack.c.b16 %v542, %v540
    %v591 = vpack.c.b16 %v545, %v543
    %v592 = vpack.c.b16 %v546, %v544
    %v593 = vpack.c.b16 %v549, %v547
    %v594 = vpack.c.b16 %v550, %v548
    %v595 = vpack.c.b16 %v553, %v551
    %v596 = vpack.c.b16 %v554, %v552
    %v597 = vpack.c.b16 %v557, %v555
    %v598 = vpack.c.b16 %v558, %v556
    %v599 = vpack.c.b16 %v561, %v559
    %v600 = vpack.c.b16 %v562, %v560
    %v601 = vpack.c.b16 %v565, %v563
    %v602 = vpack.c.b16 %v566, %v564
    %v603 = vpack.c.b16 %v569, %v567
    %v604 = vpack.c.b16 %v570, %v568
    %v605 = vpack.c.b16 %v573, %v571
    %v606 = vpack.c.b16 %v574, %v572
    %639 = vmatpush.bf16.msra.mxu0 %v589
    %640 = vmatpush.bf16.msra.mxu0 %v587
    %641 = vmatpush.bf16.msra.mxu0 %v585
    %642 = vmatpush.bf16.msra.mxu0 %v583
    %643 = vmatpush.bf16.msra.mxu0 %v581
    %644 = vmatpush.bf16.msra.mxu0 %v579
    %645 = vmatpush.bf16.msra.mxu0 %v577
    %646 = vmatpush.bf16.msra.mxu0 %v575
    %647 = vmatmul.bf16.gmra.mxu0 %v161
    %v648 = vpop.f32.mrf.mxu0
    %v649 = vadd.f32 %v447, %v648
    %v650 = vpop.f32.mrf.mxu0
    %v651 = vadd.f32 %v449, %v650
    %652 = vdwg.mxu0
    %653 = vmatpush.bf16.msra.mxu0 %v605
    %654 = vmatpush.bf16.msra.mxu0 %v603
    %655 = vmatpush.bf16.msra.mxu0 %v601
    %656 = vmatpush.bf16.msra.mxu0 %v599
    %657 = vmatpush.bf16.msra.mxu0 %v597
    %658 = vmatpush.bf16.msra.mxu0 %v595
    %659 = vmatpush.bf16.msra.mxu0 %v593
    %660 = vmatpush.bf16.msra.mxu0 %v591
    %661 = vmatmul.bf16.gmra.mxu0 %v162
    %v662 = vpop.f32.mrf.mxu0
    %v663 = vadd.f32 %v649, %v662
    %v664 = vpop.f32.mrf.mxu0
    %v665 = vadd.f32 %v651, %v664
    %666 = vdwg.mxu0
    %667 = vmatpush.bf16.msra.mxu0 %v590
    %668 = vmatpush.bf16.msra.mxu0 %v588
    %669 = vmatpush.bf16.msra.mxu0 %v586
    %670 = vmatpush.bf16.msra.mxu0 %v584
    %671 = vmatpush.bf16.msra.mxu0 %v582
    %672 = vmatpush.bf16.msra.mxu0 %v580
    %673 = vmatpush.bf16.msra.mxu0 %v578
    %674 = vmatpush.bf16.msra.mxu0 %v576
    %675 = vmatmul.bf16.gmra.mxu0 %v161
    %v676 = vpop.f32.mrf.mxu0
    %v677 = vadd.f32 %v475, %v676
    %v678 = vpop.f32.mrf.mxu0
    %v679 = vadd.f32 %v477, %v678
    %680 = vdwg.mxu0
    %681 = vmatpush.bf16.msra.mxu0 %v606
    %682 = vmatpush.bf16.msra.mxu0 %v604
    %683 = vmatpush.bf16.msra.mxu0 %v602
    %684 = vmatpush.bf16.msra.mxu0 %v600
    %685 = vmatpush.bf16.msra.mxu0 %v598
    %686 = vmatpush.bf16.msra.mxu0 %v596
    %687 = vmatpush.bf16.msra.mxu0 %v594
    %688 = vmatpush.bf16.msra.mxu0 %v592
    %689 = vmatmul.bf16.gmra.mxu0 %v162
    %v690 = vpop.f32.mrf.mxu0
    %v691 = vadd.f32 %v677, %v690
    %v692 = vpop.f32.mrf.mxu0
    %v693 = vadd.f32 %v679, %v692
    %694 = vdwg.mxu0
    %v695 = vld [vmem:[#allocation2] sm:$0xfc]
    %v696 = vld [vmem:[#allocation2 + $0x8] sm:$0xfc]
    %v697 = vld [vmem:[#allocation2 + $0x10] sm:$0x3]
    %v698 = vld [vmem:[#allocation2 + $0x18] sm:$0x3]
    %v699 = vld [vmem:[#allocation2 + $0x20] sm:$0xfc]
    %v700 = vld [vmem:[#allocation2 + $0x28] sm:$0xfc]
    %v701 = vld [vmem:[#allocation2 + $0x30] sm:$0x3]
    %v702 = vld [vmem:[#allocation2 + $0x38] sm:$0x3]
    %vm711 = vcmask 1045504
    %v712 = vrot.slane %v695, 2
    %v713 = vrot.slane %v697, 2
    %v714 = vsel %vm711, %v712, %v713
    %v715 = vrot.slane %v696, 2
    %v716 = vrot.slane %v698, 2
    %v717 = vsel %vm711, %v715, %v716
    %v718 = vrot.slane %v699, 2
    %v719 = vrot.slane %v701, 2
    %v720 = vsel %vm711, %v718, %v719
    %v721 = vrot.slane %v700, 2
    %v722 = vrot.slane %v702, 2
    %v723 = vsel %vm711, %v721, %v722
    %v728 = vpack.c.bf16 %v720, %v714
    %v729 = vpack.c.bf16 %v723, %v717
    %s730 = scalar_lea.vmem [#allocation4], 512
    %v731 = vld [vmem:[%s730] sm:$0xff]
    %v732 = vld [vmem:[%s730 + $0x8] sm:$0xff]
    %v733 = vld [vmem:[%s730 + $0x10] sm:$0xff]
    %v734 = vld [vmem:[%s730 + $0x18] sm:$0xff]
    %v735 = vld [vmem:[%s730 + $0x20] sm:$0xff]
    %v736 = vld [vmem:[%s730 + $0x28] sm:$0xff]
    %v737 = vld [vmem:[%s730 + $0x30] sm:$0xff]
    %v738 = vld [vmem:[%s730 + $0x38] sm:$0xff]
    %v739 = vld [vmem:[%s730 + $0x40] sm:$0xff]
    %v740 = vld [vmem:[%s730 + $0x48] sm:$0xff]
    %v741 = vld [vmem:[%s730 + $0x50] sm:$0xff]
    %v742 = vld [vmem:[%s730 + $0x58] sm:$0xff]
    %v743 = vld [vmem:[%s730 + $0x60] sm:$0xff]
    %v744 = vld [vmem:[%s730 + $0x68] sm:$0xff]
    %v745 = vld [vmem:[%s730 + $0x70] sm:$0xff]
    %v746 = vld [vmem:[%s730 + $0x78] sm:$0xff]
    %v747 = vld [vmem:[%s730 + $0x80] sm:$0xff]
    %v748 = vld [vmem:[%s730 + $0x88] sm:$0xff]
    %v749 = vld [vmem:[%s730 + $0x90] sm:$0xff]
    %v750 = vld [vmem:[%s730 + $0x98] sm:$0xff]
    %v751 = vld [vmem:[%s730 + $0xa0] sm:$0xff]
    %v752 = vld [vmem:[%s730 + $0xa8] sm:$0xff]
    %v753 = vld [vmem:[%s730 + $0xb0] sm:$0xff]
    %v754 = vld [vmem:[%s730 + $0xb8] sm:$0xff]
    %v755 = vld [vmem:[%s730 + $0xc0] sm:$0xff]
    %v756 = vld [vmem:[%s730 + $0xc8] sm:$0xff]
    %v757 = vld [vmem:[%s730 + $0xd0] sm:$0xff]
    %v758 = vld [vmem:[%s730 + $0xd8] sm:$0xff]
    %v759 = vld [vmem:[%s730 + $0xe0] sm:$0xff]
    %v760 = vld [vmem:[%s730 + $0xe8] sm:$0xff]
    %v761 = vld [vmem:[%s730 + $0xf0] sm:$0xff]
    %v762 = vld [vmem:[%s730 + $0xf8] sm:$0xff]
    %v795 = vunpack.c.l.b16 %v731
    %v796 = vunpack.c.h.b16 %v731
    %v797 = vunpack.c.l.b16 %v732
    %v798 = vunpack.c.h.b16 %v732
    %v799 = vunpack.c.l.b16 %v733
    %v800 = vunpack.c.h.b16 %v733
    %v801 = vunpack.c.l.b16 %v734
    %v802 = vunpack.c.h.b16 %v734
    %v803 = vunpack.c.l.b16 %v735
    %v804 = vunpack.c.h.b16 %v735
    %v805 = vunpack.c.l.b16 %v736
    %v806 = vunpack.c.h.b16 %v736
    %v807 = vunpack.c.l.b16 %v737
    %v808 = vunpack.c.h.b16 %v737
    %v809 = vunpack.c.l.b16 %v738
    %v810 = vunpack.c.h.b16 %v738
    %v811 = vunpack.c.l.b16 %v739
    %v812 = vunpack.c.h.b16 %v739
    %v813 = vunpack.c.l.b16 %v740
    %v814 = vunpack.c.h.b16 %v740
    %v815 = vunpack.c.l.b16 %v741
    %v816 = vunpack.c.h.b16 %v741
    %v817 = vunpack.c.l.b16 %v742
    %v818 = vunpack.c.h.b16 %v742
    %v819 = vunpack.c.l.b16 %v743
    %v820 = vunpack.c.h.b16 %v743
    %v821 = vunpack.c.l.b16 %v744
    %v822 = vunpack.c.h.b16 %v744
    %v823 = vunpack.c.l.b16 %v745
    %v824 = vunpack.c.h.b16 %v745
    %v825 = vunpack.c.l.b16 %v746
    %v826 = vunpack.c.h.b16 %v746
    %v827 = vunpack.c.l.b16 %v747
    %v828 = vunpack.c.h.b16 %v747
    %v829 = vunpack.c.l.b16 %v748
    %v830 = vunpack.c.h.b16 %v748
    %v831 = vunpack.c.l.b16 %v749
    %v832 = vunpack.c.h.b16 %v749
    %v833 = vunpack.c.l.b16 %v750
    %v834 = vunpack.c.h.b16 %v750
    %v835 = vunpack.c.l.b16 %v751
    %v836 = vunpack.c.h.b16 %v751
    %v837 = vunpack.c.l.b16 %v752
    %v838 = vunpack.c.h.b16 %v752
    %v839 = vunpack.c.l.b16 %v753
    %v840 = vunpack.c.h.b16 %v753
    %v841 = vunpack.c.l.b16 %v754
    %v842 = vunpack.c.h.b16 %v754
    %v843 = vunpack.c.l.b16 %v755
    %v844 = vunpack.c.h.b16 %v755
    %v845 = vunpack.c.l.b16 %v756
    %v846 = vunpack.c.h.b16 %v756
    %v847 = vunpack.c.l.b16 %v757
    %v848 = vunpack.c.h.b16 %v757
    %v849 = vunpack.c.l.b16 %v758
    %v850 = vunpack.c.h.b16 %v758
    %v851 = vunpack.c.l.b16 %v759
    %v852 = vunpack.c.h.b16 %v759
    %v853 = vunpack.c.l.b16 %v760
    %v854 = vunpack.c.h.b16 %v760
    %v855 = vunpack.c.l.b16 %v761
    %v856 = vunpack.c.h.b16 %v761
    %v857 = vunpack.c.l.b16 %v762
    %v858 = vunpack.c.h.b16 %v762
    %v859 = vpack.c.b16 %v797, %v795
    %v860 = vpack.c.b16 %v798, %v796
    %v861 = vpack.c.b16 %v801, %v799
    %v862 = vpack.c.b16 %v802, %v800
    %v863 = vpack.c.b16 %v805, %v803
    %v864 = vpack.c.b16 %v806, %v804
    %v865 = vpack.c.b16 %v809, %v807
    %v866 = vpack.c.b16 %v810, %v808
    %v867 = vpack.c.b16 %v813, %v811
    %v868 = vpack.c.b16 %v814, %v812
    %v869 = vpack.c.b16 %v817, %v815
    %v870 = vpack.c.b16 %v818, %v816
    %v871 = vpack.c.b16 %v821, %v819
    %v872 = vpack.c.b16 %v822, %v820
    %v873 = vpack.c.b16 %v825, %v823
    %v874 = vpack.c.b16 %v826, %v824
    %v875 = vpack.c.b16 %v829, %v827
    %v876 = vpack.c.b16 %v830, %v828
    %v877 = vpack.c.b16 %v833, %v831
    %v878 = vpack.c.b16 %v834, %v832
    %v879 = vpack.c.b16 %v837, %v835
    %v880 = vpack.c.b16 %v838, %v836
    %v881 = vpack.c.b16 %v841, %v839
    %v882 = vpack.c.b16 %v842, %v840
    %v883 = vpack.c.b16 %v845, %v843
    %v884 = vpack.c.b16 %v846, %v844
    %v885 = vpack.c.b16 %v849, %v847
    %v886 = vpack.c.b16 %v850, %v848
    %v887 = vpack.c.b16 %v853, %v851
    %v888 = vpack.c.b16 %v854, %v852
    %v889 = vpack.c.b16 %v857, %v855
    %v890 = vpack.c.b16 %v858, %v856
    %923 = vmatpush.bf16.msra.mxu0 %v873
    %924 = vmatpush.bf16.msra.mxu0 %v871
    %925 = vmatpush.bf16.msra.mxu0 %v869
    %926 = vmatpush.bf16.msra.mxu0 %v867
    %927 = vmatpush.bf16.msra.mxu0 %v865
    %928 = vmatpush.bf16.msra.mxu0 %v863
    %929 = vmatpush.bf16.msra.mxu0 %v861
    %930 = vmatpush.bf16.msra.mxu0 %v859
    %931 = vmatmul.bf16.gmra.mxu0 %v728
    %v932 = vpop.f32.mrf.mxu0
    %v933 = vadd.f32 0.0, %v932
    %v934 = vpop.f32.mrf.mxu0
    %v935 = vadd.f32 0.0, %v934
    %936 = vdwg.mxu0
    %937 = vmatpush.bf16.msra.mxu0 %v889
    %938 = vmatpush.bf16.msra.mxu0 %v887
    %939 = vmatpush.bf16.msra.mxu0 %v885
    %940 = vmatpush.bf16.msra.mxu0 %v883
    %941 = vmatpush.bf16.msra.mxu0 %v881
    %942 = vmatpush.bf16.msra.mxu0 %v879
    %943 = vmatpush.bf16.msra.mxu0 %v877
    %944 = vmatpush.bf16.msra.mxu0 %v875
    %945 = vmatmul.bf16.gmra.mxu0 %v729
    %v946 = vpop.f32.mrf.mxu0
    %v947 = vadd.f32 %v933, %v946
    %v948 = vpop.f32.mrf.mxu0
    %v949 = vadd.f32 %v935, %v948
    %950 = vdwg.mxu0
    %951 = vmatpush.bf16.msra.mxu0 %v874
    %952 = vmatpush.bf16.msra.mxu0 %v872
    %953 = vmatpush.bf16.msra.mxu0 %v870
    %954 = vmatpush.bf16.msra.mxu0 %v868
    %955 = vmatpush.bf16.msra.mxu0 %v866
    %956 = vmatpush.bf16.msra.mxu0 %v864
    %957 = vmatpush.bf16.msra.mxu0 %v862
    %958 = vmatpush.bf16.msra.mxu0 %v860
    %959 = vmatmul.bf16.gmra.mxu0 %v728
    %v960 = vpop.f32.mrf.mxu0
    %v961 = vadd.f32 0.0, %v960
    %v962 = vpop.f32.mrf.mxu0
    %v963 = vadd.f32 0.0, %v962
    %964 = vdwg.mxu0
    %965 = vmatpush.bf16.msra.mxu0 %v890
    %966 = vmatpush.bf16.msra.mxu0 %v888
    %967 = vmatpush.bf16.msra.mxu0 %v886
    %968 = vmatpush.bf16.msra.mxu0 %v884
    %969 = vmatpush.bf16.msra.mxu0 %v882
    %970 = vmatpush.bf16.msra.mxu0 %v880
    %971 = vmatpush.bf16.msra.mxu0 %v878
    %972 = vmatpush.bf16.msra.mxu0 %v876
    %973 = vmatmul.bf16.gmra.mxu0 %v729
    %v974 = vpop.f32.mrf.mxu0
    %v975 = vadd.f32 %v961, %v974
    %v976 = vpop.f32.mrf.mxu0
    %v977 = vadd.f32 %v963, %v976
    %978 = vdwg.mxu0
    %v979 = vadd.f32 %v663, %v947
    %v980 = vadd.f32 %v691, %v975
    %v981 = vadd.f32 %v665, %v949
    %v982 = vadd.f32 %v693, %v977
    %v983 = vld [vmem:[#allocation2] sm:$0xf8]
    %v984 = vld [vmem:[#allocation2 + $0x8] sm:$0xf8]
    %v985 = vld [vmem:[#allocation2 + $0x10] sm:$0x7]
    %v986 = vld [vmem:[#allocation2 + $0x18] sm:$0x7]
    %v987 = vld [vmem:[#allocation2 + $0x20] sm:$0xf8]
    %v988 = vld [vmem:[#allocation2 + $0x28] sm:$0xf8]
    %v989 = vld [vmem:[#allocation2 + $0x30] sm:$0x7]
    %v990 = vld [vmem:[#allocation2 + $0x38] sm:$0x7]
    %vm999 = vcmask 1044480
    %v1000 = vrot.slane %v983, 3
    %v1001 = vrot.slane %v985, 3
    %v1002 = vsel %vm999, %v1000, %v1001
    %v1003 = vrot.slane %v984, 3
    %v1004 = vrot.slane %v986, 3
    %v1005 = vsel %vm999, %v1003, %v1004
    %v1006 = vrot.slane %v987, 3
    %v1007 = vrot.slane %v989, 3
    %v1008 = vsel %vm999, %v1006, %v1007
    %v1009 = vrot.slane %v988, 3
    %v1010 = vrot.slane %v990, 3
    %v1011 = vsel %vm999, %v1009, %v1010
    %v1016 = vpack.c.bf16 %v1008, %v1002
    %v1017 = vpack.c.bf16 %v1011, %v1005
    %s1018 = scalar_lea.vmem [#allocation4], 768
    %v1019 = vld [vmem:[%s1018] sm:$0xff]
    %v1020 = vld [vmem:[%s1018 + $0x8] sm:$0xff]
    %v1021 = vld [vmem:[%s1018 + $0x10] sm:$0xff]
    %v1022 = vld [vmem:[%s1018 + $0x18] sm:$0xff]
    %v1023 = vld [vmem:[%s1018 + $0x20] sm:$0xff]
    %v1024 = vld [vmem:[%s1018 + $0x28] sm:$0xff]
    %v1025 = vld [vmem:[%s1018 + $0x30] sm:$0xff]
    %v1026 = vld [vmem:[%s1018 + $0x38] sm:$0xff]
    %v1027 = vld [vmem:[%s1018 + $0x40] sm:$0xff]
    %v1028 = vld [vmem:[%s1018 + $0x48] sm:$0xff]
    %v1029 = vld [vmem:[%s1018 + $0x50] sm:$0xff]
    %v1030 = vld [vmem:[%s1018 + $0x58] sm:$0xff]
    %v1031 = vld [vmem:[%s1018 + $0x60] sm:$0xff]
    %v1032 = vld [vmem:[%s1018 + $0x68] sm:$0xff]
    %v1033 = vld [vmem:[%s1018 + $0x70] sm:$0xff]
    %v1034 = vld [vmem:[%s1018 + $0x78] sm:$0xff]
    %v1035 = vld [vmem:[%s1018 + $0x80] sm:$0xff]
    %v1036 = vld [vmem:[%s1018 + $0x88] sm:$0xff]
    %v1037 = vld [vmem:[%s1018 + $0x90] sm:$0xff]
    %v1038 = vld [vmem:[%s1018 + $0x98] sm:$0xff]
    %v1039 = vld [vmem:[%s1018 + $0xa0] sm:$0xff]
    %v1040 = vld [vmem:[%s1018 + $0xa8] sm:$0xff]
    %v1041 = vld [vmem:[%s1018 + $0xb0] sm:$0xff]
    %v1042 = vld [vmem:[%s1018 + $0xb8] sm:$0xff]
    %v1043 = vld [vmem:[%s1018 + $0xc0] sm:$0xff]
    %v1044 = vld [vmem:[%s1018 + $0xc8] sm:$0xff]
    %v1045 = vld [vmem:[%s1018 + $0xd0] sm:$0xff]
    %v1046 = vld [vmem:[%s1018 + $0xd8] sm:$0xff]
    %v1047 = vld [vmem:[%s1018 + $0xe0] sm:$0xff]
    %v1048 = vld [vmem:[%s1018 + $0xe8] sm:$0xff]
    %v1049 = vld [vmem:[%s1018 + $0xf0] sm:$0xff]
    %v1050 = vld [vmem:[%s1018 + $0xf8] sm:$0xff]
    %v1083 = vunpack.c.l.b16 %v1019
    %v1084 = vunpack.c.h.b16 %v1019
    %v1085 = vunpack.c.l.b16 %v1020
    %v1086 = vunpack.c.h.b16 %v1020
    %v1087 = vunpack.c.l.b16 %v1021
    %v1088 = vunpack.c.h.b16 %v1021
    %v1089 = vunpack.c.l.b16 %v1022
    %v1090 = vunpack.c.h.b16 %v1022
    %v1091 = vunpack.c.l.b16 %v1023
    %v1092 = vunpack.c.h.b16 %v1023
    %v1093 = vunpack.c.l.b16 %v1024
    %v1094 = vunpack.c.h.b16 %v1024
    %v1095 = vunpack.c.l.b16 %v1025
    %v1096 = vunpack.c.h.b16 %v1025
    %v1097 = vunpack.c.l.b16 %v1026
    %v1098 = vunpack.c.h.b16 %v1026
    %v1099 = vunpack.c.l.b16 %v1027
    %v1100 = vunpack.c.h.b16 %v1027
    %v1101 = vunpack.c.l.b16 %v1028
    %v1102 = vunpack.c.h.b16 %v1028
    %v1103 = vunpack.c.l.b16 %v1029
    %v1104 = vunpack.c.h.b16 %v1029
    %v1105 = vunpack.c.l.b16 %v1030
    %v1106 = vunpack.c.h.b16 %v1030
    %v1107 = vunpack.c.l.b16 %v1031
    %v1108 = vunpack.c.h.b16 %v1031
    %v1109 = vunpack.c.l.b16 %v1032
    %v1110 = vunpack.c.h.b16 %v1032
    %v1111 = vunpack.c.l.b16 %v1033
    %v1112 = vunpack.c.h.b16 %v1033
    %v1113 = vunpack.c.l.b16 %v1034
    %v1114 = vunpack.c.h.b16 %v1034
    %v1115 = vunpack.c.l.b16 %v1035
    %v1116 = vunpack.c.h.b16 %v1035
    %v1117 = vunpack.c.l.b16 %v1036
    %v1118 = vunpack.c.h.b16 %v1036
    %v1119 = vunpack.c.l.b16 %v1037
    %v1120 = vunpack.c.h.b16 %v1037
    %v1121 = vunpack.c.l.b16 %v1038
    %v1122 = vunpack.c.h.b16 %v1038
    %v1123 = vunpack.c.l.b16 %v1039
    %v1124 = vunpack.c.h.b16 %v1039
    %v1125 = vunpack.c.l.b16 %v1040
    %v1126 = vunpack.c.h.b16 %v1040
    %v1127 = vunpack.c.l.b16 %v1041
    %v1128 = vunpack.c.h.b16 %v1041
    %v1129 = vunpack.c.l.b16 %v1042
    %v1130 = vunpack.c.h.b16 %v1042
    %v1131 = vunpack.c.l.b16 %v1043
    %v1132 = vunpack.c.h.b16 %v1043
    %v1133 = vunpack.c.l.b16 %v1044
    %v1134 = vunpack.c.h.b16 %v1044
    %v1135 = vunpack.c.l.b16 %v1045
    %v1136 = vunpack.c.h.b16 %v1045
    %v1137 = vunpack.c.l.b16 %v1046
    %v1138 = vunpack.c.h.b16 %v1046
    %v1139 = vunpack.c.l.b16 %v1047
    %v1140 = vunpack.c.h.b16 %v1047
    %v1141 = vunpack.c.l.b16 %v1048
    %v1142 = vunpack.c.h.b16 %v1048
    %v1143 = vunpack.c.l.b16 %v1049
    %v1144 = vunpack.c.h.b16 %v1049
    %v1145 = vunpack.c.l.b16 %v1050
    %v1146 = vunpack.c.h.b16 %v1050
    %v1147 = vpack.c.b16 %v1085, %v1083
    %v1148 = vpack.c.b16 %v1086, %v1084
    %v1149 = vpack.c.b16 %v1089, %v1087
    %v1150 = vpack.c.b16 %v1090, %v1088
    %v1151 = vpack.c.b16 %v1093, %v1091
    %v1152 = vpack.c.b16 %v1094, %v1092
    %v1153 = vpack.c.b16 %v1097, %v1095
    %v1154 = vpack.c.b16 %v1098, %v1096
    %v1155 = vpack.c.b16 %v1101, %v1099
    %v1156 = vpack.c.b16 %v1102, %v1100
    %v1157 = vpack.c.b16 %v1105, %v1103
    %v1158 = vpack.c.b16 %v1106, %v1104
    %v1159 = vpack.c.b16 %v1109, %v1107
    %v1160 = vpack.c.b16 %v1110, %v1108
    %v1161 = vpack.c.b16 %v1113, %v1111
    %v1162 = vpack.c.b16 %v1114, %v1112
    %v1163 = vpack.c.b16 %v1117, %v1115
    %v1164 = vpack.c.b16 %v1118, %v1116
    %v1165 = vpack.c.b16 %v1121, %v1119
    %v1166 = vpack.c.b16 %v1122, %v1120
    %v1167 = vpack.c.b16 %v1125, %v1123
    %v1168 = vpack.c.b16 %v1126, %v1124
    %v1169 = vpack.c.b16 %v1129, %v1127
    %v1170 = vpack.c.b16 %v1130, %v1128
    %v1171 = vpack.c.b16 %v1133, %v1131
    %v1172 = vpack.c.b16 %v1134, %v1132
    %v1173 = vpack.c.b16 %v1137, %v1135
    %v1174 = vpack.c.b16 %v1138, %v1136
    %v1175 = vpack.c.b16 %v1141, %v1139
    %v1176 = vpack.c.b16 %v1142, %v1140
    %v1177 = vpack.c.b16 %v1145, %v1143
    %v1178 = vpack.c.b16 %v1146, %v1144
    %1211 = vmatpush.bf16.msra.mxu0 %v1161
    %1212 = vmatpush.bf16.msra.mxu0 %v1159
    %1213 = vmatpush.bf16.msra.mxu0 %v1157
    %1214 = vmatpush.bf16.msra.mxu0 %v1155
    %1215 = vmatpush.bf16.msra.mxu0 %v1153
    %1216 = vmatpush.bf16.msra.mxu0 %v1151
    %1217 = vmatpush.bf16.msra.mxu0 %v1149
    %1218 = vmatpush.bf16.msra.mxu0 %v1147
    %1219 = vmatmul.bf16.gmra.mxu0 %v1016
    %v1220 = vpop.f32.mrf.mxu0
    %v1221 = vadd.f32 0.0, %v1220
    %v1222 = vpop.f32.mrf.mxu0
    %v1223 = vadd.f32 0.0, %v1222
    %1224 = vdwg.mxu0
    %1225 = vmatpush.bf16.msra.mxu0 %v1177
    %1226 = vmatpush.bf16.msra.mxu0 %v1175
    %1227 = vmatpush.bf16.msra.mxu0 %v1173
    %1228 = vmatpush.bf16.msra.mxu0 %v1171
    %1229 = vmatpush.bf16.msra.mxu0 %v1169
    %1230 = vmatpush.bf16.msra.mxu0 %v1167
    %1231 = vmatpush.bf16.msra.mxu0 %v1165
    %1232 = vmatpush.bf16.msra.mxu0 %v1163
    %1233 = vmatmul.bf16.gmra.mxu0 %v1017
    %v1234 = vpop.f32.mrf.mxu0
    %v1235 = vadd.f32 %v1221, %v1234
    %v1236 = vpop.f32.mrf.mxu0
    %v1237 = vadd.f32 %v1223, %v1236
    %1238 = vdwg.mxu0
    %1239 = vmatpush.bf16.msra.mxu0 %v1162
    %1240 = vmatpush.bf16.msra.mxu0 %v1160
    %1241 = vmatpush.bf16.msra.mxu0 %v1158
    %1242 = vmatpush.bf16.msra.mxu0 %v1156
    %1243 = vmatpush.bf16.msra.mxu0 %v1154
    %1244 = vmatpush.bf16.msra.mxu0 %v1152
    %1245 = vmatpush.bf16.msra.mxu0 %v1150
    %1246 = vmatpush.bf16.msra.mxu0 %v1148
    %1247 = vmatmul.bf16.gmra.mxu0 %v1016
    %v1248 = vpop.f32.mrf.mxu0
    %v1249 = vadd.f32 0.0, %v1248
    %v1250 = vpop.f32.mrf.mxu0
    %v1251 = vadd.f32 0.0, %v1250
    %1252 = vdwg.mxu0
    %1253 = vmatpush.bf16.msra.mxu0 %v1178
    %1254 = vmatpush.bf16.msra.mxu0 %v1176
    %1255 = vmatpush.bf16.msra.mxu0 %v1174
    %1256 = vmatpush.bf16.msra.mxu0 %v1172
    %1257 = vmatpush.bf16.msra.mxu0 %v1170
    %1258 = vmatpush.bf16.msra.mxu0 %v1168
    %1259 = vmatpush.bf16.msra.mxu0 %v1166
    %1260 = vmatpush.bf16.msra.mxu0 %v1164
    %1261 = vmatmul.bf16.gmra.mxu0 %v1017
    %v1262 = vpop.f32.mrf.mxu0
    %v1263 = vadd.f32 %v1249, %v1262
    %v1264 = vpop.f32.mrf.mxu0
    %v1265 = vadd.f32 %v1251, %v1264
    %1266 = vdwg.mxu0
    %v1267 = vadd.f32 %v979, %v1235
    %v1268 = vadd.f32 %v980, %v1263
    %v1269 = vadd.f32 %v981, %v1237
    %v1270 = vadd.f32 %v982, %v1265
    %v1271 = vld [vmem:[#allocation2] sm:$0xf0]
    %v1272 = vld [vmem:[#allocation2 + $0x8] sm:$0xf0]
    %v1273 = vld [vmem:[#allocation2 + $0x10] sm:$0xf]
    %v1274 = vld [vmem:[#allocation2 + $0x18] sm:$0xf]
    %v1275 = vld [vmem:[#allocation2 + $0x20] sm:$0xf0]
    %v1276 = vld [vmem:[#allocation2 + $0x28] sm:$0xf0]
    %v1277 = vld [vmem:[#allocation2 + $0x30] sm:$0xf]
    %v1278 = vld [vmem:[#allocation2 + $0x38] sm:$0xf]
    %vm1287 = vcmask 1043456
    %v1288 = vrot.slane %v1271, 4
    %v1289 = vrot.slane %v1273, 4
    %v1290 = vsel %vm1287, %v1288, %v1289
    %v1291 = vrot.slane %v1272, 4
    %v1292 = vrot.slane %v1274, 4
    %v1293 = vsel %vm1287, %v1291, %v1292
    %v1294 = vrot.slane %v1275, 4
    %v1295 = vrot.slane %v1277, 4
    %v1296 = vsel %vm1287, %v1294, %v1295
    %v1297 = vrot.slane %v1276, 4
    %v1298 = vrot.slane %v1278, 4
    %v1299 = vsel %vm1287, %v1297, %v1298
    %v1304 = vpack.c.bf16 %v1296, %v1290
    %v1305 = vpack.c.bf16 %v1299, %v1293
    %s1306 = scalar_lea.vmem [#allocation4], 1024
    %v1307 = vld [vmem:[%s1306] sm:$0xff]
    %v1308 = vld [vmem:[%s1306 + $0x8] sm:$0xff]
    %v1309 = vld [vmem:[%s1306 + $0x10] sm:$0xff]
    %v1310 = vld [vmem:[%s1306 + $0x18] sm:$0xff]
    %v1311 = vld [vmem:[%s1306 + $0x20] sm:$0xff]
    %v1312 = vld [vmem:[%s1306 + $0x28] sm:$0xff]
    %v1313 = vld [vmem:[%s1306 + $0x30] sm:$0xff]
    %v1314 = vld [vmem:[%s1306 + $0x38] sm:$0xff]
    %v1315 = vld [vmem:[%s1306 + $0x40] sm:$0xff]
    %v1316 = vld [vmem:[%s1306 + $0x48] sm:$0xff]
    %v1317 = vld [vmem:[%s1306 + $0x50] sm:$0xff]
    %v1318 = vld [vmem:[%s1306 + $0x58] sm:$0xff]
    %v1319 = vld [vmem:[%s1306 + $0x60] sm:$0xff]
    %v1320 = vld [vmem:[%s1306 + $0x68] sm:$0xff]
    %v1321 = vld [vmem:[%s1306 + $0x70] sm:$0xff]
    %v1322 = vld [vmem:[%s1306 + $0x78] sm:$0xff]
    %v1323 = vld [vmem:[%s1306 + $0x80] sm:$0xff]
    %v1324 = vld [vmem:[%s1306 + $0x88] sm:$0xff]
    %v1325 = vld [vmem:[%s1306 + $0x90] sm:$0xff]
    %v1326 = vld [vmem:[%s1306 + $0x98] sm:$0xff]
    %v1327 = vld [vmem:[%s1306 + $0xa0] sm:$0xff]
    %v1328 = vld [vmem:[%s1306 + $0xa8] sm:$0xff]
    %v1329 = vld [vmem:[%s1306 + $0xb0] sm:$0xff]
    %v1330 = vld [vmem:[%s1306 + $0xb8] sm:$0xff]
    %v1331 = vld [vmem:[%s1306 + $0xc0] sm:$0xff]
    %v1332 = vld [vmem:[%s1306 + $0xc8] sm:$0xff]
    %v1333 = vld [vmem:[%s1306 + $0xd0] sm:$0xff]
    %v1334 = vld [vmem:[%s1306 + $0xd8] sm:$0xff]
    %v1335 = vld [vmem:[%s1306 + $0xe0] sm:$0xff]
    %v1336 = vld [vmem:[%s1306 + $0xe8] sm:$0xff]
    %v1337 = vld [vmem:[%s1306 + $0xf0] sm:$0xff]
    %v1338 = vld [vmem:[%s1306 + $0xf8] sm:$0xff]
    %v1371 = vunpack.c.l.b16 %v1307
    %v1372 = vunpack.c.h.b16 %v1307
    %v1373 = vunpack.c.l.b16 %v1308
    %v1374 = vunpack.c.h.b16 %v1308
    %v1375 = vunpack.c.l.b16 %v1309
    %v1376 = vunpack.c.h.b16 %v1309
    %v1377 = vunpack.c.l.b16 %v1310
    %v1378 = vunpack.c.h.b16 %v1310
    %v1379 = vunpack.c.l.b16 %v1311
    %v1380 = vunpack.c.h.b16 %v1311
    %v1381 = vunpack.c.l.b16 %v1312
    %v1382 = vunpack.c.h.b16 %v1312
    %v1383 = vunpack.c.l.b16 %v1313
    %v1384 = vunpack.c.h.b16 %v1313
    %v1385 = vunpack.c.l.b16 %v1314
    %v1386 = vunpack.c.h.b16 %v1314
    %v1387 = vunpack.c.l.b16 %v1315
    %v1388 = vunpack.c.h.b16 %v1315
    %v1389 = vunpack.c.l.b16 %v1316
    %v1390 = vunpack.c.h.b16 %v1316
    %v1391 = vunpack.c.l.b16 %v1317
    %v1392 = vunpack.c.h.b16 %v1317
    %v1393 = vunpack.c.l.b16 %v1318
    %v1394 = vunpack.c.h.b16 %v1318
    %v1395 = vunpack.c.l.b16 %v1319
    %v1396 = vunpack.c.h.b16 %v1319
    %v1397 = vunpack.c.l.b16 %v1320
    %v1398 = vunpack.c.h.b16 %v1320
    %v1399 = vunpack.c.l.b16 %v1321
    %v1400 = vunpack.c.h.b16 %v1321
    %v1401 = vunpack.c.l.b16 %v1322
    %v1402 = vunpack.c.h.b16 %v1322
    %v1403 = vunpack.c.l.b16 %v1323
    %v1404 = vunpack.c.h.b16 %v1323
    %v1405 = vunpack.c.l.b16 %v1324
    %v1406 = vunpack.c.h.b16 %v1324
    %v1407 = vunpack.c.l.b16 %v1325
    %v1408 = vunpack.c.h.b16 %v1325
    %v1409 = vunpack.c.l.b16 %v1326
    %v1410 = vunpack.c.h.b16 %v1326
    %v1411 = vunpack.c.l.b16 %v1327
    %v1412 = vunpack.c.h.b16 %v1327
    %v1413 = vunpack.c.l.b16 %v1328
    %v1414 = vunpack.c.h.b16 %v1328
    %v1415 = vunpack.c.l.b16 %v1329
    %v1416 = vunpack.c.h.b16 %v1329
    %v1417 = vunpack.c.l.b16 %v1330
    %v1418 = vunpack.c.h.b16 %v1330
    %v1419 = vunpack.c.l.b16 %v1331
    %v1420 = vunpack.c.h.b16 %v1331
    %v1421 = vunpack.c.l.b16 %v1332
    %v1422 = vunpack.c.h.b16 %v1332
    %v1423 = vunpack.c.l.b16 %v1333
    %v1424 = vunpack.c.h.b16 %v1333
    %v1425 = vunpack.c.l.b16 %v1334
    %v1426 = vunpack.c.h.b16 %v1334
    %v1427 = vunpack.c.l.b16 %v1335
    %v1428 = vunpack.c.h.b16 %v1335
    %v1429 = vunpack.c.l.b16 %v1336
    %v1430 = vunpack.c.h.b16 %v1336
    %v1431 = vunpack.c.l.b16 %v1337
    %v1432 = vunpack.c.h.b16 %v1337
    %v1433 = vunpack.c.l.b16 %v1338
    %v1434 = vunpack.c.h.b16 %v1338
    %v1435 = vpack.c.b16 %v1373, %v1371
    %v1436 = vpack.c.b16 %v1374, %v1372
    %v1437 = vpack.c.b16 %v1377, %v1375
    %v1438 = vpack.c.b16 %v1378, %v1376
    %v1439 = vpack.c.b16 %v1381, %v1379
    %v1440 = vpack.c.b16 %v1382, %v1380
    %v1441 = vpack.c.b16 %v1385, %v1383
    %v1442 = vpack.c.b16 %v1386, %v1384
    %v1443 = vpack.c.b16 %v1389, %v1387
    %v1444 = vpack.c.b16 %v1390, %v1388
    %v1445 = vpack.c.b16 %v1393, %v1391
    %v1446 = vpack.c.b16 %v1394, %v1392
    %v1447 = vpack.c.b16 %v1397, %v1395
    %v1448 = vpack.c.b16 %v1398, %v1396
    %v1449 = vpack.c.b16 %v1401, %v1399
    %v1450 = vpack.c.b16 %v1402, %v1400
    %v1451 = vpack.c.b16 %v1405, %v1403
    %v1452 = vpack.c.b16 %v1406, %v1404
    %v1453 = vpack.c.b16 %v1409, %v1407
    %v1454 = vpack.c.b16 %v1410, %v1408
    %v1455 = vpack.c.b16 %v1413, %v1411
    %v1456 = vpack.c.b16 %v1414, %v1412
    %v1457 = vpack.c.b16 %v1417, %v1415
    %v1458 = vpack.c.b16 %v1418, %v1416
    %v1459 = vpack.c.b16 %v1421, %v1419
    %v1460 = vpack.c.b16 %v1422, %v1420
    %v1461 = vpack.c.b16 %v1425, %v1423
    %v1462 = vpack.c.b16 %v1426, %v1424
    %v1463 = vpack.c.b16 %v1429, %v1427
    %v1464 = vpack.c.b16 %v1430, %v1428
    %v1465 = vpack.c.b16 %v1433, %v1431
    %v1466 = vpack.c.b16 %v1434, %v1432
    %1499 = vmatpush.bf16.msra.mxu0 %v1449
    %1500 = vmatpush.bf16.msra.mxu0 %v1447
    %1501 = vmatpush.bf16.msra.mxu0 %v1445
    %1502 = vmatpush.bf16.msra.mxu0 %v1443
    %1503 = vmatpush.bf16.msra.mxu0 %v1441
    %1504 = vmatpush.bf16.msra.mxu0 %v1439
    %1505 = vmatpush.bf16.msra.mxu0 %v1437
    %1506 = vmatpush.bf16.msra.mxu0 %v1435
    %1507 = vmatmul.bf16.gmra.mxu0 %v1304
    %v1508 = vpop.f32.mrf.mxu0
    %v1509 = vadd.f32 0.0, %v1508
    %v1510 = vpop.f32.mrf.mxu0
    %v1511 = vadd.f32 0.0, %v1510
    %1512 = vdwg.mxu0
    %1513 = vmatpush.bf16.msra.mxu0 %v1465
    %1514 = vmatpush.bf16.msra.mxu0 %v1463
    %1515 = vmatpush.bf16.msra.mxu0 %v1461
    %1516 = vmatpush.bf16.msra.mxu0 %v1459
    %1517 = vmatpush.bf16.msra.mxu0 %v1457
    %1518 = vmatpush.bf16.msra.mxu0 %v1455
    %1519 = vmatpush.bf16.msra.mxu0 %v1453
    %1520 = vmatpush.bf16.msra.mxu0 %v1451
    %1521 = vmatmul.bf16.gmra.mxu0 %v1305
    %v1522 = vpop.f32.mrf.mxu0
    %v1523 = vadd.f32 %v1509, %v1522
    %v1524 = vpop.f32.mrf.mxu0
    %v1525 = vadd.f32 %v1511, %v1524
    %1526 = vdwg.mxu0
    %1527 = vmatpush.bf16.msra.mxu0 %v1450
    %1528 = vmatpush.bf16.msra.mxu0 %v1448
    %1529 = vmatpush.bf16.msra.mxu0 %v1446
    %1530 = vmatpush.bf16.msra.mxu0 %v1444
    %1531 = vmatpush.bf16.msra.mxu0 %v1442
    %1532 = vmatpush.bf16.msra.mxu0 %v1440
    %1533 = vmatpush.bf16.msra.mxu0 %v1438
    %1534 = vmatpush.bf16.msra.mxu0 %v1436
    %1535 = vmatmul.bf16.gmra.mxu0 %v1304
    %v1536 = vpop.f32.mrf.mxu0
    %v1537 = vadd.f32 0.0, %v1536
    %v1538 = vpop.f32.mrf.mxu0
    %v1539 = vadd.f32 0.0, %v1538
    %1540 = vdwg.mxu0
    %1541 = vmatpush.bf16.msra.mxu0 %v1466
    %1542 = vmatpush.bf16.msra.mxu0 %v1464
    %1543 = vmatpush.bf16.msra.mxu0 %v1462
    %1544 = vmatpush.bf16.msra.mxu0 %v1460
    %1545 = vmatpush.bf16.msra.mxu0 %v1458
    %1546 = vmatpush.bf16.msra.mxu0 %v1456
    %1547 = vmatpush.bf16.msra.mxu0 %v1454
    %1548 = vmatpush.bf16.msra.mxu0 %v1452
    %1549 = vmatmul.bf16.gmra.mxu0 %v1305
    %v1550 = vpop.f32.mrf.mxu0
    %v1551 = vadd.f32 %v1537, %v1550
    %v1552 = vpop.f32.mrf.mxu0
    %v1553 = vadd.f32 %v1539, %v1552
    %1554 = vdwg.mxu0
    %v1555 = vadd.f32 %v1267, %v1523
    %v1556 = vadd.f32 %v1268, %v1551
    %v1557 = vadd.f32 %v1269, %v1525
    %v1558 = vadd.f32 %v1270, %v1553
    %v1559 = vld [vmem:[#allocation6] sm:$0x3]
    %v1561 = vperm.slane %v1559, 0
    %v1562 = vperm.slane %v1559, 1
    %v1565 = vadd.f32 %v1555, %v1561
    %v1566 = vadd.f32 %v1556, %v1562
    %v1567 = vadd.f32 %v1557, %v1561
    %v1568 = vadd.f32 %v1558, %v1562
    %v1569 = vmul.f32 %v1565, 0.01
    %v1570 = vmul.f32 %v1566, 0.01
    %v1571 = vmul.f32 %v1567, 0.01
    %v1572 = vmul.f32 %v1568, 0.01
    %v1573 = vmax.f32 %v1565, %v1569
    %v1574 = vmax.f32 %v1566, %v1570
    %v1575 = vmax.f32 %v1567, %v1571
    %v1576 = vmax.f32 %v1568, %v1572
    %v1581 = vrot.slane %v1573, 6
    %v1582 = vrot.slane %v1574, 6
    %v1583 = vrot.slane %v1575, 6
    %v1584 = vrot.slane %v1576, 6
    %1589 = vst [vmem:[#allocation2] sm:$0xfc] %v1581
    %1590 = vst [vmem:[#allocation2 + $0x8] sm:$0xfc] %v1582
    %1591 = vst [vmem:[#allocation2 + $0x10] sm:$0x3] %v1581
    %1592 = vst [vmem:[#allocation2 + $0x18] sm:$0x3] %v1582
    %1593 = vst [vmem:[#allocation2 + $0x20] sm:$0xfc] %v1583
    %1594 = vst [vmem:[#allocation2 + $0x28] sm:$0xfc] %v1584
    %1595 = vst [vmem:[#allocation2 + $0x30] sm:$0x3] %v1583
    %1596 = vst [vmem:[#allocation2 + $0x38] sm:$0x3] %v1584
    %v1597 = vld [vmem:[#allocation2] sm:$0xff]
    %v1598 = vld [vmem:[#allocation2 + $0x8] sm:$0xff]
    %v1599 = vld [vmem:[#allocation2 + $0x20] sm:$0xff]
    %v1600 = vld [vmem:[#allocation2 + $0x28] sm:$0xff]
    %v1601 = vpack.c.bf16 %v1599, %v1597
    %v1602 = vpack.c.bf16 %v1600, %v1598
    %s1603 = scalar_lea.vmem [#allocation4], 1280
    %v1604 = vld [vmem:[%s1603] sm:$0xff]
    %v1605 = vld [vmem:[%s1603 + $0x8] sm:$0xff]
    %v1606 = vld [vmem:[%s1603 + $0x10] sm:$0xff]
    %v1607 = vld [vmem:[%s1603 + $0x18] sm:$0xff]
    %v1608 = vld [vmem:[%s1603 + $0x20] sm:$0xff]
    %v1609 = vld [vmem:[%s1603 + $0x28] sm:$0xff]
    %v1610 = vld [vmem:[%s1603 + $0x30] sm:$0xff]
    %v1611 = vld [vmem:[%s1603 + $0x38] sm:$0xff]
    %v1612 = vld [vmem:[%s1603 + $0x40] sm:$0xff]
    %v1613 = vld [vmem:[%s1603 + $0x48] sm:$0xff]
    %v1614 = vld [vmem:[%s1603 + $0x50] sm:$0xff]
    %v1615 = vld [vmem:[%s1603 + $0x58] sm:$0xff]
    %v1616 = vld [vmem:[%s1603 + $0x60] sm:$0xff]
    %v1617 = vld [vmem:[%s1603 + $0x68] sm:$0xff]
    %v1618 = vld [vmem:[%s1603 + $0x70] sm:$0xff]
    %v1619 = vld [vmem:[%s1603 + $0x78] sm:$0xff]
    %v1620 = vld [vmem:[%s1603 + $0x80] sm:$0xff]
    %v1621 = vld [vmem:[%s1603 + $0x88] sm:$0xff]
    %v1622 = vld [vmem:[%s1603 + $0x90] sm:$0xff]
    %v1623 = vld [vmem:[%s1603 + $0x98] sm:$0xff]
    %v1624 = vld [vmem:[%s1603 + $0xa0] sm:$0xff]
    %v1625 = vld [vmem:[%s1603 + $0xa8] sm:$0xff]
    %v1626 = vld [vmem:[%s1603 + $0xb0] sm:$0xff]
    %v1627 = vld [vmem:[%s1603 + $0xb8] sm:$0xff]
    %v1628 = vld [vmem:[%s1603 + $0xc0] sm:$0xff]
    %v1629 = vld [vmem:[%s1603 + $0xc8] sm:$0xff]
    %v1630 = vld [vmem:[%s1603 + $0xd0] sm:$0xff]
    %v1631 = vld [vmem:[%s1603 + $0xd8] sm:$0xff]
    %v1632 = vld [vmem:[%s1603 + $0xe0] sm:$0xff]
    %v1633 = vld [vmem:[%s1603 + $0xe8] sm:$0xff]
    %v1634 = vld [vmem:[%s1603 + $0xf0] sm:$0xff]
    %v1635 = vld [vmem:[%s1603 + $0xf8] sm:$0xff]
    %v1636 = vld [vmem:[#allocation2] sm:$0xfe]
    %v1637 = vld [vmem:[#allocation2 + $0x8] sm:$0xfe]
    %v1638 = vld [vmem:[#allocation2 + $0x10] sm:$0x1]
    %v1639 = vld [vmem:[#allocation2 + $0x18] sm:$0x1]
    %v1640 = vld [vmem:[#allocation2 + $0x20] sm:$0xfe]
    %v1641 = vld [vmem:[#allocation2 + $0x28] sm:$0xfe]
    %v1642 = vld [vmem:[#allocation2 + $0x30] sm:$0x1]
    %v1643 = vld [vmem:[#allocation2 + $0x38] sm:$0x1]
    %v1652 = vrot.slane %v1636, 1
    %v1653 = vrot.slane %v1638, 1
    %v1654 = vsel %vm211, %v1652, %v1653
    %v1655 = vrot.slane %v1637, 1
    %v1656 = vrot.slane %v1639, 1
    %v1657 = vsel %vm211, %v1655, %v1656
    %v1658 = vrot.slane %v1640, 1
    %v1659 = vrot.slane %v1642, 1
    %v1660 = vsel %vm211, %v1658, %v1659
    %v1661 = vrot.slane %v1641, 1
    %v1662 = vrot.slane %v1643, 1
    %v1663 = vsel %vm211, %v1661, %v1662
    %v1668 = vpack.c.bf16 %v1660, %v1654
    %v1669 = vpack.c.bf16 %v1663, %v1657
    %s1670 = scalar_lea.vmem [#allocation4], 1536
    %v1671 = vld [vmem:[%s1670] sm:$0xff]
    %v1672 = vld [vmem:[%s1670 + $0x8] sm:$0xff]
    %v1673 = vld [vmem:[%s1670 + $0x10] sm:$0xff]
    %v1674 = vld [vmem:[%s1670 + $0x18] sm:$0xff]
    %v1675 = vld [vmem:[%s1670 + $0x20] sm:$0xff]
    %v1676 = vld [vmem:[%s1670 + $0x28] sm:$0xff]
    %v1677 = vld [vmem:[%s1670 + $0x30] sm:$0xff]
    %v1678 = vld [vmem:[%s1670 + $0x38] sm:$0xff]
    %v1679 = vld [vmem:[%s1670 + $0x40] sm:$0xff]
    %v1680 = vld [vmem:[%s1670 + $0x48] sm:$0xff]
    %v1681 = vld [vmem:[%s1670 + $0x50] sm:$0xff]
    %v1682 = vld [vmem:[%s1670 + $0x58] sm:$0xff]
    %v1683 = vld [vmem:[%s1670 + $0x60] sm:$0xff]
    %v1684 = vld [vmem:[%s1670 + $0x68] sm:$0xff]
    %v1685 = vld [vmem:[%s1670 + $0x70] sm:$0xff]
    %v1686 = vld [vmem:[%s1670 + $0x78] sm:$0xff]
    %v1687 = vld [vmem:[%s1670 + $0x80] sm:$0xff]
    %v1688 = vld [vmem:[%s1670 + $0x88] sm:$0xff]
    %v1689 = vld [vmem:[%s1670 + $0x90] sm:$0xff]
    %v1690 = vld [vmem:[%s1670 + $0x98] sm:$0xff]
    %v1691 = vld [vmem:[%s1670 + $0xa0] sm:$0xff]
    %v1692 = vld [vmem:[%s1670 + $0xa8] sm:$0xff]
    %v1693 = vld [vmem:[%s1670 + $0xb0] sm:$0xff]
    %v1694 = vld [vmem:[%s1670 + $0xb8] sm:$0xff]
    %v1695 = vld [vmem:[%s1670 + $0xc0] sm:$0xff]
    %v1696 = vld [vmem:[%s1670 + $0xc8] sm:$0xff]
    %v1697 = vld [vmem:[%s1670 + $0xd0] sm:$0xff]
    %v1698 = vld [vmem:[%s1670 + $0xd8] sm:$0xff]
    %v1699 = vld [vmem:[%s1670 + $0xe0] sm:$0xff]
    %v1700 = vld [vmem:[%s1670 + $0xe8] sm:$0xff]
    %v1701 = vld [vmem:[%s1670 + $0xf0] sm:$0xff]
    %v1702 = vld [vmem:[%s1670 + $0xf8] sm:$0xff]
    %v1735 = vunpack.c.l.b16 %v1671
    %v1736 = vunpack.c.h.b16 %v1671
    %v1737 = vunpack.c.l.b16 %v1672
    %v1738 = vunpack.c.h.b16 %v1672
    %v1739 = vunpack.c.l.b16 %v1673
    %v1740 = vunpack.c.h.b16 %v1673
    %v1741 = vunpack.c.l.b16 %v1674
    %v1742 = vunpack.c.h.b16 %v1674
    %v1743 = vunpack.c.l.b16 %v1675
    %v1744 = vunpack.c.h.b16 %v1675
    %v1745 = vunpack.c.l.b16 %v1676
    %v1746 = vunpack.c.h.b16 %v1676
    %v1747 = vunpack.c.l.b16 %v1677
    %v1748 = vunpack.c.h.b16 %v1677
    %v1749 = vunpack.c.l.b16 %v1678
    %v1750 = vunpack.c.h.b16 %v1678
    %v1751 = vunpack.c.l.b16 %v1679
    %v1752 = vunpack.c.h.b16 %v1679
    %v1753 = vunpack.c.l.b16 %v1680
    %v1754 = vunpack.c.h.b16 %v1680
    %v1755 = vunpack.c.l.b16 %v1681
    %v1756 = vunpack.c.h.b16 %v1681
    %v1757 = vunpack.c.l.b16 %v1682
    %v1758 = vunpack.c.h.b16 %v1682
    %v1759 = vunpack.c.l.b16 %v1683
    %v1760 = vunpack.c.h.b16 %v1683
    %v1761 = vunpack.c.l.b16 %v1684
    %v1762 = vunpack.c.h.b16 %v1684
    %v1763 = vunpack.c.l.b16 %v1685
    %v1764 = vunpack.c.h.b16 %v1685
    %v1765 = vunpack.c.l.b16 %v1686
    %v1766 = vunpack.c.h.b16 %v1686
    %v1767 = vunpack.c.l.b16 %v1687
    %v1768 = vunpack.c.h.b16 %v1687
    %v1769 = vunpack.c.l.b16 %v1688
    %v1770 = vunpack.c.h.b16 %v1688
    %v1771 = vunpack.c.l.b16 %v1689
    %v1772 = vunpack.c.h.b16 %v1689
    %v1773 = vunpack.c.l.b16 %v1690
    %v1774 = vunpack.c.h.b16 %v1690
    %v1775 = vunpack.c.l.b16 %v1691
    %v1776 = vunpack.c.h.b16 %v1691
    %v1777 = vunpack.c.l.b16 %v1692
    %v1778 = vunpack.c.h.b16 %v1692
    %v1779 = vunpack.c.l.b16 %v1693
    %v1780 = vunpack.c.h.b16 %v1693
    %v1781 = vunpack.c.l.b16 %v1694
    %v1782 = vunpack.c.h.b16 %v1694
    %v1783 = vunpack.c.l.b16 %v1695
    %v1784 = vunpack.c.h.b16 %v1695
    %v1785 = vunpack.c.l.b16 %v1696
    %v1786 = vunpack.c.h.b16 %v1696
    %v1787 = vunpack.c.l.b16 %v1697
    %v1788 = vunpack.c.h.b16 %v1697
    %v1789 = vunpack.c.l.b16 %v1698
    %v1790 = vunpack.c.h.b16 %v1698
    %v1791 = vunpack.c.l.b16 %v1699
    %v1792 = vunpack.c.h.b16 %v1699
    %v1793 = vunpack.c.l.b16 %v1700
    %v1794 = vunpack.c.h.b16 %v1700
    %v1795 = vunpack.c.l.b16 %v1701
    %v1796 = vunpack.c.h.b16 %v1701
    %v1797 = vunpack.c.l.b16 %v1702
    %v1798 = vunpack.c.h.b16 %v1702
    %v1799 = vpack.c.b16 %v1737, %v1735
    %v1800 = vpack.c.b16 %v1738, %v1736
    %v1801 = vpack.c.b16 %v1741, %v1739
    %v1802 = vpack.c.b16 %v1742, %v1740
    %v1803 = vpack.c.b16 %v1745, %v1743
    %v1804 = vpack.c.b16 %v1746, %v1744
    %v1805 = vpack.c.b16 %v1749, %v1747
    %v1806 = vpack.c.b16 %v1750, %v1748
    %v1807 = vpack.c.b16 %v1753, %v1751
    %v1808 = vpack.c.b16 %v1754, %v1752
    %v1809 = vpack.c.b16 %v1757, %v1755
    %v1810 = vpack.c.b16 %v1758, %v1756
    %v1811 = vpack.c.b16 %v1761, %v1759
    %v1812 = vpack.c.b16 %v1762, %v1760
    %v1813 = vpack.c.b16 %v1765, %v1763
    %v1814 = vpack.c.b16 %v1766, %v1764
    %v1815 = vpack.c.b16 %v1769, %v1767
    %v1816 = vpack.c.b16 %v1770, %v1768
    %v1817 = vpack.c.b16 %v1773, %v1771
    %v1818 = vpack.c.b16 %v1774, %v1772
    %v1819 = vpack.c.b16 %v1777, %v1775
    %v1820 = vpack.c.b16 %v1778, %v1776
    %v1821 = vpack.c.b16 %v1781, %v1779
    %v1822 = vpack.c.b16 %v1782, %v1780
    %v1823 = vpack.c.b16 %v1785, %v1783
    %v1824 = vpack.c.b16 %v1786, %v1784
    %v1825 = vpack.c.b16 %v1789, %v1787
    %v1826 = vpack.c.b16 %v1790, %v1788
    %v1827 = vpack.c.b16 %v1793, %v1791
    %v1828 = vpack.c.b16 %v1794, %v1792
    %v1829 = vpack.c.b16 %v1797, %v1795
    %v1830 = vpack.c.b16 %v1798, %v1796
    %1863 = vmatpush.bf16.msra.mxu0 %v1813
    %1864 = vmatpush.bf16.msra.mxu0 %v1811
    %1865 = vmatpush.bf16.msra.mxu0 %v1809
    %1866 = vmatpush.bf16.msra.mxu0 %v1807
    %1867 = vmatpush.bf16.msra.mxu0 %v1805
    %1868 = vmatpush.bf16.msra.mxu0 %v1803
    %1869 = vmatpush.bf16.msra.mxu0 %v1801
    %1870 = vmatpush.bf16.msra.mxu0 %v1799
    %1871 = vmatmul.bf16.gmra.mxu0 %v1668
    %v1872 = vpop.f32.mrf.mxu0
    %v1873 = vadd.f32 0.0, %v1872
    %v1874 = vpop.f32.mrf.mxu0
    %v1875 = vadd.f32 0.0, %v1874
    %1876 = vdwg.mxu0
    %1877 = vmatpush.bf16.msra.mxu0 %v1829
    %1878 = vmatpush.bf16.msra.mxu0 %v1827
    %1879 = vmatpush.bf16.msra.mxu0 %v1825
    %1880 = vmatpush.bf16.msra.mxu0 %v1823
    %1881 = vmatpush.bf16.msra.mxu0 %v1821
    %1882 = vmatpush.bf16.msra.mxu0 %v1819
    %1883 = vmatpush.bf16.msra.mxu0 %v1817
    %1884 = vmatpush.bf16.msra.mxu0 %v1815
    %1885 = vmatmul.bf16.gmra.mxu0 %v1669
    %v1886 = vpop.f32.mrf.mxu0
    %v1887 = vadd.f32 %v1873, %v1886
    %v1888 = vpop.f32.mrf.mxu0
    %v1889 = vadd.f32 %v1875, %v1888
    %1890 = vdwg.mxu0
    %1891 = vmatpush.bf16.msra.mxu0 %v1814
    %1892 = vmatpush.bf16.msra.mxu0 %v1812
    %1893 = vmatpush.bf16.msra.mxu0 %v1810
    %1894 = vmatpush.bf16.msra.mxu0 %v1808
    %1895 = vmatpush.bf16.msra.mxu0 %v1806
    %1896 = vmatpush.bf16.msra.mxu0 %v1804
    %1897 = vmatpush.bf16.msra.mxu0 %v1802
    %1898 = vmatpush.bf16.msra.mxu0 %v1800
    %1899 = vmatmul.bf16.gmra.mxu0 %v1668
    %v1900 = vpop.f32.mrf.mxu0
    %v1901 = vadd.f32 0.0, %v1900
    %v1902 = vpop.f32.mrf.mxu0
    %v1903 = vadd.f32 0.0, %v1902
    %1904 = vdwg.mxu0
    %1905 = vmatpush.bf16.msra.mxu0 %v1830
    %1906 = vmatpush.bf16.msra.mxu0 %v1828
    %1907 = vmatpush.bf16.msra.mxu0 %v1826
    %1908 = vmatpush.bf16.msra.mxu0 %v1824
    %1909 = vmatpush.bf16.msra.mxu0 %v1822
    %1910 = vmatpush.bf16.msra.mxu0 %v1820
    %1911 = vmatpush.bf16.msra.mxu0 %v1818
    %1912 = vmatpush.bf16.msra.mxu0 %v1816
    %1913 = vmatmul.bf16.gmra.mxu0 %v1669
    %v1914 = vpop.f32.mrf.mxu0
    %v1915 = vadd.f32 %v1901, %v1914
    %v1916 = vpop.f32.mrf.mxu0
    %v1917 = vadd.f32 %v1903, %v1916
    %1918 = vdwg.mxu0
    %v1951 = vunpack.c.l.b16 %v1604
    %v1952 = vunpack.c.h.b16 %v1604
    %v1953 = vunpack.c.l.b16 %v1605
    %v1954 = vunpack.c.h.b16 %v1605
    %v1955 = vunpack.c.l.b16 %v1606
    %v1956 = vunpack.c.h.b16 %v1606
    %v1957 = vunpack.c.l.b16 %v1607
    %v1958 = vunpack.c.h.b16 %v1607
    %v1959 = vunpack.c.l.b16 %v1608
    %v1960 = vunpack.c.h.b16 %v1608
    %v1961 = vunpack.c.l.b16 %v1609
    %v1962 = vunpack.c.h.b16 %v1609
    %v1963 = vunpack.c.l.b16 %v1610
    %v1964 = vunpack.c.h.b16 %v1610
    %v1965 = vunpack.c.l.b16 %v1611
    %v1966 = vunpack.c.h.b16 %v1611
    %v1967 = vunpack.c.l.b16 %v1612
    %v1968 = vunpack.c.h.b16 %v1612
    %v1969 = vunpack.c.l.b16 %v1613
    %v1970 = vunpack.c.h.b16 %v1613
    %v1971 = vunpack.c.l.b16 %v1614
    %v1972 = vunpack.c.h.b16 %v1614
    %v1973 = vunpack.c.l.b16 %v1615
    %v1974 = vunpack.c.h.b16 %v1615
    %v1975 = vunpack.c.l.b16 %v1616
    %v1976 = vunpack.c.h.b16 %v1616
    %v1977 = vunpack.c.l.b16 %v1617
    %v1978 = vunpack.c.h.b16 %v1617
    %v1979 = vunpack.c.l.b16 %v1618
    %v1980 = vunpack.c.h.b16 %v1618
    %v1981 = vunpack.c.l.b16 %v1619
    %v1982 = vunpack.c.h.b16 %v1619
    %v1983 = vunpack.c.l.b16 %v1620
    %v1984 = vunpack.c.h.b16 %v1620
    %v1985 = vunpack.c.l.b16 %v1621
    %v1986 = vunpack.c.h.b16 %v1621
    %v1987 = vunpack.c.l.b16 %v1622
    %v1988 = vunpack.c.h.b16 %v1622
    %v1989 = vunpack.c.l.b16 %v1623
    %v1990 = vunpack.c.h.b16 %v1623
    %v1991 = vunpack.c.l.b16 %v1624
    %v1992 = vunpack.c.h.b16 %v1624
    %v1993 = vunpack.c.l.b16 %v1625
    %v1994 = vunpack.c.h.b16 %v1625
    %v1995 = vunpack.c.l.b16 %v1626
    %v1996 = vunpack.c.h.b16 %v1626
    %v1997 = vunpack.c.l.b16 %v1627
    %v1998 = vunpack.c.h.b16 %v1627
    %v1999 = vunpack.c.l.b16 %v1628
    %v2000 = vunpack.c.h.b16 %v1628
    %v2001 = vunpack.c.l.b16 %v1629
    %v2002 = vunpack.c.h.b16 %v1629
    %v2003 = vunpack.c.l.b16 %v1630
    %v2004 = vunpack.c.h.b16 %v1630
    %v2005 = vunpack.c.l.b16 %v1631
    %v2006 = vunpack.c.h.b16 %v1631
    %v2007 = vunpack.c.l.b16 %v1632
    %v2008 = vunpack.c.h.b16 %v1632
    %v2009 = vunpack.c.l.b16 %v1633
    %v2010 = vunpack.c.h.b16 %v1633
    %v2011 = vunpack.c.l.b16 %v1634
    %v2012 = vunpack.c.h.b16 %v1634
    %v2013 = vunpack.c.l.b16 %v1635
    %v2014 = vunpack.c.h.b16 %v1635
    %v2015 = vpack.c.b16 %v1953, %v1951
    %v2016 = vpack.c.b16 %v1954, %v1952
    %v2017 = vpack.c.b16 %v1957, %v1955
    %v2018 = vpack.c.b16 %v1958, %v1956
    %v2019 = vpack.c.b16 %v1961, %v1959
    %v2020 = vpack.c.b16 %v1962, %v1960
    %v2021 = vpack.c.b16 %v1965, %v1963
    %v2022 = vpack.c.b16 %v1966, %v1964
    %v2023 = vpack.c.b16 %v1969, %v1967
    %v2024 = vpack.c.b16 %v1970, %v1968
    %v2025 = vpack.c.b16 %v1973, %v1971
    %v2026 = vpack.c.b16 %v1974, %v1972
    %v2027 = vpack.c.b16 %v1977, %v1975
    %v2028 = vpack.c.b16 %v1978, %v1976
    %v2029 = vpack.c.b16 %v1981, %v1979
    %v2030 = vpack.c.b16 %v1982, %v1980
    %v2031 = vpack.c.b16 %v1985, %v1983
    %v2032 = vpack.c.b16 %v1986, %v1984
    %v2033 = vpack.c.b16 %v1989, %v1987
    %v2034 = vpack.c.b16 %v1990, %v1988
    %v2035 = vpack.c.b16 %v1993, %v1991
    %v2036 = vpack.c.b16 %v1994, %v1992
    %v2037 = vpack.c.b16 %v1997, %v1995
    %v2038 = vpack.c.b16 %v1998, %v1996
    %v2039 = vpack.c.b16 %v2001, %v1999
    %v2040 = vpack.c.b16 %v2002, %v2000
    %v2041 = vpack.c.b16 %v2005, %v2003
    %v2042 = vpack.c.b16 %v2006, %v2004
    %v2043 = vpack.c.b16 %v2009, %v2007
    %v2044 = vpack.c.b16 %v2010, %v2008
    %v2045 = vpack.c.b16 %v2013, %v2011
    %v2046 = vpack.c.b16 %v2014, %v2012
    %2079 = vmatpush.bf16.msra.mxu0 %v2029
    %2080 = vmatpush.bf16.msra.mxu0 %v2027
    %2081 = vmatpush.bf16.msra.mxu0 %v2025
    %2082 = vmatpush.bf16.msra.mxu0 %v2023
    %2083 = vmatpush.bf16.msra.mxu0 %v2021
    %2084 = vmatpush.bf16.msra.mxu0 %v2019
    %2085 = vmatpush.bf16.msra.mxu0 %v2017
    %2086 = vmatpush.bf16.msra.mxu0 %v2015
    %2087 = vmatmul.bf16.gmra.mxu0 %v1601
    %v2088 = vpop.f32.mrf.mxu0
    %v2089 = vadd.f32 %v1887, %v2088
    %v2090 = vpop.f32.mrf.mxu0
    %v2091 = vadd.f32 %v1889, %v2090
    %2092 = vdwg.mxu0
    %2093 = vmatpush.bf16.msra.mxu0 %v2045
    %2094 = vmatpush.bf16.msra.mxu0 %v2043
    %2095 = vmatpush.bf16.msra.mxu0 %v2041
    %2096 = vmatpush.bf16.msra.mxu0 %v2039
    %2097 = vmatpush.bf16.msra.mxu0 %v2037
    %2098 = vmatpush.bf16.msra.mxu0 %v2035
    %2099 = vmatpush.bf16.msra.mxu0 %v2033
    %2100 = vmatpush.bf16.msra.mxu0 %v2031
    %2101 = vmatmul.bf16.gmra.mxu0 %v1602
    %v2102 = vpop.f32.mrf.mxu0
    %v2103 = vadd.f32 %v2089, %v2102
    %v2104 = vpop.f32.mrf.mxu0
    %v2105 = vadd.f32 %v2091, %v2104
    %2106 = vdwg.mxu0
    %2107 = vmatpush.bf16.msra.mxu0 %v2030
    %2108 = vmatpush.bf16.msra.mxu0 %v2028
    %2109 = vmatpush.bf16.msra.mxu0 %v2026
    %2110 = vmatpush.bf16.msra.mxu0 %v2024
    %2111 = vmatpush.bf16.msra.mxu0 %v2022
    %2112 = vmatpush.bf16.msra.mxu0 %v2020
    %2113 = vmatpush.bf16.msra.mxu0 %v2018
    %2114 = vmatpush.bf16.msra.mxu0 %v2016
    %2115 = vmatmul.bf16.gmra.mxu0 %v1601
    %v2116 = vpop.f32.mrf.mxu0
    %v2117 = vadd.f32 %v1915, %v2116
    %v2118 = vpop.f32.mrf.mxu0
    %v2119 = vadd.f32 %v1917, %v2118
    %2120 = vdwg.mxu0
    %2121 = vmatpush.bf16.msra.mxu0 %v2046
    %2122 = vmatpush.bf16.msra.mxu0 %v2044
    %2123 = vmatpush.bf16.msra.mxu0 %v2042
    %2124 = vmatpush.bf16.msra.mxu0 %v2040
    %2125 = vmatpush.bf16.msra.mxu0 %v2038
    %2126 = vmatpush.bf16.msra.mxu0 %v2036
    %2127 = vmatpush.bf16.msra.mxu0 %v2034
    %2128 = vmatpush.bf16.msra.mxu0 %v2032
    %2129 = vmatmul.bf16.gmra.mxu0 %v1602
    %v2130 = vpop.f32.mrf.mxu0
    %v2131 = vadd.f32 %v2117, %v2130
    %v2132 = vpop.f32.mrf.mxu0
    %v2133 = vadd.f32 %v2119, %v2132
    %2134 = vdwg.mxu0
    %v2135 = vld [vmem:[#allocation2] sm:$0xfc]
    %v2136 = vld [vmem:[#allocation2 + $0x8] sm:$0xfc]
    %v2137 = vld [vmem:[#allocation2 + $0x10] sm:$0x3]
    %v2138 = vld [vmem:[#allocation2 + $0x18] sm:$0x3]
    %v2139 = vld [vmem:[#allocation2 + $0x20] sm:$0xfc]
    %v2140 = vld [vmem:[#allocation2 + $0x28] sm:$0xfc]
    %v2141 = vld [vmem:[#allocation2 + $0x30] sm:$0x3]
    %v2142 = vld [vmem:[#allocation2 + $0x38] sm:$0x3]
    %v2151 = vrot.slane %v2135, 2
    %v2152 = vrot.slane %v2137, 2
    %v2153 = vsel %vm711, %v2151, %v2152
    %v2154 = vrot.slane %v2136, 2
    %v2155 = vrot.slane %v2138, 2
    %v2156 = vsel %vm711, %v2154, %v2155
    %v2157 = vrot.slane %v2139, 2
    %v2158 = vrot.slane %v2141, 2
    %v2159 = vsel %vm711, %v2157, %v2158
    %v2160 = vrot.slane %v2140, 2
    %v2161 = vrot.slane %v2142, 2
    %v2162 = vsel %vm711, %v2160, %v2161
    %v2167 = vpack.c.bf16 %v2159, %v2153
    %v2168 = vpack.c.bf16 %v2162, %v2156
    %s2169 = scalar_lea.vmem [#allocation4], 1792
    %v2170 = vld [vmem:[%s2169] sm:$0xff]
    %v2171 = vld [vmem:[%s2169 + $0x8] sm:$0xff]
    %v2172 = vld [vmem:[%s2169 + $0x10] sm:$0xff]
    %v2173 = vld [vmem:[%s2169 + $0x18] sm:$0xff]
    %v2174 = vld [vmem:[%s2169 + $0x20] sm:$0xff]
    %v2175 = vld [vmem:[%s2169 + $0x28] sm:$0xff]
    %v2176 = vld [vmem:[%s2169 + $0x30] sm:$0xff]
    %v2177 = vld [vmem:[%s2169 + $0x38] sm:$0xff]
    %v2178 = vld [vmem:[%s2169 + $0x40] sm:$0xff]
    %v2179 = vld [vmem:[%s2169 + $0x48] sm:$0xff]
    %v2180 = vld [vmem:[%s2169 + $0x50] sm:$0xff]
    %v2181 = vld [vmem:[%s2169 + $0x58] sm:$0xff]
    %v2182 = vld [vmem:[%s2169 + $0x60] sm:$0xff]
    %v2183 = vld [vmem:[%s2169 + $0x68] sm:$0xff]
    %v2184 = vld [vmem:[%s2169 + $0x70] sm:$0xff]
    %v2185 = vld [vmem:[%s2169 + $0x78] sm:$0xff]
    %v2186 = vld [vmem:[%s2169 + $0x80] sm:$0xff]
    %v2187 = vld [vmem:[%s2169 + $0x88] sm:$0xff]
    %v2188 = vld [vmem:[%s2169 + $0x90] sm:$0xff]
    %v2189 = vld [vmem:[%s2169 + $0x98] sm:$0xff]
    %v2190 = vld [vmem:[%s2169 + $0xa0] sm:$0xff]
    %v2191 = vld [vmem:[%s2169 + $0xa8] sm:$0xff]
    %v2192 = vld [vmem:[%s2169 + $0xb0] sm:$0xff]
    %v2193 = vld [vmem:[%s2169 + $0xb8] sm:$0xff]
    %v2194 = vld [vmem:[%s2169 + $0xc0] sm:$0xff]
    %v2195 = vld [vmem:[%s2169 + $0xc8] sm:$0xff]
    %v2196 = vld [vmem:[%s2169 + $0xd0] sm:$0xff]
    %v2197 = vld [vmem:[%s2169 + $0xd8] sm:$0xff]
    %v2198 = vld [vmem:[%s2169 + $0xe0] sm:$0xff]
    %v2199 = vld [vmem:[%s2169 + $0xe8] sm:$0xff]
    %v2200 = vld [vmem:[%s2169 + $0xf0] sm:$0xff]
    %v2201 = vld [vmem:[%s2169 + $0xf8] sm:$0xff]
    %v2234 = vunpack.c.l.b16 %v2170
    %v2235 = vunpack.c.h.b16 %v2170
    %v2236 = vunpack.c.l.b16 %v2171
    %v2237 = vunpack.c.h.b16 %v2171
    %v2238 = vunpack.c.l.b16 %v2172
    %v2239 = vunpack.c.h.b16 %v2172
    %v2240 = vunpack.c.l.b16 %v2173
    %v2241 = vunpack.c.h.b16 %v2173
    %v2242 = vunpack.c.l.b16 %v2174
    %v2243 = vunpack.c.h.b16 %v2174
    %v2244 = vunpack.c.l.b16 %v2175
    %v2245 = vunpack.c.h.b16 %v2175
    %v2246 = vunpack.c.l.b16 %v2176
    %v2247 = vunpack.c.h.b16 %v2176
    %v2248 = vunpack.c.l.b16 %v2177
    %v2249 = vunpack.c.h.b16 %v2177
    %v2250 = vunpack.c.l.b16 %v2178
    %v2251 = vunpack.c.h.b16 %v2178
    %v2252 = vunpack.c.l.b16 %v2179
    %v2253 = vunpack.c.h.b16 %v2179
    %v2254 = vunpack.c.l.b16 %v2180
    %v2255 = vunpack.c.h.b16 %v2180
    %v2256 = vunpack.c.l.b16 %v2181
    %v2257 = vunpack.c.h.b16 %v2181
    %v2258 = vunpack.c.l.b16 %v2182
    %v2259 = vunpack.c.h.b16 %v2182
    %v2260 = vunpack.c.l.b16 %v2183
    %v2261 = vunpack.c.h.b16 %v2183
    %v2262 = vunpack.c.l.b16 %v2184
    %v2263 = vunpack.c.h.b16 %v2184
    %v2264 = vunpack.c.l.b16 %v2185
    %v2265 = vunpack.c.h.b16 %v2185
    %v2266 = vunpack.c.l.b16 %v2186
    %v2267 = vunpack.c.h.b16 %v2186
    %v2268 = vunpack.c.l.b16 %v2187
    %v2269 = vunpack.c.h.b16 %v2187
    %v2270 = vunpack.c.l.b16 %v2188
    %v2271 = vunpack.c.h.b16 %v2188
    %v2272 = vunpack.c.l.b16 %v2189
    %v2273 = vunpack.c.h.b16 %v2189
    %v2274 = vunpack.c.l.b16 %v2190
    %v2275 = vunpack.c.h.b16 %v2190
    %v2276 = vunpack.c.l.b16 %v2191
    %v2277 = vunpack.c.h.b16 %v2191
    %v2278 = vunpack.c.l.b16 %v2192
    %v2279 = vunpack.c.h.b16 %v2192
    %v2280 = vunpack.c.l.b16 %v2193
    %v2281 = vunpack.c.h.b16 %v2193
    %v2282 = vunpack.c.l.b16 %v2194
    %v2283 = vunpack.c.h.b16 %v2194
    %v2284 = vunpack.c.l.b16 %v2195
    %v2285 = vunpack.c.h.b16 %v2195
    %v2286 = vunpack.c.l.b16 %v2196
    %v2287 = vunpack.c.h.b16 %v2196
    %v2288 = vunpack.c.l.b16 %v2197
    %v2289 = vunpack.c.h.b16 %v2197
    %v2290 = vunpack.c.l.b16 %v2198
    %v2291 = vunpack.c.h.b16 %v2198
    %v2292 = vunpack.c.l.b16 %v2199
    %v2293 = vunpack.c.h.b16 %v2199
    %v2294 = vunpack.c.l.b16 %v2200
    %v2295 = vunpack.c.h.b16 %v2200
    %v2296 = vunpack.c.l.b16 %v2201
    %v2297 = vunpack.c.h.b16 %v2201
    %v2298 = vpack.c.b16 %v2236, %v2234
    %v2299 = vpack.c.b16 %v2237, %v2235
    %v2300 = vpack.c.b16 %v2240, %v2238
    %v2301 = vpack.c.b16 %v2241, %v2239
    %v2302 = vpack.c.b16 %v2244, %v2242
    %v2303 = vpack.c.b16 %v2245, %v2243
    %v2304 = vpack.c.b16 %v2248, %v2246
    %v2305 = vpack.c.b16 %v2249, %v2247
    %v2306 = vpack.c.b16 %v2252, %v2250
    %v2307 = vpack.c.b16 %v2253, %v2251
    %v2308 = vpack.c.b16 %v2256, %v2254
    %v2309 = vpack.c.b16 %v2257, %v2255
    %v2310 = vpack.c.b16 %v2260, %v2258
    %v2311 = vpack.c.b16 %v2261, %v2259
    %v2312 = vpack.c.b16 %v2264, %v2262
    %v2313 = vpack.c.b16 %v2265, %v2263
    %v2314 = vpack.c.b16 %v2268, %v2266
    %v2315 = vpack.c.b16 %v2269, %v2267
    %v2316 = vpack.c.b16 %v2272, %v2270
    %v2317 = vpack.c.b16 %v2273, %v2271
    %v2318 = vpack.c.b16 %v2276, %v2274
    %v2319 = vpack.c.b16 %v2277, %v2275
    %v2320 = vpack.c.b16 %v2280, %v2278
    %v2321 = vpack.c.b16 %v2281, %v2279
    %v2322 = vpack.c.b16 %v2284, %v2282
    %v2323 = vpack.c.b16 %v2285, %v2283
    %v2324 = vpack.c.b16 %v2288, %v2286
    %v2325 = vpack.c.b16 %v2289, %v2287
    %v2326 = vpack.c.b16 %v2292, %v2290
    %v2327 = vpack.c.b16 %v2293, %v2291
    %v2328 = vpack.c.b16 %v2296, %v2294
    %v2329 = vpack.c.b16 %v2297, %v2295
    %2362 = vmatpush.bf16.msra.mxu0 %v2312
    %2363 = vmatpush.bf16.msra.mxu0 %v2310
    %2364 = vmatpush.bf16.msra.mxu0 %v2308
    %2365 = vmatpush.bf16.msra.mxu0 %v2306
    %2366 = vmatpush.bf16.msra.mxu0 %v2304
    %2367 = vmatpush.bf16.msra.mxu0 %v2302
    %2368 = vmatpush.bf16.msra.mxu0 %v2300
    %2369 = vmatpush.bf16.msra.mxu0 %v2298
    %2370 = vmatmul.bf16.gmra.mxu0 %v2167
    %v2371 = vpop.f32.mrf.mxu0
    %v2372 = vadd.f32 0.0, %v2371
    %v2373 = vpop.f32.mrf.mxu0
    %v2374 = vadd.f32 0.0, %v2373
    %2375 = vdwg.mxu0
    %2376 = vmatpush.bf16.msra.mxu0 %v2328
    %2377 = vmatpush.bf16.msra.mxu0 %v2326
    %2378 = vmatpush.bf16.msra.mxu0 %v2324
    %2379 = vmatpush.bf16.msra.mxu0 %v2322
    %2380 = vmatpush.bf16.msra.mxu0 %v2320
    %2381 = vmatpush.bf16.msra.mxu0 %v2318
    %2382 = vmatpush.bf16.msra.mxu0 %v2316
    %2383 = vmatpush.bf16.msra.mxu0 %v2314
    %2384 = vmatmul.bf16.gmra.mxu0 %v2168
    %v2385 = vpop.f32.mrf.mxu0
    %v2386 = vadd.f32 %v2372, %v2385
    %v2387 = vpop.f32.mrf.mxu0
    %v2388 = vadd.f32 %v2374, %v2387
    %2389 = vdwg.mxu0
    %2390 = vmatpush.bf16.msra.mxu0 %v2313
    %2391 = vmatpush.bf16.msra.mxu0 %v2311
    %2392 = vmatpush.bf16.msra.mxu0 %v2309
    %2393 = vmatpush.bf16.msra.mxu0 %v2307
    %2394 = vmatpush.bf16.msra.mxu0 %v2305
    %2395 = vmatpush.bf16.msra.mxu0 %v2303
    %2396 = vmatpush.bf16.msra.mxu0 %v2301
    %2397 = vmatpush.bf16.msra.mxu0 %v2299
    %2398 = vmatmul.bf16.gmra.mxu0 %v2167
    %v2399 = vpop.f32.mrf.mxu0
    %v2400 = vadd.f32 0.0, %v2399
    %v2401 = vpop.f32.mrf.mxu0
    %v2402 = vadd.f32 0.0, %v2401
    %2403 = vdwg.mxu0
    %2404 = vmatpush.bf16.msra.mxu0 %v2329
    %2405 = vmatpush.bf16.msra.mxu0 %v2327
    %2406 = vmatpush.bf16.msra.mxu0 %v2325
    %2407 = vmatpush.bf16.msra.mxu0 %v2323
    %2408 = vmatpush.bf16.msra.mxu0 %v2321
    %2409 = vmatpush.bf16.msra.mxu0 %v2319
    %2410 = vmatpush.bf16.msra.mxu0 %v2317
    %2411 = vmatpush.bf16.msra.mxu0 %v2315
    %2412 = vmatmul.bf16.gmra.mxu0 %v2168
    %v2413 = vpop.f32.mrf.mxu0
    %v2414 = vadd.f32 %v2400, %v2413
    %v2415 = vpop.f32.mrf.mxu0
    %v2416 = vadd.f32 %v2402, %v2415
    %2417 = vdwg.mxu0
    %v2418 = vadd.f32 %v2103, %v2386
    %v2419 = vadd.f32 %v2131, %v2414
    %v2420 = vadd.f32 %v2105, %v2388
    %v2421 = vadd.f32 %v2133, %v2416
    %v2422 = vld [vmem:[#allocation2] sm:$0xf8]
    %v2423 = vld [vmem:[#allocation2 + $0x8] sm:$0xf8]
    %v2424 = vld [vmem:[#allocation2 + $0x10] sm:$0x7]
    %v2425 = vld [vmem:[#allocation2 + $0x18] sm:$0x7]
    %v2426 = vld [vmem:[#allocation2 + $0x20] sm:$0xf8]
    %v2427 = vld [vmem:[#allocation2 + $0x28] sm:$0xf8]
    %v2428 = vld [vmem:[#allocation2 + $0x30] sm:$0x7]
    %v2429 = vld [vmem:[#allocation2 + $0x38] sm:$0x7]
    %v2438 = vrot.slane %v2422, 3
    %v2439 = vrot.slane %v2424, 3
    %v2440 = vsel %vm999, %v2438, %v2439
    %v2441 = vrot.slane %v2423, 3
    %v2442 = vrot.slane %v2425, 3
    %v2443 = vsel %vm999, %v2441, %v2442
    %v2444 = vrot.slane %v2426, 3
    %v2445 = vrot.slane %v2428, 3
    %v2446 = vsel %vm999, %v2444, %v2445
    %v2447 = vrot.slane %v2427, 3
    %v2448 = vrot.slane %v2429, 3
    %v2449 = vsel %vm999, %v2447, %v2448
    %v2454 = vpack.c.bf16 %v2446, %v2440
    %v2455 = vpack.c.bf16 %v2449, %v2443
    %s2456 = scalar_lea.vmem [#allocation4], 2048
    %v2457 = vld [vmem:[%s2456] sm:$0xff]
    %v2458 = vld [vmem:[%s2456 + $0x8] sm:$0xff]
    %v2459 = vld [vmem:[%s2456 + $0x10] sm:$0xff]
    %v2460 = vld [vmem:[%s2456 + $0x18] sm:$0xff]
    %v2461 = vld [vmem:[%s2456 + $0x20] sm:$0xff]
    %v2462 = vld [vmem:[%s2456 + $0x28] sm:$0xff]
    %v2463 = vld [vmem:[%s2456 + $0x30] sm:$0xff]
    %v2464 = vld [vmem:[%s2456 + $0x38] sm:$0xff]
    %v2465 = vld [vmem:[%s2456 + $0x40] sm:$0xff]
    %v2466 = vld [vmem:[%s2456 + $0x48] sm:$0xff]
    %v2467 = vld [vmem:[%s2456 + $0x50] sm:$0xff]
    %v2468 = vld [vmem:[%s2456 + $0x58] sm:$0xff]
    %v2469 = vld [vmem:[%s2456 + $0x60] sm:$0xff]
    %v2470 = vld [vmem:[%s2456 + $0x68] sm:$0xff]
    %v2471 = vld [vmem:[%s2456 + $0x70] sm:$0xff]
    %v2472 = vld [vmem:[%s2456 + $0x78] sm:$0xff]
    %v2473 = vld [vmem:[%s2456 + $0x80] sm:$0xff]
    %v2474 = vld [vmem:[%s2456 + $0x88] sm:$0xff]
    %v2475 = vld [vmem:[%s2456 + $0x90] sm:$0xff]
    %v2476 = vld [vmem:[%s2456 + $0x98] sm:$0xff]
    %v2477 = vld [vmem:[%s2456 + $0xa0] sm:$0xff]
    %v2478 = vld [vmem:[%s2456 + $0xa8] sm:$0xff]
    %v2479 = vld [vmem:[%s2456 + $0xb0] sm:$0xff]
    %v2480 = vld [vmem:[%s2456 + $0xb8] sm:$0xff]
    %v2481 = vld [vmem:[%s2456 + $0xc0] sm:$0xff]
    %v2482 = vld [vmem:[%s2456 + $0xc8] sm:$0xff]
    %v2483 = vld [vmem:[%s2456 + $0xd0] sm:$0xff]
    %v2484 = vld [vmem:[%s2456 + $0xd8] sm:$0xff]
    %v2485 = vld [vmem:[%s2456 + $0xe0] sm:$0xff]
    %v2486 = vld [vmem:[%s2456 + $0xe8] sm:$0xff]
    %v2487 = vld [vmem:[%s2456 + $0xf0] sm:$0xff]
    %v2488 = vld [vmem:[%s2456 + $0xf8] sm:$0xff]
    %v2521 = vunpack.c.l.b16 %v2457
    %v2522 = vunpack.c.h.b16 %v2457
    %v2523 = vunpack.c.l.b16 %v2458
    %v2524 = vunpack.c.h.b16 %v2458
    %v2525 = vunpack.c.l.b16 %v2459
    %v2526 = vunpack.c.h.b16 %v2459
    %v2527 = vunpack.c.l.b16 %v2460
    %v2528 = vunpack.c.h.b16 %v2460
    %v2529 = vunpack.c.l.b16 %v2461
    %v2530 = vunpack.c.h.b16 %v2461
    %v2531 = vunpack.c.l.b16 %v2462
    %v2532 = vunpack.c.h.b16 %v2462
    %v2533 = vunpack.c.l.b16 %v2463
    %v2534 = vunpack.c.h.b16 %v2463
    %v2535 = vunpack.c.l.b16 %v2464
    %v2536 = vunpack.c.h.b16 %v2464
    %v2537 = vunpack.c.l.b16 %v2465
    %v2538 = vunpack.c.h.b16 %v2465
    %v2539 = vunpack.c.l.b16 %v2466
    %v2540 = vunpack.c.h.b16 %v2466
    %v2541 = vunpack.c.l.b16 %v2467
    %v2542 = vunpack.c.h.b16 %v2467
    %v2543 = vunpack.c.l.b16 %v2468
    %v2544 = vunpack.c.h.b16 %v2468
    %v2545 = vunpack.c.l.b16 %v2469
    %v2546 = vunpack.c.h.b16 %v2469
    %v2547 = vunpack.c.l.b16 %v2470
    %v2548 = vunpack.c.h.b16 %v2470
    %v2549 = vunpack.c.l.b16 %v2471
    %v2550 = vunpack.c.h.b16 %v2471
    %v2551 = vunpack.c.l.b16 %v2472
    %v2552 = vunpack.c.h.b16 %v2472
    %v2553 = vunpack.c.l.b16 %v2473
    %v2554 = vunpack.c.h.b16 %v2473
    %v2555 = vunpack.c.l.b16 %v2474
    %v2556 = vunpack.c.h.b16 %v2474
    %v2557 = vunpack.c.l.b16 %v2475
    %v2558 = vunpack.c.h.b16 %v2475
    %v2559 = vunpack.c.l.b16 %v2476
    %v2560 = vunpack.c.h.b16 %v2476
    %v2561 = vunpack.c.l.b16 %v2477
    %v2562 = vunpack.c.h.b16 %v2477
    %v2563 = vunpack.c.l.b16 %v2478
    %v2564 = vunpack.c.h.b16 %v2478
    %v2565 = vunpack.c.l.b16 %v2479
    %v2566 = vunpack.c.h.b16 %v2479
    %v2567 = vunpack.c.l.b16 %v2480
    %v2568 = vunpack.c.h.b16 %v2480
    %v2569 = vunpack.c.l.b16 %v2481
    %v2570 = vunpack.c.h.b16 %v2481
    %v2571 = vunpack.c.l.b16 %v2482
    %v2572 = vunpack.c.h.b16 %v2482
    %v2573 = vunpack.c.l.b16 %v2483
    %v2574 = vunpack.c.h.b16 %v2483
    %v2575 = vunpack.c.l.b16 %v2484
    %v2576 = vunpack.c.h.b16 %v2484
    %v2577 = vunpack.c.l.b16 %v2485
    %v2578 = vunpack.c.h.b16 %v2485
    %v2579 = vunpack.c.l.b16 %v2486
    %v2580 = vunpack.c.h.b16 %v2486
    %v2581 = vunpack.c.l.b16 %v2487
    %v2582 = vunpack.c.h.b16 %v2487
    %v2583 = vunpack.c.l.b16 %v2488
    %v2584 = vunpack.c.h.b16 %v2488
    %v2585 = vpack.c.b16 %v2523, %v2521
    %v2586 = vpack.c.b16 %v2524, %v2522
    %v2587 = vpack.c.b16 %v2527, %v2525
    %v2588 = vpack.c.b16 %v2528, %v2526
    %v2589 = vpack.c.b16 %v2531, %v2529
    %v2590 = vpack.c.b16 %v2532, %v2530
    %v2591 = vpack.c.b16 %v2535, %v2533
    %v2592 = vpack.c.b16 %v2536, %v2534
    %v2593 = vpack.c.b16 %v2539, %v2537
    %v2594 = vpack.c.b16 %v2540, %v2538
    %v2595 = vpack.c.b16 %v2543, %v2541
    %v2596 = vpack.c.b16 %v2544, %v2542
    %v2597 = vpack.c.b16 %v2547, %v2545
    %v2598 = vpack.c.b16 %v2548, %v2546
    %v2599 = vpack.c.b16 %v2551, %v2549
    %v2600 = vpack.c.b16 %v2552, %v2550
    %v2601 = vpack.c.b16 %v2555, %v2553
    %v2602 = vpack.c.b16 %v2556, %v2554
    %v2603 = vpack.c.b16 %v2559, %v2557
    %v2604 = vpack.c.b16 %v2560, %v2558
    %v2605 = vpack.c.b16 %v2563, %v2561
    %v2606 = vpack.c.b16 %v2564, %v2562
    %v2607 = vpack.c.b16 %v2567, %v2565
    %v2608 = vpack.c.b16 %v2568, %v2566
    %v2609 = vpack.c.b16 %v2571, %v2569
    %v2610 = vpack.c.b16 %v2572, %v2570
    %v2611 = vpack.c.b16 %v2575, %v2573
    %v2612 = vpack.c.b16 %v2576, %v2574
    %v2613 = vpack.c.b16 %v2579, %v2577
    %v2614 = vpack.c.b16 %v2580, %v2578
    %v2615 = vpack.c.b16 %v2583, %v2581
    %v2616 = vpack.c.b16 %v2584, %v2582
    %2649 = vmatpush.bf16.msra.mxu0 %v2599
    %2650 = vmatpush.bf16.msra.mxu0 %v2597
    %2651 = vmatpush.bf16.msra.mxu0 %v2595
    %2652 = vmatpush.bf16.msra.mxu0 %v2593
    %2653 = vmatpush.bf16.msra.mxu0 %v2591
    %2654 = vmatpush.bf16.msra.mxu0 %v2589
    %2655 = vmatpush.bf16.msra.mxu0 %v2587
    %2656 = vmatpush.bf16.msra.mxu0 %v2585
    %2657 = vmatmul.bf16.gmra.mxu0 %v2454
    %v2658 = vpop.f32.mrf.mxu0
    %v2659 = vadd.f32 0.0, %v2658
    %v2660 = vpop.f32.mrf.mxu0
    %v2661 = vadd.f32 0.0, %v2660
    %2662 = vdwg.mxu0
    %2663 = vmatpush.bf16.msra.mxu0 %v2615
    %2664 = vmatpush.bf16.msra.mxu0 %v2613
    %2665 = vmatpush.bf16.msra.mxu0 %v2611
    %2666 = vmatpush.bf16.msra.mxu0 %v2609
    %2667 = vmatpush.bf16.msra.mxu0 %v2607
    %2668 = vmatpush.bf16.msra.mxu0 %v2605
    %2669 = vmatpush.bf16.msra.mxu0 %v2603
    %2670 = vmatpush.bf16.msra.mxu0 %v2601
    %2671 = vmatmul.bf16.gmra.mxu0 %v2455
    %v2672 = vpop.f32.mrf.mxu0
    %v2673 = vadd.f32 %v2659, %v2672
    %v2674 = vpop.f32.mrf.mxu0
    %v2675 = vadd.f32 %v2661, %v2674
    %2676 = vdwg.mxu0
    %2677 = vmatpush.bf16.msra.mxu0 %v2600
    %2678 = vmatpush.bf16.msra.mxu0 %v2598
    %2679 = vmatpush.bf16.msra.mxu0 %v2596
    %2680 = vmatpush.bf16.msra.mxu0 %v2594
    %2681 = vmatpush.bf16.msra.mxu0 %v2592
    %2682 = vmatpush.bf16.msra.mxu0 %v2590
    %2683 = vmatpush.bf16.msra.mxu0 %v2588
    %2684 = vmatpush.bf16.msra.mxu0 %v2586
    %2685 = vmatmul.bf16.gmra.mxu0 %v2454
    %v2686 = vpop.f32.mrf.mxu0
    %v2687 = vadd.f32 0.0, %v2686
    %v2688 = vpop.f32.mrf.mxu0
    %v2689 = vadd.f32 0.0, %v2688
    %2690 = vdwg.mxu0
    %2691 = vmatpush.bf16.msra.mxu0 %v2616
    %2692 = vmatpush.bf16.msra.mxu0 %v2614
    %2693 = vmatpush.bf16.msra.mxu0 %v2612
    %2694 = vmatpush.bf16.msra.mxu0 %v2610
    %2695 = vmatpush.bf16.msra.mxu0 %v2608
    %2696 = vmatpush.bf16.msra.mxu0 %v2606
    %2697 = vmatpush.bf16.msra.mxu0 %v2604
    %2698 = vmatpush.bf16.msra.mxu0 %v2602
    %2699 = vmatmul.bf16.gmra.mxu0 %v2455
    %v2700 = vpop.f32.mrf.mxu0
    %v2701 = vadd.f32 %v2687, %v2700
    %v2702 = vpop.f32.mrf.mxu0
    %v2703 = vadd.f32 %v2689, %v2702
    %2704 = vdwg.mxu0
    %v2705 = vadd.f32 %v2418, %v2673
    %v2706 = vadd.f32 %v2419, %v2701
    %v2707 = vadd.f32 %v2420, %v2675
    %v2708 = vadd.f32 %v2421, %v2703
    %v2709 = vld [vmem:[#allocation2] sm:$0xf0]
    %v2710 = vld [vmem:[#allocation2 + $0x8] sm:$0xf0]
    %v2711 = vld [vmem:[#allocation2 + $0x10] sm:$0xf]
    %v2712 = vld [vmem:[#allocation2 + $0x18] sm:$0xf]
    %v2713 = vld [vmem:[#allocation2 + $0x20] sm:$0xf0]
    %v2714 = vld [vmem:[#allocation2 + $0x28] sm:$0xf0]
    %v2715 = vld [vmem:[#allocation2 + $0x30] sm:$0xf]
    %v2716 = vld [vmem:[#allocation2 + $0x38] sm:$0xf]
    %v2725 = vrot.slane %v2709, 4
    %v2726 = vrot.slane %v2711, 4
    %v2727 = vsel %vm1287, %v2725, %v2726
    %v2728 = vrot.slane %v2710, 4
    %v2729 = vrot.slane %v2712, 4
    %v2730 = vsel %vm1287, %v2728, %v2729
    %v2731 = vrot.slane %v2713, 4
    %v2732 = vrot.slane %v2715, 4
    %v2733 = vsel %vm1287, %v2731, %v2732
    %v2734 = vrot.slane %v2714, 4
    %v2735 = vrot.slane %v2716, 4
    %v2736 = vsel %vm1287, %v2734, %v2735
    %v2741 = vpack.c.bf16 %v2733, %v2727
    %v2742 = vpack.c.bf16 %v2736, %v2730
    %s2743 = scalar_lea.vmem [#allocation4], 2304
    %v2744 = vld [vmem:[%s2743] sm:$0xff]
    %v2745 = vld [vmem:[%s2743 + $0x8] sm:$0xff]
    %v2746 = vld [vmem:[%s2743 + $0x10] sm:$0xff]
    %v2747 = vld [vmem:[%s2743 + $0x18] sm:$0xff]
    %v2748 = vld [vmem:[%s2743 + $0x20] sm:$0xff]
    %v2749 = vld [vmem:[%s2743 + $0x28] sm:$0xff]
    %v2750 = vld [vmem:[%s2743 + $0x30] sm:$0xff]
    %v2751 = vld [vmem:[%s2743 + $0x38] sm:$0xff]
    %v2752 = vld [vmem:[%s2743 + $0x40] sm:$0xff]
    %v2753 = vld [vmem:[%s2743 + $0x48] sm:$0xff]
    %v2754 = vld [vmem:[%s2743 + $0x50] sm:$0xff]
    %v2755 = vld [vmem:[%s2743 + $0x58] sm:$0xff]
    %v2756 = vld [vmem:[%s2743 + $0x60] sm:$0xff]
    %v2757 = vld [vmem:[%s2743 + $0x68] sm:$0xff]
    %v2758 = vld [vmem:[%s2743 + $0x70] sm:$0xff]
    %v2759 = vld [vmem:[%s2743 + $0x78] sm:$0xff]
    %v2760 = vld [vmem:[%s2743 + $0x80] sm:$0xff]
    %v2761 = vld [vmem:[%s2743 + $0x88] sm:$0xff]
    %v2762 = vld [vmem:[%s2743 + $0x90] sm:$0xff]
    %v2763 = vld [vmem:[%s2743 + $0x98] sm:$0xff]
    %v2764 = vld [vmem:[%s2743 + $0xa0] sm:$0xff]
    %v2765 = vld [vmem:[%s2743 + $0xa8] sm:$0xff]
    %v2766 = vld [vmem:[%s2743 + $0xb0] sm:$0xff]
    %v2767 = vld [vmem:[%s2743 + $0xb8] sm:$0xff]
    %v2768 = vld [vmem:[%s2743 + $0xc0] sm:$0xff]
    %v2769 = vld [vmem:[%s2743 + $0xc8] sm:$0xff]
    %v2770 = vld [vmem:[%s2743 + $0xd0] sm:$0xff]
    %v2771 = vld [vmem:[%s2743 + $0xd8] sm:$0xff]
    %v2772 = vld [vmem:[%s2743 + $0xe0] sm:$0xff]
    %v2773 = vld [vmem:[%s2743 + $0xe8] sm:$0xff]
    %v2774 = vld [vmem:[%s2743 + $0xf0] sm:$0xff]
    %v2775 = vld [vmem:[%s2743 + $0xf8] sm:$0xff]
    %v2808 = vunpack.c.l.b16 %v2744
    %v2809 = vunpack.c.h.b16 %v2744
    %v2810 = vunpack.c.l.b16 %v2745
    %v2811 = vunpack.c.h.b16 %v2745
    %v2812 = vunpack.c.l.b16 %v2746
    %v2813 = vunpack.c.h.b16 %v2746
    %v2814 = vunpack.c.l.b16 %v2747
    %v2815 = vunpack.c.h.b16 %v2747
    %v2816 = vunpack.c.l.b16 %v2748
    %v2817 = vunpack.c.h.b16 %v2748
    %v2818 = vunpack.c.l.b16 %v2749
    %v2819 = vunpack.c.h.b16 %v2749
    %v2820 = vunpack.c.l.b16 %v2750
    %v2821 = vunpack.c.h.b16 %v2750
    %v2822 = vunpack.c.l.b16 %v2751
    %v2823 = vunpack.c.h.b16 %v2751
    %v2824 = vunpack.c.l.b16 %v2752
    %v2825 = vunpack.c.h.b16 %v2752
    %v2826 = vunpack.c.l.b16 %v2753
    %v2827 = vunpack.c.h.b16 %v2753
    %v2828 = vunpack.c.l.b16 %v2754
    %v2829 = vunpack.c.h.b16 %v2754
    %v2830 = vunpack.c.l.b16 %v2755
    %v2831 = vunpack.c.h.b16 %v2755
    %v2832 = vunpack.c.l.b16 %v2756
    %v2833 = vunpack.c.h.b16 %v2756
    %v2834 = vunpack.c.l.b16 %v2757
    %v2835 = vunpack.c.h.b16 %v2757
    %v2836 = vunpack.c.l.b16 %v2758
    %v2837 = vunpack.c.h.b16 %v2758
    %v2838 = vunpack.c.l.b16 %v2759
    %v2839 = vunpack.c.h.b16 %v2759
    %v2840 = vunpack.c.l.b16 %v2760
    %v2841 = vunpack.c.h.b16 %v2760
    %v2842 = vunpack.c.l.b16 %v2761
    %v2843 = vunpack.c.h.b16 %v2761
    %v2844 = vunpack.c.l.b16 %v2762
    %v2845 = vunpack.c.h.b16 %v2762
    %v2846 = vunpack.c.l.b16 %v2763
    %v2847 = vunpack.c.h.b16 %v2763
    %v2848 = vunpack.c.l.b16 %v2764
    %v2849 = vunpack.c.h.b16 %v2764
    %v2850 = vunpack.c.l.b16 %v2765
    %v2851 = vunpack.c.h.b16 %v2765
    %v2852 = vunpack.c.l.b16 %v2766
    %v2853 = vunpack.c.h.b16 %v2766
    %v2854 = vunpack.c.l.b16 %v2767
    %v2855 = vunpack.c.h.b16 %v2767
    %v2856 = vunpack.c.l.b16 %v2768
    %v2857 = vunpack.c.h.b16 %v2768
    %v2858 = vunpack.c.l.b16 %v2769
    %v2859 = vunpack.c.h.b16 %v2769
    %v2860 = vunpack.c.l.b16 %v2770
    %v2861 = vunpack.c.h.b16 %v2770
    %v2862 = vunpack.c.l.b16 %v2771
    %v2863 = vunpack.c.h.b16 %v2771
    %v2864 = vunpack.c.l.b16 %v2772
    %v2865 = vunpack.c.h.b16 %v2772
    %v2866 = vunpack.c.l.b16 %v2773
    %v2867 = vunpack.c.h.b16 %v2773
    %v2868 = vunpack.c.l.b16 %v2774
    %v2869 = vunpack.c.h.b16 %v2774
    %v2870 = vunpack.c.l.b16 %v2775
    %v2871 = vunpack.c.h.b16 %v2775
    %v2872 = vpack.c.b16 %v2810, %v2808
    %v2873 = vpack.c.b16 %v2811, %v2809
    %v2874 = vpack.c.b16 %v2814, %v2812
    %v2875 = vpack.c.b16 %v2815, %v2813
    %v2876 = vpack.c.b16 %v2818, %v2816
    %v2877 = vpack.c.b16 %v2819, %v2817
    %v2878 = vpack.c.b16 %v2822, %v2820
    %v2879 = vpack.c.b16 %v2823, %v2821
    %v2880 = vpack.c.b16 %v2826, %v2824
    %v2881 = vpack.c.b16 %v2827, %v2825
    %v2882 = vpack.c.b16 %v2830, %v2828
    %v2883 = vpack.c.b16 %v2831, %v2829
    %v2884 = vpack.c.b16 %v2834, %v2832
    %v2885 = vpack.c.b16 %v2835, %v2833
    %v2886 = vpack.c.b16 %v2838, %v2836
    %v2887 = vpack.c.b16 %v2839, %v2837
    %v2888 = vpack.c.b16 %v2842, %v2840
    %v2889 = vpack.c.b16 %v2843, %v2841
    %v2890 = vpack.c.b16 %v2846, %v2844
    %v2891 = vpack.c.b16 %v2847, %v2845
    %v2892 = vpack.c.b16 %v2850, %v2848
    %v2893 = vpack.c.b16 %v2851, %v2849
    %v2894 = vpack.c.b16 %v2854, %v2852
    %v2895 = vpack.c.b16 %v2855, %v2853
    %v2896 = vpack.c.b16 %v2858, %v2856
    %v2897 = vpack.c.b16 %v2859, %v2857
    %v2898 = vpack.c.b16 %v2862, %v2860
    %v2899 = vpack.c.b16 %v2863, %v2861
    %v2900 = vpack.c.b16 %v2866, %v2864
    %v2901 = vpack.c.b16 %v2867, %v2865
    %v2902 = vpack.c.b16 %v2870, %v2868
    %v2903 = vpack.c.b16 %v2871, %v2869
    %2936 = vmatpush.bf16.msra.mxu0 %v2886
    %2937 = vmatpush.bf16.msra.mxu0 %v2884
    %2938 = vmatpush.bf16.msra.mxu0 %v2882
    %2939 = vmatpush.bf16.msra.mxu0 %v2880
    %2940 = vmatpush.bf16.msra.mxu0 %v2878
    %2941 = vmatpush.bf16.msra.mxu0 %v2876
    %2942 = vmatpush.bf16.msra.mxu0 %v2874
    %2943 = vmatpush.bf16.msra.mxu0 %v2872
    %2944 = vmatmul.bf16.gmra.mxu0 %v2741
    %v2945 = vpop.f32.mrf.mxu0
    %v2946 = vadd.f32 0.0, %v2945
    %v2947 = vpop.f32.mrf.mxu0
    %v2948 = vadd.f32 0.0, %v2947
    %2949 = vdwg.mxu0
    %2950 = vmatpush.bf16.msra.mxu0 %v2902
    %2951 = vmatpush.bf16.msra.mxu0 %v2900
    %2952 = vmatpush.bf16.msra.mxu0 %v2898
    %2953 = vmatpush.bf16.msra.mxu0 %v2896
    %2954 = vmatpush.bf16.msra.mxu0 %v2894
    %2955 = vmatpush.bf16.msra.mxu0 %v2892
    %2956 = vmatpush.bf16.msra.mxu0 %v2890
    %2957 = vmatpush.bf16.msra.mxu0 %v2888
    %2958 = vmatmul.bf16.gmra.mxu0 %v2742
    %v2959 = vpop.f32.mrf.mxu0
    %v2960 = vadd.f32 %v2946, %v2959
    %v2961 = vpop.f32.mrf.mxu0
    %v2962 = vadd.f32 %v2948, %v2961
    %2963 = vdwg.mxu0
    %2964 = vmatpush.bf16.msra.mxu0 %v2887
    %2965 = vmatpush.bf16.msra.mxu0 %v2885
    %2966 = vmatpush.bf16.msra.mxu0 %v2883
    %2967 = vmatpush.bf16.msra.mxu0 %v2881
    %2968 = vmatpush.bf16.msra.mxu0 %v2879
    %2969 = vmatpush.bf16.msra.mxu0 %v2877
    %2970 = vmatpush.bf16.msra.mxu0 %v2875
    %2971 = vmatpush.bf16.msra.mxu0 %v2873
    %2972 = vmatmul.bf16.gmra.mxu0 %v2741
    %v2973 = vpop.f32.mrf.mxu0
    %v2974 = vadd.f32 0.0, %v2973
    %v2975 = vpop.f32.mrf.mxu0
    %v2976 = vadd.f32 0.0, %v2975
    %2977 = vdwg.mxu0
    %2978 = vmatpush.bf16.msra.mxu0 %v2903
    %2979 = vmatpush.bf16.msra.mxu0 %v2901
    %2980 = vmatpush.bf16.msra.mxu0 %v2899
    %2981 = vmatpush.bf16.msra.mxu0 %v2897
    %2982 = vmatpush.bf16.msra.mxu0 %v2895
    %2983 = vmatpush.bf16.msra.mxu0 %v2893
    %2984 = vmatpush.bf16.msra.mxu0 %v2891
    %2985 = vmatpush.bf16.msra.mxu0 %v2889
    %2986 = vmatmul.bf16.gmra.mxu0 %v2742
    %v2987 = vpop.f32.mrf.mxu0
    %v2988 = vadd.f32 %v2974, %v2987
    %v2989 = vpop.f32.mrf.mxu0
    %v2990 = vadd.f32 %v2976, %v2989
    %2991 = vdwg.mxu0
    %v2992 = vadd.f32 %v2705, %v2960
    %v2993 = vadd.f32 %v2706, %v2988
    %v2994 = vadd.f32 %v2707, %v2962
    %v2995 = vadd.f32 %v2708, %v2990
    %s2996 = scalar_lea.vmem [#allocation6], 2
    %v2997 = vld [vmem:[%s2996] sm:$0x3]
    %v2999 = vperm.slane %v2997, 0
    %v3000 = vperm.slane %v2997, 1
    %v3003 = vadd.f32 %v2992, %v2999
    %v3004 = vadd.f32 %v2993, %v3000
    %v3005 = vadd.f32 %v2994, %v2999
    %v3006 = vadd.f32 %v2995, %v3000
    %v3007 = vmul.f32 %v3003, 0.01
    %v3008 = vmul.f32 %v3004, 0.01
    %v3009 = vmul.f32 %v3005, 0.01
    %v3010 = vmul.f32 %v3006, 0.01
    %v3011 = vmax.f32 %v3003, %v3007
    %v3012 = vmax.f32 %v3004, %v3008
    %v3013 = vmax.f32 %v3005, %v3009
    %v3014 = vmax.f32 %v3006, %v3010
    %v3019 = vrot.slane %v3011, 6
    %v3020 = vrot.slane %v3012, 6
    %v3021 = vrot.slane %v3013, 6
    %v3022 = vrot.slane %v3014, 6
    %3027 = vst [vmem:[#allocation2] sm:$0xfc] %v3019
    %3028 = vst [vmem:[#allocation2 + $0x8] sm:$0xfc] %v3020
    %3029 = vst [vmem:[#allocation2 + $0x10] sm:$0x3] %v3019
    %3030 = vst [vmem:[#allocation2 + $0x18] sm:$0x3] %v3020
    %3031 = vst [vmem:[#allocation2 + $0x20] sm:$0xfc] %v3021
    %3032 = vst [vmem:[#allocation2 + $0x28] sm:$0xfc] %v3022
    %3033 = vst [vmem:[#allocation2 + $0x30] sm:$0x3] %v3021
    %3034 = vst [vmem:[#allocation2 + $0x38] sm:$0x3] %v3022
    %v3035 = vld [vmem:[#allocation2] sm:$0xff]
    %v3036 = vld [vmem:[#allocation2 + $0x8] sm:$0xff]
    %v3037 = vld [vmem:[#allocation2 + $0x20] sm:$0xff]
    %v3038 = vld [vmem:[#allocation2 + $0x28] sm:$0xff]
    %v3039 = vpack.c.bf16 %v3037, %v3035
    %v3040 = vpack.c.bf16 %v3038, %v3036
    %s3041 = scalar_lea.vmem [#allocation4], 2560
    %v3042 = vld [vmem:[%s3041] sm:$0xff]
    %v3043 = vld [vmem:[%s3041 + $0x8] sm:$0xff]
    %v3044 = vld [vmem:[%s3041 + $0x10] sm:$0xff]
    %v3045 = vld [vmem:[%s3041 + $0x18] sm:$0xff]
    %v3046 = vld [vmem:[%s3041 + $0x20] sm:$0xff]
    %v3047 = vld [vmem:[%s3041 + $0x28] sm:$0xff]
    %v3048 = vld [vmem:[%s3041 + $0x30] sm:$0xff]
    %v3049 = vld [vmem:[%s3041 + $0x38] sm:$0xff]
    %v3050 = vld [vmem:[%s3041 + $0x40] sm:$0xff]
    %v3051 = vld [vmem:[%s3041 + $0x48] sm:$0xff]
    %v3052 = vld [vmem:[%s3041 + $0x50] sm:$0xff]
    %v3053 = vld [vmem:[%s3041 + $0x58] sm:$0xff]
    %v3054 = vld [vmem:[%s3041 + $0x60] sm:$0xff]
    %v3055 = vld [vmem:[%s3041 + $0x68] sm:$0xff]
    %v3056 = vld [vmem:[%s3041 + $0x70] sm:$0xff]
    %v3057 = vld [vmem:[%s3041 + $0x78] sm:$0xff]
    %v3058 = vld [vmem:[%s3041 + $0x80] sm:$0xff]
    %v3059 = vld [vmem:[%s3041 + $0x88] sm:$0xff]
    %v3060 = vld [vmem:[%s3041 + $0x90] sm:$0xff]
    %v3061 = vld [vmem:[%s3041 + $0x98] sm:$0xff]
    %v3062 = vld [vmem:[%s3041 + $0xa0] sm:$0xff]
    %v3063 = vld [vmem:[%s3041 + $0xa8] sm:$0xff]
    %v3064 = vld [vmem:[%s3041 + $0xb0] sm:$0xff]
    %v3065 = vld [vmem:[%s3041 + $0xb8] sm:$0xff]
    %v3066 = vld [vmem:[%s3041 + $0xc0] sm:$0xff]
    %v3067 = vld [vmem:[%s3041 + $0xc8] sm:$0xff]
    %v3068 = vld [vmem:[%s3041 + $0xd0] sm:$0xff]
    %v3069 = vld [vmem:[%s3041 + $0xd8] sm:$0xff]
    %v3070 = vld [vmem:[%s3041 + $0xe0] sm:$0xff]
    %v3071 = vld [vmem:[%s3041 + $0xe8] sm:$0xff]
    %v3072 = vld [vmem:[%s3041 + $0xf0] sm:$0xff]
    %v3073 = vld [vmem:[%s3041 + $0xf8] sm:$0xff]
    %v3074 = vld [vmem:[#allocation2] sm:$0xfe]
    %v3075 = vld [vmem:[#allocation2 + $0x8] sm:$0xfe]
    %v3076 = vld [vmem:[#allocation2 + $0x10] sm:$0x1]
    %v3077 = vld [vmem:[#allocation2 + $0x18] sm:$0x1]
    %v3078 = vld [vmem:[#allocation2 + $0x20] sm:$0xfe]
    %v3079 = vld [vmem:[#allocation2 + $0x28] sm:$0xfe]
    %v3080 = vld [vmem:[#allocation2 + $0x30] sm:$0x1]
    %v3081 = vld [vmem:[#allocation2 + $0x38] sm:$0x1]
    %v3090 = vrot.slane %v3074, 1
    %v3091 = vrot.slane %v3076, 1
    %v3092 = vsel %vm211, %v3090, %v3091
    %v3093 = vrot.slane %v3075, 1
    %v3094 = vrot.slane %v3077, 1
    %v3095 = vsel %vm211, %v3093, %v3094
    %v3096 = vrot.slane %v3078, 1
    %v3097 = vrot.slane %v3080, 1
    %v3098 = vsel %vm211, %v3096, %v3097
    %v3099 = vrot.slane %v3079, 1
    %v3100 = vrot.slane %v3081, 1
    %v3101 = vsel %vm211, %v3099, %v3100
    %v3106 = vpack.c.bf16 %v3098, %v3092
    %v3107 = vpack.c.bf16 %v3101, %v3095
    %s3108 = scalar_lea.vmem [#allocation4], 2816
    %v3109 = vld [vmem:[%s3108] sm:$0xff]
    %v3110 = vld [vmem:[%s3108 + $0x8] sm:$0xff]
    %v3111 = vld [vmem:[%s3108 + $0x10] sm:$0xff]
    %v3112 = vld [vmem:[%s3108 + $0x18] sm:$0xff]
    %v3113 = vld [vmem:[%s3108 + $0x20] sm:$0xff]
    %v3114 = vld [vmem:[%s3108 + $0x28] sm:$0xff]
    %v3115 = vld [vmem:[%s3108 + $0x30] sm:$0xff]
    %v3116 = vld [vmem:[%s3108 + $0x38] sm:$0xff]
    %v3117 = vld [vmem:[%s3108 + $0x40] sm:$0xff]
    %v3118 = vld [vmem:[%s3108 + $0x48] sm:$0xff]
    %v3119 = vld [vmem:[%s3108 + $0x50] sm:$0xff]
    %v3120 = vld [vmem:[%s3108 + $0x58] sm:$0xff]
    %v3121 = vld [vmem:[%s3108 + $0x60] sm:$0xff]
    %v3122 = vld [vmem:[%s3108 + $0x68] sm:$0xff]
    %v3123 = vld [vmem:[%s3108 + $0x70] sm:$0xff]
    %v3124 = vld [vmem:[%s3108 + $0x78] sm:$0xff]
    %v3125 = vld [vmem:[%s3108 + $0x80] sm:$0xff]
    %v3126 = vld [vmem:[%s3108 + $0x88] sm:$0xff]
    %v3127 = vld [vmem:[%s3108 + $0x90] sm:$0xff]
    %v3128 = vld [vmem:[%s3108 + $0x98] sm:$0xff]
    %v3129 = vld [vmem:[%s3108 + $0xa0] sm:$0xff]
    %v3130 = vld [vmem:[%s3108 + $0xa8] sm:$0xff]
    %v3131 = vld [vmem:[%s3108 + $0xb0] sm:$0xff]
    %v3132 = vld [vmem:[%s3108 + $0xb8] sm:$0xff]
    %v3133 = vld [vmem:[%s3108 + $0xc0] sm:$0xff]
    %v3134 = vld [vmem:[%s3108 + $0xc8] sm:$0xff]
    %v3135 = vld [vmem:[%s3108 + $0xd0] sm:$0xff]
    %v3136 = vld [vmem:[%s3108 + $0xd8] sm:$0xff]
    %v3137 = vld [vmem:[%s3108 + $0xe0] sm:$0xff]
    %v3138 = vld [vmem:[%s3108 + $0xe8] sm:$0xff]
    %v3139 = vld [vmem:[%s3108 + $0xf0] sm:$0xff]
    %v3140 = vld [vmem:[%s3108 + $0xf8] sm:$0xff]
    %v3173 = vunpack.c.l.b16 %v3109
    %v3174 = vunpack.c.h.b16 %v3109
    %v3175 = vunpack.c.l.b16 %v3110
    %v3176 = vunpack.c.h.b16 %v3110
    %v3177 = vunpack.c.l.b16 %v3111
    %v3178 = vunpack.c.h.b16 %v3111
    %v3179 = vunpack.c.l.b16 %v3112
    %v3180 = vunpack.c.h.b16 %v3112
    %v3181 = vunpack.c.l.b16 %v3113
    %v3182 = vunpack.c.h.b16 %v3113
    %v3183 = vunpack.c.l.b16 %v3114
    %v3184 = vunpack.c.h.b16 %v3114
    %v3185 = vunpack.c.l.b16 %v3115
    %v3186 = vunpack.c.h.b16 %v3115
    %v3187 = vunpack.c.l.b16 %v3116
    %v3188 = vunpack.c.h.b16 %v3116
    %v3189 = vunpack.c.l.b16 %v3117
    %v3190 = vunpack.c.h.b16 %v3117
    %v3191 = vunpack.c.l.b16 %v3118
    %v3192 = vunpack.c.h.b16 %v3118
    %v3193 = vunpack.c.l.b16 %v3119
    %v3194 = vunpack.c.h.b16 %v3119
    %v3195 = vunpack.c.l.b16 %v3120
    %v3196 = vunpack.c.h.b16 %v3120
    %v3197 = vunpack.c.l.b16 %v3121
    %v3198 = vunpack.c.h.b16 %v3121
    %v3199 = vunpack.c.l.b16 %v3122
    %v3200 = vunpack.c.h.b16 %v3122
    %v3201 = vunpack.c.l.b16 %v3123
    %v3202 = vunpack.c.h.b16 %v3123
    %v3203 = vunpack.c.l.b16 %v3124
    %v3204 = vunpack.c.h.b16 %v3124
    %v3205 = vunpack.c.l.b16 %v3125
    %v3206 = vunpack.c.h.b16 %v3125
    %v3207 = vunpack.c.l.b16 %v3126
    %v3208 = vunpack.c.h.b16 %v3126
    %v3209 = vunpack.c.l.b16 %v3127
    %v3210 = vunpack.c.h.b16 %v3127
    %v3211 = vunpack.c.l.b16 %v3128
    %v3212 = vunpack.c.h.b16 %v3128
    %v3213 = vunpack.c.l.b16 %v3129
    %v3214 = vunpack.c.h.b16 %v3129
    %v3215 = vunpack.c.l.b16 %v3130
    %v3216 = vunpack.c.h.b16 %v3130
    %v3217 = vunpack.c.l.b16 %v3131
    %v3218 = vunpack.c.h.b16 %v3131
    %v3219 = vunpack.c.l.b16 %v3132
    %v3220 = vunpack.c.h.b16 %v3132
    %v3221 = vunpack.c.l.b16 %v3133
    %v3222 = vunpack.c.h.b16 %v3133
    %v3223 = vunpack.c.l.b16 %v3134
    %v3224 = vunpack.c.h.b16 %v3134
    %v3225 = vunpack.c.l.b16 %v3135
    %v3226 = vunpack.c.h.b16 %v3135
    %v3227 = vunpack.c.l.b16 %v3136
    %v3228 = vunpack.c.h.b16 %v3136
    %v3229 = vunpack.c.l.b16 %v3137
    %v3230 = vunpack.c.h.b16 %v3137
    %v3231 = vunpack.c.l.b16 %v3138
    %v3232 = vunpack.c.h.b16 %v3138
    %v3233 = vunpack.c.l.b16 %v3139
    %v3234 = vunpack.c.h.b16 %v3139
    %v3235 = vunpack.c.l.b16 %v3140
    %v3236 = vunpack.c.h.b16 %v3140
    %v3237 = vpack.c.b16 %v3175, %v3173
    %v3238 = vpack.c.b16 %v3176, %v3174
    %v3239 = vpack.c.b16 %v3179, %v3177
    %v3240 = vpack.c.b16 %v3180, %v3178
    %v3241 = vpack.c.b16 %v3183, %v3181
    %v3242 = vpack.c.b16 %v3184, %v3182
    %v3243 = vpack.c.b16 %v3187, %v3185
    %v3244 = vpack.c.b16 %v3188, %v3186
    %v3245 = vpack.c.b16 %v3191, %v3189
    %v3246 = vpack.c.b16 %v3192, %v3190
    %v3247 = vpack.c.b16 %v3195, %v3193
    %v3248 = vpack.c.b16 %v3196, %v3194
    %v3249 = vpack.c.b16 %v3199, %v3197
    %v3250 = vpack.c.b16 %v3200, %v3198
    %v3251 = vpack.c.b16 %v3203, %v3201
    %v3252 = vpack.c.b16 %v3204, %v3202
    %v3253 = vpack.c.b16 %v3207, %v3205
    %v3254 = vpack.c.b16 %v3208, %v3206
    %v3255 = vpack.c.b16 %v3211, %v3209
    %v3256 = vpack.c.b16 %v3212, %v3210
    %v3257 = vpack.c.b16 %v3215, %v3213
    %v3258 = vpack.c.b16 %v3216, %v3214
    %v3259 = vpack.c.b16 %v3219, %v3217
    %v3260 = vpack.c.b16 %v3220, %v3218
    %v3261 = vpack.c.b16 %v3223, %v3221
    %v3262 = vpack.c.b16 %v3224, %v3222
    %v3263 = vpack.c.b16 %v3227, %v3225
    %v3264 = vpack.c.b16 %v3228, %v3226
    %v3265 = vpack.c.b16 %v3231, %v3229
    %v3266 = vpack.c.b16 %v3232, %v3230
    %v3267 = vpack.c.b16 %v3235, %v3233
    %v3268 = vpack.c.b16 %v3236, %v3234
    %3301 = vmatpush.bf16.msra.mxu0 %v3251
    %3302 = vmatpush.bf16.msra.mxu0 %v3249
    %3303 = vmatpush.bf16.msra.mxu0 %v3247
    %3304 = vmatpush.bf16.msra.mxu0 %v3245
    %3305 = vmatpush.bf16.msra.mxu0 %v3243
    %3306 = vmatpush.bf16.msra.mxu0 %v3241
    %3307 = vmatpush.bf16.msra.mxu0 %v3239
    %3308 = vmatpush.bf16.msra.mxu0 %v3237
    %3309 = vmatmul.bf16.gmra.mxu0 %v3106
    %v3310 = vpop.f32.mrf.mxu0
    %v3311 = vadd.f32 0.0, %v3310
    %v3312 = vpop.f32.mrf.mxu0
    %v3313 = vadd.f32 0.0, %v3312
    %3314 = vdwg.mxu0
    %3315 = vmatpush.bf16.msra.mxu0 %v3267
    %3316 = vmatpush.bf16.msra.mxu0 %v3265
    %3317 = vmatpush.bf16.msra.mxu0 %v3263
    %3318 = vmatpush.bf16.msra.mxu0 %v3261
    %3319 = vmatpush.bf16.msra.mxu0 %v3259
    %3320 = vmatpush.bf16.msra.mxu0 %v3257
    %3321 = vmatpush.bf16.msra.mxu0 %v3255
    %3322 = vmatpush.bf16.msra.mxu0 %v3253
    %3323 = vmatmul.bf16.gmra.mxu0 %v3107
    %v3324 = vpop.f32.mrf.mxu0
    %v3325 = vadd.f32 %v3311, %v3324
    %v3326 = vpop.f32.mrf.mxu0
    %v3327 = vadd.f32 %v3313, %v3326
    %3328 = vdwg.mxu0
    %3329 = vmatpush.bf16.msra.mxu0 %v3252
    %3330 = vmatpush.bf16.msra.mxu0 %v3250
    %3331 = vmatpush.bf16.msra.mxu0 %v3248
    %3332 = vmatpush.bf16.msra.mxu0 %v3246
    %3333 = vmatpush.bf16.msra.mxu0 %v3244
    %3334 = vmatpush.bf16.msra.mxu0 %v3242
    %3335 = vmatpush.bf16.msra.mxu0 %v3240
    %3336 = vmatpush.bf16.msra.mxu0 %v3238
    %3337 = vmatmul.bf16.gmra.mxu0 %v3106
    %v3338 = vpop.f32.mrf.mxu0
    %v3339 = vadd.f32 0.0, %v3338
    %v3340 = vpop.f32.mrf.mxu0
    %v3341 = vadd.f32 0.0, %v3340
    %3342 = vdwg.mxu0
    %3343 = vmatpush.bf16.msra.mxu0 %v3268
    %3344 = vmatpush.bf16.msra.mxu0 %v3266
    %3345 = vmatpush.bf16.msra.mxu0 %v3264
    %3346 = vmatpush.bf16.msra.mxu0 %v3262
    %3347 = vmatpush.bf16.msra.mxu0 %v3260
    %3348 = vmatpush.bf16.msra.mxu0 %v3258
    %3349 = vmatpush.bf16.msra.mxu0 %v3256
    %3350 = vmatpush.bf16.msra.mxu0 %v3254
    %3351 = vmatmul.bf16.gmra.mxu0 %v3107
    %v3352 = vpop.f32.mrf.mxu0
    %v3353 = vadd.f32 %v3339, %v3352
    %v3354 = vpop.f32.mrf.mxu0
    %v3355 = vadd.f32 %v3341, %v3354
    %3356 = vdwg.mxu0
    %v3389 = vunpack.c.l.b16 %v3042
    %v3390 = vunpack.c.h.b16 %v3042
    %v3391 = vunpack.c.l.b16 %v3043
    %v3392 = vunpack.c.h.b16 %v3043
    %v3393 = vunpack.c.l.b16 %v3044
    %v3394 = vunpack.c.h.b16 %v3044
    %v3395 = vunpack.c.l.b16 %v3045
    %v3396 = vunpack.c.h.b16 %v3045
    %v3397 = vunpack.c.l.b16 %v3046
    %v3398 = vunpack.c.h.b16 %v3046
    %v3399 = vunpack.c.l.b16 %v3047
    %v3400 = vunpack.c.h.b16 %v3047
    %v3401 = vunpack.c.l.b16 %v3048
    %v3402 = vunpack.c.h.b16 %v3048
    %v3403 = vunpack.c.l.b16 %v3049
    %v3404 = vunpack.c.h.b16 %v3049
    %v3405 = vunpack.c.l.b16 %v3050
    %v3406 = vunpack.c.h.b16 %v3050
    %v3407 = vunpack.c.l.b16 %v3051
    %v3408 = vunpack.c.h.b16 %v3051
    %v3409 = vunpack.c.l.b16 %v3052
    %v3410 = vunpack.c.h.b16 %v3052
    %v3411 = vunpack.c.l.b16 %v3053
    %v3412 = vunpack.c.h.b16 %v3053
    %v3413 = vunpack.c.l.b16 %v3054
    %v3414 = vunpack.c.h.b16 %v3054
    %v3415 = vunpack.c.l.b16 %v3055
    %v3416 = vunpack.c.h.b16 %v3055
    %v3417 = vunpack.c.l.b16 %v3056
    %v3418 = vunpack.c.h.b16 %v3056
    %v3419 = vunpack.c.l.b16 %v3057
    %v3420 = vunpack.c.h.b16 %v3057
    %v3421 = vunpack.c.l.b16 %v3058
    %v3422 = vunpack.c.h.b16 %v3058
    %v3423 = vunpack.c.l.b16 %v3059
    %v3424 = vunpack.c.h.b16 %v3059
    %v3425 = vunpack.c.l.b16 %v3060
    %v3426 = vunpack.c.h.b16 %v3060
    %v3427 = vunpack.c.l.b16 %v3061
    %v3428 = vunpack.c.h.b16 %v3061
    %v3429 = vunpack.c.l.b16 %v3062
    %v3430 = vunpack.c.h.b16 %v3062
    %v3431 = vunpack.c.l.b16 %v3063
    %v3432 = vunpack.c.h.b16 %v3063
    %v3433 = vunpack.c.l.b16 %v3064
    %v3434 = vunpack.c.h.b16 %v3064
    %v3435 = vunpack.c.l.b16 %v3065
    %v3436 = vunpack.c.h.b16 %v3065
    %v3437 = vunpack.c.l.b16 %v3066
    %v3438 = vunpack.c.h.b16 %v3066
    %v3439 = vunpack.c.l.b16 %v3067
    %v3440 = vunpack.c.h.b16 %v3067
    %v3441 = vunpack.c.l.b16 %v3068
    %v3442 = vunpack.c.h.b16 %v3068
    %v3443 = vunpack.c.l.b16 %v3069
    %v3444 = vunpack.c.h.b16 %v3069
    %v3445 = vunpack.c.l.b16 %v3070
    %v3446 = vunpack.c.h.b16 %v3070
    %v3447 = vunpack.c.l.b16 %v3071
    %v3448 = vunpack.c.h.b16 %v3071
    %v3449 = vunpack.c.l.b16 %v3072
    %v3450 = vunpack.c.h.b16 %v3072
    %v3451 = vunpack.c.l.b16 %v3073
    %v3452 = vunpack.c.h.b16 %v3073
    %v3453 = vpack.c.b16 %v3391, %v3389
    %v3454 = vpack.c.b16 %v3392, %v3390
    %v3455 = vpack.c.b16 %v3395, %v3393
    %v3456 = vpack.c.b16 %v3396, %v3394
    %v3457 = vpack.c.b16 %v3399, %v3397
    %v3458 = vpack.c.b16 %v3400, %v3398
    %v3459 = vpack.c.b16 %v3403, %v3401
    %v3460 = vpack.c.b16 %v3404, %v3402
    %v3461 = vpack.c.b16 %v3407, %v3405
    %v3462 = vpack.c.b16 %v3408, %v3406
    %v3463 = vpack.c.b16 %v3411, %v3409
    %v3464 = vpack.c.b16 %v3412, %v3410
    %v3465 = vpack.c.b16 %v3415, %v3413
    %v3466 = vpack.c.b16 %v3416, %v3414
    %v3467 = vpack.c.b16 %v3419, %v3417
    %v3468 = vpack.c.b16 %v3420, %v3418
    %v3469 = vpack.c.b16 %v3423, %v3421
    %v3470 = vpack.c.b16 %v3424, %v3422
    %v3471 = vpack.c.b16 %v3427, %v3425
    %v3472 = vpack.c.b16 %v3428, %v3426
    %v3473 = vpack.c.b16 %v3431, %v3429
    %v3474 = vpack.c.b16 %v3432, %v3430
    %v3475 = vpack.c.b16 %v3435, %v3433
    %v3476 = vpack.c.b16 %v3436, %v3434
    %v3477 = vpack.c.b16 %v3439, %v3437
    %v3478 = vpack.c.b16 %v3440, %v3438
    %v3479 = vpack.c.b16 %v3443, %v3441
    %v3480 = vpack.c.b16 %v3444, %v3442
    %v3481 = vpack.c.b16 %v3447, %v3445
    %v3482 = vpack.c.b16 %v3448, %v3446
    %v3483 = vpack.c.b16 %v3451, %v3449
    %v3484 = vpack.c.b16 %v3452, %v3450
    %3517 = vmatpush.bf16.msra.mxu0 %v3467
    %3518 = vmatpush.bf16.msra.mxu0 %v3465
    %3519 = vmatpush.bf16.msra.mxu0 %v3463
    %3520 = vmatpush.bf16.msra.mxu0 %v3461
    %3521 = vmatpush.bf16.msra.mxu0 %v3459
    %3522 = vmatpush.bf16.msra.mxu0 %v3457
    %3523 = vmatpush.bf16.msra.mxu0 %v3455
    %3524 = vmatpush.bf16.msra.mxu0 %v3453
    %3525 = vmatmul.bf16.gmra.mxu0 %v3039
    %v3526 = vpop.f32.mrf.mxu0
    %v3527 = vadd.f32 %v3325, %v3526
    %v3528 = vpop.f32.mrf.mxu0
    %v3529 = vadd.f32 %v3327, %v3528
    %3530 = vdwg.mxu0
    %3531 = vmatpush.bf16.msra.mxu0 %v3483
    %3532 = vmatpush.bf16.msra.mxu0 %v3481
    %3533 = vmatpush.bf16.msra.mxu0 %v3479
    %3534 = vmatpush.bf16.msra.mxu0 %v3477
    %3535 = vmatpush.bf16.msra.mxu0 %v3475
    %3536 = vmatpush.bf16.msra.mxu0 %v3473
    %3537 = vmatpush.bf16.msra.mxu0 %v3471
    %3538 = vmatpush.bf16.msra.mxu0 %v3469
    %3539 = vmatmul.bf16.gmra.mxu0 %v3040
    %v3540 = vpop.f32.mrf.mxu0
    %v3541 = vadd.f32 %v3527, %v3540
    %v3542 = vpop.f32.mrf.mxu0
    %v3543 = vadd.f32 %v3529, %v3542
    %3544 = vdwg.mxu0
    %3545 = vmatpush.bf16.msra.mxu0 %v3468
    %3546 = vmatpush.bf16.msra.mxu0 %v3466
    %3547 = vmatpush.bf16.msra.mxu0 %v3464
    %3548 = vmatpush.bf16.msra.mxu0 %v3462
    %3549 = vmatpush.bf16.msra.mxu0 %v3460
    %3550 = vmatpush.bf16.msra.mxu0 %v3458
    %3551 = vmatpush.bf16.msra.mxu0 %v3456
    %3552 = vmatpush.bf16.msra.mxu0 %v3454
    %3553 = vmatmul.bf16.gmra.mxu0 %v3039
    %v3554 = vpop.f32.mrf.mxu0
    %v3555 = vadd.f32 %v3353, %v3554
    %v3556 = vpop.f32.mrf.mxu0
    %v3557 = vadd.f32 %v3355, %v3556
    %3558 = vdwg.mxu0
    %3559 = vmatpush.bf16.msra.mxu0 %v3484
    %3560 = vmatpush.bf16.msra.mxu0 %v3482
    %3561 = vmatpush.bf16.msra.mxu0 %v3480
    %3562 = vmatpush.bf16.msra.mxu0 %v3478
    %3563 = vmatpush.bf16.msra.mxu0 %v3476
    %3564 = vmatpush.bf16.msra.mxu0 %v3474
    %3565 = vmatpush.bf16.msra.mxu0 %v3472
    %3566 = vmatpush.bf16.msra.mxu0 %v3470
    %3567 = vmatmul.bf16.gmra.mxu0 %v3040
    %v3568 = vpop.f32.mrf.mxu0
    %v3569 = vadd.f32 %v3555, %v3568
    %v3570 = vpop.f32.mrf.mxu0
    %v3571 = vadd.f32 %v3557, %v3570
    %3572 = vdwg.mxu0
    %v3573 = vld [vmem:[#allocation2] sm:$0xfc]
    %v3574 = vld [vmem:[#allocation2 + $0x8] sm:$0xfc]
    %v3575 = vld [vmem:[#allocation2 + $0x10] sm:$0x3]
    %v3576 = vld [vmem:[#allocation2 + $0x18] sm:$0x3]
    %v3577 = vld [vmem:[#allocation2 + $0x20] sm:$0xfc]
    %v3578 = vld [vmem:[#allocation2 + $0x28] sm:$0xfc]
    %v3579 = vld [vmem:[#allocation2 + $0x30] sm:$0x3]
    %v3580 = vld [vmem:[#allocation2 + $0x38] sm:$0x3]
    %v3589 = vrot.slane %v3573, 2
    %v3590 = vrot.slane %v3575, 2
    %v3591 = vsel %vm711, %v3589, %v3590
    %v3592 = vrot.slane %v3574, 2
    %v3593 = vrot.slane %v3576, 2
    %v3594 = vsel %vm711, %v3592, %v3593
    %v3595 = vrot.slane %v3577, 2
    %v3596 = vrot.slane %v3579, 2
    %v3597 = vsel %vm711, %v3595, %v3596
    %v3598 = vrot.slane %v3578, 2
    %v3599 = vrot.slane %v3580, 2
    %v3600 = vsel %vm711, %v3598, %v3599
    %v3605 = vpack.c.bf16 %v3597, %v3591
    %v3606 = vpack.c.bf16 %v3600, %v3594
    %s3607 = scalar_lea.vmem [#allocation4], 3072
    %v3608 = vld [vmem:[%s3607] sm:$0xff]
    %v3609 = vld [vmem:[%s3607 + $0x8] sm:$0xff]
    %v3610 = vld [vmem:[%s3607 + $0x10] sm:$0xff]
    %v3611 = vld [vmem:[%s3607 + $0x18] sm:$0xff]
    %v3612 = vld [vmem:[%s3607 + $0x20] sm:$0xff]
    %v3613 = vld [vmem:[%s3607 + $0x28] sm:$0xff]
    %v3614 = vld [vmem:[%s3607 + $0x30] sm:$0xff]
    %v3615 = vld [vmem:[%s3607 + $0x38] sm:$0xff]
    %v3616 = vld [vmem:[%s3607 + $0x40] sm:$0xff]
    %v3617 = vld [vmem:[%s3607 + $0x48] sm:$0xff]
    %v3618 = vld [vmem:[%s3607 + $0x50] sm:$0xff]
    %v3619 = vld [vmem:[%s3607 + $0x58] sm:$0xff]
    %v3620 = vld [vmem:[%s3607 + $0x60] sm:$0xff]
    %v3621 = vld [vmem:[%s3607 + $0x68] sm:$0xff]
    %v3622 = vld [vmem:[%s3607 + $0x70] sm:$0xff]
    %v3623 = vld [vmem:[%s3607 + $0x78] sm:$0xff]
    %v3624 = vld [vmem:[%s3607 + $0x80] sm:$0xff]
    %v3625 = vld [vmem:[%s3607 + $0x88] sm:$0xff]
    %v3626 = vld [vmem:[%s3607 + $0x90] sm:$0xff]
    %v3627 = vld [vmem:[%s3607 + $0x98] sm:$0xff]
    %v3628 = vld [vmem:[%s3607 + $0xa0] sm:$0xff]
    %v3629 = vld [vmem:[%s3607 + $0xa8] sm:$0xff]
    %v3630 = vld [vmem:[%s3607 + $0xb0] sm:$0xff]
    %v3631 = vld [vmem:[%s3607 + $0xb8] sm:$0xff]
    %v3632 = vld [vmem:[%s3607 + $0xc0] sm:$0xff]
    %v3633 = vld [vmem:[%s3607 + $0xc8] sm:$0xff]
    %v3634 = vld [vmem:[%s3607 + $0xd0] sm:$0xff]
    %v3635 = vld [vmem:[%s3607 + $0xd8] sm:$0xff]
    %v3636 = vld [vmem:[%s3607 + $0xe0] sm:$0xff]
    %v3637 = vld [vmem:[%s3607 + $0xe8] sm:$0xff]
    %v3638 = vld [vmem:[%s3607 + $0xf0] sm:$0xff]
    %v3639 = vld [vmem:[%s3607 + $0xf8] sm:$0xff]
    %v3672 = vunpack.c.l.b16 %v3608
    %v3673 = vunpack.c.h.b16 %v3608
    %v3674 = vunpack.c.l.b16 %v3609
    %v3675 = vunpack.c.h.b16 %v3609
    %v3676 = vunpack.c.l.b16 %v3610
    %v3677 = vunpack.c.h.b16 %v3610
    %v3678 = vunpack.c.l.b16 %v3611
    %v3679 = vunpack.c.h.b16 %v3611
    %v3680 = vunpack.c.l.b16 %v3612
    %v3681 = vunpack.c.h.b16 %v3612
    %v3682 = vunpack.c.l.b16 %v3613
    %v3683 = vunpack.c.h.b16 %v3613
    %v3684 = vunpack.c.l.b16 %v3614
    %v3685 = vunpack.c.h.b16 %v3614
    %v3686 = vunpack.c.l.b16 %v3615
    %v3687 = vunpack.c.h.b16 %v3615
    %v3688 = vunpack.c.l.b16 %v3616
    %v3689 = vunpack.c.h.b16 %v3616
    %v3690 = vunpack.c.l.b16 %v3617
    %v3691 = vunpack.c.h.b16 %v3617
    %v3692 = vunpack.c.l.b16 %v3618
    %v3693 = vunpack.c.h.b16 %v3618
    %v3694 = vunpack.c.l.b16 %v3619
    %v3695 = vunpack.c.h.b16 %v3619
    %v3696 = vunpack.c.l.b16 %v3620
    %v3697 = vunpack.c.h.b16 %v3620
    %v3698 = vunpack.c.l.b16 %v3621
    %v3699 = vunpack.c.h.b16 %v3621
    %v3700 = vunpack.c.l.b16 %v3622
    %v3701 = vunpack.c.h.b16 %v3622
    %v3702 = vunpack.c.l.b16 %v3623
    %v3703 = vunpack.c.h.b16 %v3623
    %v3704 = vunpack.c.l.b16 %v3624
    %v3705 = vunpack.c.h.b16 %v3624
    %v3706 = vunpack.c.l.b16 %v3625
    %v3707 = vunpack.c.h.b16 %v3625
    %v3708 = vunpack.c.l.b16 %v3626
    %v3709 = vunpack.c.h.b16 %v3626
    %v3710 = vunpack.c.l.b16 %v3627
    %v3711 = vunpack.c.h.b16 %v3627
    %v3712 = vunpack.c.l.b16 %v3628
    %v3713 = vunpack.c.h.b16 %v3628
    %v3714 = vunpack.c.l.b16 %v3629
    %v3715 = vunpack.c.h.b16 %v3629
    %v3716 = vunpack.c.l.b16 %v3630
    %v3717 = vunpack.c.h.b16 %v3630
    %v3718 = vunpack.c.l.b16 %v3631
    %v3719 = vunpack.c.h.b16 %v3631
    %v3720 = vunpack.c.l.b16 %v3632
    %v3721 = vunpack.c.h.b16 %v3632
    %v3722 = vunpack.c.l.b16 %v3633
    %v3723 = vunpack.c.h.b16 %v3633
    %v3724 = vunpack.c.l.b16 %v3634
    %v3725 = vunpack.c.h.b16 %v3634
    %v3726 = vunpack.c.l.b16 %v3635
    %v3727 = vunpack.c.h.b16 %v3635
    %v3728 = vunpack.c.l.b16 %v3636
    %v3729 = vunpack.c.h.b16 %v3636
    %v3730 = vunpack.c.l.b16 %v3637
    %v3731 = vunpack.c.h.b16 %v3637
    %v3732 = vunpack.c.l.b16 %v3638
    %v3733 = vunpack.c.h.b16 %v3638
    %v3734 = vunpack.c.l.b16 %v3639
    %v3735 = vunpack.c.h.b16 %v3639
    %v3736 = vpack.c.b16 %v3674, %v3672
    %v3737 = vpack.c.b16 %v3675, %v3673
    %v3738 = vpack.c.b16 %v3678, %v3676
    %v3739 = vpack.c.b16 %v3679, %v3677
    %v3740 = vpack.c.b16 %v3682, %v3680
    %v3741 = vpack.c.b16 %v3683, %v3681
    %v3742 = vpack.c.b16 %v3686, %v3684
    %v3743 = vpack.c.b16 %v3687, %v3685
    %v3744 = vpack.c.b16 %v3690, %v3688
    %v3745 = vpack.c.b16 %v3691, %v3689
    %v3746 = vpack.c.b16 %v3694, %v3692
    %v3747 = vpack.c.b16 %v3695, %v3693
    %v3748 = vpack.c.b16 %v3698, %v3696
    %v3749 = vpack.c.b16 %v3699, %v3697
    %v3750 = vpack.c.b16 %v3702, %v3700
    %v3751 = vpack.c.b16 %v3703, %v3701
    %v3752 = vpack.c.b16 %v3706, %v3704
    %v3753 = vpack.c.b16 %v3707, %v3705
    %v3754 = vpack.c.b16 %v3710, %v3708
    %v3755 = vpack.c.b16 %v3711, %v3709
    %v3756 = vpack.c.b16 %v3714, %v3712
    %v3757 = vpack.c.b16 %v3715, %v3713
    %v3758 = vpack.c.b16 %v3718, %v3716
    %v3759 = vpack.c.b16 %v3719, %v3717
    %v3760 = vpack.c.b16 %v3722, %v3720
    %v3761 = vpack.c.b16 %v3723, %v3721
    %v3762 = vpack.c.b16 %v3726, %v3724
    %v3763 = vpack.c.b16 %v3727, %v3725
    %v3764 = vpack.c.b16 %v3730, %v3728
    %v3765 = vpack.c.b16 %v3731, %v3729
    %v3766 = vpack.c.b16 %v3734, %v3732
    %v3767 = vpack.c.b16 %v3735, %v3733
    %3800 = vmatpush.bf16.msra.mxu0 %v3750
    %3801 = vmatpush.bf16.msra.mxu0 %v3748
    %3802 = vmatpush.bf16.msra.mxu0 %v3746
    %3803 = vmatpush.bf16.msra.mxu0 %v3744
    %3804 = vmatpush.bf16.msra.mxu0 %v3742
    %3805 = vmatpush.bf16.msra.mxu0 %v3740
    %3806 = vmatpush.bf16.msra.mxu0 %v3738
    %3807 = vmatpush.bf16.msra.mxu0 %v3736
    %3808 = vmatmul.bf16.gmra.mxu0 %v3605
    %v3809 = vpop.f32.mrf.mxu0
    %v3810 = vadd.f32 0.0, %v3809
    %v3811 = vpop.f32.mrf.mxu0
    %v3812 = vadd.f32 0.0, %v3811
    %3813 = vdwg.mxu0
    %3814 = vmatpush.bf16.msra.mxu0 %v3766
    %3815 = vmatpush.bf16.msra.mxu0 %v3764
    %3816 = vmatpush.bf16.msra.mxu0 %v3762
    %3817 = vmatpush.bf16.msra.mxu0 %v3760
    %3818 = vmatpush.bf16.msra.mxu0 %v3758
    %3819 = vmatpush.bf16.msra.mxu0 %v3756
    %3820 = vmatpush.bf16.msra.mxu0 %v3754
    %3821 = vmatpush.bf16.msra.mxu0 %v3752
    %3822 = vmatmul.bf16.gmra.mxu0 %v3606
    %v3823 = vpop.f32.mrf.mxu0
    %v3824 = vadd.f32 %v3810, %v3823
    %v3825 = vpop.f32.mrf.mxu0
    %v3826 = vadd.f32 %v3812, %v3825
    %3827 = vdwg.mxu0
    %3828 = vmatpush.bf16.msra.mxu0 %v3751
    %3829 = vmatpush.bf16.msra.mxu0 %v3749
    %3830 = vmatpush.bf16.msra.mxu0 %v3747
    %3831 = vmatpush.bf16.msra.mxu0 %v3745
    %3832 = vmatpush.bf16.msra.mxu0 %v3743
    %3833 = vmatpush.bf16.msra.mxu0 %v3741
    %3834 = vmatpush.bf16.msra.mxu0 %v3739
    %3835 = vmatpush.bf16.msra.mxu0 %v3737
    %3836 = vmatmul.bf16.gmra.mxu0 %v3605
    %v3837 = vpop.f32.mrf.mxu0
    %v3838 = vadd.f32 0.0, %v3837
    %v3839 = vpop.f32.mrf.mxu0
    %v3840 = vadd.f32 0.0, %v3839
    %3841 = vdwg.mxu0
    %3842 = vmatpush.bf16.msra.mxu0 %v3767
    %3843 = vmatpush.bf16.msra.mxu0 %v3765
    %3844 = vmatpush.bf16.msra.mxu0 %v3763
    %3845 = vmatpush.bf16.msra.mxu0 %v3761
    %3846 = vmatpush.bf16.msra.mxu0 %v3759
    %3847 = vmatpush.bf16.msra.mxu0 %v3757
    %3848 = vmatpush.bf16.msra.mxu0 %v3755
    %3849 = vmatpush.bf16.msra.mxu0 %v3753
    %3850 = vmatmul.bf16.gmra.mxu0 %v3606
    %v3851 = vpop.f32.mrf.mxu0
    %v3852 = vadd.f32 %v3838, %v3851
    %v3853 = vpop.f32.mrf.mxu0
    %v3854 = vadd.f32 %v3840, %v3853
    %3855 = vdwg.mxu0
    %v3856 = vadd.f32 %v3541, %v3824
    %v3857 = vadd.f32 %v3569, %v3852
    %v3858 = vadd.f32 %v3543, %v3826
    %v3859 = vadd.f32 %v3571, %v3854
    %v3860 = vld [vmem:[#allocation2] sm:$0xf8]
    %v3861 = vld [vmem:[#allocation2 + $0x8] sm:$0xf8]
    %v3862 = vld [vmem:[#allocation2 + $0x10] sm:$0x7]
    %v3863 = vld [vmem:[#allocation2 + $0x18] sm:$0x7]
    %v3864 = vld [vmem:[#allocation2 + $0x20] sm:$0xf8]
    %v3865 = vld [vmem:[#allocation2 + $0x28] sm:$0xf8]
    %v3866 = vld [vmem:[#allocation2 + $0x30] sm:$0x7]
    %v3867 = vld [vmem:[#allocation2 + $0x38] sm:$0x7]
    %v3876 = vrot.slane %v3860, 3
    %v3877 = vrot.slane %v3862, 3
    %v3878 = vsel %vm999, %v3876, %v3877
    %v3879 = vrot.slane %v3861, 3
    %v3880 = vrot.slane %v3863, 3
    %v3881 = vsel %vm999, %v3879, %v3880
    %v3882 = vrot.slane %v3864, 3
    %v3883 = vrot.slane %v3866, 3
    %v3884 = vsel %vm999, %v3882, %v3883
    %v3885 = vrot.slane %v3865, 3
    %v3886 = vrot.slane %v3867, 3
    %v3887 = vsel %vm999, %v3885, %v3886
    %v3892 = vpack.c.bf16 %v3884, %v3878
    %v3893 = vpack.c.bf16 %v3887, %v3881
    %s3894 = scalar_lea.vmem [#allocation4], 3328
    %v3895 = vld [vmem:[%s3894] sm:$0xff]
    %v3896 = vld [vmem:[%s3894 + $0x8] sm:$0xff]
    %v3897 = vld [vmem:[%s3894 + $0x10] sm:$0xff]
    %v3898 = vld [vmem:[%s3894 + $0x18] sm:$0xff]
    %v3899 = vld [vmem:[%s3894 + $0x20] sm:$0xff]
    %v3900 = vld [vmem:[%s3894 + $0x28] sm:$0xff]
    %v3901 = vld [vmem:[%s3894 + $0x30] sm:$0xff]
    %v3902 = vld [vmem:[%s3894 + $0x38] sm:$0xff]
    %v3903 = vld [vmem:[%s3894 + $0x40] sm:$0xff]
    %v3904 = vld [vmem:[%s3894 + $0x48] sm:$0xff]
    %v3905 = vld [vmem:[%s3894 + $0x50] sm:$0xff]
    %v3906 = vld [vmem:[%s3894 + $0x58] sm:$0xff]
    %v3907 = vld [vmem:[%s3894 + $0x60] sm:$0xff]
    %v3908 = vld [vmem:[%s3894 + $0x68] sm:$0xff]
    %v3909 = vld [vmem:[%s3894 + $0x70] sm:$0xff]
    %v3910 = vld [vmem:[%s3894 + $0x78] sm:$0xff]
    %v3911 = vld [vmem:[%s3894 + $0x80] sm:$0xff]
    %v3912 = vld [vmem:[%s3894 + $0x88] sm:$0xff]
    %v3913 = vld [vmem:[%s3894 + $0x90] sm:$0xff]
    %v3914 = vld [vmem:[%s3894 + $0x98] sm:$0xff]
    %v3915 = vld [vmem:[%s3894 + $0xa0] sm:$0xff]
    %v3916 = vld [vmem:[%s3894 + $0xa8] sm:$0xff]
    %v3917 = vld [vmem:[%s3894 + $0xb0] sm:$0xff]
    %v3918 = vld [vmem:[%s3894 + $0xb8] sm:$0xff]
    %v3919 = vld [vmem:[%s3894 + $0xc0] sm:$0xff]
    %v3920 = vld [vmem:[%s3894 + $0xc8] sm:$0xff]
    %v3921 = vld [vmem:[%s3894 + $0xd0] sm:$0xff]
    %v3922 = vld [vmem:[%s3894 + $0xd8] sm:$0xff]
    %v3923 = vld [vmem:[%s3894 + $0xe0] sm:$0xff]
    %v3924 = vld [vmem:[%s3894 + $0xe8] sm:$0xff]
    %v3925 = vld [vmem:[%s3894 + $0xf0] sm:$0xff]
    %v3926 = vld [vmem:[%s3894 + $0xf8] sm:$0xff]
    %v3959 = vunpack.c.l.b16 %v3895
    %v3960 = vunpack.c.h.b16 %v3895
    %v3961 = vunpack.c.l.b16 %v3896
    %v3962 = vunpack.c.h.b16 %v3896
    %v3963 = vunpack.c.l.b16 %v3897
    %v3964 = vunpack.c.h.b16 %v3897
    %v3965 = vunpack.c.l.b16 %v3898
    %v3966 = vunpack.c.h.b16 %v3898
    %v3967 = vunpack.c.l.b16 %v3899
    %v3968 = vunpack.c.h.b16 %v3899
    %v3969 = vunpack.c.l.b16 %v3900
    %v3970 = vunpack.c.h.b16 %v3900
    %v3971 = vunpack.c.l.b16 %v3901
    %v3972 = vunpack.c.h.b16 %v3901
    %v3973 = vunpack.c.l.b16 %v3902
    %v3974 = vunpack.c.h.b16 %v3902
    %v3975 = vunpack.c.l.b16 %v3903
    %v3976 = vunpack.c.h.b16 %v3903
    %v3977 = vunpack.c.l.b16 %v3904
    %v3978 = vunpack.c.h.b16 %v3904
    %v3979 = vunpack.c.l.b16 %v3905
    %v3980 = vunpack.c.h.b16 %v3905
    %v3981 = vunpack.c.l.b16 %v3906
    %v3982 = vunpack.c.h.b16 %v3906
    %v3983 = vunpack.c.l.b16 %v3907
    %v3984 = vunpack.c.h.b16 %v3907
    %v3985 = vunpack.c.l.b16 %v3908
    %v3986 = vunpack.c.h.b16 %v3908
    %v3987 = vunpack.c.l.b16 %v3909
    %v3988 = vunpack.c.h.b16 %v3909
    %v3989 = vunpack.c.l.b16 %v3910
    %v3990 = vunpack.c.h.b16 %v3910
    %v3991 = vunpack.c.l.b16 %v3911
    %v3992 = vunpack.c.h.b16 %v3911
    %v3993 = vunpack.c.l.b16 %v3912
    %v3994 = vunpack.c.h.b16 %v3912
    %v3995 = vunpack.c.l.b16 %v3913
    %v3996 = vunpack.c.h.b16 %v3913
    %v3997 = vunpack.c.l.b16 %v3914
    %v3998 = vunpack.c.h.b16 %v3914
    %v3999 = vunpack.c.l.b16 %v3915
    %v4000 = vunpack.c.h.b16 %v3915
    %v4001 = vunpack.c.l.b16 %v3916
    %v4002 = vunpack.c.h.b16 %v3916
    %v4003 = vunpack.c.l.b16 %v3917
    %v4004 = vunpack.c.h.b16 %v3917
    %v4005 = vunpack.c.l.b16 %v3918
    %v4006 = vunpack.c.h.b16 %v3918
    %v4007 = vunpack.c.l.b16 %v3919
    %v4008 = vunpack.c.h.b16 %v3919
    %v4009 = vunpack.c.l.b16 %v3920
    %v4010 = vunpack.c.h.b16 %v3920
    %v4011 = vunpack.c.l.b16 %v3921
    %v4012 = vunpack.c.h.b16 %v3921
    %v4013 = vunpack.c.l.b16 %v3922
    %v4014 = vunpack.c.h.b16 %v3922
    %v4015 = vunpack.c.l.b16 %v3923
    %v4016 = vunpack.c.h.b16 %v3923
    %v4017 = vunpack.c.l.b16 %v3924
    %v4018 = vunpack.c.h.b16 %v3924
    %v4019 = vunpack.c.l.b16 %v3925
    %v4020 = vunpack.c.h.b16 %v3925
    %v4021 = vunpack.c.l.b16 %v3926
    %v4022 = vunpack.c.h.b16 %v3926
    %v4023 = vpack.c.b16 %v3961, %v3959
    %v4024 = vpack.c.b16 %v3962, %v3960
    %v4025 = vpack.c.b16 %v3965, %v3963
    %v4026 = vpack.c.b16 %v3966, %v3964
    %v4027 = vpack.c.b16 %v3969, %v3967
    %v4028 = vpack.c.b16 %v3970, %v3968
    %v4029 = vpack.c.b16 %v3973, %v3971
    %v4030 = vpack.c.b16 %v3974, %v3972
    %v4031 = vpack.c.b16 %v3977, %v3975
    %v4032 = vpack.c.b16 %v3978, %v3976
    %v4033 = vpack.c.b16 %v3981, %v3979
    %v4034 = vpack.c.b16 %v3982, %v3980
    %v4035 = vpack.c.b16 %v3985, %v3983
    %v4036 = vpack.c.b16 %v3986, %v3984
    %v4037 = vpack.c.b16 %v3989, %v3987
    %v4038 = vpack.c.b16 %v3990, %v3988
    %v4039 = vpack.c.b16 %v3993, %v3991
    %v4040 = vpack.c.b16 %v3994, %v3992
    %v4041 = vpack.c.b16 %v3997, %v3995
    %v4042 = vpack.c.b16 %v3998, %v3996
    %v4043 = vpack.c.b16 %v4001, %v3999
    %v4044 = vpack.c.b16 %v4002, %v4000
    %v4045 = vpack.c.b16 %v4005, %v4003
    %v4046 = vpack.c.b16 %v4006, %v4004
    %v4047 = vpack.c.b16 %v4009, %v4007
    %v4048 = vpack.c.b16 %v4010, %v4008
    %v4049 = vpack.c.b16 %v4013, %v4011
    %v4050 = vpack.c.b16 %v4014, %v4012
    %v4051 = vpack.c.b16 %v4017, %v4015
    %v4052 = vpack.c.b16 %v4018, %v4016
    %v4053 = vpack.c.b16 %v4021, %v4019
    %v4054 = vpack.c.b16 %v4022, %v4020
    %4087 = vmatpush.bf16.msra.mxu0 %v4037
    %4088 = vmatpush.bf16.msra.mxu0 %v4035
    %4089 = vmatpush.bf16.msra.mxu0 %v4033
    %4090 = vmatpush.bf16.msra.mxu0 %v4031
    %4091 = vmatpush.bf16.msra.mxu0 %v4029
    %4092 = vmatpush.bf16.msra.mxu0 %v4027
    %4093 = vmatpush.bf16.msra.mxu0 %v4025
    %4094 = vmatpush.bf16.msra.mxu0 %v4023
    %4095 = vmatmul.bf16.gmra.mxu0 %v3892
    %v4096 = vpop.f32.mrf.mxu0
    %v4097 = vadd.f32 0.0, %v4096
    %v4098 = vpop.f32.mrf.mxu0
    %v4099 = vadd.f32 0.0, %v4098
    %4100 = vdwg.mxu0
    %4101 = vmatpush.bf16.msra.mxu0 %v4053
    %4102 = vmatpush.bf16.msra.mxu0 %v4051
    %4103 = vmatpush.bf16.msra.mxu0 %v4049
    %4104 = vmatpush.bf16.msra.mxu0 %v4047
    %4105 = vmatpush.bf16.msra.mxu0 %v4045
    %4106 = vmatpush.bf16.msra.mxu0 %v4043
    %4107 = vmatpush.bf16.msra.mxu0 %v4041
    %4108 = vmatpush.bf16.msra.mxu0 %v4039
    %4109 = vmatmul.bf16.gmra.mxu0 %v3893
    %v4110 = vpop.f32.mrf.mxu0
    %v4111 = vadd.f32 %v4097, %v4110
    %v4112 = vpop.f32.mrf.mxu0
    %v4113 = vadd.f32 %v4099, %v4112
    %4114 = vdwg.mxu0
    %4115 = vmatpush.bf16.msra.mxu0 %v4038
    %4116 = vmatpush.bf16.msra.mxu0 %v4036
    %4117 = vmatpush.bf16.msra.mxu0 %v4034
    %4118 = vmatpush.bf16.msra.mxu0 %v4032
    %4119 = vmatpush.bf16.msra.mxu0 %v4030
    %4120 = vmatpush.bf16.msra.mxu0 %v4028
    %4121 = vmatpush.bf16.msra.mxu0 %v4026
    %4122 = vmatpush.bf16.msra.mxu0 %v4024
    %4123 = vmatmul.bf16.gmra.mxu0 %v3892
    %v4124 = vpop.f32.mrf.mxu0
    %v4125 = vadd.f32 0.0, %v4124
    %v4126 = vpop.f32.mrf.mxu0
    %v4127 = vadd.f32 0.0, %v4126
    %4128 = vdwg.mxu0
    %4129 = vmatpush.bf16.msra.mxu0 %v4054
    %4130 = vmatpush.bf16.msra.mxu0 %v4052
    %4131 = vmatpush.bf16.msra.mxu0 %v4050
    %4132 = vmatpush.bf16.msra.mxu0 %v4048
    %4133 = vmatpush.bf16.msra.mxu0 %v4046
    %4134 = vmatpush.bf16.msra.mxu0 %v4044
    %4135 = vmatpush.bf16.msra.mxu0 %v4042
    %4136 = vmatpush.bf16.msra.mxu0 %v4040
    %4137 = vmatmul.bf16.gmra.mxu0 %v3893
    %v4138 = vpop.f32.mrf.mxu0
    %v4139 = vadd.f32 %v4125, %v4138
    %v4140 = vpop.f32.mrf.mxu0
    %v4141 = vadd.f32 %v4127, %v4140
    %4142 = vdwg.mxu0
    %v4143 = vadd.f32 %v3856, %v4111
    %v4144 = vadd.f32 %v3857, %v4139
    %v4145 = vadd.f32 %v3858, %v4113
    %v4146 = vadd.f32 %v3859, %v4141
    %v4147 = vld [vmem:[#allocation2] sm:$0xf0]
    %v4148 = vld [vmem:[#allocation2 + $0x8] sm:$0xf0]
    %v4149 = vld [vmem:[#allocation2 + $0x10] sm:$0xf]
    %v4150 = vld [vmem:[#allocation2 + $0x18] sm:$0xf]
    %v4151 = vld [vmem:[#allocation2 + $0x20] sm:$0xf0]
    %v4152 = vld [vmem:[#allocation2 + $0x28] sm:$0xf0]
    %v4153 = vld [vmem:[#allocation2 + $0x30] sm:$0xf]
    %v4154 = vld [vmem:[#allocation2 + $0x38] sm:$0xf]
    %v4163 = vrot.slane %v4147, 4
    %v4164 = vrot.slane %v4149, 4
    %v4165 = vsel %vm1287, %v4163, %v4164
    %v4166 = vrot.slane %v4148, 4
    %v4167 = vrot.slane %v4150, 4
    %v4168 = vsel %vm1287, %v4166, %v4167
    %v4169 = vrot.slane %v4151, 4
    %v4170 = vrot.slane %v4153, 4
    %v4171 = vsel %vm1287, %v4169, %v4170
    %v4172 = vrot.slane %v4152, 4
    %v4173 = vrot.slane %v4154, 4
    %v4174 = vsel %vm1287, %v4172, %v4173
    %v4179 = vpack.c.bf16 %v4171, %v4165
    %v4180 = vpack.c.bf16 %v4174, %v4168
    %s4181 = scalar_lea.vmem [#allocation4], 3584
    %v4182 = vld [vmem:[%s4181] sm:$0xff]
    %v4183 = vld [vmem:[%s4181 + $0x8] sm:$0xff]
    %v4184 = vld [vmem:[%s4181 + $0x10] sm:$0xff]
    %v4185 = vld [vmem:[%s4181 + $0x18] sm:$0xff]
    %v4186 = vld [vmem:[%s4181 + $0x20] sm:$0xff]
    %v4187 = vld [vmem:[%s4181 + $0x28] sm:$0xff]
    %v4188 = vld [vmem:[%s4181 + $0x30] sm:$0xff]
    %v4189 = vld [vmem:[%s4181 + $0x38] sm:$0xff]
    %v4190 = vld [vmem:[%s4181 + $0x40] sm:$0xff]
    %v4191 = vld [vmem:[%s4181 + $0x48] sm:$0xff]
    %v4192 = vld [vmem:[%s4181 + $0x50] sm:$0xff]
    %v4193 = vld [vmem:[%s4181 + $0x58] sm:$0xff]
    %v4194 = vld [vmem:[%s4181 + $0x60] sm:$0xff]
    %v4195 = vld [vmem:[%s4181 + $0x68] sm:$0xff]
    %v4196 = vld [vmem:[%s4181 + $0x70] sm:$0xff]
    %v4197 = vld [vmem:[%s4181 + $0x78] sm:$0xff]
    %v4198 = vld [vmem:[%s4181 + $0x80] sm:$0xff]
    %v4199 = vld [vmem:[%s4181 + $0x88] sm:$0xff]
    %v4200 = vld [vmem:[%s4181 + $0x90] sm:$0xff]
    %v4201 = vld [vmem:[%s4181 + $0x98] sm:$0xff]
    %v4202 = vld [vmem:[%s4181 + $0xa0] sm:$0xff]
    %v4203 = vld [vmem:[%s4181 + $0xa8] sm:$0xff]
    %v4204 = vld [vmem:[%s4181 + $0xb0] sm:$0xff]
    %v4205 = vld [vmem:[%s4181 + $0xb8] sm:$0xff]
    %v4206 = vld [vmem:[%s4181 + $0xc0] sm:$0xff]
    %v4207 = vld [vmem:[%s4181 + $0xc8] sm:$0xff]
    %v4208 = vld [vmem:[%s4181 + $0xd0] sm:$0xff]
    %v4209 = vld [vmem:[%s4181 + $0xd8] sm:$0xff]
    %v4210 = vld [vmem:[%s4181 + $0xe0] sm:$0xff]
    %v4211 = vld [vmem:[%s4181 + $0xe8] sm:$0xff]
    %v4212 = vld [vmem:[%s4181 + $0xf0] sm:$0xff]
    %v4213 = vld [vmem:[%s4181 + $0xf8] sm:$0xff]
    %v4246 = vunpack.c.l.b16 %v4182
    %v4247 = vunpack.c.h.b16 %v4182
    %v4248 = vunpack.c.l.b16 %v4183
    %v4249 = vunpack.c.h.b16 %v4183
    %v4250 = vunpack.c.l.b16 %v4184
    %v4251 = vunpack.c.h.b16 %v4184
    %v4252 = vunpack.c.l.b16 %v4185
    %v4253 = vunpack.c.h.b16 %v4185
    %v4254 = vunpack.c.l.b16 %v4186
    %v4255 = vunpack.c.h.b16 %v4186
    %v4256 = vunpack.c.l.b16 %v4187
    %v4257 = vunpack.c.h.b16 %v4187
    %v4258 = vunpack.c.l.b16 %v4188
    %v4259 = vunpack.c.h.b16 %v4188
    %v4260 = vunpack.c.l.b16 %v4189
    %v4261 = vunpack.c.h.b16 %v4189
    %v4262 = vunpack.c.l.b16 %v4190
    %v4263 = vunpack.c.h.b16 %v4190
    %v4264 = vunpack.c.l.b16 %v4191
    %v4265 = vunpack.c.h.b16 %v4191
    %v4266 = vunpack.c.l.b16 %v4192
    %v4267 = vunpack.c.h.b16 %v4192
    %v4268 = vunpack.c.l.b16 %v4193
    %v4269 = vunpack.c.h.b16 %v4193
    %v4270 = vunpack.c.l.b16 %v4194
    %v4271 = vunpack.c.h.b16 %v4194
    %v4272 = vunpack.c.l.b16 %v4195
    %v4273 = vunpack.c.h.b16 %v4195
    %v4274 = vunpack.c.l.b16 %v4196
    %v4275 = vunpack.c.h.b16 %v4196
    %v4276 = vunpack.c.l.b16 %v4197
    %v4277 = vunpack.c.h.b16 %v4197
    %v4278 = vunpack.c.l.b16 %v4198
    %v4279 = vunpack.c.h.b16 %v4198
    %v4280 = vunpack.c.l.b16 %v4199
    %v4281 = vunpack.c.h.b16 %v4199
    %v4282 = vunpack.c.l.b16 %v4200
    %v4283 = vunpack.c.h.b16 %v4200
    %v4284 = vunpack.c.l.b16 %v4201
    %v4285 = vunpack.c.h.b16 %v4201
    %v4286 = vunpack.c.l.b16 %v4202
    %v4287 = vunpack.c.h.b16 %v4202
    %v4288 = vunpack.c.l.b16 %v4203
    %v4289 = vunpack.c.h.b16 %v4203
    %v4290 = vunpack.c.l.b16 %v4204
    %v4291 = vunpack.c.h.b16 %v4204
    %v4292 = vunpack.c.l.b16 %v4205
    %v4293 = vunpack.c.h.b16 %v4205
    %v4294 = vunpack.c.l.b16 %v4206
    %v4295 = vunpack.c.h.b16 %v4206
    %v4296 = vunpack.c.l.b16 %v4207
    %v4297 = vunpack.c.h.b16 %v4207
    %v4298 = vunpack.c.l.b16 %v4208
    %v4299 = vunpack.c.h.b16 %v4208
    %v4300 = vunpack.c.l.b16 %v4209
    %v4301 = vunpack.c.h.b16 %v4209
    %v4302 = vunpack.c.l.b16 %v4210
    %v4303 = vunpack.c.h.b16 %v4210
    %v4304 = vunpack.c.l.b16 %v4211
    %v4305 = vunpack.c.h.b16 %v4211
    %v4306 = vunpack.c.l.b16 %v4212
    %v4307 = vunpack.c.h.b16 %v4212
    %v4308 = vunpack.c.l.b16 %v4213
    %v4309 = vunpack.c.h.b16 %v4213
    %v4310 = vpack.c.b16 %v4248, %v4246
    %v4311 = vpack.c.b16 %v4249, %v4247
    %v4312 = vpack.c.b16 %v4252, %v4250
    %v4313 = vpack.c.b16 %v4253, %v4251
    %v4314 = vpack.c.b16 %v4256, %v4254
    %v4315 = vpack.c.b16 %v4257, %v4255
    %v4316 = vpack.c.b16 %v4260, %v4258
    %v4317 = vpack.c.b16 %v4261, %v4259
    %v4318 = vpack.c.b16 %v4264, %v4262
    %v4319 = vpack.c.b16 %v4265, %v4263
    %v4320 = vpack.c.b16 %v4268, %v4266
    %v4321 = vpack.c.b16 %v4269, %v4267
    %v4322 = vpack.c.b16 %v4272, %v4270
    %v4323 = vpack.c.b16 %v4273, %v4271
    %v4324 = vpack.c.b16 %v4276, %v4274
    %v4325 = vpack.c.b16 %v4277, %v4275
    %v4326 = vpack.c.b16 %v4280, %v4278
    %v4327 = vpack.c.b16 %v4281, %v4279
    %v4328 = vpack.c.b16 %v4284, %v4282
    %v4329 = vpack.c.b16 %v4285, %v4283
    %v4330 = vpack.c.b16 %v4288, %v4286
    %v4331 = vpack.c.b16 %v4289, %v4287
    %v4332 = vpack.c.b16 %v4292, %v4290
    %v4333 = vpack.c.b16 %v4293, %v4291
    %v4334 = vpack.c.b16 %v4296, %v4294
    %v4335 = vpack.c.b16 %v4297, %v4295
    %v4336 = vpack.c.b16 %v4300, %v4298
    %v4337 = vpack.c.b16 %v4301, %v4299
    %v4338 = vpack.c.b16 %v4304, %v4302
    %v4339 = vpack.c.b16 %v4305, %v4303
    %v4340 = vpack.c.b16 %v4308, %v4306
    %v4341 = vpack.c.b16 %v4309, %v4307
    %4374 = vmatpush.bf16.msra.mxu0 %v4324
    %4375 = vmatpush.bf16.msra.mxu0 %v4322
    %4376 = vmatpush.bf16.msra.mxu0 %v4320
    %4377 = vmatpush.bf16.msra.mxu0 %v4318
    %4378 = vmatpush.bf16.msra.mxu0 %v4316
    %4379 = vmatpush.bf16.msra.mxu0 %v4314
    %4380 = vmatpush.bf16.msra.mxu0 %v4312
    %4381 = vmatpush.bf16.msra.mxu0 %v4310
    %4382 = vmatmul.bf16.gmra.mxu0 %v4179
    %v4383 = vpop.f32.mrf.mxu0
    %v4384 = vadd.f32 0.0, %v4383
    %v4385 = vpop.f32.mrf.mxu0
    %v4386 = vadd.f32 0.0, %v4385
    %4387 = vdwg.mxu0
    %4388 = vmatpush.bf16.msra.mxu0 %v4340
    %4389 = vmatpush.bf16.msra.mxu0 %v4338
    %4390 = vmatpush.bf16.msra.mxu0 %v4336
    %4391 = vmatpush.bf16.msra.mxu0 %v4334
    %4392 = vmatpush.bf16.msra.mxu0 %v4332
    %4393 = vmatpush.bf16.msra.mxu0 %v4330
    %4394 = vmatpush.bf16.msra.mxu0 %v4328
    %4395 = vmatpush.bf16.msra.mxu0 %v4326
    %4396 = vmatmul.bf16.gmra.mxu0 %v4180
    %v4397 = vpop.f32.mrf.mxu0
    %v4398 = vadd.f32 %v4384, %v4397
    %v4399 = vpop.f32.mrf.mxu0
    %v4400 = vadd.f32 %v4386, %v4399
    %4401 = vdwg.mxu0
    %4402 = vmatpush.bf16.msra.mxu0 %v4325
    %4403 = vmatpush.bf16.msra.mxu0 %v4323
    %4404 = vmatpush.bf16.msra.mxu0 %v4321
    %4405 = vmatpush.bf16.msra.mxu0 %v4319
    %4406 = vmatpush.bf16.msra.mxu0 %v4317
    %4407 = vmatpush.bf16.msra.mxu0 %v4315
    %4408 = vmatpush.bf16.msra.mxu0 %v4313
    %4409 = vmatpush.bf16.msra.mxu0 %v4311
    %4410 = vmatmul.bf16.gmra.mxu0 %v4179
    %v4411 = vpop.f32.mrf.mxu0
    %v4412 = vadd.f32 0.0, %v4411
    %v4413 = vpop.f32.mrf.mxu0
    %v4414 = vadd.f32 0.0, %v4413
    %4415 = vdwg.mxu0
    %4416 = vmatpush.bf16.msra.mxu0 %v4341
    %4417 = vmatpush.bf16.msra.mxu0 %v4339
    %4418 = vmatpush.bf16.msra.mxu0 %v4337
    %4419 = vmatpush.bf16.msra.mxu0 %v4335
    %4420 = vmatpush.bf16.msra.mxu0 %v4333
    %4421 = vmatpush.bf16.msra.mxu0 %v4331
    %4422 = vmatpush.bf16.msra.mxu0 %v4329
    %4423 = vmatpush.bf16.msra.mxu0 %v4327
    %4424 = vmatmul.bf16.gmra.mxu0 %v4180
    %v4425 = vpop.f32.mrf.mxu0
    %v4426 = vadd.f32 %v4412, %v4425
    %v4427 = vpop.f32.mrf.mxu0
    %v4428 = vadd.f32 %v4414, %v4427
    %4429 = vdwg.mxu0
    %v4430 = vadd.f32 %v4143, %v4398
    %v4431 = vadd.f32 %v4144, %v4426
    %v4432 = vadd.f32 %v4145, %v4400
    %v4433 = vadd.f32 %v4146, %v4428
    %s4434 = scalar_lea.vmem [#allocation6], 4
    %v4435 = vld [vmem:[%s4434] sm:$0x3]
    %v4437 = vperm.slane %v4435, 0
    %v4438 = vperm.slane %v4435, 1
    %v4441 = vadd.f32 %v4430, %v4437
    %v4442 = vadd.f32 %v4431, %v4438
    %v4443 = vadd.f32 %v4432, %v4437
    %v4444 = vadd.f32 %v4433, %v4438
    %v4445 = vmul.f32 %v4441, 0.01
    %v4446 = vmul.f32 %v4442, 0.01
    %v4447 = vmul.f32 %v4443, 0.01
    %v4448 = vmul.f32 %v4444, 0.01
    %v4449 = vmax.f32 %v4441, %v4445
    %v4450 = vmax.f32 %v4442, %v4446
    %v4451 = vmax.f32 %v4443, %v4447
    %v4452 = vmax.f32 %v4444, %v4448
    %v4457 = vrot.slane %v4449, 6
    %v4458 = vrot.slane %v4450, 6
    %v4459 = vrot.slane %v4451, 6
    %v4460 = vrot.slane %v4452, 6
    %4465 = vst [vmem:[#allocation2] sm:$0xfc] %v4457
    %4466 = vst [vmem:[#allocation2 + $0x8] sm:$0xfc] %v4458
    %4467 = vst [vmem:[#allocation2 + $0x10] sm:$0x3] %v4457
    %4468 = vst [vmem:[#allocation2 + $0x18] sm:$0x3] %v4458
    %4469 = vst [vmem:[#allocation2 + $0x20] sm:$0xfc] %v4459
    %4470 = vst [vmem:[#allocation2 + $0x28] sm:$0xfc] %v4460
    %4471 = vst [vmem:[#allocation2 + $0x30] sm:$0x3] %v4459
    %4472 = vst [vmem:[#allocation2 + $0x38] sm:$0x3] %v4460
    %v4473 = vld [vmem:[#allocation2] sm:$0xff]
    %v4474 = vld [vmem:[#allocation2 + $0x8] sm:$0xff]
    %v4475 = vld [vmem:[#allocation2 + $0x20] sm:$0xff]
    %v4476 = vld [vmem:[#allocation2 + $0x28] sm:$0xff]
    %v4477 = vpack.c.bf16 %v4475, %v4473
    %v4478 = vpack.c.bf16 %v4476, %v4474
    %s4479 = scalar_lea.vmem [#allocation4], 3840
    %v4480 = vld [vmem:[%s4479] sm:$0xff]
    %v4481 = vld [vmem:[%s4479 + $0x8] sm:$0xff]
    %v4482 = vld [vmem:[%s4479 + $0x10] sm:$0xff]
    %v4483 = vld [vmem:[%s4479 + $0x18] sm:$0xff]
    %v4484 = vld [vmem:[%s4479 + $0x20] sm:$0xff]
    %v4485 = vld [vmem:[%s4479 + $0x28] sm:$0xff]
    %v4486 = vld [vmem:[%s4479 + $0x30] sm:$0xff]
    %v4487 = vld [vmem:[%s4479 + $0x38] sm:$0xff]
    %v4488 = vld [vmem:[%s4479 + $0x40] sm:$0xff]
    %v4489 = vld [vmem:[%s4479 + $0x48] sm:$0xff]
    %v4490 = vld [vmem:[%s4479 + $0x50] sm:$0xff]
    %v4491 = vld [vmem:[%s4479 + $0x58] sm:$0xff]
    %v4492 = vld [vmem:[%s4479 + $0x60] sm:$0xff]
    %v4493 = vld [vmem:[%s4479 + $0x68] sm:$0xff]
    %v4494 = vld [vmem:[%s4479 + $0x70] sm:$0xff]
    %v4495 = vld [vmem:[%s4479 + $0x78] sm:$0xff]
    %v4496 = vld [vmem:[%s4479 + $0x80] sm:$0xff]
    %v4497 = vld [vmem:[%s4479 + $0x88] sm:$0xff]
    %v4498 = vld [vmem:[%s4479 + $0x90] sm:$0xff]
    %v4499 = vld [vmem:[%s4479 + $0x98] sm:$0xff]
    %v4500 = vld [vmem:[%s4479 + $0xa0] sm:$0xff]
    %v4501 = vld [vmem:[%s4479 + $0xa8] sm:$0xff]
    %v4502 = vld [vmem:[%s4479 + $0xb0] sm:$0xff]
    %v4503 = vld [vmem:[%s4479 + $0xb8] sm:$0xff]
    %v4504 = vld [vmem:[%s4479 + $0xc0] sm:$0xff]
    %v4505 = vld [vmem:[%s4479 + $0xc8] sm:$0xff]
    %v4506 = vld [vmem:[%s4479 + $0xd0] sm:$0xff]
    %v4507 = vld [vmem:[%s4479 + $0xd8] sm:$0xff]
    %v4508 = vld [vmem:[%s4479 + $0xe0] sm:$0xff]
    %v4509 = vld [vmem:[%s4479 + $0xe8] sm:$0xff]
    %v4510 = vld [vmem:[%s4479 + $0xf0] sm:$0xff]
    %v4511 = vld [vmem:[%s4479 + $0xf8] sm:$0xff]
    %v4512 = vld [vmem:[#allocation2] sm:$0xfe]
    %v4513 = vld [vmem:[#allocation2 + $0x8] sm:$0xfe]
    %v4514 = vld [vmem:[#allocation2 + $0x10] sm:$0x1]
    %v4515 = vld [vmem:[#allocation2 + $0x18] sm:$0x1]
    %v4516 = vld [vmem:[#allocation2 + $0x20] sm:$0xfe]
    %v4517 = vld [vmem:[#allocation2 + $0x28] sm:$0xfe]
    %v4518 = vld [vmem:[#allocation2 + $0x30] sm:$0x1]
    %v4519 = vld [vmem:[#allocation2 + $0x38] sm:$0x1]
    %v4528 = vrot.slane %v4512, 1
    %v4529 = vrot.slane %v4514, 1
    %v4530 = vsel %vm211, %v4528, %v4529
    %v4531 = vrot.slane %v4513, 1
    %v4532 = vrot.slane %v4515, 1
    %v4533 = vsel %vm211, %v4531, %v4532
    %v4534 = vrot.slane %v4516, 1
    %v4535 = vrot.slane %v4518, 1
    %v4536 = vsel %vm211, %v4534, %v4535
    %v4537 = vrot.slane %v4517, 1
    %v4538 = vrot.slane %v4519, 1
    %v4539 = vsel %vm211, %v4537, %v4538
    %v4544 = vpack.c.bf16 %v4536, %v4530
    %v4545 = vpack.c.bf16 %v4539, %v4533
    %s4546 = scalar_lea.vmem [#allocation4], 4096
    %v4547 = vld [vmem:[%s4546] sm:$0xff]
    %v4548 = vld [vmem:[%s4546 + $0x8] sm:$0xff]
    %v4549 = vld [vmem:[%s4546 + $0x10] sm:$0xff]
    %v4550 = vld [vmem:[%s4546 + $0x18] sm:$0xff]
    %v4551 = vld [vmem:[%s4546 + $0x20] sm:$0xff]
    %v4552 = vld [vmem:[%s4546 + $0x28] sm:$0xff]
    %v4553 = vld [vmem:[%s4546 + $0x30] sm:$0xff]
    %v4554 = vld [vmem:[%s4546 + $0x38] sm:$0xff]
    %v4555 = vld [vmem:[%s4546 + $0x40] sm:$0xff]
    %v4556 = vld [vmem:[%s4546 + $0x48] sm:$0xff]
    %v4557 = vld [vmem:[%s4546 + $0x50] sm:$0xff]
    %v4558 = vld [vmem:[%s4546 + $0x58] sm:$0xff]
    %v4559 = vld [vmem:[%s4546 + $0x60] sm:$0xff]
    %v4560 = vld [vmem:[%s4546 + $0x68] sm:$0xff]
    %v4561 = vld [vmem:[%s4546 + $0x70] sm:$0xff]
    %v4562 = vld [vmem:[%s4546 + $0x78] sm:$0xff]
    %v4563 = vld [vmem:[%s4546 + $0x80] sm:$0xff]
    %v4564 = vld [vmem:[%s4546 + $0x88] sm:$0xff]
    %v4565 = vld [vmem:[%s4546 + $0x90] sm:$0xff]
    %v4566 = vld [vmem:[%s4546 + $0x98] sm:$0xff]
    %v4567 = vld [vmem:[%s4546 + $0xa0] sm:$0xff]
    %v4568 = vld [vmem:[%s4546 + $0xa8] sm:$0xff]
    %v4569 = vld [vmem:[%s4546 + $0xb0] sm:$0xff]
    %v4570 = vld [vmem:[%s4546 + $0xb8] sm:$0xff]
    %v4571 = vld [vmem:[%s4546 + $0xc0] sm:$0xff]
    %v4572 = vld [vmem:[%s4546 + $0xc8] sm:$0xff]
    %v4573 = vld [vmem:[%s4546 + $0xd0] sm:$0xff]
    %v4574 = vld [vmem:[%s4546 + $0xd8] sm:$0xff]
    %v4575 = vld [vmem:[%s4546 + $0xe0] sm:$0xff]
    %v4576 = vld [vmem:[%s4546 + $0xe8] sm:$0xff]
    %v4577 = vld [vmem:[%s4546 + $0xf0] sm:$0xff]
    %v4578 = vld [vmem:[%s4546 + $0xf8] sm:$0xff]
    %v4611 = vunpack.c.l.b16 %v4547
    %v4612 = vunpack.c.h.b16 %v4547
    %v4613 = vunpack.c.l.b16 %v4548
    %v4614 = vunpack.c.h.b16 %v4548
    %v4615 = vunpack.c.l.b16 %v4549
    %v4616 = vunpack.c.h.b16 %v4549
    %v4617 = vunpack.c.l.b16 %v4550
    %v4618 = vunpack.c.h.b16 %v4550
    %v4619 = vunpack.c.l.b16 %v4551
    %v4620 = vunpack.c.h.b16 %v4551
    %v4621 = vunpack.c.l.b16 %v4552
    %v4622 = vunpack.c.h.b16 %v4552
    %v4623 = vunpack.c.l.b16 %v4553
    %v4624 = vunpack.c.h.b16 %v4553
    %v4625 = vunpack.c.l.b16 %v4554
    %v4626 = vunpack.c.h.b16 %v4554
    %v4627 = vunpack.c.l.b16 %v4555
    %v4628 = vunpack.c.h.b16 %v4555
    %v4629 = vunpack.c.l.b16 %v4556
    %v4630 = vunpack.c.h.b16 %v4556
    %v4631 = vunpack.c.l.b16 %v4557
    %v4632 = vunpack.c.h.b16 %v4557
    %v4633 = vunpack.c.l.b16 %v4558
    %v4634 = vunpack.c.h.b16 %v4558
    %v4635 = vunpack.c.l.b16 %v4559
    %v4636 = vunpack.c.h.b16 %v4559
    %v4637 = vunpack.c.l.b16 %v4560
    %v4638 = vunpack.c.h.b16 %v4560
    %v4639 = vunpack.c.l.b16 %v4561
    %v4640 = vunpack.c.h.b16 %v4561
    %v4641 = vunpack.c.l.b16 %v4562
    %v4642 = vunpack.c.h.b16 %v4562
    %v4643 = vunpack.c.l.b16 %v4563
    %v4644 = vunpack.c.h.b16 %v4563
    %v4645 = vunpack.c.l.b16 %v4564
    %v4646 = vunpack.c.h.b16 %v4564
    %v4647 = vunpack.c.l.b16 %v4565
    %v4648 = vunpack.c.h.b16 %v4565
    %v4649 = vunpack.c.l.b16 %v4566
    %v4650 = vunpack.c.h.b16 %v4566
    %v4651 = vunpack.c.l.b16 %v4567
    %v4652 = vunpack.c.h.b16 %v4567
    %v4653 = vunpack.c.l.b16 %v4568
    %v4654 = vunpack.c.h.b16 %v4568
    %v4655 = vunpack.c.l.b16 %v4569
    %v4656 = vunpack.c.h.b16 %v4569
    %v4657 = vunpack.c.l.b16 %v4570
    %v4658 = vunpack.c.h.b16 %v4570
    %v4659 = vunpack.c.l.b16 %v4571
    %v4660 = vunpack.c.h.b16 %v4571
    %v4661 = vunpack.c.l.b16 %v4572
    %v4662 = vunpack.c.h.b16 %v4572
    %v4663 = vunpack.c.l.b16 %v4573
    %v4664 = vunpack.c.h.b16 %v4573
    %v4665 = vunpack.c.l.b16 %v4574
    %v4666 = vunpack.c.h.b16 %v4574
    %v4667 = vunpack.c.l.b16 %v4575
    %v4668 = vunpack.c.h.b16 %v4575
    %v4669 = vunpack.c.l.b16 %v4576
    %v4670 = vunpack.c.h.b16 %v4576
    %v4671 = vunpack.c.l.b16 %v4577
    %v4672 = vunpack.c.h.b16 %v4577
    %v4673 = vunpack.c.l.b16 %v4578
    %v4674 = vunpack.c.h.b16 %v4578
    %v4675 = vpack.c.b16 %v4613, %v4611
    %v4676 = vpack.c.b16 %v4614, %v4612
    %v4677 = vpack.c.b16 %v4617, %v4615
    %v4678 = vpack.c.b16 %v4618, %v4616
    %v4679 = vpack.c.b16 %v4621, %v4619
    %v4680 = vpack.c.b16 %v4622, %v4620
    %v4681 = vpack.c.b16 %v4625, %v4623
    %v4682 = vpack.c.b16 %v4626, %v4624
    %v4683 = vpack.c.b16 %v4629, %v4627
    %v4684 = vpack.c.b16 %v4630, %v4628
    %v4685 = vpack.c.b16 %v4633, %v4631
    %v4686 = vpack.c.b16 %v4634, %v4632
    %v4687 = vpack.c.b16 %v4637, %v4635
    %v4688 = vpack.c.b16 %v4638, %v4636
    %v4689 = vpack.c.b16 %v4641, %v4639
    %v4690 = vpack.c.b16 %v4642, %v4640
    %v4691 = vpack.c.b16 %v4645, %v4643
    %v4692 = vpack.c.b16 %v4646, %v4644
    %v4693 = vpack.c.b16 %v4649, %v4647
    %v4694 = vpack.c.b16 %v4650, %v4648
    %v4695 = vpack.c.b16 %v4653, %v4651
    %v4696 = vpack.c.b16 %v4654, %v4652
    %v4697 = vpack.c.b16 %v4657, %v4655
    %v4698 = vpack.c.b16 %v4658, %v4656
    %v4699 = vpack.c.b16 %v4661, %v4659
    %v4700 = vpack.c.b16 %v4662, %v4660
    %v4701 = vpack.c.b16 %v4665, %v4663
    %v4702 = vpack.c.b16 %v4666, %v4664
    %v4703 = vpack.c.b16 %v4669, %v4667
    %v4704 = vpack.c.b16 %v4670, %v4668
    %v4705 = vpack.c.b16 %v4673, %v4671
    %v4706 = vpack.c.b16 %v4674, %v4672
    %4739 = vmatpush.bf16.msra.mxu0 %v4689
    %4740 = vmatpush.bf16.msra.mxu0 %v4687
    %4741 = vmatpush.bf16.msra.mxu0 %v4685
    %4742 = vmatpush.bf16.msra.mxu0 %v4683
    %4743 = vmatpush.bf16.msra.mxu0 %v4681
    %4744 = vmatpush.bf16.msra.mxu0 %v4679
    %4745 = vmatpush.bf16.msra.mxu0 %v4677
    %4746 = vmatpush.bf16.msra.mxu0 %v4675
    %4747 = vmatmul.bf16.gmra.mxu0 %v4544
    %v4748 = vpop.f32.mrf.mxu0
    %v4749 = vadd.f32 0.0, %v4748
    %v4750 = vpop.f32.mrf.mxu0
    %v4751 = vadd.f32 0.0, %v4750
    %4752 = vdwg.mxu0
    %4753 = vmatpush.bf16.msra.mxu0 %v4705
    %4754 = vmatpush.bf16.msra.mxu0 %v4703
    %4755 = vmatpush.bf16.msra.mxu0 %v4701
    %4756 = vmatpush.bf16.msra.mxu0 %v4699
    %4757 = vmatpush.bf16.msra.mxu0 %v4697
    %4758 = vmatpush.bf16.msra.mxu0 %v4695
    %4759 = vmatpush.bf16.msra.mxu0 %v4693
    %4760 = vmatpush.bf16.msra.mxu0 %v4691
    %4761 = vmatmul.bf16.gmra.mxu0 %v4545
    %v4762 = vpop.f32.mrf.mxu0
    %v4763 = vadd.f32 %v4749, %v4762
    %v4764 = vpop.f32.mrf.mxu0
    %v4765 = vadd.f32 %v4751, %v4764
    %4766 = vdwg.mxu0
    %4767 = vmatpush.bf16.msra.mxu0 %v4690
    %4768 = vmatpush.bf16.msra.mxu0 %v4688
    %4769 = vmatpush.bf16.msra.mxu0 %v4686
    %4770 = vmatpush.bf16.msra.mxu0 %v4684
    %4771 = vmatpush.bf16.msra.mxu0 %v4682
    %4772 = vmatpush.bf16.msra.mxu0 %v4680
    %4773 = vmatpush.bf16.msra.mxu0 %v4678
    %4774 = vmatpush.bf16.msra.mxu0 %v4676
    %4775 = vmatmul.bf16.gmra.mxu0 %v4544
    %v4776 = vpop.f32.mrf.mxu0
    %v4777 = vadd.f32 0.0, %v4776
    %v4778 = vpop.f32.mrf.mxu0
    %v4779 = vadd.f32 0.0, %v4778
    %4780 = vdwg.mxu0
    %4781 = vmatpush.bf16.msra.mxu0 %v4706
    %4782 = vmatpush.bf16.msra.mxu0 %v4704
    %4783 = vmatpush.bf16.msra.mxu0 %v4702
    %4784 = vmatpush.bf16.msra.mxu0 %v4700
    %4785 = vmatpush.bf16.msra.mxu0 %v4698
    %4786 = vmatpush.bf16.msra.mxu0 %v4696
    %4787 = vmatpush.bf16.msra.mxu0 %v4694
    %4788 = vmatpush.bf16.msra.mxu0 %v4692
    %4789 = vmatmul.bf16.gmra.mxu0 %v4545
    %v4790 = vpop.f32.mrf.mxu0
    %v4791 = vadd.f32 %v4777, %v4790
    %v4792 = vpop.f32.mrf.mxu0
    %v4793 = vadd.f32 %v4779, %v4792
    %4794 = vdwg.mxu0
    %v4827 = vunpack.c.l.b16 %v4480
    %v4828 = vunpack.c.h.b16 %v4480
    %v4829 = vunpack.c.l.b16 %v4481
    %v4830 = vunpack.c.h.b16 %v4481
    %v4831 = vunpack.c.l.b16 %v4482
    %v4832 = vunpack.c.h.b16 %v4482
    %v4833 = vunpack.c.l.b16 %v4483
    %v4834 = vunpack.c.h.b16 %v4483
    %v4835 = vunpack.c.l.b16 %v4484
    %v4836 = vunpack.c.h.b16 %v4484
    %v4837 = vunpack.c.l.b16 %v4485
    %v4838 = vunpack.c.h.b16 %v4485
    %v4839 = vunpack.c.l.b16 %v4486
    %v4840 = vunpack.c.h.b16 %v4486
    %v4841 = vunpack.c.l.b16 %v4487
    %v4842 = vunpack.c.h.b16 %v4487
    %v4843 = vunpack.c.l.b16 %v4488
    %v4844 = vunpack.c.h.b16 %v4488
    %v4845 = vunpack.c.l.b16 %v4489
    %v4846 = vunpack.c.h.b16 %v4489
    %v4847 = vunpack.c.l.b16 %v4490
    %v4848 = vunpack.c.h.b16 %v4490
    %v4849 = vunpack.c.l.b16 %v4491
    %v4850 = vunpack.c.h.b16 %v4491
    %v4851 = vunpack.c.l.b16 %v4492
    %v4852 = vunpack.c.h.b16 %v4492
    %v4853 = vunpack.c.l.b16 %v4493
    %v4854 = vunpack.c.h.b16 %v4493
    %v4855 = vunpack.c.l.b16 %v4494
    %v4856 = vunpack.c.h.b16 %v4494
    %v4857 = vunpack.c.l.b16 %v4495
    %v4858 = vunpack.c.h.b16 %v4495
    %v4859 = vunpack.c.l.b16 %v4496
    %v4860 = vunpack.c.h.b16 %v4496
    %v4861 = vunpack.c.l.b16 %v4497
    %v4862 = vunpack.c.h.b16 %v4497
    %v4863 = vunpack.c.l.b16 %v4498
    %v4864 = vunpack.c.h.b16 %v4498
    %v4865 = vunpack.c.l.b16 %v4499
    %v4866 = vunpack.c.h.b16 %v4499
    %v4867 = vunpack.c.l.b16 %v4500
    %v4868 = vunpack.c.h.b16 %v4500
    %v4869 = vunpack.c.l.b16 %v4501
    %v4870 = vunpack.c.h.b16 %v4501
    %v4871 = vunpack.c.l.b16 %v4502
    %v4872 = vunpack.c.h.b16 %v4502
    %v4873 = vunpack.c.l.b16 %v4503
    %v4874 = vunpack.c.h.b16 %v4503
    %v4875 = vunpack.c.l.b16 %v4504
    %v4876 = vunpack.c.h.b16 %v4504
    %v4877 = vunpack.c.l.b16 %v4505
    %v4878 = vunpack.c.h.b16 %v4505
    %v4879 = vunpack.c.l.b16 %v4506
    %v4880 = vunpack.c.h.b16 %v4506
    %v4881 = vunpack.c.l.b16 %v4507
    %v4882 = vunpack.c.h.b16 %v4507
    %v4883 = vunpack.c.l.b16 %v4508
    %v4884 = vunpack.c.h.b16 %v4508
    %v4885 = vunpack.c.l.b16 %v4509
    %v4886 = vunpack.c.h.b16 %v4509
    %v4887 = vunpack.c.l.b16 %v4510
    %v4888 = vunpack.c.h.b16 %v4510
    %v4889 = vunpack.c.l.b16 %v4511
    %v4890 = vunpack.c.h.b16 %v4511
    %v4891 = vpack.c.b16 %v4829, %v4827
    %v4892 = vpack.c.b16 %v4830, %v4828
    %v4893 = vpack.c.b16 %v4833, %v4831
    %v4894 = vpack.c.b16 %v4834, %v4832
    %v4895 = vpack.c.b16 %v4837, %v4835
    %v4896 = vpack.c.b16 %v4838, %v4836
    %v4897 = vpack.c.b16 %v4841, %v4839
    %v4898 = vpack.c.b16 %v4842, %v4840
    %v4899 = vpack.c.b16 %v4845, %v4843
    %v4900 = vpack.c.b16 %v4846, %v4844
    %v4901 = vpack.c.b16 %v4849, %v4847
    %v4902 = vpack.c.b16 %v4850, %v4848
    %v4903 = vpack.c.b16 %v4853, %v4851
    %v4904 = vpack.c.b16 %v4854, %v4852
    %v4905 = vpack.c.b16 %v4857, %v4855
    %v4906 = vpack.c.b16 %v4858, %v4856
    %v4907 = vpack.c.b16 %v4861, %v4859
    %v4908 = vpack.c.b16 %v4862, %v4860
    %v4909 = vpack.c.b16 %v4865, %v4863
    %v4910 = vpack.c.b16 %v4866, %v4864
    %v4911 = vpack.c.b16 %v4869, %v4867
    %v4912 = vpack.c.b16 %v4870, %v4868
    %v4913 = vpack.c.b16 %v4873, %v4871
    %v4914 = vpack.c.b16 %v4874, %v4872
    %v4915 = vpack.c.b16 %v4877, %v4875
    %v4916 = vpack.c.b16 %v4878, %v4876
    %v4917 = vpack.c.b16 %v4881, %v4879
    %v4918 = vpack.c.b16 %v4882, %v4880
    %v4919 = vpack.c.b16 %v4885, %v4883
    %v4920 = vpack.c.b16 %v4886, %v4884
    %v4921 = vpack.c.b16 %v4889, %v4887
    %v4922 = vpack.c.b16 %v4890, %v4888
    %4955 = vmatpush.bf16.msra.mxu0 %v4905
    %4956 = vmatpush.bf16.msra.mxu0 %v4903
    %4957 = vmatpush.bf16.msra.mxu0 %v4901
    %4958 = vmatpush.bf16.msra.mxu0 %v4899
    %4959 = vmatpush.bf16.msra.mxu0 %v4897
    %4960 = vmatpush.bf16.msra.mxu0 %v4895
    %4961 = vmatpush.bf16.msra.mxu0 %v4893
    %4962 = vmatpush.bf16.msra.mxu0 %v4891
    %4963 = vmatmul.bf16.gmra.mxu0 %v4477
    %v4964 = vpop.f32.mrf.mxu0
    %v4965 = vadd.f32 %v4763, %v4964
    %v4966 = vpop.f32.mrf.mxu0
    %v4967 = vadd.f32 %v4765, %v4966
    %4968 = vdwg.mxu0
    %4969 = vmatpush.bf16.msra.mxu0 %v4921
    %4970 = vmatpush.bf16.msra.mxu0 %v4919
    %4971 = vmatpush.bf16.msra.mxu0 %v4917
    %4972 = vmatpush.bf16.msra.mxu0 %v4915
    %4973 = vmatpush.bf16.msra.mxu0 %v4913
    %4974 = vmatpush.bf16.msra.mxu0 %v4911
    %4975 = vmatpush.bf16.msra.mxu0 %v4909
    %4976 = vmatpush.bf16.msra.mxu0 %v4907
    %4977 = vmatmul.bf16.gmra.mxu0 %v4478
    %v4978 = vpop.f32.mrf.mxu0
    %v4979 = vadd.f32 %v4965, %v4978
    %v4980 = vpop.f32.mrf.mxu0
    %v4981 = vadd.f32 %v4967, %v4980
    %4982 = vdwg.mxu0
    %4983 = vmatpush.bf16.msra.mxu0 %v4906
    %4984 = vmatpush.bf16.msra.mxu0 %v4904
    %4985 = vmatpush.bf16.msra.mxu0 %v4902
    %4986 = vmatpush.bf16.msra.mxu0 %v4900
    %4987 = vmatpush.bf16.msra.mxu0 %v4898
    %4988 = vmatpush.bf16.msra.mxu0 %v4896
    %4989 = vmatpush.bf16.msra.mxu0 %v4894
    %4990 = vmatpush.bf16.msra.mxu0 %v4892
    %4991 = vmatmul.bf16.gmra.mxu0 %v4477
    %v4992 = vpop.f32.mrf.mxu0
    %v4993 = vadd.f32 %v4791, %v4992
    %v4994 = vpop.f32.mrf.mxu0
    %v4995 = vadd.f32 %v4793, %v4994
    %4996 = vdwg.mxu0
    %4997 = vmatpush.bf16.msra.mxu0 %v4922
    %4998 = vmatpush.bf16.msra.mxu0 %v4920
    %4999 = vmatpush.bf16.msra.mxu0 %v4918
    %5000 = vmatpush.bf16.msra.mxu0 %v4916
    %5001 = vmatpush.bf16.msra.mxu0 %v4914
    %5002 = vmatpush.bf16.msra.mxu0 %v4912
    %5003 = vmatpush.bf16.msra.mxu0 %v4910
    %5004 = vmatpush.bf16.msra.mxu0 %v4908
    %5005 = vmatmul.bf16.gmra.mxu0 %v4478
    %v5006 = vpop.f32.mrf.mxu0
    %v5007 = vadd.f32 %v4993, %v5006
    %v5008 = vpop.f32.mrf.mxu0
    %v5009 = vadd.f32 %v4995, %v5008
    %5010 = vdwg.mxu0
    %v5011 = vld [vmem:[#allocation2] sm:$0xfc]
    %v5012 = vld [vmem:[#allocation2 + $0x8] sm:$0xfc]
    %v5013 = vld [vmem:[#allocation2 + $0x10] sm:$0x3]
    %v5014 = vld [vmem:[#allocation2 + $0x18] sm:$0x3]
    %v5015 = vld [vmem:[#allocation2 + $0x20] sm:$0xfc]
    %v5016 = vld [vmem:[#allocation2 + $0x28] sm:$0xfc]
    %v5017 = vld [vmem:[#allocation2 + $0x30] sm:$0x3]
    %v5018 = vld [vmem:[#allocation2 + $0x38] sm:$0x3]
    %v5027 = vrot.slane %v5011, 2
    %v5028 = vrot.slane %v5013, 2
    %v5029 = vsel %vm711, %v5027, %v5028
    %v5030 = vrot.slane %v5012, 2
    %v5031 = vrot.slane %v5014, 2
    %v5032 = vsel %vm711, %v5030, %v5031
    %v5033 = vrot.slane %v5015, 2
    %v5034 = vrot.slane %v5017, 2
    %v5035 = vsel %vm711, %v5033, %v5034
    %v5036 = vrot.slane %v5016, 2
    %v5037 = vrot.slane %v5018, 2
    %v5038 = vsel %vm711, %v5036, %v5037
    %v5043 = vpack.c.bf16 %v5035, %v5029
    %v5044 = vpack.c.bf16 %v5038, %v5032
    %s5045 = scalar_lea.vmem [#allocation4], 4352
    %v5046 = vld [vmem:[%s5045] sm:$0xff]
    %v5047 = vld [vmem:[%s5045 + $0x8] sm:$0xff]
    %v5048 = vld [vmem:[%s5045 + $0x10] sm:$0xff]
    %v5049 = vld [vmem:[%s5045 + $0x18] sm:$0xff]
    %v5050 = vld [vmem:[%s5045 + $0x20] sm:$0xff]
    %v5051 = vld [vmem:[%s5045 + $0x28] sm:$0xff]
    %v5052 = vld [vmem:[%s5045 + $0x30] sm:$0xff]
    %v5053 = vld [vmem:[%s5045 + $0x38] sm:$0xff]
    %v5054 = vld [vmem:[%s5045 + $0x40] sm:$0xff]
    %v5055 = vld [vmem:[%s5045 + $0x48] sm:$0xff]
    %v5056 = vld [vmem:[%s5045 + $0x50] sm:$0xff]
    %v5057 = vld [vmem:[%s5045 + $0x58] sm:$0xff]
    %v5058 = vld [vmem:[%s5045 + $0x60] sm:$0xff]
    %v5059 = vld [vmem:[%s5045 + $0x68] sm:$0xff]
    %v5060 = vld [vmem:[%s5045 + $0x70] sm:$0xff]
    %v5061 = vld [vmem:[%s5045 + $0x78] sm:$0xff]
    %v5062 = vld [vmem:[%s5045 + $0x80] sm:$0xff]
    %v5063 = vld [vmem:[%s5045 + $0x88] sm:$0xff]
    %v5064 = vld [vmem:[%s5045 + $0x90] sm:$0xff]
    %v5065 = vld [vmem:[%s5045 + $0x98] sm:$0xff]
    %v5066 = vld [vmem:[%s5045 + $0xa0] sm:$0xff]
    %v5067 = vld [vmem:[%s5045 + $0xa8] sm:$0xff]
    %v5068 = vld [vmem:[%s5045 + $0xb0] sm:$0xff]
    %v5069 = vld [vmem:[%s5045 + $0xb8] sm:$0xff]
    %v5070 = vld [vmem:[%s5045 + $0xc0] sm:$0xff]
    %v5071 = vld [vmem:[%s5045 + $0xc8] sm:$0xff]
    %v5072 = vld [vmem:[%s5045 + $0xd0] sm:$0xff]
    %v5073 = vld [vmem:[%s5045 + $0xd8] sm:$0xff]
    %v5074 = vld [vmem:[%s5045 + $0xe0] sm:$0xff]
    %v5075 = vld [vmem:[%s5045 + $0xe8] sm:$0xff]
    %v5076 = vld [vmem:[%s5045 + $0xf0] sm:$0xff]
    %v5077 = vld [vmem:[%s5045 + $0xf8] sm:$0xff]
    %v5110 = vunpack.c.l.b16 %v5046
    %v5111 = vunpack.c.h.b16 %v5046
    %v5112 = vunpack.c.l.b16 %v5047
    %v5113 = vunpack.c.h.b16 %v5047
    %v5114 = vunpack.c.l.b16 %v5048
    %v5115 = vunpack.c.h.b16 %v5048
    %v5116 = vunpack.c.l.b16 %v5049
    %v5117 = vunpack.c.h.b16 %v5049
    %v5118 = vunpack.c.l.b16 %v5050
    %v5119 = vunpack.c.h.b16 %v5050
    %v5120 = vunpack.c.l.b16 %v5051
    %v5121 = vunpack.c.h.b16 %v5051
    %v5122 = vunpack.c.l.b16 %v5052
    %v5123 = vunpack.c.h.b16 %v5052
    %v5124 = vunpack.c.l.b16 %v5053
    %v5125 = vunpack.c.h.b16 %v5053
    %v5126 = vunpack.c.l.b16 %v5054
    %v5127 = vunpack.c.h.b16 %v5054
    %v5128 = vunpack.c.l.b16 %v5055
    %v5129 = vunpack.c.h.b16 %v5055
    %v5130 = vunpack.c.l.b16 %v5056
    %v5131 = vunpack.c.h.b16 %v5056
    %v5132 = vunpack.c.l.b16 %v5057
    %v5133 = vunpack.c.h.b16 %v5057
    %v5134 = vunpack.c.l.b16 %v5058
    %v5135 = vunpack.c.h.b16 %v5058
    %v5136 = vunpack.c.l.b16 %v5059
    %v5137 = vunpack.c.h.b16 %v5059
    %v5138 = vunpack.c.l.b16 %v5060
    %v5139 = vunpack.c.h.b16 %v5060
    %v5140 = vunpack.c.l.b16 %v5061
    %v5141 = vunpack.c.h.b16 %v5061
    %v5142 = vunpack.c.l.b16 %v5062
    %v5143 = vunpack.c.h.b16 %v5062
    %v5144 = vunpack.c.l.b16 %v5063
    %v5145 = vunpack.c.h.b16 %v5063
    %v5146 = vunpack.c.l.b16 %v5064
    %v5147 = vunpack.c.h.b16 %v5064
    %v5148 = vunpack.c.l.b16 %v5065
    %v5149 = vunpack.c.h.b16 %v5065
    %v5150 = vunpack.c.l.b16 %v5066
    %v5151 = vunpack.c.h.b16 %v5066
    %v5152 = vunpack.c.l.b16 %v5067
    %v5153 = vunpack.c.h.b16 %v5067
    %v5154 = vunpack.c.l.b16 %v5068
    %v5155 = vunpack.c.h.b16 %v5068
    %v5156 = vunpack.c.l.b16 %v5069
    %v5157 = vunpack.c.h.b16 %v5069
    %v5158 = vunpack.c.l.b16 %v5070
    %v5159 = vunpack.c.h.b16 %v5070
    %v5160 = vunpack.c.l.b16 %v5071
    %v5161 = vunpack.c.h.b16 %v5071
    %v5162 = vunpack.c.l.b16 %v5072
    %v5163 = vunpack.c.h.b16 %v5072
    %v5164 = vunpack.c.l.b16 %v5073
    %v5165 = vunpack.c.h.b16 %v5073
    %v5166 = vunpack.c.l.b16 %v5074
    %v5167 = vunpack.c.h.b16 %v5074
    %v5168 = vunpack.c.l.b16 %v5075
    %v5169 = vunpack.c.h.b16 %v5075
    %v5170 = vunpack.c.l.b16 %v5076
    %v5171 = vunpack.c.h.b16 %v5076
    %v5172 = vunpack.c.l.b16 %v5077
    %v5173 = vunpack.c.h.b16 %v5077
    %v5174 = vpack.c.b16 %v5112, %v5110
    %v5175 = vpack.c.b16 %v5113, %v5111
    %v5176 = vpack.c.b16 %v5116, %v5114
    %v5177 = vpack.c.b16 %v5117, %v5115
    %v5178 = vpack.c.b16 %v5120, %v5118
    %v5179 = vpack.c.b16 %v5121, %v5119
    %v5180 = vpack.c.b16 %v5124, %v5122
    %v5181 = vpack.c.b16 %v5125, %v5123
    %v5182 = vpack.c.b16 %v5128, %v5126
    %v5183 = vpack.c.b16 %v5129, %v5127
    %v5184 = vpack.c.b16 %v5132, %v5130
    %v5185 = vpack.c.b16 %v5133, %v5131
    %v5186 = vpack.c.b16 %v5136, %v5134
    %v5187 = vpack.c.b16 %v5137, %v5135
    %v5188 = vpack.c.b16 %v5140, %v5138
    %v5189 = vpack.c.b16 %v5141, %v5139
    %v5190 = vpack.c.b16 %v5144, %v5142
    %v5191 = vpack.c.b16 %v5145, %v5143
    %v5192 = vpack.c.b16 %v5148, %v5146
    %v5193 = vpack.c.b16 %v5149, %v5147
    %v5194 = vpack.c.b16 %v5152, %v5150
    %v5195 = vpack.c.b16 %v5153, %v5151
    %v5196 = vpack.c.b16 %v5156, %v5154
    %v5197 = vpack.c.b16 %v5157, %v5155
    %v5198 = vpack.c.b16 %v5160, %v5158
    %v5199 = vpack.c.b16 %v5161, %v5159
    %v5200 = vpack.c.b16 %v5164, %v5162
    %v5201 = vpack.c.b16 %v5165, %v5163
    %v5202 = vpack.c.b16 %v5168, %v5166
    %v5203 = vpack.c.b16 %v5169, %v5167
    %v5204 = vpack.c.b16 %v5172, %v5170
    %v5205 = vpack.c.b16 %v5173, %v5171
    %5238 = vmatpush.bf16.msra.mxu0 %v5188
    %5239 = vmatpush.bf16.msra.mxu0 %v5186
    %5240 = vmatpush.bf16.msra.mxu0 %v5184
    %5241 = vmatpush.bf16.msra.mxu0 %v5182
    %5242 = vmatpush.bf16.msra.mxu0 %v5180
    %5243 = vmatpush.bf16.msra.mxu0 %v5178
    %5244 = vmatpush.bf16.msra.mxu0 %v5176
    %5245 = vmatpush.bf16.msra.mxu0 %v5174
    %5246 = vmatmul.bf16.gmra.mxu0 %v5043
    %v5247 = vpop.f32.mrf.mxu0
    %v5248 = vadd.f32 0.0, %v5247
    %v5249 = vpop.f32.mrf.mxu0
    %v5250 = vadd.f32 0.0, %v5249
    %5251 = vdwg.mxu0
    %5252 = vmatpush.bf16.msra.mxu0 %v5204
    %5253 = vmatpush.bf16.msra.mxu0 %v5202
    %5254 = vmatpush.bf16.msra.mxu0 %v5200
    %5255 = vmatpush.bf16.msra.mxu0 %v5198
    %5256 = vmatpush.bf16.msra.mxu0 %v5196
    %5257 = vmatpush.bf16.msra.mxu0 %v5194
    %5258 = vmatpush.bf16.msra.mxu0 %v5192
    %5259 = vmatpush.bf16.msra.mxu0 %v5190
    %5260 = vmatmul.bf16.gmra.mxu0 %v5044
    %v5261 = vpop.f32.mrf.mxu0
    %v5262 = vadd.f32 %v5248, %v5261
    %v5263 = vpop.f32.mrf.mxu0
    %v5264 = vadd.f32 %v5250, %v5263
    %5265 = vdwg.mxu0
    %5266 = vmatpush.bf16.msra.mxu0 %v5189
    %5267 = vmatpush.bf16.msra.mxu0 %v5187
    %5268 = vmatpush.bf16.msra.mxu0 %v5185
    %5269 = vmatpush.bf16.msra.mxu0 %v5183
    %5270 = vmatpush.bf16.msra.mxu0 %v5181
    %5271 = vmatpush.bf16.msra.mxu0 %v5179
    %5272 = vmatpush.bf16.msra.mxu0 %v5177
    %5273 = vmatpush.bf16.msra.mxu0 %v5175
    %5274 = vmatmul.bf16.gmra.mxu0 %v5043
    %v5275 = vpop.f32.mrf.mxu0
    %v5276 = vadd.f32 0.0, %v5275
    %v5277 = vpop.f32.mrf.mxu0
    %v5278 = vadd.f32 0.0, %v5277
    %5279 = vdwg.mxu0
    %5280 = vmatpush.bf16.msra.mxu0 %v5205
    %5281 = vmatpush.bf16.msra.mxu0 %v5203
    %5282 = vmatpush.bf16.msra.mxu0 %v5201
    %5283 = vmatpush.bf16.msra.mxu0 %v5199
    %5284 = vmatpush.bf16.msra.mxu0 %v5197
    %5285 = vmatpush.bf16.msra.mxu0 %v5195
    %5286 = vmatpush.bf16.msra.mxu0 %v5193
    %5287 = vmatpush.bf16.msra.mxu0 %v5191
    %5288 = vmatmul.bf16.gmra.mxu0 %v5044
    %v5289 = vpop.f32.mrf.mxu0
    %v5290 = vadd.f32 %v5276, %v5289
    %v5291 = vpop.f32.mrf.mxu0
    %v5292 = vadd.f32 %v5278, %v5291
    %5293 = vdwg.mxu0
    %v5294 = vadd.f32 %v4979, %v5262
    %v5295 = vadd.f32 %v5007, %v5290
    %v5296 = vadd.f32 %v4981, %v5264
    %v5297 = vadd.f32 %v5009, %v5292
    %v5298 = vld [vmem:[#allocation2] sm:$0xf8]
    %v5299 = vld [vmem:[#allocation2 + $0x8] sm:$0xf8]
    %v5300 = vld [vmem:[#allocation2 + $0x10] sm:$0x7]
    %v5301 = vld [vmem:[#allocation2 + $0x18] sm:$0x7]
    %v5302 = vld [vmem:[#allocation2 + $0x20] sm:$0xf8]
    %v5303 = vld [vmem:[#allocation2 + $0x28] sm:$0xf8]
    %v5304 = vld [vmem:[#allocation2 + $0x30] sm:$0x7]
    %v5305 = vld [vmem:[#allocation2 + $0x38] sm:$0x7]
    %v5314 = vrot.slane %v5298, 3
    %v5315 = vrot.slane %v5300, 3
    %v5316 = vsel %vm999, %v5314, %v5315
    %v5317 = vrot.slane %v5299, 3
    %v5318 = vrot.slane %v5301, 3
    %v5319 = vsel %vm999, %v5317, %v5318
    %v5320 = vrot.slane %v5302, 3
    %v5321 = vrot.slane %v5304, 3
    %v5322 = vsel %vm999, %v5320, %v5321
    %v5323 = vrot.slane %v5303, 3
    %v5324 = vrot.slane %v5305, 3
    %v5325 = vsel %vm999, %v5323, %v5324
    %v5330 = vpack.c.bf16 %v5322, %v5316
    %v5331 = vpack.c.bf16 %v5325, %v5319
    %s5332 = scalar_lea.vmem [#allocation4], 4608
    %v5333 = vld [vmem:[%s5332] sm:$0xff]
    %v5334 = vld [vmem:[%s5332 + $0x8] sm:$0xff]
    %v5335 = vld [vmem:[%s5332 + $0x10] sm:$0xff]
    %v5336 = vld [vmem:[%s5332 + $0x18] sm:$0xff]
    %v5337 = vld [vmem:[%s5332 + $0x20] sm:$0xff]
    %v5338 = vld [vmem:[%s5332 + $0x28] sm:$0xff]
    %v5339 = vld [vmem:[%s5332 + $0x30] sm:$0xff]
    %v5340 = vld [vmem:[%s5332 + $0x38] sm:$0xff]
    %v5341 = vld [vmem:[%s5332 + $0x40] sm:$0xff]
    %v5342 = vld [vmem:[%s5332 + $0x48] sm:$0xff]
    %v5343 = vld [vmem:[%s5332 + $0x50] sm:$0xff]
    %v5344 = vld [vmem:[%s5332 + $0x58] sm:$0xff]
    %v5345 = vld [vmem:[%s5332 + $0x60] sm:$0xff]
    %v5346 = vld [vmem:[%s5332 + $0x68] sm:$0xff]
    %v5347 = vld [vmem:[%s5332 + $0x70] sm:$0xff]
    %v5348 = vld [vmem:[%s5332 + $0x78] sm:$0xff]
    %v5349 = vld [vmem:[%s5332 + $0x80] sm:$0xff]
    %v5350 = vld [vmem:[%s5332 + $0x88] sm:$0xff]
    %v5351 = vld [vmem:[%s5332 + $0x90] sm:$0xff]
    %v5352 = vld [vmem:[%s5332 + $0x98] sm:$0xff]
    %v5353 = vld [vmem:[%s5332 + $0xa0] sm:$0xff]
    %v5354 = vld [vmem:[%s5332 + $0xa8] sm:$0xff]
    %v5355 = vld [vmem:[%s5332 + $0xb0] sm:$0xff]
    %v5356 = vld [vmem:[%s5332 + $0xb8] sm:$0xff]
    %v5357 = vld [vmem:[%s5332 + $0xc0] sm:$0xff]
    %v5358 = vld [vmem:[%s5332 + $0xc8] sm:$0xff]
    %v5359 = vld [vmem:[%s5332 + $0xd0] sm:$0xff]
    %v5360 = vld [vmem:[%s5332 + $0xd8] sm:$0xff]
    %v5361 = vld [vmem:[%s5332 + $0xe0] sm:$0xff]
    %v5362 = vld [vmem:[%s5332 + $0xe8] sm:$0xff]
    %v5363 = vld [vmem:[%s5332 + $0xf0] sm:$0xff]
    %v5364 = vld [vmem:[%s5332 + $0xf8] sm:$0xff]
    %v5397 = vunpack.c.l.b16 %v5333
    %v5398 = vunpack.c.h.b16 %v5333
    %v5399 = vunpack.c.l.b16 %v5334
    %v5400 = vunpack.c.h.b16 %v5334
    %v5401 = vunpack.c.l.b16 %v5335
    %v5402 = vunpack.c.h.b16 %v5335
    %v5403 = vunpack.c.l.b16 %v5336
    %v5404 = vunpack.c.h.b16 %v5336
    %v5405 = vunpack.c.l.b16 %v5337
    %v5406 = vunpack.c.h.b16 %v5337
    %v5407 = vunpack.c.l.b16 %v5338
    %v5408 = vunpack.c.h.b16 %v5338
    %v5409 = vunpack.c.l.b16 %v5339
    %v5410 = vunpack.c.h.b16 %v5339
    %v5411 = vunpack.c.l.b16 %v5340
    %v5412 = vunpack.c.h.b16 %v5340
    %v5413 = vunpack.c.l.b16 %v5341
    %v5414 = vunpack.c.h.b16 %v5341
    %v5415 = vunpack.c.l.b16 %v5342
    %v5416 = vunpack.c.h.b16 %v5342
    %v5417 = vunpack.c.l.b16 %v5343
    %v5418 = vunpack.c.h.b16 %v5343
    %v5419 = vunpack.c.l.b16 %v5344
    %v5420 = vunpack.c.h.b16 %v5344
    %v5421 = vunpack.c.l.b16 %v5345
    %v5422 = vunpack.c.h.b16 %v5345
    %v5423 = vunpack.c.l.b16 %v5346
    %v5424 = vunpack.c.h.b16 %v5346
    %v5425 = vunpack.c.l.b16 %v5347
    %v5426 = vunpack.c.h.b16 %v5347
    %v5427 = vunpack.c.l.b16 %v5348
    %v5428 = vunpack.c.h.b16 %v5348
    %v5429 = vunpack.c.l.b16 %v5349
    %v5430 = vunpack.c.h.b16 %v5349
    %v5431 = vunpack.c.l.b16 %v5350
    %v5432 = vunpack.c.h.b16 %v5350
    %v5433 = vunpack.c.l.b16 %v5351
    %v5434 = vunpack.c.h.b16 %v5351
    %v5435 = vunpack.c.l.b16 %v5352
    %v5436 = vunpack.c.h.b16 %v5352
    %v5437 = vunpack.c.l.b16 %v5353
    %v5438 = vunpack.c.h.b16 %v5353
    %v5439 = vunpack.c.l.b16 %v5354
    %v5440 = vunpack.c.h.b16 %v5354
    %v5441 = vunpack.c.l.b16 %v5355
    %v5442 = vunpack.c.h.b16 %v5355
    %v5443 = vunpack.c.l.b16 %v5356
    %v5444 = vunpack.c.h.b16 %v5356
    %v5445 = vunpack.c.l.b16 %v5357
    %v5446 = vunpack.c.h.b16 %v5357
    %v5447 = vunpack.c.l.b16 %v5358
    %v5448 = vunpack.c.h.b16 %v5358
    %v5449 = vunpack.c.l.b16 %v5359
    %v5450 = vunpack.c.h.b16 %v5359
    %v5451 = vunpack.c.l.b16 %v5360
    %v5452 = vunpack.c.h.b16 %v5360
    %v5453 = vunpack.c.l.b16 %v5361
    %v5454 = vunpack.c.h.b16 %v5361
    %v5455 = vunpack.c.l.b16 %v5362
    %v5456 = vunpack.c.h.b16 %v5362
    %v5457 = vunpack.c.l.b16 %v5363
    %v5458 = vunpack.c.h.b16 %v5363
    %v5459 = vunpack.c.l.b16 %v5364
    %v5460 = vunpack.c.h.b16 %v5364
    %v5461 = vpack.c.b16 %v5399, %v5397
    %v5462 = vpack.c.b16 %v5400, %v5398
    %v5463 = vpack.c.b16 %v5403, %v5401
    %v5464 = vpack.c.b16 %v5404, %v5402
    %v5465 = vpack.c.b16 %v5407, %v5405
    %v5466 = vpack.c.b16 %v5408, %v5406
    %v5467 = vpack.c.b16 %v5411, %v5409
    %v5468 = vpack.c.b16 %v5412, %v5410
    %v5469 = vpack.c.b16 %v5415, %v5413
    %v5470 = vpack.c.b16 %v5416, %v5414
    %v5471 = vpack.c.b16 %v5419, %v5417
    %v5472 = vpack.c.b16 %v5420, %v5418
    %v5473 = vpack.c.b16 %v5423, %v5421
    %v5474 = vpack.c.b16 %v5424, %v5422
    %v5475 = vpack.c.b16 %v5427, %v5425
    %v5476 = vpack.c.b16 %v5428, %v5426
    %v5477 = vpack.c.b16 %v5431, %v5429
    %v5478 = vpack.c.b16 %v5432, %v5430
    %v5479 = vpack.c.b16 %v5435, %v5433
    %v5480 = vpack.c.b16 %v5436, %v5434
    %v5481 = vpack.c.b16 %v5439, %v5437
    %v5482 = vpack.c.b16 %v5440, %v5438
    %v5483 = vpack.c.b16 %v5443, %v5441
    %v5484 = vpack.c.b16 %v5444, %v5442
    %v5485 = vpack.c.b16 %v5447, %v5445
    %v5486 = vpack.c.b16 %v5448, %v5446
    %v5487 = vpack.c.b16 %v5451, %v5449
    %v5488 = vpack.c.b16 %v5452, %v5450
    %v5489 = vpack.c.b16 %v5455, %v5453
    %v5490 = vpack.c.b16 %v5456, %v5454
    %v5491 = vpack.c.b16 %v5459, %v5457
    %v5492 = vpack.c.b16 %v5460, %v5458
    %5525 = vmatpush.bf16.msra.mxu0 %v5475
    %5526 = vmatpush.bf16.msra.mxu0 %v5473
    %5527 = vmatpush.bf16.msra.mxu0 %v5471
    %5528 = vmatpush.bf16.msra.mxu0 %v5469
    %5529 = vmatpush.bf16.msra.mxu0 %v5467
    %5530 = vmatpush.bf16.msra.mxu0 %v5465
    %5531 = vmatpush.bf16.msra.mxu0 %v5463
    %5532 = vmatpush.bf16.msra.mxu0 %v5461
    %5533 = vmatmul.bf16.gmra.mxu0 %v5330
    %v5534 = vpop.f32.mrf.mxu0
    %v5535 = vadd.f32 0.0, %v5534
    %v5536 = vpop.f32.mrf.mxu0
    %v5537 = vadd.f32 0.0, %v5536
    %5538 = vdwg.mxu0
    %5539 = vmatpush.bf16.msra.mxu0 %v5491
    %5540 = vmatpush.bf16.msra.mxu0 %v5489
    %5541 = vmatpush.bf16.msra.mxu0 %v5487
    %5542 = vmatpush.bf16.msra.mxu0 %v5485
    %5543 = vmatpush.bf16.msra.mxu0 %v5483
    %5544 = vmatpush.bf16.msra.mxu0 %v5481
    %5545 = vmatpush.bf16.msra.mxu0 %v5479
    %5546 = vmatpush.bf16.msra.mxu0 %v5477
    %5547 = vmatmul.bf16.gmra.mxu0 %v5331
    %v5548 = vpop.f32.mrf.mxu0
    %v5549 = vadd.f32 %v5535, %v5548
    %v5550 = vpop.f32.mrf.mxu0
    %v5551 = vadd.f32 %v5537, %v5550
    %5552 = vdwg.mxu0
    %5553 = vmatpush.bf16.msra.mxu0 %v5476
    %5554 = vmatpush.bf16.msra.mxu0 %v5474
    %5555 = vmatpush.bf16.msra.mxu0 %v5472
    %5556 = vmatpush.bf16.msra.mxu0 %v5470
    %5557 = vmatpush.bf16.msra.mxu0 %v5468
    %5558 = vmatpush.bf16.msra.mxu0 %v5466
    %5559 = vmatpush.bf16.msra.mxu0 %v5464
    %5560 = vmatpush.bf16.msra.mxu0 %v5462
    %5561 = vmatmul.bf16.gmra.mxu0 %v5330
    %v5562 = vpop.f32.mrf.mxu0
    %v5563 = vadd.f32 0.0, %v5562
    %v5564 = vpop.f32.mrf.mxu0
    %v5565 = vadd.f32 0.0, %v5564
    %5566 = vdwg.mxu0
    %5567 = vmatpush.bf16.msra.mxu0 %v5492
    %5568 = vmatpush.bf16.msra.mxu0 %v5490
    %5569 = vmatpush.bf16.msra.mxu0 %v5488
    %5570 = vmatpush.bf16.msra.mxu0 %v5486
    %5571 = vmatpush.bf16.msra.mxu0 %v5484
    %5572 = vmatpush.bf16.msra.mxu0 %v5482
    %5573 = vmatpush.bf16.msra.mxu0 %v5480
    %5574 = vmatpush.bf16.msra.mxu0 %v5478
    %5575 = vmatmul.bf16.gmra.mxu0 %v5331
    %v5576 = vpop.f32.mrf.mxu0
    %v5577 = vadd.f32 %v5563, %v5576
    %v5578 = vpop.f32.mrf.mxu0
    %v5579 = vadd.f32 %v5565, %v5578
    %5580 = vdwg.mxu0
    %v5581 = vadd.f32 %v5294, %v5549
    %v5582 = vadd.f32 %v5295, %v5577
    %v5583 = vadd.f32 %v5296, %v5551
    %v5584 = vadd.f32 %v5297, %v5579
    %v5585 = vld [vmem:[#allocation2] sm:$0xf0]
    %v5586 = vld [vmem:[#allocation2 + $0x8] sm:$0xf0]
    %v5587 = vld [vmem:[#allocation2 + $0x10] sm:$0xf]
    %v5588 = vld [vmem:[#allocation2 + $0x18] sm:$0xf]
    %v5589 = vld [vmem:[#allocation2 + $0x20] sm:$0xf0]
    %v5590 = vld [vmem:[#allocation2 + $0x28] sm:$0xf0]
    %v5591 = vld [vmem:[#allocation2 + $0x30] sm:$0xf]
    %v5592 = vld [vmem:[#allocation2 + $0x38] sm:$0xf]
    %v5601 = vrot.slane %v5585, 4
    %v5602 = vrot.slane %v5587, 4
    %v5603 = vsel %vm1287, %v5601, %v5602
    %v5604 = vrot.slane %v5586, 4
    %v5605 = vrot.slane %v5588, 4
    %v5606 = vsel %vm1287, %v5604, %v5605
    %v5607 = vrot.slane %v5589, 4
    %v5608 = vrot.slane %v5591, 4
    %v5609 = vsel %vm1287, %v5607, %v5608
    %v5610 = vrot.slane %v5590, 4
    %v5611 = vrot.slane %v5592, 4
    %v5612 = vsel %vm1287, %v5610, %v5611
    %v5617 = vpack.c.bf16 %v5609, %v5603
    %v5618 = vpack.c.bf16 %v5612, %v5606
    %s5619 = scalar_lea.vmem [#allocation4], 4864
    %v5620 = vld [vmem:[%s5619] sm:$0xff]
    %v5621 = vld [vmem:[%s5619 + $0x8] sm:$0xff]
    %v5622 = vld [vmem:[%s5619 + $0x10] sm:$0xff]
    %v5623 = vld [vmem:[%s5619 + $0x18] sm:$0xff]
    %v5624 = vld [vmem:[%s5619 + $0x20] sm:$0xff]
    %v5625 = vld [vmem:[%s5619 + $0x28] sm:$0xff]
    %v5626 = vld [vmem:[%s5619 + $0x30] sm:$0xff]
    %v5627 = vld [vmem:[%s5619 + $0x38] sm:$0xff]
    %v5628 = vld [vmem:[%s5619 + $0x40] sm:$0xff]
    %v5629 = vld [vmem:[%s5619 + $0x48] sm:$0xff]
    %v5630 = vld [vmem:[%s5619 + $0x50] sm:$0xff]
    %v5631 = vld [vmem:[%s5619 + $0x58] sm:$0xff]
    %v5632 = vld [vmem:[%s5619 + $0x60] sm:$0xff]
    %v5633 = vld [vmem:[%s5619 + $0x68] sm:$0xff]
    %v5634 = vld [vmem:[%s5619 + $0x70] sm:$0xff]
    %v5635 = vld [vmem:[%s5619 + $0x78] sm:$0xff]
    %v5636 = vld [vmem:[%s5619 + $0x80] sm:$0xff]
    %v5637 = vld [vmem:[%s5619 + $0x88] sm:$0xff]
    %v5638 = vld [vmem:[%s5619 + $0x90] sm:$0xff]
    %v5639 = vld [vmem:[%s5619 + $0x98] sm:$0xff]
    %v5640 = vld [vmem:[%s5619 + $0xa0] sm:$0xff]
    %v5641 = vld [vmem:[%s5619 + $0xa8] sm:$0xff]
    %v5642 = vld [vmem:[%s5619 + $0xb0] sm:$0xff]
    %v5643 = vld [vmem:[%s5619 + $0xb8] sm:$0xff]
    %v5644 = vld [vmem:[%s5619 + $0xc0] sm:$0xff]
    %v5645 = vld [vmem:[%s5619 + $0xc8] sm:$0xff]
    %v5646 = vld [vmem:[%s5619 + $0xd0] sm:$0xff]
    %v5647 = vld [vmem:[%s5619 + $0xd8] sm:$0xff]
    %v5648 = vld [vmem:[%s5619 + $0xe0] sm:$0xff]
    %v5649 = vld [vmem:[%s5619 + $0xe8] sm:$0xff]
    %v5650 = vld [vmem:[%s5619 + $0xf0] sm:$0xff]
    %v5651 = vld [vmem:[%s5619 + $0xf8] sm:$0xff]
    %v5684 = vunpack.c.l.b16 %v5620
    %v5685 = vunpack.c.h.b16 %v5620
    %v5686 = vunpack.c.l.b16 %v5621
    %v5687 = vunpack.c.h.b16 %v5621
    %v5688 = vunpack.c.l.b16 %v5622
    %v5689 = vunpack.c.h.b16 %v5622
    %v5690 = vunpack.c.l.b16 %v5623
    %v5691 = vunpack.c.h.b16 %v5623
    %v5692 = vunpack.c.l.b16 %v5624
    %v5693 = vunpack.c.h.b16 %v5624
    %v5694 = vunpack.c.l.b16 %v5625
    %v5695 = vunpack.c.h.b16 %v5625
    %v5696 = vunpack.c.l.b16 %v5626
    %v5697 = vunpack.c.h.b16 %v5626
    %v5698 = vunpack.c.l.b16 %v5627
    %v5699 = vunpack.c.h.b16 %v5627
    %v5700 = vunpack.c.l.b16 %v5628
    %v5701 = vunpack.c.h.b16 %v5628
    %v5702 = vunpack.c.l.b16 %v5629
    %v5703 = vunpack.c.h.b16 %v5629
    %v5704 = vunpack.c.l.b16 %v5630
    %v5705 = vunpack.c.h.b16 %v5630
    %v5706 = vunpack.c.l.b16 %v5631
    %v5707 = vunpack.c.h.b16 %v5631
    %v5708 = vunpack.c.l.b16 %v5632
    %v5709 = vunpack.c.h.b16 %v5632
    %v5710 = vunpack.c.l.b16 %v5633
    %v5711 = vunpack.c.h.b16 %v5633
    %v5712 = vunpack.c.l.b16 %v5634
    %v5713 = vunpack.c.h.b16 %v5634
    %v5714 = vunpack.c.l.b16 %v5635
    %v5715 = vunpack.c.h.b16 %v5635
    %v5716 = vunpack.c.l.b16 %v5636
    %v5717 = vunpack.c.h.b16 %v5636
    %v5718 = vunpack.c.l.b16 %v5637
    %v5719 = vunpack.c.h.b16 %v5637
    %v5720 = vunpack.c.l.b16 %v5638
    %v5721 = vunpack.c.h.b16 %v5638
    %v5722 = vunpack.c.l.b16 %v5639
    %v5723 = vunpack.c.h.b16 %v5639
    %v5724 = vunpack.c.l.b16 %v5640
    %v5725 = vunpack.c.h.b16 %v5640
    %v5726 = vunpack.c.l.b16 %v5641
    %v5727 = vunpack.c.h.b16 %v5641
    %v5728 = vunpack.c.l.b16 %v5642
    %v5729 = vunpack.c.h.b16 %v5642
    %v5730 = vunpack.c.l.b16 %v5643
    %v5731 = vunpack.c.h.b16 %v5643
    %v5732 = vunpack.c.l.b16 %v5644
    %v5733 = vunpack.c.h.b16 %v5644
    %v5734 = vunpack.c.l.b16 %v5645
    %v5735 = vunpack.c.h.b16 %v5645
    %v5736 = vunpack.c.l.b16 %v5646
    %v5737 = vunpack.c.h.b16 %v5646
    %v5738 = vunpack.c.l.b16 %v5647
    %v5739 = vunpack.c.h.b16 %v5647
    %v5740 = vunpack.c.l.b16 %v5648
    %v5741 = vunpack.c.h.b16 %v5648
    %v5742 = vunpack.c.l.b16 %v5649
    %v5743 = vunpack.c.h.b16 %v5649
    %v5744 = vunpack.c.l.b16 %v5650
    %v5745 = vunpack.c.h.b16 %v5650
    %v5746 = vunpack.c.l.b16 %v5651
    %v5747 = vunpack.c.h.b16 %v5651
    %v5748 = vpack.c.b16 %v5686, %v5684
    %v5749 = vpack.c.b16 %v5687, %v5685
    %v5750 = vpack.c.b16 %v5690, %v5688
    %v5751 = vpack.c.b16 %v5691, %v5689
    %v5752 = vpack.c.b16 %v5694, %v5692
    %v5753 = vpack.c.b16 %v5695, %v5693
    %v5754 = vpack.c.b16 %v5698, %v5696
    %v5755 = vpack.c.b16 %v5699, %v5697
    %v5756 = vpack.c.b16 %v5702, %v5700
    %v5757 = vpack.c.b16 %v5703, %v5701
    %v5758 = vpack.c.b16 %v5706, %v5704
    %v5759 = vpack.c.b16 %v5707, %v5705
    %v5760 = vpack.c.b16 %v5710, %v5708
    %v5761 = vpack.c.b16 %v5711, %v5709
    %v5762 = vpack.c.b16 %v5714, %v5712
    %v5763 = vpack.c.b16 %v5715, %v5713
    %v5764 = vpack.c.b16 %v5718, %v5716
    %v5765 = vpack.c.b16 %v5719, %v5717
    %v5766 = vpack.c.b16 %v5722, %v5720
    %v5767 = vpack.c.b16 %v5723, %v5721
    %v5768 = vpack.c.b16 %v5726, %v5724
    %v5769 = vpack.c.b16 %v5727, %v5725
    %v5770 = vpack.c.b16 %v5730, %v5728
    %v5771 = vpack.c.b16 %v5731, %v5729
    %v5772 = vpack.c.b16 %v5734, %v5732
    %v5773 = vpack.c.b16 %v5735, %v5733
    %v5774 = vpack.c.b16 %v5738, %v5736
    %v5775 = vpack.c.b16 %v5739, %v5737
    %v5776 = vpack.c.b16 %v5742, %v5740
    %v5777 = vpack.c.b16 %v5743, %v5741
    %v5778 = vpack.c.b16 %v5746, %v5744
    %v5779 = vpack.c.b16 %v5747, %v5745
    %5812 = vmatpush.bf16.msra.mxu0 %v5762
    %5813 = vmatpush.bf16.msra.mxu0 %v5760
    %5814 = vmatpush.bf16.msra.mxu0 %v5758
    %5815 = vmatpush.bf16.msra.mxu0 %v5756
    %5816 = vmatpush.bf16.msra.mxu0 %v5754
    %5817 = vmatpush.bf16.msra.mxu0 %v5752
    %5818 = vmatpush.bf16.msra.mxu0 %v5750
    %5819 = vmatpush.bf16.msra.mxu0 %v5748
    %5820 = vmatmul.bf16.gmra.mxu0 %v5617
    %v5821 = vpop.f32.mrf.mxu0
    %v5822 = vadd.f32 0.0, %v5821
    %v5823 = vpop.f32.mrf.mxu0
    %v5824 = vadd.f32 0.0, %v5823
    %5825 = vdwg.mxu0
    %5826 = vmatpush.bf16.msra.mxu0 %v5778
    %5827 = vmatpush.bf16.msra.mxu0 %v5776
    %5828 = vmatpush.bf16.msra.mxu0 %v5774
    %5829 = vmatpush.bf16.msra.mxu0 %v5772
    %5830 = vmatpush.bf16.msra.mxu0 %v5770
    %5831 = vmatpush.bf16.msra.mxu0 %v5768
    %5832 = vmatpush.bf16.msra.mxu0 %v5766
    %5833 = vmatpush.bf16.msra.mxu0 %v5764
    %5834 = vmatmul.bf16.gmra.mxu0 %v5618
    %v5835 = vpop.f32.mrf.mxu0
    %v5836 = vadd.f32 %v5822, %v5835
    %v5837 = vpop.f32.mrf.mxu0
    %v5838 = vadd.f32 %v5824, %v5837
    %5839 = vdwg.mxu0
    %5840 = vmatpush.bf16.msra.mxu0 %v5763
    %5841 = vmatpush.bf16.msra.mxu0 %v5761
    %5842 = vmatpush.bf16.msra.mxu0 %v5759
    %5843 = vmatpush.bf16.msra.mxu0 %v5757
    %5844 = vmatpush.bf16.msra.mxu0 %v5755
    %5845 = vmatpush.bf16.msra.mxu0 %v5753
    %5846 = vmatpush.bf16.msra.mxu0 %v5751
    %5847 = vmatpush.bf16.msra.mxu0 %v5749
    %5848 = vmatmul.bf16.gmra.mxu0 %v5617
    %v5849 = vpop.f32.mrf.mxu0
    %v5850 = vadd.f32 0.0, %v5849
    %v5851 = vpop.f32.mrf.mxu0
    %v5852 = vadd.f32 0.0, %v5851
    %5853 = vdwg.mxu0
    %5854 = vmatpush.bf16.msra.mxu0 %v5779
    %5855 = vmatpush.bf16.msra.mxu0 %v5777
    %5856 = vmatpush.bf16.msra.mxu0 %v5775
    %5857 = vmatpush.bf16.msra.mxu0 %v5773
    %5858 = vmatpush.bf16.msra.mxu0 %v5771
    %5859 = vmatpush.bf16.msra.mxu0 %v5769
    %5860 = vmatpush.bf16.msra.mxu0 %v5767
    %5861 = vmatpush.bf16.msra.mxu0 %v5765
    %5862 = vmatmul.bf16.gmra.mxu0 %v5618
    %v5863 = vpop.f32.mrf.mxu0
    %v5864 = vadd.f32 %v5850, %v5863
    %v5865 = vpop.f32.mrf.mxu0
    %v5866 = vadd.f32 %v5852, %v5865
    %5867 = vdwg.mxu0
    %v5868 = vadd.f32 %v5581, %v5836
    %v5869 = vadd.f32 %v5582, %v5864
    %v5870 = vadd.f32 %v5583, %v5838
    %v5871 = vadd.f32 %v5584, %v5866
    %s5872 = scalar_lea.vmem [#allocation6], 6
    %v5873 = vld [vmem:[%s5872] sm:$0x3]
    %v5875 = vperm.slane %v5873, 0
    %v5876 = vperm.slane %v5873, 1
    %v5879 = vadd.f32 %v5868, %v5875
    %v5880 = vadd.f32 %v5869, %v5876
    %v5881 = vadd.f32 %v5870, %v5875
    %v5882 = vadd.f32 %v5871, %v5876
    %v5883 = vmul.f32 %v5879, 0.01
    %v5884 = vmul.f32 %v5880, 0.01
    %v5885 = vmul.f32 %v5881, 0.01
    %v5886 = vmul.f32 %v5882, 0.01
    %v5887 = vmax.f32 %v5879, %v5883
    %v5888 = vmax.f32 %v5880, %v5884
    %v5889 = vmax.f32 %v5881, %v5885
    %v5890 = vmax.f32 %v5882, %v5886
    %v5895 = vrot.slane %v5887, 6
    %v5896 = vrot.slane %v5888, 6
    %v5897 = vrot.slane %v5889, 6
    %v5898 = vrot.slane %v5890, 6
    %5903 = vst [vmem:[#allocation2] sm:$0xfc] %v5895
    %5904 = vst [vmem:[#allocation2 + $0x8] sm:$0xfc] %v5896
    %5905 = vst [vmem:[#allocation2 + $0x10] sm:$0x3] %v5895
    %5906 = vst [vmem:[#allocation2 + $0x18] sm:$0x3] %v5896
    %5907 = vst [vmem:[#allocation2 + $0x20] sm:$0xfc] %v5897
    %5908 = vst [vmem:[#allocation2 + $0x28] sm:$0xfc] %v5898
    %5909 = vst [vmem:[#allocation2 + $0x30] sm:$0x3] %v5897
    %5910 = vst [vmem:[#allocation2 + $0x38] sm:$0x3] %v5898
    %v5911 = vld [vmem:[#allocation2] sm:$0xff]
    %v5912 = vld [vmem:[#allocation2 + $0x8] sm:$0xff]
    %v5913 = vld [vmem:[#allocation2 + $0x20] sm:$0xff]
    %v5914 = vld [vmem:[#allocation2 + $0x28] sm:$0xff]
    %v5915 = vpack.c.bf16 %v5913, %v5911
    %v5916 = vpack.c.bf16 %v5914, %v5912
    %s5917 = scalar_lea.vmem [#allocation4], 5120
    %v5918 = vld [vmem:[%s5917] sm:$0xff]
    %v5919 = vld [vmem:[%s5917 + $0x8] sm:$0xff]
    %v5920 = vld [vmem:[%s5917 + $0x10] sm:$0xff]
    %v5921 = vld [vmem:[%s5917 + $0x18] sm:$0xff]
    %v5922 = vld [vmem:[%s5917 + $0x20] sm:$0xff]
    %v5923 = vld [vmem:[%s5917 + $0x28] sm:$0xff]
    %v5924 = vld [vmem:[%s5917 + $0x30] sm:$0xff]
    %v5925 = vld [vmem:[%s5917 + $0x38] sm:$0xff]
    %v5926 = vld [vmem:[%s5917 + $0x40] sm:$0xff]
    %v5927 = vld [vmem:[%s5917 + $0x48] sm:$0xff]
    %v5928 = vld [vmem:[%s5917 + $0x50] sm:$0xff]
    %v5929 = vld [vmem:[%s5917 + $0x58] sm:$0xff]
    %v5930 = vld [vmem:[%s5917 + $0x60] sm:$0xff]
    %v5931 = vld [vmem:[%s5917 + $0x68] sm:$0xff]
    %v5932 = vld [vmem:[%s5917 + $0x70] sm:$0xff]
    %v5933 = vld [vmem:[%s5917 + $0x78] sm:$0xff]
    %v5934 = vld [vmem:[%s5917 + $0x80] sm:$0xff]
    %v5935 = vld [vmem:[%s5917 + $0x88] sm:$0xff]
    %v5936 = vld [vmem:[%s5917 + $0x90] sm:$0xff]
    %v5937 = vld [vmem:[%s5917 + $0x98] sm:$0xff]
    %v5938 = vld [vmem:[%s5917 + $0xa0] sm:$0xff]
    %v5939 = vld [vmem:[%s5917 + $0xa8] sm:$0xff]
    %v5940 = vld [vmem:[%s5917 + $0xb0] sm:$0xff]
    %v5941 = vld [vmem:[%s5917 + $0xb8] sm:$0xff]
    %v5942 = vld [vmem:[%s5917 + $0xc0] sm:$0xff]
    %v5943 = vld [vmem:[%s5917 + $0xc8] sm:$0xff]
    %v5944 = vld [vmem:[%s5917 + $0xd0] sm:$0xff]
    %v5945 = vld [vmem:[%s5917 + $0xd8] sm:$0xff]
    %v5946 = vld [vmem:[%s5917 + $0xe0] sm:$0xff]
    %v5947 = vld [vmem:[%s5917 + $0xe8] sm:$0xff]
    %v5948 = vld [vmem:[%s5917 + $0xf0] sm:$0xff]
    %v5949 = vld [vmem:[%s5917 + $0xf8] sm:$0xff]
    %v5950 = vld [vmem:[#allocation2] sm:$0xfe]
    %v5951 = vld [vmem:[#allocation2 + $0x8] sm:$0xfe]
    %v5952 = vld [vmem:[#allocation2 + $0x10] sm:$0x1]
    %v5953 = vld [vmem:[#allocation2 + $0x18] sm:$0x1]
    %v5954 = vld [vmem:[#allocation2 + $0x20] sm:$0xfe]
    %v5955 = vld [vmem:[#allocation2 + $0x28] sm:$0xfe]
    %v5956 = vld [vmem:[#allocation2 + $0x30] sm:$0x1]
    %v5957 = vld [vmem:[#allocation2 + $0x38] sm:$0x1]
    %v5966 = vrot.slane %v5950, 1
    %v5967 = vrot.slane %v5952, 1
    %v5968 = vsel %vm211, %v5966, %v5967
    %v5969 = vrot.slane %v5951, 1
    %v5970 = vrot.slane %v5953, 1
    %v5971 = vsel %vm211, %v5969, %v5970
    %v5972 = vrot.slane %v5954, 1
    %v5973 = vrot.slane %v5956, 1
    %v5974 = vsel %vm211, %v5972, %v5973
    %v5975 = vrot.slane %v5955, 1
    %v5976 = vrot.slane %v5957, 1
    %v5977 = vsel %vm211, %v5975, %v5976
    %v5982 = vpack.c.bf16 %v5974, %v5968
    %v5983 = vpack.c.bf16 %v5977, %v5971
    %s5984 = scalar_lea.vmem [#allocation4], 5376
    %v5985 = vld [vmem:[%s5984] sm:$0xff]
    %v5986 = vld [vmem:[%s5984 + $0x8] sm:$0xff]
    %v5987 = vld [vmem:[%s5984 + $0x10] sm:$0xff]
    %v5988 = vld [vmem:[%s5984 + $0x18] sm:$0xff]
    %v5989 = vld [vmem:[%s5984 + $0x20] sm:$0xff]
    %v5990 = vld [vmem:[%s5984 + $0x28] sm:$0xff]
    %v5991 = vld [vmem:[%s5984 + $0x30] sm:$0xff]
    %v5992 = vld [vmem:[%s5984 + $0x38] sm:$0xff]
    %v5993 = vld [vmem:[%s5984 + $0x40] sm:$0xff]
    %v5994 = vld [vmem:[%s5984 + $0x48] sm:$0xff]
    %v5995 = vld [vmem:[%s5984 + $0x50] sm:$0xff]
    %v5996 = vld [vmem:[%s5984 + $0x58] sm:$0xff]
    %v5997 = vld [vmem:[%s5984 + $0x60] sm:$0xff]
    %v5998 = vld [vmem:[%s5984 + $0x68] sm:$0xff]
    %v5999 = vld [vmem:[%s5984 + $0x70] sm:$0xff]
    %v6000 = vld [vmem:[%s5984 + $0x78] sm:$0xff]
    %v6001 = vld [vmem:[%s5984 + $0x80] sm:$0xff]
    %v6002 = vld [vmem:[%s5984 + $0x88] sm:$0xff]
    %v6003 = vld [vmem:[%s5984 + $0x90] sm:$0xff]
    %v6004 = vld [vmem:[%s5984 + $0x98] sm:$0xff]
    %v6005 = vld [vmem:[%s5984 + $0xa0] sm:$0xff]
    %v6006 = vld [vmem:[%s5984 + $0xa8] sm:$0xff]
    %v6007 = vld [vmem:[%s5984 + $0xb0] sm:$0xff]
    %v6008 = vld [vmem:[%s5984 + $0xb8] sm:$0xff]
    %v6009 = vld [vmem:[%s5984 + $0xc0] sm:$0xff]
    %v6010 = vld [vmem:[%s5984 + $0xc8] sm:$0xff]
    %v6011 = vld [vmem:[%s5984 + $0xd0] sm:$0xff]
    %v6012 = vld [vmem:[%s5984 + $0xd8] sm:$0xff]
    %v6013 = vld [vmem:[%s5984 + $0xe0] sm:$0xff]
    %v6014 = vld [vmem:[%s5984 + $0xe8] sm:$0xff]
    %v6015 = vld [vmem:[%s5984 + $0xf0] sm:$0xff]
    %v6016 = vld [vmem:[%s5984 + $0xf8] sm:$0xff]
    %v6049 = vunpack.c.l.b16 %v5985
    %v6050 = vunpack.c.h.b16 %v5985
    %v6051 = vunpack.c.l.b16 %v5986
    %v6052 = vunpack.c.h.b16 %v5986
    %v6053 = vunpack.c.l.b16 %v5987
    %v6054 = vunpack.c.h.b16 %v5987
    %v6055 = vunpack.c.l.b16 %v5988
    %v6056 = vunpack.c.h.b16 %v5988
    %v6057 = vunpack.c.l.b16 %v5989
    %v6058 = vunpack.c.h.b16 %v5989
    %v6059 = vunpack.c.l.b16 %v5990
    %v6060 = vunpack.c.h.b16 %v5990
    %v6061 = vunpack.c.l.b16 %v5991
    %v6062 = vunpack.c.h.b16 %v5991
    %v6063 = vunpack.c.l.b16 %v5992
    %v6064 = vunpack.c.h.b16 %v5992
    %v6065 = vunpack.c.l.b16 %v5993
    %v6066 = vunpack.c.h.b16 %v5993
    %v6067 = vunpack.c.l.b16 %v5994
    %v6068 = vunpack.c.h.b16 %v5994
    %v6069 = vunpack.c.l.b16 %v5995
    %v6070 = vunpack.c.h.b16 %v5995
    %v6071 = vunpack.c.l.b16 %v5996
    %v6072 = vunpack.c.h.b16 %v5996
    %v6073 = vunpack.c.l.b16 %v5997
    %v6074 = vunpack.c.h.b16 %v5997
    %v6075 = vunpack.c.l.b16 %v5998
    %v6076 = vunpack.c.h.b16 %v5998
    %v6077 = vunpack.c.l.b16 %v5999
    %v6078 = vunpack.c.h.b16 %v5999
    %v6079 = vunpack.c.l.b16 %v6000
    %v6080 = vunpack.c.h.b16 %v6000
    %v6081 = vunpack.c.l.b16 %v6001
    %v6082 = vunpack.c.h.b16 %v6001
    %v6083 = vunpack.c.l.b16 %v6002
    %v6084 = vunpack.c.h.b16 %v6002
    %v6085 = vunpack.c.l.b16 %v6003
    %v6086 = vunpack.c.h.b16 %v6003
    %v6087 = vunpack.c.l.b16 %v6004
    %v6088 = vunpack.c.h.b16 %v6004
    %v6089 = vunpack.c.l.b16 %v6005
    %v6090 = vunpack.c.h.b16 %v6005
    %v6091 = vunpack.c.l.b16 %v6006
    %v6092 = vunpack.c.h.b16 %v6006
    %v6093 = vunpack.c.l.b16 %v6007
    %v6094 = vunpack.c.h.b16 %v6007
    %v6095 = vunpack.c.l.b16 %v6008
    %v6096 = vunpack.c.h.b16 %v6008
    %v6097 = vunpack.c.l.b16 %v6009
    %v6098 = vunpack.c.h.b16 %v6009
    %v6099 = vunpack.c.l.b16 %v6010
    %v6100 = vunpack.c.h.b16 %v6010
    %v6101 = vunpack.c.l.b16 %v6011
    %v6102 = vunpack.c.h.b16 %v6011
    %v6103 = vunpack.c.l.b16 %v6012
    %v6104 = vunpack.c.h.b16 %v6012
    %v6105 = vunpack.c.l.b16 %v6013
    %v6106 = vunpack.c.h.b16 %v6013
    %v6107 = vunpack.c.l.b16 %v6014
    %v6108 = vunpack.c.h.b16 %v6014
    %v6109 = vunpack.c.l.b16 %v6015
    %v6110 = vunpack.c.h.b16 %v6015
    %v6111 = vunpack.c.l.b16 %v6016
    %v6112 = vunpack.c.h.b16 %v6016
    %v6113 = vpack.c.b16 %v6051, %v6049
    %v6114 = vpack.c.b16 %v6052, %v6050
    %v6115 = vpack.c.b16 %v6055, %v6053
    %v6116 = vpack.c.b16 %v6056, %v6054
    %v6117 = vpack.c.b16 %v6059, %v6057
    %v6118 = vpack.c.b16 %v6060, %v6058
    %v6119 = vpack.c.b16 %v6063, %v6061
    %v6120 = vpack.c.b16 %v6064, %v6062
    %v6121 = vpack.c.b16 %v6067, %v6065
    %v6122 = vpack.c.b16 %v6068, %v6066
    %v6123 = vpack.c.b16 %v6071, %v6069
    %v6124 = vpack.c.b16 %v6072, %v6070
    %v6125 = vpack.c.b16 %v6075, %v6073
    %v6126 = vpack.c.b16 %v6076, %v6074
    %v6127 = vpack.c.b16 %v6079, %v6077
    %v6128 = vpack.c.b16 %v6080, %v6078
    %v6129 = vpack.c.b16 %v6083, %v6081
    %v6130 = vpack.c.b16 %v6084, %v6082
    %v6131 = vpack.c.b16 %v6087, %v6085
    %v6132 = vpack.c.b16 %v6088, %v6086
    %v6133 = vpack.c.b16 %v6091, %v6089
    %v6134 = vpack.c.b16 %v6092, %v6090
    %v6135 = vpack.c.b16 %v6095, %v6093
    %v6136 = vpack.c.b16 %v6096, %v6094
    %v6137 = vpack.c.b16 %v6099, %v6097
    %v6138 = vpack.c.b16 %v6100, %v6098
    %v6139 = vpack.c.b16 %v6103, %v6101
    %v6140 = vpack.c.b16 %v6104, %v6102
    %v6141 = vpack.c.b16 %v6107, %v6105
    %v6142 = vpack.c.b16 %v6108, %v6106
    %v6143 = vpack.c.b16 %v6111, %v6109
    %v6144 = vpack.c.b16 %v6112, %v6110
    %6177 = vmatpush.bf16.msra.mxu0 %v6127
    %6178 = vmatpush.bf16.msra.mxu0 %v6125
    %6179 = vmatpush.bf16.msra.mxu0 %v6123
    %6180 = vmatpush.bf16.msra.mxu0 %v6121
    %6181 = vmatpush.bf16.msra.mxu0 %v6119
    %6182 = vmatpush.bf16.msra.mxu0 %v6117
    %6183 = vmatpush.bf16.msra.mxu0 %v6115
    %6184 = vmatpush.bf16.msra.mxu0 %v6113
    %6185 = vmatmul.bf16.gmra.mxu0 %v5982
    %v6186 = vpop.f32.mrf.mxu0
    %v6187 = vadd.f32 0.0, %v6186
    %v6188 = vpop.f32.mrf.mxu0
    %v6189 = vadd.f32 0.0, %v6188
    %6190 = vdwg.mxu0
    %6191 = vmatpush.bf16.msra.mxu0 %v6143
    %6192 = vmatpush.bf16.msra.mxu0 %v6141
    %6193 = vmatpush.bf16.msra.mxu0 %v6139
    %6194 = vmatpush.bf16.msra.mxu0 %v6137
    %6195 = vmatpush.bf16.msra.mxu0 %v6135
    %6196 = vmatpush.bf16.msra.mxu0 %v6133
    %6197 = vmatpush.bf16.msra.mxu0 %v6131
    %6198 = vmatpush.bf16.msra.mxu0 %v6129
    %6199 = vmatmul.bf16.gmra.mxu0 %v5983
    %v6200 = vpop.f32.mrf.mxu0
    %v6201 = vadd.f32 %v6187, %v6200
    %v6202 = vpop.f32.mrf.mxu0
    %v6203 = vadd.f32 %v6189, %v6202
    %6204 = vdwg.mxu0
    %6205 = vmatpush.bf16.msra.mxu0 %v6128
    %6206 = vmatpush.bf16.msra.mxu0 %v6126
    %6207 = vmatpush.bf16.msra.mxu0 %v6124
    %6208 = vmatpush.bf16.msra.mxu0 %v6122
    %6209 = vmatpush.bf16.msra.mxu0 %v6120
    %6210 = vmatpush.bf16.msra.mxu0 %v6118
    %6211 = vmatpush.bf16.msra.mxu0 %v6116
    %6212 = vmatpush.bf16.msra.mxu0 %v6114
    %6213 = vmatmul.bf16.gmra.mxu0 %v5982
    %v6214 = vpop.f32.mrf.mxu0
    %v6215 = vadd.f32 0.0, %v6214
    %v6216 = vpop.f32.mrf.mxu0
    %v6217 = vadd.f32 0.0, %v6216
    %6218 = vdwg.mxu0
    %6219 = vmatpush.bf16.msra.mxu0 %v6144
    %6220 = vmatpush.bf16.msra.mxu0 %v6142
    %6221 = vmatpush.bf16.msra.mxu0 %v6140
    %6222 = vmatpush.bf16.msra.mxu0 %v6138
    %6223 = vmatpush.bf16.msra.mxu0 %v6136
    %6224 = vmatpush.bf16.msra.mxu0 %v6134
    %6225 = vmatpush.bf16.msra.mxu0 %v6132
    %6226 = vmatpush.bf16.msra.mxu0 %v6130
    %6227 = vmatmul.bf16.gmra.mxu0 %v5983
    %v6228 = vpop.f32.mrf.mxu0
    %v6229 = vadd.f32 %v6215, %v6228
    %v6230 = vpop.f32.mrf.mxu0
    %v6231 = vadd.f32 %v6217, %v6230
    %6232 = vdwg.mxu0
    %v6265 = vunpack.c.l.b16 %v5918
    %v6266 = vunpack.c.h.b16 %v5918
    %v6267 = vunpack.c.l.b16 %v5919
    %v6268 = vunpack.c.h.b16 %v5919
    %v6269 = vunpack.c.l.b16 %v5920
    %v6270 = vunpack.c.h.b16 %v5920
    %v6271 = vunpack.c.l.b16 %v5921
    %v6272 = vunpack.c.h.b16 %v5921
    %v6273 = vunpack.c.l.b16 %v5922
    %v6274 = vunpack.c.h.b16 %v5922
    %v6275 = vunpack.c.l.b16 %v5923
    %v6276 = vunpack.c.h.b16 %v5923
    %v6277 = vunpack.c.l.b16 %v5924
    %v6278 = vunpack.c.h.b16 %v5924
    %v6279 = vunpack.c.l.b16 %v5925
    %v6280 = vunpack.c.h.b16 %v5925
    %v6281 = vunpack.c.l.b16 %v5926
    %v6282 = vunpack.c.h.b16 %v5926
    %v6283 = vunpack.c.l.b16 %v5927
    %v6284 = vunpack.c.h.b16 %v5927
    %v6285 = vunpack.c.l.b16 %v5928
    %v6286 = vunpack.c.h.b16 %v5928
    %v6287 = vunpack.c.l.b16 %v5929
    %v6288 = vunpack.c.h.b16 %v5929
    %v6289 = vunpack.c.l.b16 %v5930
    %v6290 = vunpack.c.h.b16 %v5930
    %v6291 = vunpack.c.l.b16 %v5931
    %v6292 = vunpack.c.h.b16 %v5931
    %v6293 = vunpack.c.l.b16 %v5932
    %v6294 = vunpack.c.h.b16 %v5932
    %v6295 = vunpack.c.l.b16 %v5933
    %v6296 = vunpack.c.h.b16 %v5933
    %v6297 = vunpack.c.l.b16 %v5934
    %v6298 = vunpack.c.h.b16 %v5934
    %v6299 = vunpack.c.l.b16 %v5935
    %v6300 = vunpack.c.h.b16 %v5935
    %v6301 = vunpack.c.l.b16 %v5936
    %v6302 = vunpack.c.h.b16 %v5936
    %v6303 = vunpack.c.l.b16 %v5937
    %v6304 = vunpack.c.h.b16 %v5937
    %v6305 = vunpack.c.l.b16 %v5938
    %v6306 = vunpack.c.h.b16 %v5938
    %v6307 = vunpack.c.l.b16 %v5939
    %v6308 = vunpack.c.h.b16 %v5939
    %v6309 = vunpack.c.l.b16 %v5940
    %v6310 = vunpack.c.h.b16 %v5940
    %v6311 = vunpack.c.l.b16 %v5941
    %v6312 = vunpack.c.h.b16 %v5941
    %v6313 = vunpack.c.l.b16 %v5942
    %v6314 = vunpack.c.h.b16 %v5942
    %v6315 = vunpack.c.l.b16 %v5943
    %v6316 = vunpack.c.h.b16 %v5943
    %v6317 = vunpack.c.l.b16 %v5944
    %v6318 = vunpack.c.h.b16 %v5944
    %v6319 = vunpack.c.l.b16 %v5945
    %v6320 = vunpack.c.h.b16 %v5945
    %v6321 = vunpack.c.l.b16 %v5946
    %v6322 = vunpack.c.h.b16 %v5946
    %v6323 = vunpack.c.l.b16 %v5947
    %v6324 = vunpack.c.h.b16 %v5947
    %v6325 = vunpack.c.l.b16 %v5948
    %v6326 = vunpack.c.h.b16 %v5948
    %v6327 = vunpack.c.l.b16 %v5949
    %v6328 = vunpack.c.h.b16 %v5949
    %v6329 = vpack.c.b16 %v6267, %v6265
    %v6330 = vpack.c.b16 %v6268, %v6266
    %v6331 = vpack.c.b16 %v6271, %v6269
    %v6332 = vpack.c.b16 %v6272, %v6270
    %v6333 = vpack.c.b16 %v6275, %v6273
    %v6334 = vpack.c.b16 %v6276, %v6274
    %v6335 = vpack.c.b16 %v6279, %v6277
    %v6336 = vpack.c.b16 %v6280, %v6278
    %v6337 = vpack.c.b16 %v6283, %v6281
    %v6338 = vpack.c.b16 %v6284, %v6282
    %v6339 = vpack.c.b16 %v6287, %v6285
    %v6340 = vpack.c.b16 %v6288, %v6286
    %v6341 = vpack.c.b16 %v6291, %v6289
    %v6342 = vpack.c.b16 %v6292, %v6290
    %v6343 = vpack.c.b16 %v6295, %v6293
    %v6344 = vpack.c.b16 %v6296, %v6294
    %v6345 = vpack.c.b16 %v6299, %v6297
    %v6346 = vpack.c.b16 %v6300, %v6298
    %v6347 = vpack.c.b16 %v6303, %v6301
    %v6348 = vpack.c.b16 %v6304, %v6302
    %v6349 = vpack.c.b16 %v6307, %v6305
    %v6350 = vpack.c.b16 %v6308, %v6306
    %v6351 = vpack.c.b16 %v6311, %v6309
    %v6352 = vpack.c.b16 %v6312, %v6310
    %v6353 = vpack.c.b16 %v6315, %v6313
    %v6354 = vpack.c.b16 %v6316, %v6314
    %v6355 = vpack.c.b16 %v6319, %v6317
    %v6356 = vpack.c.b16 %v6320, %v6318
    %v6357 = vpack.c.b16 %v6323, %v6321
    %v6358 = vpack.c.b16 %v6324, %v6322
    %v6359 = vpack.c.b16 %v6327, %v6325
    %v6360 = vpack.c.b16 %v6328, %v6326
    %6393 = vmatpush.bf16.msra.mxu0 %v6343
    %6394 = vmatpush.bf16.msra.mxu0 %v6341
    %6395 = vmatpush.bf16.msra.mxu0 %v6339
    %6396 = vmatpush.bf16.msra.mxu0 %v6337
    %6397 = vmatpush.bf16.msra.mxu0 %v6335
    %6398 = vmatpush.bf16.msra.mxu0 %v6333
    %6399 = vmatpush.bf16.msra.mxu0 %v6331
    %6400 = vmatpush.bf16.msra.mxu0 %v6329
    %6401 = vmatmul.bf16.gmra.mxu0 %v5915
    %v6402 = vpop.f32.mrf.mxu0
    %v6403 = vadd.f32 %v6201, %v6402
    %v6404 = vpop.f32.mrf.mxu0
    %v6405 = vadd.f32 %v6203, %v6404
    %6406 = vdwg.mxu0
    %6407 = vmatpush.bf16.msra.mxu0 %v6359
    %6408 = vmatpush.bf16.msra.mxu0 %v6357
    %6409 = vmatpush.bf16.msra.mxu0 %v6355
    %6410 = vmatpush.bf16.msra.mxu0 %v6353
    %6411 = vmatpush.bf16.msra.mxu0 %v6351
    %6412 = vmatpush.bf16.msra.mxu0 %v6349
    %6413 = vmatpush.bf16.msra.mxu0 %v6347
    %6414 = vmatpush.bf16.msra.mxu0 %v6345
    %6415 = vmatmul.bf16.gmra.mxu0 %v5916
    %v6416 = vpop.f32.mrf.mxu0
    %v6417 = vadd.f32 %v6403, %v6416
    %v6418 = vpop.f32.mrf.mxu0
    %v6419 = vadd.f32 %v6405, %v6418
    %6420 = vdwg.mxu0
    %6421 = vmatpush.bf16.msra.mxu0 %v6344
    %6422 = vmatpush.bf16.msra.mxu0 %v6342
    %6423 = vmatpush.bf16.msra.mxu0 %v6340
    %6424 = vmatpush.bf16.msra.mxu0 %v6338
    %6425 = vmatpush.bf16.msra.mxu0 %v6336
    %6426 = vmatpush.bf16.msra.mxu0 %v6334
    %6427 = vmatpush.bf16.msra.mxu0 %v6332
    %6428 = vmatpush.bf16.msra.mxu0 %v6330
    %6429 = vmatmul.bf16.gmra.mxu0 %v5915
    %v6430 = vpop.f32.mrf.mxu0
    %v6431 = vadd.f32 %v6229, %v6430
    %v6432 = vpop.f32.mrf.mxu0
    %v6433 = vadd.f32 %v6231, %v6432
    %6434 = vdwg.mxu0
    %6435 = vmatpush.bf16.msra.mxu0 %v6360
    %6436 = vmatpush.bf16.msra.mxu0 %v6358
    %6437 = vmatpush.bf16.msra.mxu0 %v6356
    %6438 = vmatpush.bf16.msra.mxu0 %v6354
    %6439 = vmatpush.bf16.msra.mxu0 %v6352
    %6440 = vmatpush.bf16.msra.mxu0 %v6350
    %6441 = vmatpush.bf16.msra.mxu0 %v6348
    %6442 = vmatpush.bf16.msra.mxu0 %v6346
    %6443 = vmatmul.bf16.gmra.mxu0 %v5916
    %v6444 = vpop.f32.mrf.mxu0
    %v6445 = vadd.f32 %v6431, %v6444
    %v6446 = vpop.f32.mrf.mxu0
    %v6447 = vadd.f32 %v6433, %v6446
    %6448 = vdwg.mxu0
    %v6449 = vld [vmem:[#allocation2] sm:$0xfc]
    %v6450 = vld [vmem:[#allocation2 + $0x8] sm:$0xfc]
    %v6451 = vld [vmem:[#allocation2 + $0x10] sm:$0x3]
    %v6452 = vld [vmem:[#allocation2 + $0x18] sm:$0x3]
    %v6453 = vld [vmem:[#allocation2 + $0x20] sm:$0xfc]
    %v6454 = vld [vmem:[#allocation2 + $0x28] sm:$0xfc]
    %v6455 = vld [vmem:[#allocation2 + $0x30] sm:$0x3]
    %v6456 = vld [vmem:[#allocation2 + $0x38] sm:$0x3]
    %v6465 = vrot.slane %v6449, 2
    %v6466 = vrot.slane %v6451, 2
    %v6467 = vsel %vm711, %v6465, %v6466
    %v6468 = vrot.slane %v6450, 2
    %v6469 = vrot.slane %v6452, 2
    %v6470 = vsel %vm711, %v6468, %v6469
    %v6471 = vrot.slane %v6453, 2
    %v6472 = vrot.slane %v6455, 2
    %v6473 = vsel %vm711, %v6471, %v6472
    %v6474 = vrot.slane %v6454, 2
    %v6475 = vrot.slane %v6456, 2
    %v6476 = vsel %vm711, %v6474, %v6475
    %v6481 = vpack.c.bf16 %v6473, %v6467
    %v6482 = vpack.c.bf16 %v6476, %v6470
    %s6483 = scalar_lea.vmem [#allocation4], 5632
    %v6484 = vld [vmem:[%s6483] sm:$0xff]
    %v6485 = vld [vmem:[%s6483 + $0x8] sm:$0xff]
    %v6486 = vld [vmem:[%s6483 + $0x10] sm:$0xff]
    %v6487 = vld [vmem:[%s6483 + $0x18] sm:$0xff]
    %v6488 = vld [vmem:[%s6483 + $0x20] sm:$0xff]
    %v6489 = vld [vmem:[%s6483 + $0x28] sm:$0xff]
    %v6490 = vld [vmem:[%s6483 + $0x30] sm:$0xff]
    %v6491 = vld [vmem:[%s6483 + $0x38] sm:$0xff]
    %v6492 = vld [vmem:[%s6483 + $0x40] sm:$0xff]
    %v6493 = vld [vmem:[%s6483 + $0x48] sm:$0xff]
    %v6494 = vld [vmem:[%s6483 + $0x50] sm:$0xff]
    %v6495 = vld [vmem:[%s6483 + $0x58] sm:$0xff]
    %v6496 = vld [vmem:[%s6483 + $0x60] sm:$0xff]
    %v6497 = vld [vmem:[%s6483 + $0x68] sm:$0xff]
    %v6498 = vld [vmem:[%s6483 + $0x70] sm:$0xff]
    %v6499 = vld [vmem:[%s6483 + $0x78] sm:$0xff]
    %v6500 = vld [vmem:[%s6483 + $0x80] sm:$0xff]
    %v6501 = vld [vmem:[%s6483 + $0x88] sm:$0xff]
    %v6502 = vld [vmem:[%s6483 + $0x90] sm:$0xff]
    %v6503 = vld [vmem:[%s6483 + $0x98] sm:$0xff]
    %v6504 = vld [vmem:[%s6483 + $0xa0] sm:$0xff]
    %v6505 = vld [vmem:[%s6483 + $0xa8] sm:$0xff]
    %v6506 = vld [vmem:[%s6483 + $0xb0] sm:$0xff]
    %v6507 = vld [vmem:[%s6483 + $0xb8] sm:$0xff]
    %v6508 = vld [vmem:[%s6483 + $0xc0] sm:$0xff]
    %v6509 = vld [vmem:[%s6483 + $0xc8] sm:$0xff]
    %v6510 = vld [vmem:[%s6483 + $0xd0] sm:$0xff]
    %v6511 = vld [vmem:[%s6483 + $0xd8] sm:$0xff]
    %v6512 = vld [vmem:[%s6483 + $0xe0] sm:$0xff]
    %v6513 = vld [vmem:[%s6483 + $0xe8] sm:$0xff]
    %v6514 = vld [vmem:[%s6483 + $0xf0] sm:$0xff]
    %v6515 = vld [vmem:[%s6483 + $0xf8] sm:$0xff]
    %v6548 = vunpack.c.l.b16 %v6484
    %v6549 = vunpack.c.h.b16 %v6484
    %v6550 = vunpack.c.l.b16 %v6485
    %v6551 = vunpack.c.h.b16 %v6485
    %v6552 = vunpack.c.l.b16 %v6486
    %v6553 = vunpack.c.h.b16 %v6486
    %v6554 = vunpack.c.l.b16 %v6487
    %v6555 = vunpack.c.h.b16 %v6487
    %v6556 = vunpack.c.l.b16 %v6488
    %v6557 = vunpack.c.h.b16 %v6488
    %v6558 = vunpack.c.l.b16 %v6489
    %v6559 = vunpack.c.h.b16 %v6489
    %v6560 = vunpack.c.l.b16 %v6490
    %v6561 = vunpack.c.h.b16 %v6490
    %v6562 = vunpack.c.l.b16 %v6491
    %v6563 = vunpack.c.h.b16 %v6491
    %v6564 = vunpack.c.l.b16 %v6492
    %v6565 = vunpack.c.h.b16 %v6492
    %v6566 = vunpack.c.l.b16 %v6493
    %v6567 = vunpack.c.h.b16 %v6493
    %v6568 = vunpack.c.l.b16 %v6494
    %v6569 = vunpack.c.h.b16 %v6494
    %v6570 = vunpack.c.l.b16 %v6495
    %v6571 = vunpack.c.h.b16 %v6495
    %v6572 = vunpack.c.l.b16 %v6496
    %v6573 = vunpack.c.h.b16 %v6496
    %v6574 = vunpack.c.l.b16 %v6497
    %v6575 = vunpack.c.h.b16 %v6497
    %v6576 = vunpack.c.l.b16 %v6498
    %v6577 = vunpack.c.h.b16 %v6498
    %v6578 = vunpack.c.l.b16 %v6499
    %v6579 = vunpack.c.h.b16 %v6499
    %v6580 = vunpack.c.l.b16 %v6500
    %v6581 = vunpack.c.h.b16 %v6500
    %v6582 = vunpack.c.l.b16 %v6501
    %v6583 = vunpack.c.h.b16 %v6501
    %v6584 = vunpack.c.l.b16 %v6502
    %v6585 = vunpack.c.h.b16 %v6502
    %v6586 = vunpack.c.l.b16 %v6503
    %v6587 = vunpack.c.h.b16 %v6503
    %v6588 = vunpack.c.l.b16 %v6504
    %v6589 = vunpack.c.h.b16 %v6504
    %v6590 = vunpack.c.l.b16 %v6505
    %v6591 = vunpack.c.h.b16 %v6505
    %v6592 = vunpack.c.l.b16 %v6506
    %v6593 = vunpack.c.h.b16 %v6506
    %v6594 = vunpack.c.l.b16 %v6507
    %v6595 = vunpack.c.h.b16 %v6507
    %v6596 = vunpack.c.l.b16 %v6508
    %v6597 = vunpack.c.h.b16 %v6508
    %v6598 = vunpack.c.l.b16 %v6509
    %v6599 = vunpack.c.h.b16 %v6509
    %v6600 = vunpack.c.l.b16 %v6510
    %v6601 = vunpack.c.h.b16 %v6510
    %v6602 = vunpack.c.l.b16 %v6511
    %v6603 = vunpack.c.h.b16 %v6511
    %v6604 = vunpack.c.l.b16 %v6512
    %v6605 = vunpack.c.h.b16 %v6512
    %v6606 = vunpack.c.l.b16 %v6513
    %v6607 = vunpack.c.h.b16 %v6513
    %v6608 = vunpack.c.l.b16 %v6514
    %v6609 = vunpack.c.h.b16 %v6514
    %v6610 = vunpack.c.l.b16 %v6515
    %v6611 = vunpack.c.h.b16 %v6515
    %v6612 = vpack.c.b16 %v6550, %v6548
    %v6613 = vpack.c.b16 %v6551, %v6549
    %v6614 = vpack.c.b16 %v6554, %v6552
    %v6615 = vpack.c.b16 %v6555, %v6553
    %v6616 = vpack.c.b16 %v6558, %v6556
    %v6617 = vpack.c.b16 %v6559, %v6557
    %v6618 = vpack.c.b16 %v6562, %v6560
    %v6619 = vpack.c.b16 %v6563, %v6561
    %v6620 = vpack.c.b16 %v6566, %v6564
    %v6621 = vpack.c.b16 %v6567, %v6565
    %v6622 = vpack.c.b16 %v6570, %v6568
    %v6623 = vpack.c.b16 %v6571, %v6569
    %v6624 = vpack.c.b16 %v6574, %v6572
    %v6625 = vpack.c.b16 %v6575, %v6573
    %v6626 = vpack.c.b16 %v6578, %v6576
    %v6627 = vpack.c.b16 %v6579, %v6577
    %v6628 = vpack.c.b16 %v6582, %v6580
    %v6629 = vpack.c.b16 %v6583, %v6581
    %v6630 = vpack.c.b16 %v6586, %v6584
    %v6631 = vpack.c.b16 %v6587, %v6585
    %v6632 = vpack.c.b16 %v6590, %v6588
    %v6633 = vpack.c.b16 %v6591, %v6589
    %v6634 = vpack.c.b16 %v6594, %v6592
    %v6635 = vpack.c.b16 %v6595, %v6593
    %v6636 = vpack.c.b16 %v6598, %v6596
    %v6637 = vpack.c.b16 %v6599, %v6597
    %v6638 = vpack.c.b16 %v6602, %v6600
    %v6639 = vpack.c.b16 %v6603, %v6601
    %v6640 = vpack.c.b16 %v6606, %v6604
    %v6641 = vpack.c.b16 %v6607, %v6605
    %v6642 = vpack.c.b16 %v6610, %v6608
    %v6643 = vpack.c.b16 %v6611, %v6609
    %6676 = vmatpush.bf16.msra.mxu0 %v6626
    %6677 = vmatpush.bf16.msra.mxu0 %v6624
    %6678 = vmatpush.bf16.msra.mxu0 %v6622
    %6679 = vmatpush.bf16.msra.mxu0 %v6620
    %6680 = vmatpush.bf16.msra.mxu0 %v6618
    %6681 = vmatpush.bf16.msra.mxu0 %v6616
    %6682 = vmatpush.bf16.msra.mxu0 %v6614
    %6683 = vmatpush.bf16.msra.mxu0 %v6612
    %6684 = vmatmul.bf16.gmra.mxu0 %v6481
    %v6685 = vpop.f32.mrf.mxu0
    %v6686 = vadd.f32 0.0, %v6685
    %v6687 = vpop.f32.mrf.mxu0
    %v6688 = vadd.f32 0.0, %v6687
    %6689 = vdwg.mxu0
    %6690 = vmatpush.bf16.msra.mxu0 %v6642
    %6691 = vmatpush.bf16.msra.mxu0 %v6640
    %6692 = vmatpush.bf16.msra.mxu0 %v6638
    %6693 = vmatpush.bf16.msra.mxu0 %v6636
    %6694 = vmatpush.bf16.msra.mxu0 %v6634
    %6695 = vmatpush.bf16.msra.mxu0 %v6632
    %6696 = vmatpush.bf16.msra.mxu0 %v6630
    %6697 = vmatpush.bf16.msra.mxu0 %v6628
    %6698 = vmatmul.bf16.gmra.mxu0 %v6482
    %v6699 = vpop.f32.mrf.mxu0
    %v6700 = vadd.f32 %v6686, %v6699
    %v6701 = vpop.f32.mrf.mxu0
    %v6702 = vadd.f32 %v6688, %v6701
    %6703 = vdwg.mxu0
    %6704 = vmatpush.bf16.msra.mxu0 %v6627
    %6705 = vmatpush.bf16.msra.mxu0 %v6625
    %6706 = vmatpush.bf16.msra.mxu0 %v6623
    %6707 = vmatpush.bf16.msra.mxu0 %v6621
    %6708 = vmatpush.bf16.msra.mxu0 %v6619
    %6709 = vmatpush.bf16.msra.mxu0 %v6617
    %6710 = vmatpush.bf16.msra.mxu0 %v6615
    %6711 = vmatpush.bf16.msra.mxu0 %v6613
    %6712 = vmatmul.bf16.gmra.mxu0 %v6481
    %v6713 = vpop.f32.mrf.mxu0
    %v6714 = vadd.f32 0.0, %v6713
    %v6715 = vpop.f32.mrf.mxu0
    %v6716 = vadd.f32 0.0, %v6715
    %6717 = vdwg.mxu0
    %6718 = vmatpush.bf16.msra.mxu0 %v6643
    %6719 = vmatpush.bf16.msra.mxu0 %v6641
    %6720 = vmatpush.bf16.msra.mxu0 %v6639
    %6721 = vmatpush.bf16.msra.mxu0 %v6637
    %6722 = vmatpush.bf16.msra.mxu0 %v6635
    %6723 = vmatpush.bf16.msra.mxu0 %v6633
    %6724 = vmatpush.bf16.msra.mxu0 %v6631
    %6725 = vmatpush.bf16.msra.mxu0 %v6629
    %6726 = vmatmul.bf16.gmra.mxu0 %v6482
    %v6727 = vpop.f32.mrf.mxu0
    %v6728 = vadd.f32 %v6714, %v6727
    %v6729 = vpop.f32.mrf.mxu0
    %v6730 = vadd.f32 %v6716, %v6729
    %6731 = vdwg.mxu0
    %v6732 = vadd.f32 %v6417, %v6700
    %v6733 = vadd.f32 %v6445, %v6728
    %v6734 = vadd.f32 %v6419, %v6702
    %v6735 = vadd.f32 %v6447, %v6730
    %v6736 = vld [vmem:[#allocation2] sm:$0xf8]
    %v6737 = vld [vmem:[#allocation2 + $0x8] sm:$0xf8]
    %v6738 = vld [vmem:[#allocation2 + $0x10] sm:$0x7]
    %v6739 = vld [vmem:[#allocation2 + $0x18] sm:$0x7]
    %v6740 = vld [vmem:[#allocation2 + $0x20] sm:$0xf8]
    %v6741 = vld [vmem:[#allocation2 + $0x28] sm:$0xf8]
    %v6742 = vld [vmem:[#allocation2 + $0x30] sm:$0x7]
    %v6743 = vld [vmem:[#allocation2 + $0x38] sm:$0x7]
    %v6752 = vrot.slane %v6736, 3
    %v6753 = vrot.slane %v6738, 3
    %v6754 = vsel %vm999, %v6752, %v6753
    %v6755 = vrot.slane %v6737, 3
    %v6756 = vrot.slane %v6739, 3
    %v6757 = vsel %vm999, %v6755, %v6756
    %v6758 = vrot.slane %v6740, 3
    %v6759 = vrot.slane %v6742, 3
    %v6760 = vsel %vm999, %v6758, %v6759
    %v6761 = vrot.slane %v6741, 3
    %v6762 = vrot.slane %v6743, 3
    %v6763 = vsel %vm999, %v6761, %v6762
    %v6768 = vpack.c.bf16 %v6760, %v6754
    %v6769 = vpack.c.bf16 %v6763, %v6757
    %s6770 = scalar_lea.vmem [#allocation4], 5888
    %v6771 = vld [vmem:[%s6770] sm:$0xff]
    %v6772 = vld [vmem:[%s6770 + $0x8] sm:$0xff]
    %v6773 = vld [vmem:[%s6770 + $0x10] sm:$0xff]
    %v6774 = vld [vmem:[%s6770 + $0x18] sm:$0xff]
    %v6775 = vld [vmem:[%s6770 + $0x20] sm:$0xff]
    %v6776 = vld [vmem:[%s6770 + $0x28] sm:$0xff]
    %v6777 = vld [vmem:[%s6770 + $0x30] sm:$0xff]
    %v6778 = vld [vmem:[%s6770 + $0x38] sm:$0xff]
    %v6779 = vld [vmem:[%s6770 + $0x40] sm:$0xff]
    %v6780 = vld [vmem:[%s6770 + $0x48] sm:$0xff]
    %v6781 = vld [vmem:[%s6770 + $0x50] sm:$0xff]
    %v6782 = vld [vmem:[%s6770 + $0x58] sm:$0xff]
    %v6783 = vld [vmem:[%s6770 + $0x60] sm:$0xff]
    %v6784 = vld [vmem:[%s6770 + $0x68] sm:$0xff]
    %v6785 = vld [vmem:[%s6770 + $0x70] sm:$0xff]
    %v6786 = vld [vmem:[%s6770 + $0x78] sm:$0xff]
    %v6787 = vld [vmem:[%s6770 + $0x80] sm:$0xff]
    %v6788 = vld [vmem:[%s6770 + $0x88] sm:$0xff]
    %v6789 = vld [vmem:[%s6770 + $0x90] sm:$0xff]
    %v6790 = vld [vmem:[%s6770 + $0x98] sm:$0xff]
    %v6791 = vld [vmem:[%s6770 + $0xa0] sm:$0xff]
    %v6792 = vld [vmem:[%s6770 + $0xa8] sm:$0xff]
    %v6793 = vld [vmem:[%s6770 + $0xb0] sm:$0xff]
    %v6794 = vld [vmem:[%s6770 + $0xb8] sm:$0xff]
    %v6795 = vld [vmem:[%s6770 + $0xc0] sm:$0xff]
    %v6796 = vld [vmem:[%s6770 + $0xc8] sm:$0xff]
    %v6797 = vld [vmem:[%s6770 + $0xd0] sm:$0xff]
    %v6798 = vld [vmem:[%s6770 + $0xd8] sm:$0xff]
    %v6799 = vld [vmem:[%s6770 + $0xe0] sm:$0xff]
    %v6800 = vld [vmem:[%s6770 + $0xe8] sm:$0xff]
    %v6801 = vld [vmem:[%s6770 + $0xf0] sm:$0xff]
    %v6802 = vld [vmem:[%s6770 + $0xf8] sm:$0xff]
    %v6835 = vunpack.c.l.b16 %v6771
    %v6836 = vunpack.c.h.b16 %v6771
    %v6837 = vunpack.c.l.b16 %v6772
    %v6838 = vunpack.c.h.b16 %v6772
    %v6839 = vunpack.c.l.b16 %v6773
    %v6840 = vunpack.c.h.b16 %v6773
    %v6841 = vunpack.c.l.b16 %v6774
    %v6842 = vunpack.c.h.b16 %v6774
    %v6843 = vunpack.c.l.b16 %v6775
    %v6844 = vunpack.c.h.b16 %v6775
    %v6845 = vunpack.c.l.b16 %v6776
    %v6846 = vunpack.c.h.b16 %v6776
    %v6847 = vunpack.c.l.b16 %v6777
    %v6848 = vunpack.c.h.b16 %v6777
    %v6849 = vunpack.c.l.b16 %v6778
    %v6850 = vunpack.c.h.b16 %v6778
    %v6851 = vunpack.c.l.b16 %v6779
    %v6852 = vunpack.c.h.b16 %v6779
    %v6853 = vunpack.c.l.b16 %v6780
    %v6854 = vunpack.c.h.b16 %v6780
    %v6855 = vunpack.c.l.b16 %v6781
    %v6856 = vunpack.c.h.b16 %v6781
    %v6857 = vunpack.c.l.b16 %v6782
    %v6858 = vunpack.c.h.b16 %v6782
    %v6859 = vunpack.c.l.b16 %v6783
    %v6860 = vunpack.c.h.b16 %v6783
    %v6861 = vunpack.c.l.b16 %v6784
    %v6862 = vunpack.c.h.b16 %v6784
    %v6863 = vunpack.c.l.b16 %v6785
    %v6864 = vunpack.c.h.b16 %v6785
    %v6865 = vunpack.c.l.b16 %v6786
    %v6866 = vunpack.c.h.b16 %v6786
    %v6867 = vunpack.c.l.b16 %v6787
    %v6868 = vunpack.c.h.b16 %v6787
    %v6869 = vunpack.c.l.b16 %v6788
    %v6870 = vunpack.c.h.b16 %v6788
    %v6871 = vunpack.c.l.b16 %v6789
    %v6872 = vunpack.c.h.b16 %v6789
    %v6873 = vunpack.c.l.b16 %v6790
    %v6874 = vunpack.c.h.b16 %v6790
    %v6875 = vunpack.c.l.b16 %v6791
    %v6876 = vunpack.c.h.b16 %v6791
    %v6877 = vunpack.c.l.b16 %v6792
    %v6878 = vunpack.c.h.b16 %v6792
    %v6879 = vunpack.c.l.b16 %v6793
    %v6880 = vunpack.c.h.b16 %v6793
    %v6881 = vunpack.c.l.b16 %v6794
    %v6882 = vunpack.c.h.b16 %v6794
    %v6883 = vunpack.c.l.b16 %v6795
    %v6884 = vunpack.c.h.b16 %v6795
    %v6885 = vunpack.c.l.b16 %v6796
    %v6886 = vunpack.c.h.b16 %v6796
    %v6887 = vunpack.c.l.b16 %v6797
    %v6888 = vunpack.c.h.b16 %v6797
    %v6889 = vunpack.c.l.b16 %v6798
    %v6890 = vunpack.c.h.b16 %v6798
    %v6891 = vunpack.c.l.b16 %v6799
    %v6892 = vunpack.c.h.b16 %v6799
    %v6893 = vunpack.c.l.b16 %v6800
    %v6894 = vunpack.c.h.b16 %v6800
    %v6895 = vunpack.c.l.b16 %v6801
    %v6896 = vunpack.c.h.b16 %v6801
    %v6897 = vunpack.c.l.b16 %v6802
    %v6898 = vunpack.c.h.b16 %v6802
    %v6899 = vpack.c.b16 %v6837, %v6835
    %v6900 = vpack.c.b16 %v6838, %v6836
    %v6901 = vpack.c.b16 %v6841, %v6839
    %v6902 = vpack.c.b16 %v6842, %v6840
    %v6903 = vpack.c.b16 %v6845, %v6843
    %v6904 = vpack.c.b16 %v6846, %v6844
    %v6905 = vpack.c.b16 %v6849, %v6847
    %v6906 = vpack.c.b16 %v6850, %v6848
    %v6907 = vpack.c.b16 %v6853, %v6851
    %v6908 = vpack.c.b16 %v6854, %v6852
    %v6909 = vpack.c.b16 %v6857, %v6855
    %v6910 = vpack.c.b16 %v6858, %v6856
    %v6911 = vpack.c.b16 %v6861, %v6859
    %v6912 = vpack.c.b16 %v6862, %v6860
    %v6913 = vpack.c.b16 %v6865, %v6863
    %v6914 = vpack.c.b16 %v6866, %v6864
    %v6915 = vpack.c.b16 %v6869, %v6867
    %v6916 = vpack.c.b16 %v6870, %v6868
    %v6917 = vpack.c.b16 %v6873, %v6871
    %v6918 = vpack.c.b16 %v6874, %v6872
    %v6919 = vpack.c.b16 %v6877, %v6875
    %v6920 = vpack.c.b16 %v6878, %v6876
    %v6921 = vpack.c.b16 %v6881, %v6879
    %v6922 = vpack.c.b16 %v6882, %v6880
    %v6923 = vpack.c.b16 %v6885, %v6883
    %v6924 = vpack.c.b16 %v6886, %v6884
    %v6925 = vpack.c.b16 %v6889, %v6887
    %v6926 = vpack.c.b16 %v6890, %v6888
    %v6927 = vpack.c.b16 %v6893, %v6891
    %v6928 = vpack.c.b16 %v6894, %v6892
    %v6929 = vpack.c.b16 %v6897, %v6895
    %v6930 = vpack.c.b16 %v6898, %v6896
    %6963 = vmatpush.bf16.msra.mxu0 %v6913
    %6964 = vmatpush.bf16.msra.mxu0 %v6911
    %6965 = vmatpush.bf16.msra.mxu0 %v6909
    %6966 = vmatpush.bf16.msra.mxu0 %v6907
    %6967 = vmatpush.bf16.msra.mxu0 %v6905
    %6968 = vmatpush.bf16.msra.mxu0 %v6903
    %6969 = vmatpush.bf16.msra.mxu0 %v6901
    %6970 = vmatpush.bf16.msra.mxu0 %v6899
    %6971 = vmatmul.bf16.gmra.mxu0 %v6768
    %v6972 = vpop.f32.mrf.mxu0
    %v6973 = vadd.f32 0.0, %v6972
    %v6974 = vpop.f32.mrf.mxu0
    %v6975 = vadd.f32 0.0, %v6974
    %6976 = vdwg.mxu0
    %6977 = vmatpush.bf16.msra.mxu0 %v6929
    %6978 = vmatpush.bf16.msra.mxu0 %v6927
    %6979 = vmatpush.bf16.msra.mxu0 %v6925
    %6980 = vmatpush.bf16.msra.mxu0 %v6923
    %6981 = vmatpush.bf16.msra.mxu0 %v6921
    %6982 = vmatpush.bf16.msra.mxu0 %v6919
    %6983 = vmatpush.bf16.msra.mxu0 %v6917
    %6984 = vmatpush.bf16.msra.mxu0 %v6915
    %6985 = vmatmul.bf16.gmra.mxu0 %v6769
    %v6986 = vpop.f32.mrf.mxu0
    %v6987 = vadd.f32 %v6973, %v6986
    %v6988 = vpop.f32.mrf.mxu0
    %v6989 = vadd.f32 %v6975, %v6988
    %6990 = vdwg.mxu0
    %6991 = vmatpush.bf16.msra.mxu0 %v6914
    %6992 = vmatpush.bf16.msra.mxu0 %v6912
    %6993 = vmatpush.bf16.msra.mxu0 %v6910
    %6994 = vmatpush.bf16.msra.mxu0 %v6908
    %6995 = vmatpush.bf16.msra.mxu0 %v6906
    %6996 = vmatpush.bf16.msra.mxu0 %v6904
    %6997 = vmatpush.bf16.msra.mxu0 %v6902
    %6998 = vmatpush.bf16.msra.mxu0 %v6900
    %6999 = vmatmul.bf16.gmra.mxu0 %v6768
    %v7000 = vpop.f32.mrf.mxu0
    %v7001 = vadd.f32 0.0, %v7000
    %v7002 = vpop.f32.mrf.mxu0
    %v7003 = vadd.f32 0.0, %v7002
    %7004 = vdwg.mxu0
    %7005 = vmatpush.bf16.msra.mxu0 %v6930
    %7006 = vmatpush.bf16.msra.mxu0 %v6928
    %7007 = vmatpush.bf16.msra.mxu0 %v6926
    %7008 = vmatpush.bf16.msra.mxu0 %v6924
    %7009 = vmatpush.bf16.msra.mxu0 %v6922
    %7010 = vmatpush.bf16.msra.mxu0 %v6920
    %7011 = vmatpush.bf16.msra.mxu0 %v6918
    %7012 = vmatpush.bf16.msra.mxu0 %v6916
    %7013 = vmatmul.bf16.gmra.mxu0 %v6769
    %v7014 = vpop.f32.mrf.mxu0
    %v7015 = vadd.f32 %v7001, %v7014
    %v7016 = vpop.f32.mrf.mxu0
    %v7017 = vadd.f32 %v7003, %v7016
    %7018 = vdwg.mxu0
    %v7019 = vadd.f32 %v6732, %v6987
    %v7020 = vadd.f32 %v6733, %v7015
    %v7021 = vadd.f32 %v6734, %v6989
    %v7022 = vadd.f32 %v6735, %v7017
    %v7023 = vld [vmem:[#allocation2] sm:$0xf0]
    %v7024 = vld [vmem:[#allocation2 + $0x8] sm:$0xf0]
    %v7025 = vld [vmem:[#allocation2 + $0x10] sm:$0xf]
    %v7026 = vld [vmem:[#allocation2 + $0x18] sm:$0xf]
    %v7027 = vld [vmem:[#allocation2 + $0x20] sm:$0xf0]
    %v7028 = vld [vmem:[#allocation2 + $0x28] sm:$0xf0]
    %v7029 = vld [vmem:[#allocation2 + $0x30] sm:$0xf]
    %v7030 = vld [vmem:[#allocation2 + $0x38] sm:$0xf]
    %v7039 = vrot.slane %v7023, 4
    %v7040 = vrot.slane %v7025, 4
    %v7041 = vsel %vm1287, %v7039, %v7040
    %v7042 = vrot.slane %v7024, 4
    %v7043 = vrot.slane %v7026, 4
    %v7044 = vsel %vm1287, %v7042, %v7043
    %v7045 = vrot.slane %v7027, 4
    %v7046 = vrot.slane %v7029, 4
    %v7047 = vsel %vm1287, %v7045, %v7046
    %v7048 = vrot.slane %v7028, 4
    %v7049 = vrot.slane %v7030, 4
    %v7050 = vsel %vm1287, %v7048, %v7049
    %v7055 = vpack.c.bf16 %v7047, %v7041
    %v7056 = vpack.c.bf16 %v7050, %v7044
    %s7057 = scalar_lea.vmem [#allocation4], 6144
    %v7058 = vld [vmem:[%s7057] sm:$0xff]
    %v7059 = vld [vmem:[%s7057 + $0x8] sm:$0xff]
    %v7060 = vld [vmem:[%s7057 + $0x10] sm:$0xff]
    %v7061 = vld [vmem:[%s7057 + $0x18] sm:$0xff]
    %v7062 = vld [vmem:[%s7057 + $0x20] sm:$0xff]
    %v7063 = vld [vmem:[%s7057 + $0x28] sm:$0xff]
    %v7064 = vld [vmem:[%s7057 + $0x30] sm:$0xff]
    %v7065 = vld [vmem:[%s7057 + $0x38] sm:$0xff]
    %v7066 = vld [vmem:[%s7057 + $0x40] sm:$0xff]
    %v7067 = vld [vmem:[%s7057 + $0x48] sm:$0xff]
    %v7068 = vld [vmem:[%s7057 + $0x50] sm:$0xff]
    %v7069 = vld [vmem:[%s7057 + $0x58] sm:$0xff]
    %v7070 = vld [vmem:[%s7057 + $0x60] sm:$0xff]
    %v7071 = vld [vmem:[%s7057 + $0x68] sm:$0xff]
    %v7072 = vld [vmem:[%s7057 + $0x70] sm:$0xff]
    %v7073 = vld [vmem:[%s7057 + $0x78] sm:$0xff]
    %v7074 = vld [vmem:[%s7057 + $0x80] sm:$0xff]
    %v7075 = vld [vmem:[%s7057 + $0x88] sm:$0xff]
    %v7076 = vld [vmem:[%s7057 + $0x90] sm:$0xff]
    %v7077 = vld [vmem:[%s7057 + $0x98] sm:$0xff]
    %v7078 = vld [vmem:[%s7057 + $0xa0] sm:$0xff]
    %v7079 = vld [vmem:[%s7057 + $0xa8] sm:$0xff]
    %v7080 = vld [vmem:[%s7057 + $0xb0] sm:$0xff]
    %v7081 = vld [vmem:[%s7057 + $0xb8] sm:$0xff]
    %v7082 = vld [vmem:[%s7057 + $0xc0] sm:$0xff]
    %v7083 = vld [vmem:[%s7057 + $0xc8] sm:$0xff]
    %v7084 = vld [vmem:[%s7057 + $0xd0] sm:$0xff]
    %v7085 = vld [vmem:[%s7057 + $0xd8] sm:$0xff]
    %v7086 = vld [vmem:[%s7057 + $0xe0] sm:$0xff]
    %v7087 = vld [vmem:[%s7057 + $0xe8] sm:$0xff]
    %v7088 = vld [vmem:[%s7057 + $0xf0] sm:$0xff]
    %v7089 = vld [vmem:[%s7057 + $0xf8] sm:$0xff]
    %v7122 = vunpack.c.l.b16 %v7058
    %v7123 = vunpack.c.h.b16 %v7058
    %v7124 = vunpack.c.l.b16 %v7059
    %v7125 = vunpack.c.h.b16 %v7059
    %v7126 = vunpack.c.l.b16 %v7060
    %v7127 = vunpack.c.h.b16 %v7060
    %v7128 = vunpack.c.l.b16 %v7061
    %v7129 = vunpack.c.h.b16 %v7061
    %v7130 = vunpack.c.l.b16 %v7062
    %v7131 = vunpack.c.h.b16 %v7062
    %v7132 = vunpack.c.l.b16 %v7063
    %v7133 = vunpack.c.h.b16 %v7063
    %v7134 = vunpack.c.l.b16 %v7064
    %v7135 = vunpack.c.h.b16 %v7064
    %v7136 = vunpack.c.l.b16 %v7065
    %v7137 = vunpack.c.h.b16 %v7065
    %v7138 = vunpack.c.l.b16 %v7066
    %v7139 = vunpack.c.h.b16 %v7066
    %v7140 = vunpack.c.l.b16 %v7067
    %v7141 = vunpack.c.h.b16 %v7067
    %v7142 = vunpack.c.l.b16 %v7068
    %v7143 = vunpack.c.h.b16 %v7068
    %v7144 = vunpack.c.l.b16 %v7069
    %v7145 = vunpack.c.h.b16 %v7069
    %v7146 = vunpack.c.l.b16 %v7070
    %v7147 = vunpack.c.h.b16 %v7070
    %v7148 = vunpack.c.l.b16 %v7071
    %v7149 = vunpack.c.h.b16 %v7071
    %v7150 = vunpack.c.l.b16 %v7072
    %v7151 = vunpack.c.h.b16 %v7072
    %v7152 = vunpack.c.l.b16 %v7073
    %v7153 = vunpack.c.h.b16 %v7073
    %v7154 = vunpack.c.l.b16 %v7074
    %v7155 = vunpack.c.h.b16 %v7074
    %v7156 = vunpack.c.l.b16 %v7075
    %v7157 = vunpack.c.h.b16 %v7075
    %v7158 = vunpack.c.l.b16 %v7076
    %v7159 = vunpack.c.h.b16 %v7076
    %v7160 = vunpack.c.l.b16 %v7077
    %v7161 = vunpack.c.h.b16 %v7077
    %v7162 = vunpack.c.l.b16 %v7078
    %v7163 = vunpack.c.h.b16 %v7078
    %v7164 = vunpack.c.l.b16 %v7079
    %v7165 = vunpack.c.h.b16 %v7079
    %v7166 = vunpack.c.l.b16 %v7080
    %v7167 = vunpack.c.h.b16 %v7080
    %v7168 = vunpack.c.l.b16 %v7081
    %v7169 = vunpack.c.h.b16 %v7081
    %v7170 = vunpack.c.l.b16 %v7082
    %v7171 = vunpack.c.h.b16 %v7082
    %v7172 = vunpack.c.l.b16 %v7083
    %v7173 = vunpack.c.h.b16 %v7083
    %v7174 = vunpack.c.l.b16 %v7084
    %v7175 = vunpack.c.h.b16 %v7084
    %v7176 = vunpack.c.l.b16 %v7085
    %v7177 = vunpack.c.h.b16 %v7085
    %v7178 = vunpack.c.l.b16 %v7086
    %v7179 = vunpack.c.h.b16 %v7086
    %v7180 = vunpack.c.l.b16 %v7087
    %v7181 = vunpack.c.h.b16 %v7087
    %v7182 = vunpack.c.l.b16 %v7088
    %v7183 = vunpack.c.h.b16 %v7088
    %v7184 = vunpack.c.l.b16 %v7089
    %v7185 = vunpack.c.h.b16 %v7089
    %v7186 = vpack.c.b16 %v7124, %v7122
    %v7187 = vpack.c.b16 %v7125, %v7123
    %v7188 = vpack.c.b16 %v7128, %v7126
    %v7189 = vpack.c.b16 %v7129, %v7127
    %v7190 = vpack.c.b16 %v7132, %v7130
    %v7191 = vpack.c.b16 %v7133, %v7131
    %v7192 = vpack.c.b16 %v7136, %v7134
    %v7193 = vpack.c.b16 %v7137, %v7135
    %v7194 = vpack.c.b16 %v7140, %v7138
    %v7195 = vpack.c.b16 %v7141, %v7139
    %v7196 = vpack.c.b16 %v7144, %v7142
    %v7197 = vpack.c.b16 %v7145, %v7143
    %v7198 = vpack.c.b16 %v7148, %v7146
    %v7199 = vpack.c.b16 %v7149, %v7147
    %v7200 = vpack.c.b16 %v7152, %v7150
    %v7201 = vpack.c.b16 %v7153, %v7151
    %v7202 = vpack.c.b16 %v7156, %v7154
    %v7203 = vpack.c.b16 %v7157, %v7155
    %v7204 = vpack.c.b16 %v7160, %v7158
    %v7205 = vpack.c.b16 %v7161, %v7159
    %v7206 = vpack.c.b16 %v7164, %v7162
    %v7207 = vpack.c.b16 %v7165, %v7163
    %v7208 = vpack.c.b16 %v7168, %v7166
    %v7209 = vpack.c.b16 %v7169, %v7167
    %v7210 = vpack.c.b16 %v7172, %v7170
    %v7211 = vpack.c.b16 %v7173, %v7171
    %v7212 = vpack.c.b16 %v7176, %v7174
    %v7213 = vpack.c.b16 %v7177, %v7175
    %v7214 = vpack.c.b16 %v7180, %v7178
    %v7215 = vpack.c.b16 %v7181, %v7179
    %v7216 = vpack.c.b16 %v7184, %v7182
    %v7217 = vpack.c.b16 %v7185, %v7183
    %7250 = vmatpush.bf16.msra.mxu0 %v7200
    %7251 = vmatpush.bf16.msra.mxu0 %v7198
    %7252 = vmatpush.bf16.msra.mxu0 %v7196
    %7253 = vmatpush.bf16.msra.mxu0 %v7194
    %7254 = vmatpush.bf16.msra.mxu0 %v7192
    %7255 = vmatpush.bf16.msra.mxu0 %v7190
    %7256 = vmatpush.bf16.msra.mxu0 %v7188
    %7257 = vmatpush.bf16.msra.mxu0 %v7186
    %7258 = vmatmul.bf16.gmra.mxu0 %v7055
    %v7259 = vpop.f32.mrf.mxu0
    %v7260 = vadd.f32 0.0, %v7259
    %v7261 = vpop.f32.mrf.mxu0
    %v7262 = vadd.f32 0.0, %v7261
    %7263 = vdwg.mxu0
    %7264 = vmatpush.bf16.msra.mxu0 %v7216
    %7265 = vmatpush.bf16.msra.mxu0 %v7214
    %7266 = vmatpush.bf16.msra.mxu0 %v7212
    %7267 = vmatpush.bf16.msra.mxu0 %v7210
    %7268 = vmatpush.bf16.msra.mxu0 %v7208
    %7269 = vmatpush.bf16.msra.mxu0 %v7206
    %7270 = vmatpush.bf16.msra.mxu0 %v7204
    %7271 = vmatpush.bf16.msra.mxu0 %v7202
    %7272 = vmatmul.bf16.gmra.mxu0 %v7056
    %v7273 = vpop.f32.mrf.mxu0
    %v7274 = vadd.f32 %v7260, %v7273
    %v7275 = vpop.f32.mrf.mxu0
    %v7276 = vadd.f32 %v7262, %v7275
    %7277 = vdwg.mxu0
    %7278 = vmatpush.bf16.msra.mxu0 %v7201
    %7279 = vmatpush.bf16.msra.mxu0 %v7199
    %7280 = vmatpush.bf16.msra.mxu0 %v7197
    %7281 = vmatpush.bf16.msra.mxu0 %v7195
    %7282 = vmatpush.bf16.msra.mxu0 %v7193
    %7283 = vmatpush.bf16.msra.mxu0 %v7191
    %7284 = vmatpush.bf16.msra.mxu0 %v7189
    %7285 = vmatpush.bf16.msra.mxu0 %v7187
    %7286 = vmatmul.bf16.gmra.mxu0 %v7055
    %v7287 = vpop.f32.mrf.mxu0
    %v7288 = vadd.f32 0.0, %v7287
    %v7289 = vpop.f32.mrf.mxu0
    %v7290 = vadd.f32 0.0, %v7289
    %7291 = vdwg.mxu0
    %7292 = vmatpush.bf16.msra.mxu0 %v7217
    %7293 = vmatpush.bf16.msra.mxu0 %v7215
    %7294 = vmatpush.bf16.msra.mxu0 %v7213
    %7295 = vmatpush.bf16.msra.mxu0 %v7211
    %7296 = vmatpush.bf16.msra.mxu0 %v7209
    %7297 = vmatpush.bf16.msra.mxu0 %v7207
    %7298 = vmatpush.bf16.msra.mxu0 %v7205
    %7299 = vmatpush.bf16.msra.mxu0 %v7203
    %7300 = vmatmul.bf16.gmra.mxu0 %v7056
    %v7301 = vpop.f32.mrf.mxu0
    %v7302 = vadd.f32 %v7288, %v7301
    %v7303 = vpop.f32.mrf.mxu0
    %v7304 = vadd.f32 %v7290, %v7303
    %7305 = vdwg.mxu0
    %v7306 = vadd.f32 %v7019, %v7274
    %v7307 = vadd.f32 %v7020, %v7302
    %v7308 = vadd.f32 %v7021, %v7276
    %v7309 = vadd.f32 %v7022, %v7304
    %s7310 = scalar_lea.vmem [#allocation6], 8
    %v7311 = vld [vmem:[%s7310] sm:$0x3]
    %v7313 = vperm.slane %v7311, 0
    %v7314 = vperm.slane %v7311, 1
    %v7317 = vadd.f32 %v7306, %v7313
    %v7318 = vadd.f32 %v7307, %v7314
    %v7319 = vadd.f32 %v7308, %v7313
    %v7320 = vadd.f32 %v7309, %v7314
    %v7321 = vmul.f32 %v7317, 0.01
    %v7322 = vmul.f32 %v7318, 0.01
    %v7323 = vmul.f32 %v7319, 0.01
    %v7324 = vmul.f32 %v7320, 0.01
    %v7325 = vmax.f32 %v7317, %v7321
    %v7326 = vmax.f32 %v7318, %v7322
    %v7327 = vmax.f32 %v7319, %v7323
    %v7328 = vmax.f32 %v7320, %v7324
    %v7329 = vpack.c.bf16 %v7326, %v7325
    %v7330 = vpack.c.bf16 %v7328, %v7327
    %v7333 = vrot.slane %v7329, 3
    %v7334 = vrot.slane %v7330, 3
    %vm7335 = vcmask 1040384
    %v7338 = vsel %vm7335, %v7329, %v7333
    %v7341 = vsel %vm7335, %v7330, %v7334
    %7342 = vst [vmem:[#allocation1] ss:$4 sm:$0xff] %v7338
    %v7343 = vld [vmem:[#allocation1] sm:$0xff]
    %s7345 = scalar_lea.vmem [#allocation1], 32
    %7346 = vst [vmem:[%s7345] ss:$4 sm:$0xff] %v7341
    %v7347 = vld [vmem:[#allocation1 + $0x20] sm:$0xff]
    %v7349 = vunpack.c.l.b16 %v7343
    %v7350 = vunpack.c.h.b16 %v7343
    %v7351 = vunpack.c.l.b16 %v7347
    %v7352 = vunpack.c.h.b16 %v7347
    %v7353 = vrot.slane %v7351, 7
    %vm7354 = vcmask 1041409
    %v7355 = vsel %vm7354, %v7353, %v7349
    %v7356 = vrot.slane %v7352, 7
    %v7357 = vsel %vm7354, %v7356, %v7350
    %v7358 = vpack.c.b16 %v7357, %v7355
    %v7359 = vrot.slane %v7358, 3
    %v7362 = vsel %vm7335, %v7358, %v7359
    %7364 = vst [vmem:[#allocation3] sm:$0x3] %v7362
    %7365 = vst [vmem:[#allocation1] ss:$4 sm:$0xff] %v7338
    %v7366 = vld [vmem:[#allocation1] sm:$0xff]
    %s7368 = scalar_lea.vmem [#allocation1], 32
    %7369 = vst [vmem:[%s7368] ss:$4 sm:$0xff] %v7341
    %v7370 = vld [vmem:[#allocation1 + $0x20] sm:$0xff]
    %v7372 = vunpack.c.l.b16 %v7366
    %v7373 = vunpack.c.h.b16 %v7366
    %v7374 = vunpack.c.l.b16 %v7370
    %v7375 = vunpack.c.h.b16 %v7370
    %v7376 = vrot.slane %v7372, 1
    %v7377 = vsel %vm7354, %v7374, %v7376
    %v7378 = vrot.slane %v7373, 1
    %v7379 = vsel %vm7354, %v7375, %v7378
    %v7380 = vpack.c.b16 %v7379, %v7377
    %v7381 = vrot.slane %v7380, 3
    %v7384 = vsel %vm7335, %v7380, %v7381
    %7386 = vst [vmem:[#allocation3 + $0x2] sm:$0x3] %v7384
    %7387 = vst [vmem:[#allocation1] sm:$0xff] %v7329
    %s7388 = scalar_lea.vmem [#allocation1], 1
    %v7389 = vld [vmem:[%s7388] ss:$4 sm:$0xff]
    %7390 = vst [vmem:[#allocation1 + $0x20] sm:$0xff] %v7330
    %s7391 = scalar_lea.vmem [#allocation1], 33
    %v7392 = vld [vmem:[%s7391] ss:$4 sm:$0xff]
    %7393 = vst [vmem:[#allocation1] ss:$4 sm:$0xff] %v7389
    %v7394 = vld [vmem:[#allocation1] sm:$0xff]
    %s7396 = scalar_lea.vmem [#allocation1], 32
    %7397 = vst [vmem:[%s7396] ss:$4 sm:$0xff] %v7392
    %v7398 = vld [vmem:[#allocation1 + $0x20] sm:$0xff]
    %v7400 = vunpack.c.l.b16 %v7394
    %v7401 = vunpack.c.h.b16 %v7394
    %v7402 = vunpack.c.l.b16 %v7398
    %v7403 = vunpack.c.h.b16 %v7398
    %v7404 = vrot.slane %v7402, 7
    %v7405 = vsel %vm7354, %v7404, %v7400
    %v7406 = vrot.slane %v7403, 7
    %v7407 = vsel %vm7354, %v7406, %v7401
    %v7408 = vpack.c.b16 %v7407, %v7405
    %v7409 = vrot.slane %v7408, 3
    %v7412 = vsel %vm7335, %v7408, %v7409
    %7414 = vst [vmem:[#allocation3 + $0x4] sm:$0x3] %v7412
    %7415 = vst [vmem:[#allocation1] sm:$0xff] %v7329
    %s7416 = scalar_lea.vmem [#allocation1], 1
    %v7417 = vld [vmem:[%s7416] ss:$4 sm:$0xff]
    %7418 = vst [vmem:[#allocation1 + $0x20] sm:$0xff] %v7330
    %s7419 = scalar_lea.vmem [#allocation1], 33
    %v7420 = vld [vmem:[%s7419] ss:$4 sm:$0xff]
    %7421 = vst [vmem:[#allocation1] ss:$4 sm:$0xff] %v7417
    %v7422 = vld [vmem:[#allocation1] sm:$0xff]
    %s7424 = scalar_lea.vmem [#allocation1], 32
    %7425 = vst [vmem:[%s7424] ss:$4 sm:$0xff] %v7420
    %v7426 = vld [vmem:[#allocation1 + $0x20] sm:$0xff]
    %v7428 = vunpack.c.l.b16 %v7422
    %v7429 = vunpack.c.h.b16 %v7422
    %v7430 = vunpack.c.l.b16 %v7426
    %v7431 = vunpack.c.h.b16 %v7426
    %v7432 = vrot.slane %v7428, 1
    %v7433 = vsel %vm7354, %v7430, %v7432
    %v7434 = vrot.slane %v7429, 1
    %v7435 = vsel %vm7354, %v7431, %v7434
    %v7436 = vpack.c.b16 %v7435, %v7433
    %v7437 = vrot.slane %v7436, 3
    %v7440 = vsel %vm7335, %v7436, %v7437
    %7442 = vst [vmem:[#allocation3 + $0x6] sm:$0x3] %v7440
    %7443 = vst [vmem:[#allocation1] sm:$0xff] %v7329
    %s7444 = scalar_lea.vmem [#allocation1], 2
    %v7445 = vld [vmem:[%s7444] ss:$4 sm:$0xff]
    %7446 = vst [vmem:[#allocation1 + $0x20] sm:$0xff] %v7330
    %s7447 = scalar_lea.vmem [#allocation1], 34
    %v7448 = vld [vmem:[%s7447] ss:$4 sm:$0xff]
    %7449 = vst [vmem:[#allocation1] ss:$4 sm:$0xff] %v7445
    %v7450 = vld [vmem:[#allocation1] sm:$0xff]
    %s7452 = scalar_lea.vmem [#allocation1], 32
    %7453 = vst [vmem:[%s7452] ss:$4 sm:$0xff] %v7448
    %v7454 = vld [vmem:[#allocation1 + $0x20] sm:$0xff]
    %v7456 = vunpack.c.l.b16 %v7450
    %v7457 = vunpack.c.h.b16 %v7450
    %v7458 = vunpack.c.l.b16 %v7454
    %v7459 = vunpack.c.h.b16 %v7454
    %v7460 = vrot.slane %v7458, 7
    %v7461 = vsel %vm7354, %v7460, %v7456
    %v7462 = vrot.slane %v7459, 7
    %v7463 = vsel %vm7354, %v7462, %v7457
    %v7464 = vpack.c.b16 %v7463, %v7461
    %v7465 = vrot.slane %v7464, 3
    %v7468 = vsel %vm7335, %v7464, %v7465
    %7470 = vst [vmem:[#allocation3 + $0x8] sm:$0x3] %v7468
    %7471 = vst [vmem:[#allocation1] sm:$0xff] %v7329
    %s7472 = scalar_lea.vmem [#allocation1], 2
    %v7473 = vld [vmem:[%s7472] ss:$4 sm:$0xff]
    %7474 = vst [vmem:[#allocation1 + $0x20] sm:$0xff] %v7330
    %s7475 = scalar_lea.vmem [#allocation1], 34
    %v7476 = vld [vmem:[%s7475] ss:$4 sm:$0xff]
    %7477 = vst [vmem:[#allocation1] ss:$4 sm:$0xff] %v7473
    %v7478 = vld [vmem:[#allocation1] sm:$0xff]
    %s7480 = scalar_lea.vmem [#allocation1], 32
    %7481 = vst [vmem:[%s7480] ss:$4 sm:$0xff] %v7476
    %v7482 = vld [vmem:[#allocation1 + $0x20] sm:$0xff]
    %v7484 = vunpack.c.l.b16 %v7478
    %v7485 = vunpack.c.h.b16 %v7478
    %v7486 = vunpack.c.l.b16 %v7482
    %v7487 = vunpack.c.h.b16 %v7482
    %v7488 = vrot.slane %v7484, 1
    %v7489 = vsel %vm7354, %v7486, %v7488
    %v7490 = vrot.slane %v7485, 1
    %v7491 = vsel %vm7354, %v7487, %v7490
    %v7492 = vpack.c.b16 %v7491, %v7489
    %v7493 = vrot.slane %v7492, 3
    %v7496 = vsel %vm7335, %v7492, %v7493
    %7498 = vst [vmem:[#allocation3 + $0xa] sm:$0x3] %v7496
    %7499 = vst [vmem:[#allocation1] sm:$0xff] %v7329
    %s7500 = scalar_lea.vmem [#allocation1], 3
    %v7501 = vld [vmem:[%s7500] ss:$4 sm:$0xff]
    %7502 = vst [vmem:[#allocation1 + $0x20] sm:$0xff] %v7330
    %s7503 = scalar_lea.vmem [#allocation1], 35
    %v7504 = vld [vmem:[%s7503] ss:$4 sm:$0xff]
    %7505 = vst [vmem:[#allocation1] ss:$4 sm:$0xff] %v7501
    %v7506 = vld [vmem:[#allocation1] sm:$0xff]
    %s7508 = scalar_lea.vmem [#allocation1], 32
    %7509 = vst [vmem:[%s7508] ss:$4 sm:$0xff] %v7504
    %v7510 = vld [vmem:[#allocation1 + $0x20] sm:$0xff]
    %v7512 = vunpack.c.l.b16 %v7506
    %v7513 = vunpack.c.h.b16 %v7506
    %v7514 = vunpack.c.l.b16 %v7510
    %v7515 = vunpack.c.h.b16 %v7510
    %v7516 = vrot.slane %v7514, 7
    %v7517 = vsel %vm7354, %v7516, %v7512
    %v7518 = vrot.slane %v7515, 7
    %v7519 = vsel %vm7354, %v7518, %v7513
    %v7520 = vpack.c.b16 %v7519, %v7517
    %v7521 = vrot.slane %v7520, 3
    %v7524 = vsel %vm7335, %v7520, %v7521
    %7526 = vst [vmem:[#allocation3 + $0xc] sm:$0x3] %v7524
    %7527 = vst [vmem:[#allocation1] sm:$0xff] %v7329
    %s7528 = scalar_lea.vmem [#allocation1], 3
    %v7529 = vld [vmem:[%s7528] ss:$4 sm:$0xff]
    %7530 = vst [vmem:[#allocation1 + $0x20] sm:$0xff] %v7330
    %s7531 = scalar_lea.vmem [#allocation1], 35
    %v7532 = vld [vmem:[%s7531] ss:$4 sm:$0xff]
    %7533 = vst [vmem:[#allocation1] ss:$4 sm:$0xff] %v7529
    %v7534 = vld [vmem:[#allocation1] sm:$0xff]
    %s7536 = scalar_lea.vmem [#allocation1], 32
    %7537 = vst [vmem:[%s7536] ss:$4 sm:$0xff] %v7532
    %v7538 = vld [vmem:[#allocation1 + $0x20] sm:$0xff]
    %v7540 = vunpack.c.l.b16 %v7534
    %v7541 = vunpack.c.h.b16 %v7534
    %v7542 = vunpack.c.l.b16 %v7538
    %v7543 = vunpack.c.h.b16 %v7538
    %v7544 = vrot.slane %v7540, 1
    %v7545 = vsel %vm7354, %v7542, %v7544
    %v7546 = vrot.slane %v7541, 1
    %v7547 = vsel %vm7354, %v7543, %v7546
    %v7548 = vpack.c.b16 %v7547, %v7545
    %v7549 = vrot.slane %v7548, 3
    %v7552 = vsel %vm7335, %v7548, %v7549
    %7554 = vst [vmem:[#allocation3 + $0xe] sm:$0x3] %v7552
    %v7555 = vld [vmem:[#allocation3] sm:$0xff]
    %v7556 = vld [vmem:[#allocation3 + $0x8] sm:$0xff]
    %v7557 = vld [vmem:[%s3] sm:$0xf]
    %v7558 = vld [vmem:[%s3 + $0x4] sm:$0xf]
    %v7559 = vld [vmem:[%s3 + $0x8] sm:$0xf]
    %v7560 = vld [vmem:[%s3 + $0xc] sm:$0xf]
    %v7561 = vld [vmem:[%s3 + $0x10] sm:$0xf]
    %v7562 = vld [vmem:[%s3 + $0x14] sm:$0xf]
    %v7563 = vld [vmem:[%s3 + $0x18] sm:$0xf]
    %v7564 = vld [vmem:[%s3 + $0x1c] sm:$0xf]
    %v7565 = vld [vmem:[%s3 + $0x20] sm:$0xf]
    %v7566 = vld [vmem:[%s3 + $0x24] sm:$0xf]
    %v7567 = vld [vmem:[%s3 + $0x28] sm:$0xf]
    %v7568 = vld [vmem:[%s3 + $0x2c] sm:$0xf]
    %v7569 = vld [vmem:[%s3 + $0x30] sm:$0xf]
    %v7570 = vld [vmem:[%s3 + $0x34] sm:$0xf]
    %v7571 = vld [vmem:[%s3 + $0x38] sm:$0xf]
    %v7572 = vld [vmem:[%s3 + $0x3c] sm:$0xf]
    %v7573 = vld [vmem:[%s3 + $0x40] sm:$0xf]
    %v7574 = vld [vmem:[%s3 + $0x44] sm:$0xf]
    %v7575 = vld [vmem:[%s3 + $0x48] sm:$0xf]
    %v7576 = vld [vmem:[%s3 + $0x4c] sm:$0xf]
    %v7577 = vld [vmem:[%s3 + $0x50] sm:$0xf]
    %v7578 = vld [vmem:[%s3 + $0x54] sm:$0xf]
    %v7579 = vld [vmem:[%s3 + $0x58] sm:$0xf]
    %v7580 = vld [vmem:[%s3 + $0x5c] sm:$0xf]
    %v7581 = vld [vmem:[%s3 + $0x60] sm:$0xf]
    %v7582 = vld [vmem:[%s3 + $0x64] sm:$0xf]
    %v7583 = vld [vmem:[%s3 + $0x68] sm:$0xf]
    %v7584 = vld [vmem:[%s3 + $0x6c] sm:$0xf]
    %v7585 = vld [vmem:[%s3 + $0x70] sm:$0xf]
    %v7586 = vld [vmem:[%s3 + $0x74] sm:$0xf]
    %v7587 = vld [vmem:[%s3 + $0x78] sm:$0xf]
    %v7588 = vld [vmem:[%s3 + $0x7c] sm:$0xf]
    %v7589 = vld [vmem:[%s3 + $0x80] sm:$0xf]
    %v7590 = vld [vmem:[%s3 + $0x84] sm:$0xf]
    %v7591 = vld [vmem:[%s3 + $0x88] sm:$0xf]
    %v7592 = vld [vmem:[%s3 + $0x8c] sm:$0xf]
    %v7593 = vld [vmem:[%s3 + $0x90] sm:$0xf]
    %v7594 = vld [vmem:[%s3 + $0x94] sm:$0xf]
    %v7595 = vld [vmem:[%s3 + $0x98] sm:$0xf]
    %v7596 = vld [vmem:[%s3 + $0x9c] sm:$0xf]
    %v7597 = vld [vmem:[%s3 + $0xa0] sm:$0xf]
    %v7598 = vld [vmem:[%s3 + $0xa4] sm:$0xf]
    %v7599 = vld [vmem:[%s3 + $0xa8] sm:$0xf]
    %v7600 = vld [vmem:[%s3 + $0xac] sm:$0xf]
    %v7601 = vld [vmem:[%s3 + $0xb0] sm:$0xf]
    %v7602 = vld [vmem:[%s3 + $0xb4] sm:$0xf]
    %v7603 = vld [vmem:[%s3 + $0xb8] sm:$0xf]
    %v7604 = vld [vmem:[%s3 + $0xbc] sm:$0xf]
    %v7605 = vld [vmem:[%s3 + $0xc0] sm:$0xf]
    %v7606 = vld [vmem:[%s3 + $0xc4] sm:$0xf]
    %v7607 = vld [vmem:[%s3 + $0xc8] sm:$0xf]
    %v7608 = vld [vmem:[%s3 + $0xcc] sm:$0xf]
    %v7609 = vld [vmem:[%s3 + $0xd0] sm:$0xf]
    %v7610 = vld [vmem:[%s3 + $0xd4] sm:$0xf]
    %v7611 = vld [vmem:[%s3 + $0xd8] sm:$0xf]
    %v7612 = vld [vmem:[%s3 + $0xdc] sm:$0xf]
    %v7613 = vld [vmem:[%s3 + $0xe0] sm:$0xf]
    %v7614 = vld [vmem:[%s3 + $0xe4] sm:$0xf]
    %v7615 = vld [vmem:[%s3 + $0xe8] sm:$0xf]
    %v7616 = vld [vmem:[%s3 + $0xec] sm:$0xf]
    %v7617 = vld [vmem:[%s3 + $0xf0] sm:$0xf]
    %v7618 = vld [vmem:[%s3 + $0xf4] sm:$0xf]
    %v7619 = vld [vmem:[%s3 + $0xf8] sm:$0xf]
    %v7620 = vld [vmem:[%s3 + $0xfc] sm:$0xf]
    %v7621 = vld [vmem:[%s3 + $0x100] sm:$0xf]
    %v7622 = vld [vmem:[%s3 + $0x104] sm:$0xf]
    %v7623 = vld [vmem:[%s3 + $0x108] sm:$0xf]
    %v7624 = vld [vmem:[%s3 + $0x10c] sm:$0xf]
    %v7625 = vld [vmem:[%s3 + $0x110] sm:$0xf]
    %v7626 = vld [vmem:[%s3 + $0x114] sm:$0xf]
    %v7627 = vld [vmem:[%s3 + $0x118] sm:$0xf]
    %v7628 = vld [vmem:[%s3 + $0x11c] sm:$0xf]
    %v7629 = vld [vmem:[%s3 + $0x120] sm:$0xf]
    %v7630 = vld [vmem:[%s3 + $0x124] sm:$0xf]
    %v7631 = vld [vmem:[%s3 + $0x128] sm:$0xf]
    %v7632 = vld [vmem:[%s3 + $0x12c] sm:$0xf]
    %v7633 = vld [vmem:[%s3 + $0x130] sm:$0xf]
    %v7634 = vld [vmem:[%s3 + $0x134] sm:$0xf]
    %v7635 = vld [vmem:[%s3 + $0x138] sm:$0xf]
    %v7636 = vld [vmem:[%s3 + $0x13c] sm:$0xf]
    %v7637 = vld [vmem:[%s3 + $0x140] sm:$0xf]
    %v7638 = vld [vmem:[%s3 + $0x144] sm:$0xf]
    %v7639 = vld [vmem:[%s3 + $0x148] sm:$0xf]
    %v7640 = vld [vmem:[%s3 + $0x14c] sm:$0xf]
    %v7641 = vld [vmem:[%s3 + $0x150] sm:$0xf]
    %v7642 = vld [vmem:[%s3 + $0x154] sm:$0xf]
    %v7643 = vld [vmem:[%s3 + $0x158] sm:$0xf]
    %v7644 = vld [vmem:[%s3 + $0x15c] sm:$0xf]
    %v7645 = vld [vmem:[%s3 + $0x160] sm:$0xf]
    %v7646 = vld [vmem:[%s3 + $0x164] sm:$0xf]
    %v7647 = vld [vmem:[%s3 + $0x168] sm:$0xf]
    %v7648 = vld [vmem:[%s3 + $0x16c] sm:$0xf]
    %v7649 = vld [vmem:[%s3 + $0x170] sm:$0xf]
    %v7650 = vld [vmem:[%s3 + $0x174] sm:$0xf]
    %v7651 = vld [vmem:[%s3 + $0x178] sm:$0xf]
    %v7652 = vld [vmem:[%s3 + $0x17c] sm:$0xf]
    %v7653 = vld [vmem:[%s3 + $0x180] sm:$0xf]
    %v7654 = vld [vmem:[%s3 + $0x184] sm:$0xf]
    %v7655 = vld [vmem:[%s3 + $0x188] sm:$0xf]
    %v7656 = vld [vmem:[%s3 + $0x18c] sm:$0xf]
    %v7657 = vld [vmem:[%s3 + $0x190] sm:$0xf]
    %v7658 = vld [vmem:[%s3 + $0x194] sm:$0xf]
    %v7659 = vld [vmem:[%s3 + $0x198] sm:$0xf]
    %v7660 = vld [vmem:[%s3 + $0x19c] sm:$0xf]
    %v7661 = vld [vmem:[%s3 + $0x1a0] sm:$0xf]
    %v7662 = vld [vmem:[%s3 + $0x1a4] sm:$0xf]
    %v7663 = vld [vmem:[%s3 + $0x1a8] sm:$0xf]
    %v7664 = vld [vmem:[%s3 + $0x1ac] sm:$0xf]
    %v7665 = vld [vmem:[%s3 + $0x1b0] sm:$0xf]
    %v7666 = vld [vmem:[%s3 + $0x1b4] sm:$0xf]
    %v7667 = vld [vmem:[%s3 + $0x1b8] sm:$0xf]
    %v7668 = vld [vmem:[%s3 + $0x1bc] sm:$0xf]
    %v7669 = vld [vmem:[%s3 + $0x1c0] sm:$0xf]
    %v7670 = vld [vmem:[%s3 + $0x1c4] sm:$0xf]
    %v7671 = vld [vmem:[%s3 + $0x1c8] sm:$0xf]
    %v7672 = vld [vmem:[%s3 + $0x1cc] sm:$0xf]
    %v7673 = vld [vmem:[%s3 + $0x1d0] sm:$0xf]
    %v7674 = vld [vmem:[%s3 + $0x1d4] sm:$0xf]
    %v7675 = vld [vmem:[%s3 + $0x1d8] sm:$0xf]
    %v7676 = vld [vmem:[%s3 + $0x1dc] sm:$0xf]
    %v7677 = vld [vmem:[%s3 + $0x1e0] sm:$0xf]
    %v7678 = vld [vmem:[%s3 + $0x1e4] sm:$0xf]
    %v7679 = vld [vmem:[%s3 + $0x1e8] sm:$0xf]
    %v7680 = vld [vmem:[%s3 + $0x1ec] sm:$0xf]
    %v7681 = vld [vmem:[%s3 + $0x1f0] sm:$0xf]
    %v7682 = vld [vmem:[%s3 + $0x1f4] sm:$0xf]
    %v7683 = vld [vmem:[%s3 + $0x1f8] sm:$0xf]
    %v7684 = vld [vmem:[%s3 + $0x1fc] sm:$0xf]
    %v7685 = vld [vmem:[%s3 + $0x200] sm:$0xf]
    %v7686 = vld [vmem:[%s3 + $0x204] sm:$0xf]
    %v7687 = vld [vmem:[%s3 + $0x208] sm:$0xf]
    %v7688 = vld [vmem:[%s3 + $0x20c] sm:$0xf]
    %v7689 = vld [vmem:[%s3 + $0x210] sm:$0xf]
    %v7690 = vld [vmem:[%s3 + $0x214] sm:$0xf]
    %v7691 = vld [vmem:[%s3 + $0x218] sm:$0xf]
    %v7692 = vld [vmem:[%s3 + $0x21c] sm:$0xf]
    %v7693 = vld [vmem:[%s3 + $0x220] sm:$0xf]
    %v7694 = vld [vmem:[%s3 + $0x224] sm:$0xf]
    %v7695 = vld [vmem:[%s3 + $0x228] sm:$0xf]
    %v7696 = vld [vmem:[%s3 + $0x22c] sm:$0xf]
    %v7697 = vld [vmem:[%s3 + $0x230] sm:$0xf]
    %v7698 = vld [vmem:[%s3 + $0x234] sm:$0xf]
    %v7699 = vld [vmem:[%s3 + $0x238] sm:$0xf]
    %v7700 = vld [vmem:[%s3 + $0x23c] sm:$0xf]
    %v7701 = vld [vmem:[%s3 + $0x240] sm:$0xf]
    %v7702 = vld [vmem:[%s3 + $0x244] sm:$0xf]
    %v7703 = vld [vmem:[%s3 + $0x248] sm:$0xf]
    %v7704 = vld [vmem:[%s3 + $0x24c] sm:$0xf]
    %v7705 = vld [vmem:[%s3 + $0x250] sm:$0xf]
    %v7706 = vld [vmem:[%s3 + $0x254] sm:$0xf]
    %v7707 = vld [vmem:[%s3 + $0x258] sm:$0xf]
    %v7708 = vld [vmem:[%s3 + $0x25c] sm:$0xf]
    %v7709 = vld [vmem:[%s3 + $0x260] sm:$0xf]
    %v7710 = vld [vmem:[%s3 + $0x264] sm:$0xf]
    %v7711 = vld [vmem:[%s3 + $0x268] sm:$0xf]
    %v7712 = vld [vmem:[%s3 + $0x26c] sm:$0xf]
    %v7713 = vld [vmem:[%s3 + $0x270] sm:$0xf]
    %v7714 = vld [vmem:[%s3 + $0x274] sm:$0xf]
    %v7715 = vld [vmem:[%s3 + $0x278] sm:$0xf]
    %v7716 = vld [vmem:[%s3 + $0x27c] sm:$0xf]
    %v7717 = vld [vmem:[%s3 + $0x280] sm:$0xf]
    %v7718 = vld [vmem:[%s3 + $0x284] sm:$0xf]
    %v7719 = vld [vmem:[%s3 + $0x288] sm:$0xf]
    %v7720 = vld [vmem:[%s3 + $0x28c] sm:$0xf]
    %v7721 = vld [vmem:[%s3 + $0x290] sm:$0xf]
    %v7722 = vld [vmem:[%s3 + $0x294] sm:$0xf]
    %v7723 = vld [vmem:[%s3 + $0x298] sm:$0xf]
    %v7724 = vld [vmem:[%s3 + $0x29c] sm:$0xf]
    %v7725 = vld [vmem:[%s3 + $0x2a0] sm:$0xf]
    %v7726 = vld [vmem:[%s3 + $0x2a4] sm:$0xf]
    %v7727 = vld [vmem:[%s3 + $0x2a8] sm:$0xf]
    %v7728 = vld [vmem:[%s3 + $0x2ac] sm:$0xf]
    %v7729 = vld [vmem:[%s3 + $0x2b0] sm:$0xf]
    %v7730 = vld [vmem:[%s3 + $0x2b4] sm:$0xf]
    %v7731 = vld [vmem:[%s3 + $0x2b8] sm:$0xf]
    %v7732 = vld [vmem:[%s3 + $0x2bc] sm:$0xf]
    %v7733 = vld [vmem:[%s3 + $0x2c0] sm:$0xf]
    %v7734 = vld [vmem:[%s3 + $0x2c4] sm:$0xf]
    %v7735 = vld [vmem:[%s3 + $0x2c8] sm:$0xf]
    %v7736 = vld [vmem:[%s3 + $0x2cc] sm:$0xf]
    %v7737 = vld [vmem:[%s3 + $0x2d0] sm:$0xf]
    %v7738 = vld [vmem:[%s3 + $0x2d4] sm:$0xf]
    %v7739 = vld [vmem:[%s3 + $0x2d8] sm:$0xf]
    %v7740 = vld [vmem:[%s3 + $0x2dc] sm:$0xf]
    %v7741 = vld [vmem:[%s3 + $0x2e0] sm:$0xf]
    %v7742 = vld [vmem:[%s3 + $0x2e4] sm:$0xf]
    %v7743 = vld [vmem:[%s3 + $0x2e8] sm:$0xf]
    %v7744 = vld [vmem:[%s3 + $0x2ec] sm:$0xf]
    %v7745 = vld [vmem:[%s3 + $0x2f0] sm:$0xf]
    %v7746 = vld [vmem:[%s3 + $0x2f4] sm:$0xf]
    %v7747 = vld [vmem:[%s3 + $0x2f8] sm:$0xf]
    %v7748 = vld [vmem:[%s3 + $0x2fc] sm:$0xf]
    %v7749 = vld [vmem:[%s3 + $0x300] sm:$0xf]
    %v7750 = vld [vmem:[%s3 + $0x304] sm:$0xf]
    %v7751 = vld [vmem:[%s3 + $0x308] sm:$0xf]
    %v7752 = vld [vmem:[%s3 + $0x30c] sm:$0xf]
    %v7753 = vld [vmem:[%s3 + $0x310] sm:$0xf]
    %v7754 = vld [vmem:[%s3 + $0x314] sm:$0xf]
    %v7755 = vld [vmem:[%s3 + $0x318] sm:$0xf]
    %v7756 = vld [vmem:[%s3 + $0x31c] sm:$0xf]
    %v7757 = vld [vmem:[%s3 + $0x320] sm:$0xf]
    %v7758 = vld [vmem:[%s3 + $0x324] sm:$0xf]
    %v7759 = vld [vmem:[%s3 + $0x328] sm:$0xf]
    %v7760 = vld [vmem:[%s3 + $0x32c] sm:$0xf]
    %v7761 = vld [vmem:[%s3 + $0x330] sm:$0xf]
    %v7762 = vld [vmem:[%s3 + $0x334] sm:$0xf]
    %v7763 = vld [vmem:[%s3 + $0x338] sm:$0xf]
    %v7764 = vld [vmem:[%s3 + $0x33c] sm:$0xf]
    %v7765 = vld [vmem:[%s3 + $0x340] sm:$0xf]
    %v7766 = vld [vmem:[%s3 + $0x344] sm:$0xf]
    %v7767 = vld [vmem:[%s3 + $0x348] sm:$0xf]
    %v7768 = vld [vmem:[%s3 + $0x34c] sm:$0xf]
    %v7769 = vld [vmem:[%s3 + $0x350] sm:$0xf]
    %v7770 = vld [vmem:[%s3 + $0x354] sm:$0xf]
    %v7771 = vld [vmem:[%s3 + $0x358] sm:$0xf]
    %v7772 = vld [vmem:[%s3 + $0x35c] sm:$0xf]
    %v7773 = vld [vmem:[%s3 + $0x360] sm:$0xf]
    %v7774 = vld [vmem:[%s3 + $0x364] sm:$0xf]
    %v7775 = vld [vmem:[%s3 + $0x368] sm:$0xf]
    %v7776 = vld [vmem:[%s3 + $0x36c] sm:$0xf]
    %v7777 = vld [vmem:[%s3 + $0x370] sm:$0xf]
    %v7778 = vld [vmem:[%s3 + $0x374] sm:$0xf]
    %v7779 = vld [vmem:[%s3 + $0x378] sm:$0xf]
    %v7780 = vld [vmem:[%s3 + $0x37c] sm:$0xf]
    %v7781 = vld [vmem:[%s3 + $0x380] sm:$0xf]
    %v7782 = vld [vmem:[%s3 + $0x384] sm:$0xf]
    %v7783 = vld [vmem:[%s3 + $0x388] sm:$0xf]
    %v7784 = vld [vmem:[%s3 + $0x38c] sm:$0xf]
    %v7785 = vld [vmem:[%s3 + $0x390] sm:$0xf]
    %v7786 = vld [vmem:[%s3 + $0x394] sm:$0xf]
    %v7787 = vld [vmem:[%s3 + $0x398] sm:$0xf]
    %v7788 = vld [vmem:[%s3 + $0x39c] sm:$0xf]
    %v7789 = vld [vmem:[%s3 + $0x3a0] sm:$0xf]
    %v7790 = vld [vmem:[%s3 + $0x3a4] sm:$0xf]
    %v7791 = vld [vmem:[%s3 + $0x3a8] sm:$0xf]
    %v7792 = vld [vmem:[%s3 + $0x3ac] sm:$0xf]
    %v7793 = vld [vmem:[%s3 + $0x3b0] sm:$0xf]
    %v7794 = vld [vmem:[%s3 + $0x3b4] sm:$0xf]
    %v7795 = vld [vmem:[%s3 + $0x3b8] sm:$0xf]
    %v7796 = vld [vmem:[%s3 + $0x3bc] sm:$0xf]
    %v7797 = vld [vmem:[%s3 + $0x3c0] sm:$0xf]
    %v7798 = vld [vmem:[%s3 + $0x3c4] sm:$0xf]
    %v7799 = vld [vmem:[%s3 + $0x3c8] sm:$0xf]
    %v7800 = vld [vmem:[%s3 + $0x3cc] sm:$0xf]
    %v7801 = vld [vmem:[%s3 + $0x3d0] sm:$0xf]
    %v7802 = vld [vmem:[%s3 + $0x3d4] sm:$0xf]
    %v7803 = vld [vmem:[%s3 + $0x3d8] sm:$0xf]
    %v7804 = vld [vmem:[%s3 + $0x3dc] sm:$0xf]
    %v7805 = vld [vmem:[%s3 + $0x3e0] sm:$0xf]
    %v7806 = vld [vmem:[%s3 + $0x3e4] sm:$0xf]
    %v7807 = vld [vmem:[%s3 + $0x3e8] sm:$0xf]
    %v7808 = vld [vmem:[%s3 + $0x3ec] sm:$0xf]
    %v7809 = vld [vmem:[%s3 + $0x3f0] sm:$0xf]
    %v7810 = vld [vmem:[%s3 + $0x3f4] sm:$0xf]
    %v7811 = vld [vmem:[%s3 + $0x3f8] sm:$0xf]
    %v7812 = vld [vmem:[%s3 + $0x3fc] sm:$0xf]
    %v7813 = vld [vmem:[#allocation11] sm:$0x1]
    %v7815 = vperm.slane %v7813, 0
    %7818 = vst [vmem:[#allocation1] ss:$9 sm:$0xff] %v7555
    %v7819 = vld [vmem:[#allocation1] sm:$0xff]
    %v7820 = vld [vmem:[#allocation1 + $0x9] sm:$0xff]
    %v7821 = vld [vmem:[#allocation1 + $0x12] sm:$0xff]
    %v7822 = vld [vmem:[#allocation1 + $0x1b] sm:$0xff]
    %v7823 = vld [vmem:[#allocation1 + $0x24] sm:$0xff]
    %v7824 = vld [vmem:[#allocation1 + $0x2d] sm:$0xff]
    %v7825 = vld [vmem:[#allocation1 + $0x36] sm:$0xff]
    %v7826 = vld [vmem:[#allocation1 + $0x3f] sm:$0xff]
    %7828 = vst [vmem:[#allocation1] ss:$9 sm:$0xff] %v7556
    %v7829 = vld [vmem:[#allocation1] sm:$0xff]
    %v7830 = vld [vmem:[#allocation1 + $0x9] sm:$0xff]
    %v7831 = vld [vmem:[#allocation1 + $0x12] sm:$0xff]
    %v7832 = vld [vmem:[#allocation1 + $0x1b] sm:$0xff]
    %v7833 = vld [vmem:[#allocation1 + $0x24] sm:$0xff]
    %v7834 = vld [vmem:[#allocation1 + $0x2d] sm:$0xff]
    %v7835 = vld [vmem:[#allocation1 + $0x36] sm:$0xff]
    %v7836 = vld [vmem:[#allocation1 + $0x3f] sm:$0xff]
    %v8109 = vunpack.c.l.b16 %v7557
    %v8110 = vunpack.c.l.b16 %v7558
    %v8111 = vunpack.c.l.b16 %v7559
    %v8112 = vunpack.c.l.b16 %v7560
    %v8113 = vunpack.c.l.b16 %v7561
    %v8114 = vunpack.c.l.b16 %v7562
    %v8115 = vunpack.c.l.b16 %v7563
    %v8116 = vunpack.c.l.b16 %v7564
    %v8117 = vunpack.c.l.b16 %v7565
    %v8118 = vunpack.c.l.b16 %v7566
    %v8119 = vunpack.c.l.b16 %v7567
    %v8120 = vunpack.c.l.b16 %v7568
    %v8121 = vunpack.c.l.b16 %v7569
    %v8122 = vunpack.c.l.b16 %v7570
    %v8123 = vunpack.c.l.b16 %v7571
    %v8124 = vunpack.c.l.b16 %v7572
    %v8125 = vunpack.c.l.b16 %v7573
    %v8126 = vunpack.c.l.b16 %v7574
    %v8127 = vunpack.c.l.b16 %v7575
    %v8128 = vunpack.c.l.b16 %v7576
    %v8129 = vunpack.c.l.b16 %v7577
    %v8130 = vunpack.c.l.b16 %v7578
    %v8131 = vunpack.c.l.b16 %v7579
    %v8132 = vunpack.c.l.b16 %v7580
    %v8133 = vunpack.c.l.b16 %v7581
    %v8134 = vunpack.c.l.b16 %v7582
    %v8135 = vunpack.c.l.b16 %v7583
    %v8136 = vunpack.c.l.b16 %v7584
    %v8137 = vunpack.c.l.b16 %v7585
    %v8138 = vunpack.c.l.b16 %v7586
    %v8139 = vunpack.c.l.b16 %v7587
    %v8140 = vunpack.c.l.b16 %v7588
    %v8141 = vunpack.c.l.b16 %v7589
    %v8142 = vunpack.c.l.b16 %v7590
    %v8143 = vunpack.c.l.b16 %v7591
    %v8144 = vunpack.c.l.b16 %v7592
    %v8145 = vunpack.c.l.b16 %v7593
    %v8146 = vunpack.c.l.b16 %v7594
    %v8147 = vunpack.c.l.b16 %v7595
    %v8148 = vunpack.c.l.b16 %v7596
    %v8149 = vunpack.c.l.b16 %v7597
    %v8150 = vunpack.c.l.b16 %v7598
    %v8151 = vunpack.c.l.b16 %v7599
    %v8152 = vunpack.c.l.b16 %v7600
    %v8153 = vunpack.c.l.b16 %v7601
    %v8154 = vunpack.c.l.b16 %v7602
    %v8155 = vunpack.c.l.b16 %v7603
    %v8156 = vunpack.c.l.b16 %v7604
    %v8157 = vunpack.c.l.b16 %v7605
    %v8158 = vunpack.c.l.b16 %v7606
    %v8159 = vunpack.c.l.b16 %v7607
    %v8160 = vunpack.c.l.b16 %v7608
    %v8161 = vunpack.c.l.b16 %v7609
    %v8162 = vunpack.c.l.b16 %v7610
    %v8163 = vunpack.c.l.b16 %v7611
    %v8164 = vunpack.c.l.b16 %v7612
    %v8165 = vunpack.c.l.b16 %v7613
    %v8166 = vunpack.c.l.b16 %v7614
    %v8167 = vunpack.c.l.b16 %v7615
    %v8168 = vunpack.c.l.b16 %v7616
    %v8169 = vunpack.c.l.b16 %v7617
    %v8170 = vunpack.c.l.b16 %v7618
    %v8171 = vunpack.c.l.b16 %v7619
    %v8172 = vunpack.c.l.b16 %v7620
    %v8173 = vunpack.c.l.b16 %v7621
    %v8174 = vunpack.c.l.b16 %v7622
    %v8175 = vunpack.c.l.b16 %v7623
    %v8176 = vunpack.c.l.b16 %v7624
    %v8177 = vunpack.c.l.b16 %v7625
    %v8178 = vunpack.c.l.b16 %v7626
    %v8179 = vunpack.c.l.b16 %v7627
    %v8180 = vunpack.c.l.b16 %v7628
    %v8181 = vunpack.c.l.b16 %v7629
    %v8182 = vunpack.c.l.b16 %v7630
    %v8183 = vunpack.c.l.b16 %v7631
    %v8184 = vunpack.c.l.b16 %v7632
    %v8185 = vunpack.c.l.b16 %v7633
    %v8186 = vunpack.c.l.b16 %v7634
    %v8187 = vunpack.c.l.b16 %v7635
    %v8188 = vunpack.c.l.b16 %v7636
    %v8189 = vunpack.c.l.b16 %v7637
    %v8190 = vunpack.c.l.b16 %v7638
    %v8191 = vunpack.c.l.b16 %v7639
    %v8192 = vunpack.c.l.b16 %v7640
    %v8193 = vunpack.c.l.b16 %v7641
    %v8194 = vunpack.c.l.b16 %v7642
    %v8195 = vunpack.c.l.b16 %v7643
    %v8196 = vunpack.c.l.b16 %v7644
    %v8197 = vunpack.c.l.b16 %v7645
    %v8198 = vunpack.c.l.b16 %v7646
    %v8199 = vunpack.c.l.b16 %v7647
    %v8200 = vunpack.c.l.b16 %v7648
    %v8201 = vunpack.c.l.b16 %v7649
    %v8202 = vunpack.c.l.b16 %v7650
    %v8203 = vunpack.c.l.b16 %v7651
    %v8204 = vunpack.c.l.b16 %v7652
    %v8205 = vunpack.c.l.b16 %v7653
    %v8206 = vunpack.c.l.b16 %v7654
    %v8207 = vunpack.c.l.b16 %v7655
    %v8208 = vunpack.c.l.b16 %v7656
    %v8209 = vunpack.c.l.b16 %v7657
    %v8210 = vunpack.c.l.b16 %v7658
    %v8211 = vunpack.c.l.b16 %v7659
    %v8212 = vunpack.c.l.b16 %v7660
    %v8213 = vunpack.c.l.b16 %v7661
    %v8214 = vunpack.c.l.b16 %v7662
    %v8215 = vunpack.c.l.b16 %v7663
    %v8216 = vunpack.c.l.b16 %v7664
    %v8217 = vunpack.c.l.b16 %v7665
    %v8218 = vunpack.c.l.b16 %v7666
    %v8219 = vunpack.c.l.b16 %v7667
    %v8220 = vunpack.c.l.b16 %v7668
    %v8221 = vunpack.c.l.b16 %v7669
    %v8222 = vunpack.c.l.b16 %v7670
    %v8223 = vunpack.c.l.b16 %v7671
    %v8224 = vunpack.c.l.b16 %v7672
    %v8225 = vunpack.c.l.b16 %v7673
    %v8226 = vunpack.c.l.b16 %v7674
    %v8227 = vunpack.c.l.b16 %v7675
    %v8228 = vunpack.c.l.b16 %v7676
    %v8229 = vunpack.c.l.b16 %v7677
    %v8230 = vunpack.c.l.b16 %v7678
    %v8231 = vunpack.c.l.b16 %v7679
    %v8232 = vunpack.c.l.b16 %v7680
    %v8233 = vunpack.c.l.b16 %v7681
    %v8234 = vunpack.c.l.b16 %v7682
    %v8235 = vunpack.c.l.b16 %v7683
    %v8236 = vunpack.c.l.b16 %v7684
    %v8237 = vunpack.c.l.b16 %v7685
    %v8238 = vunpack.c.l.b16 %v7686
    %v8239 = vunpack.c.l.b16 %v7687
    %v8240 = vunpack.c.l.b16 %v7688
    %v8241 = vunpack.c.l.b16 %v7689
    %v8242 = vunpack.c.l.b16 %v7690
    %v8243 = vunpack.c.l.b16 %v7691
    %v8244 = vunpack.c.l.b16 %v7692
    %v8245 = vunpack.c.l.b16 %v7693
    %v8246 = vunpack.c.l.b16 %v7694
    %v8247 = vunpack.c.l.b16 %v7695
    %v8248 = vunpack.c.l.b16 %v7696
    %v8249 = vunpack.c.l.b16 %v7697
    %v8250 = vunpack.c.l.b16 %v7698
    %v8251 = vunpack.c.l.b16 %v7699
    %v8252 = vunpack.c.l.b16 %v7700
    %v8253 = vunpack.c.l.b16 %v7701
    %v8254 = vunpack.c.l.b16 %v7702
    %v8255 = vunpack.c.l.b16 %v7703
    %v8256 = vunpack.c.l.b16 %v7704
    %v8257 = vunpack.c.l.b16 %v7705
    %v8258 = vunpack.c.l.b16 %v7706
    %v8259 = vunpack.c.l.b16 %v7707
    %v8260 = vunpack.c.l.b16 %v7708
    %v8261 = vunpack.c.l.b16 %v7709
    %v8262 = vunpack.c.l.b16 %v7710
    %v8263 = vunpack.c.l.b16 %v7711
    %v8264 = vunpack.c.l.b16 %v7712
    %v8265 = vunpack.c.l.b16 %v7713
    %v8266 = vunpack.c.l.b16 %v7714
    %v8267 = vunpack.c.l.b16 %v7715
    %v8268 = vunpack.c.l.b16 %v7716
    %v8269 = vunpack.c.l.b16 %v7717
    %v8270 = vunpack.c.l.b16 %v7718
    %v8271 = vunpack.c.l.b16 %v7719
    %v8272 = vunpack.c.l.b16 %v7720
    %v8273 = vunpack.c.l.b16 %v7721
    %v8274 = vunpack.c.l.b16 %v7722
    %v8275 = vunpack.c.l.b16 %v7723
    %v8276 = vunpack.c.l.b16 %v7724
    %v8277 = vunpack.c.l.b16 %v7725
    %v8278 = vunpack.c.l.b16 %v7726
    %v8279 = vunpack.c.l.b16 %v7727
    %v8280 = vunpack.c.l.b16 %v7728
    %v8281 = vunpack.c.l.b16 %v7729
    %v8282 = vunpack.c.l.b16 %v7730
    %v8283 = vunpack.c.l.b16 %v7731
    %v8284 = vunpack.c.l.b16 %v7732
    %v8285 = vunpack.c.l.b16 %v7733
    %v8286 = vunpack.c.l.b16 %v7734
    %v8287 = vunpack.c.l.b16 %v7735
    %v8288 = vunpack.c.l.b16 %v7736
    %v8289 = vunpack.c.l.b16 %v7737
    %v8290 = vunpack.c.l.b16 %v7738
    %v8291 = vunpack.c.l.b16 %v7739
    %v8292 = vunpack.c.l.b16 %v7740
    %v8293 = vunpack.c.l.b16 %v7741
    %v8294 = vunpack.c.l.b16 %v7742
    %v8295 = vunpack.c.l.b16 %v7743
    %v8296 = vunpack.c.l.b16 %v7744
    %v8297 = vunpack.c.l.b16 %v7745
    %v8298 = vunpack.c.l.b16 %v7746
    %v8299 = vunpack.c.l.b16 %v7747
    %v8300 = vunpack.c.l.b16 %v7748
    %v8301 = vunpack.c.l.b16 %v7749
    %v8302 = vunpack.c.l.b16 %v7750
    %v8303 = vunpack.c.l.b16 %v7751
    %v8304 = vunpack.c.l.b16 %v7752
    %v8305 = vunpack.c.l.b16 %v7753
    %v8306 = vunpack.c.l.b16 %v7754
    %v8307 = vunpack.c.l.b16 %v7755
    %v8308 = vunpack.c.l.b16 %v7756
    %v8309 = vunpack.c.l.b16 %v7757
    %v8310 = vunpack.c.l.b16 %v7758
    %v8311 = vunpack.c.l.b16 %v7759
    %v8312 = vunpack.c.l.b16 %v7760
    %v8313 = vunpack.c.l.b16 %v7761
    %v8314 = vunpack.c.l.b16 %v7762
    %v8315 = vunpack.c.l.b16 %v7763
    %v8316 = vunpack.c.l.b16 %v7764
    %v8317 = vunpack.c.l.b16 %v7765
    %v8318 = vunpack.c.l.b16 %v7766
    %v8319 = vunpack.c.l.b16 %v7767
    %v8320 = vunpack.c.l.b16 %v7768
    %v8321 = vunpack.c.l.b16 %v7769
    %v8322 = vunpack.c.l.b16 %v7770
    %v8323 = vunpack.c.l.b16 %v7771
    %v8324 = vunpack.c.l.b16 %v7772
    %v8325 = vunpack.c.l.b16 %v7773
    %v8326 = vunpack.c.l.b16 %v7774
    %v8327 = vunpack.c.l.b16 %v7775
    %v8328 = vunpack.c.l.b16 %v7776
    %v8329 = vunpack.c.l.b16 %v7777
    %v8330 = vunpack.c.l.b16 %v7778
    %v8331 = vunpack.c.l.b16 %v7779
    %v8332 = vunpack.c.l.b16 %v7780
    %v8333 = vunpack.c.l.b16 %v7781
    %v8334 = vunpack.c.l.b16 %v7782
    %v8335 = vunpack.c.l.b16 %v7783
    %v8336 = vunpack.c.l.b16 %v7784
    %v8337 = vunpack.c.l.b16 %v7785
    %v8338 = vunpack.c.l.b16 %v7786
    %v8339 = vunpack.c.l.b16 %v7787
    %v8340 = vunpack.c.l.b16 %v7788
    %v8341 = vunpack.c.l.b16 %v7789
    %v8342 = vunpack.c.l.b16 %v7790
    %v8343 = vunpack.c.l.b16 %v7791
    %v8344 = vunpack.c.l.b16 %v7792
    %v8345 = vunpack.c.l.b16 %v7793
    %v8346 = vunpack.c.l.b16 %v7794
    %v8347 = vunpack.c.l.b16 %v7795
    %v8348 = vunpack.c.l.b16 %v7796
    %v8349 = vunpack.c.l.b16 %v7797
    %v8350 = vunpack.c.l.b16 %v7798
    %v8351 = vunpack.c.l.b16 %v7799
    %v8352 = vunpack.c.l.b16 %v7800
    %v8353 = vunpack.c.l.b16 %v7801
    %v8354 = vunpack.c.l.b16 %v7802
    %v8355 = vunpack.c.l.b16 %v7803
    %v8356 = vunpack.c.l.b16 %v7804
    %v8357 = vunpack.c.l.b16 %v7805
    %v8358 = vunpack.c.l.b16 %v7806
    %v8359 = vunpack.c.l.b16 %v7807
    %v8360 = vunpack.c.l.b16 %v7808
    %v8361 = vunpack.c.l.b16 %v7809
    %v8362 = vunpack.c.l.b16 %v7810
    %v8363 = vunpack.c.l.b16 %v7811
    %v8364 = vunpack.c.l.b16 %v7812
    %v8365 = vpack.c.b16 %v8110, %v8109
    %v8366 = vpack.c.b16 %v8112, %v8111
    %v8367 = vpack.c.b16 %v8114, %v8113
    %v8368 = vpack.c.b16 %v8116, %v8115
    %v8369 = vpack.c.b16 %v8118, %v8117
    %v8370 = vpack.c.b16 %v8120, %v8119
    %v8371 = vpack.c.b16 %v8122, %v8121
    %v8372 = vpack.c.b16 %v8124, %v8123
    %v8373 = vpack.c.b16 %v8126, %v8125
    %v8374 = vpack.c.b16 %v8128, %v8127
    %v8375 = vpack.c.b16 %v8130, %v8129
    %v8376 = vpack.c.b16 %v8132, %v8131
    %v8377 = vpack.c.b16 %v8134, %v8133
    %v8378 = vpack.c.b16 %v8136, %v8135
    %v8379 = vpack.c.b16 %v8138, %v8137
    %v8380 = vpack.c.b16 %v8140, %v8139
    %v8381 = vpack.c.b16 %v8142, %v8141
    %v8382 = vpack.c.b16 %v8144, %v8143
    %v8383 = vpack.c.b16 %v8146, %v8145
    %v8384 = vpack.c.b16 %v8148, %v8147
    %v8385 = vpack.c.b16 %v8150, %v8149
    %v8386 = vpack.c.b16 %v8152, %v8151
    %v8387 = vpack.c.b16 %v8154, %v8153
    %v8388 = vpack.c.b16 %v8156, %v8155
    %v8389 = vpack.c.b16 %v8158, %v8157
    %v8390 = vpack.c.b16 %v8160, %v8159
    %v8391 = vpack.c.b16 %v8162, %v8161
    %v8392 = vpack.c.b16 %v8164, %v8163
    %v8393 = vpack.c.b16 %v8166, %v8165
    %v8394 = vpack.c.b16 %v8168, %v8167
    %v8395 = vpack.c.b16 %v8170, %v8169
    %v8396 = vpack.c.b16 %v8172, %v8171
    %v8397 = vpack.c.b16 %v8174, %v8173
    %v8398 = vpack.c.b16 %v8176, %v8175
    %v8399 = vpack.c.b16 %v8178, %v8177
    %v8400 = vpack.c.b16 %v8180, %v8179
    %v8401 = vpack.c.b16 %v8182, %v8181
    %v8402 = vpack.c.b16 %v8184, %v8183
    %v8403 = vpack.c.b16 %v8186, %v8185
    %v8404 = vpack.c.b16 %v8188, %v8187
    %v8405 = vpack.c.b16 %v8190, %v8189
    %v8406 = vpack.c.b16 %v8192, %v8191
    %v8407 = vpack.c.b16 %v8194, %v8193
    %v8408 = vpack.c.b16 %v8196, %v8195
    %v8409 = vpack.c.b16 %v8198, %v8197
    %v8410 = vpack.c.b16 %v8200, %v8199
    %v8411 = vpack.c.b16 %v8202, %v8201
    %v8412 = vpack.c.b16 %v8204, %v8203
    %v8413 = vpack.c.b16 %v8206, %v8205
    %v8414 = vpack.c.b16 %v8208, %v8207
    %v8415 = vpack.c.b16 %v8210, %v8209
    %v8416 = vpack.c.b16 %v8212, %v8211
    %v8417 = vpack.c.b16 %v8214, %v8213
    %v8418 = vpack.c.b16 %v8216, %v8215
    %v8419 = vpack.c.b16 %v8218, %v8217
    %v8420 = vpack.c.b16 %v8220, %v8219
    %v8421 = vpack.c.b16 %v8222, %v8221
    %v8422 = vpack.c.b16 %v8224, %v8223
    %v8423 = vpack.c.b16 %v8226, %v8225
    %v8424 = vpack.c.b16 %v8228, %v8227
    %v8425 = vpack.c.b16 %v8230, %v8229
    %v8426 = vpack.c.b16 %v8232, %v8231
    %v8427 = vpack.c.b16 %v8234, %v8233
    %v8428 = vpack.c.b16 %v8236, %v8235
    %v8429 = vpack.c.b16 %v8238, %v8237
    %v8430 = vpack.c.b16 %v8240, %v8239
    %v8431 = vpack.c.b16 %v8242, %v8241
    %v8432 = vpack.c.b16 %v8244, %v8243
    %v8433 = vpack.c.b16 %v8246, %v8245
    %v8434 = vpack.c.b16 %v8248, %v8247
    %v8435 = vpack.c.b16 %v8250, %v8249
    %v8436 = vpack.c.b16 %v8252, %v8251
    %v8437 = vpack.c.b16 %v8254, %v8253
    %v8438 = vpack.c.b16 %v8256, %v8255
    %v8439 = vpack.c.b16 %v8258, %v8257
    %v8440 = vpack.c.b16 %v8260, %v8259
    %v8441 = vpack.c.b16 %v8262, %v8261
    %v8442 = vpack.c.b16 %v8264, %v8263
    %v8443 = vpack.c.b16 %v8266, %v8265
    %v8444 = vpack.c.b16 %v8268, %v8267
    %v8445 = vpack.c.b16 %v8270, %v8269
    %v8446 = vpack.c.b16 %v8272, %v8271
    %v8447 = vpack.c.b16 %v8274, %v8273
    %v8448 = vpack.c.b16 %v8276, %v8275
    %v8449 = vpack.c.b16 %v8278, %v8277
    %v8450 = vpack.c.b16 %v8280, %v8279
    %v8451 = vpack.c.b16 %v8282, %v8281
    %v8452 = vpack.c.b16 %v8284, %v8283
    %v8453 = vpack.c.b16 %v8286, %v8285
    %v8454 = vpack.c.b16 %v8288, %v8287
    %v8455 = vpack.c.b16 %v8290, %v8289
    %v8456 = vpack.c.b16 %v8292, %v8291
    %v8457 = vpack.c.b16 %v8294, %v8293
    %v8458 = vpack.c.b16 %v8296, %v8295
    %v8459 = vpack.c.b16 %v8298, %v8297
    %v8460 = vpack.c.b16 %v8300, %v8299
    %v8461 = vpack.c.b16 %v8302, %v8301
    %v8462 = vpack.c.b16 %v8304, %v8303
    %v8463 = vpack.c.b16 %v8306, %v8305
    %v8464 = vpack.c.b16 %v8308, %v8307
    %v8465 = vpack.c.b16 %v8310, %v8309
    %v8466 = vpack.c.b16 %v8312, %v8311
    %v8467 = vpack.c.b16 %v8314, %v8313
    %v8468 = vpack.c.b16 %v8316, %v8315
    %v8469 = vpack.c.b16 %v8318, %v8317
    %v8470 = vpack.c.b16 %v8320, %v8319
    %v8471 = vpack.c.b16 %v8322, %v8321
    %v8472 = vpack.c.b16 %v8324, %v8323
    %v8473 = vpack.c.b16 %v8326, %v8325
    %v8474 = vpack.c.b16 %v8328, %v8327
    %v8475 = vpack.c.b16 %v8330, %v8329
    %v8476 = vpack.c.b16 %v8332, %v8331
    %v8477 = vpack.c.b16 %v8334, %v8333
    %v8478 = vpack.c.b16 %v8336, %v8335
    %v8479 = vpack.c.b16 %v8338, %v8337
    %v8480 = vpack.c.b16 %v8340, %v8339
    %v8481 = vpack.c.b16 %v8342, %v8341
    %v8482 = vpack.c.b16 %v8344, %v8343
    %v8483 = vpack.c.b16 %v8346, %v8345
    %v8484 = vpack.c.b16 %v8348, %v8347
    %v8485 = vpack.c.b16 %v8350, %v8349
    %v8486 = vpack.c.b16 %v8352, %v8351
    %v8487 = vpack.c.b16 %v8354, %v8353
    %v8488 = vpack.c.b16 %v8356, %v8355
    %v8489 = vpack.c.b16 %v8358, %v8357
    %v8490 = vpack.c.b16 %v8360, %v8359
    %v8491 = vpack.c.b16 %v8362, %v8361
    %v8492 = vpack.c.b16 %v8364, %v8363
    %8621 = vmatpush.bf16.msra.mxu0 %v8372
    %8622 = vmatpush.bf16.msra.mxu0 %v8371
    %8623 = vmatpush.bf16.msra.mxu0 %v8370
    %8624 = vmatpush.bf16.msra.mxu0 %v8369
    %8625 = vmatpush.bf16.msra.mxu0 %v8368
    %8626 = vmatpush.bf16.msra.mxu0 %v8367
    %8627 = vmatpush.bf16.msra.mxu0 %v8366
    %8628 = vmatpush.bf16.msra.mxu0 %v8365
    %8629 = vmatmul.bf16.gmra.mxu0 %v7819
    %v8630 = vpop.f32.mrf.mxu0
    %v8631 = vadd.f32 %v7815, %v8630
    %v8632 = vpop.f32.mrf.mxu0
    %8633 = vdwg.mxu0
    %8634 = vmatpush.bf16.msra.mxu0 %v8380
    %8635 = vmatpush.bf16.msra.mxu0 %v8379
    %8636 = vmatpush.bf16.msra.mxu0 %v8378
    %8637 = vmatpush.bf16.msra.mxu0 %v8377
    %8638 = vmatpush.bf16.msra.mxu0 %v8376
    %8639 = vmatpush.bf16.msra.mxu0 %v8375
    %8640 = vmatpush.bf16.msra.mxu0 %v8374
    %8641 = vmatpush.bf16.msra.mxu0 %v8373
    %8642 = vmatmul.bf16.gmra.mxu0 %v7820
    %v8643 = vpop.f32.mrf.mxu0
    %v8644 = vadd.f32 %v8631, %v8643
    %v8645 = vpop.f32.mrf.mxu0
    %8646 = vdwg.mxu0
    %8647 = vmatpush.bf16.msra.mxu0 %v8388
    %8648 = vmatpush.bf16.msra.mxu0 %v8387
    %8649 = vmatpush.bf16.msra.mxu0 %v8386
    %8650 = vmatpush.bf16.msra.mxu0 %v8385
    %8651 = vmatpush.bf16.msra.mxu0 %v8384
    %8652 = vmatpush.bf16.msra.mxu0 %v8383
    %8653 = vmatpush.bf16.msra.mxu0 %v8382
    %8654 = vmatpush.bf16.msra.mxu0 %v8381
    %8655 = vmatmul.bf16.gmra.mxu0 %v7821
    %v8656 = vpop.f32.mrf.mxu0
    %v8657 = vadd.f32 %v8644, %v8656
    %v8658 = vpop.f32.mrf.mxu0
    %8659 = vdwg.mxu0
    %8660 = vmatpush.bf16.msra.mxu0 %v8396
    %8661 = vmatpush.bf16.msra.mxu0 %v8395
    %8662 = vmatpush.bf16.msra.mxu0 %v8394
    %8663 = vmatpush.bf16.msra.mxu0 %v8393
    %8664 = vmatpush.bf16.msra.mxu0 %v8392
    %8665 = vmatpush.bf16.msra.mxu0 %v8391
    %8666 = vmatpush.bf16.msra.mxu0 %v8390
    %8667 = vmatpush.bf16.msra.mxu0 %v8389
    %8668 = vmatmul.bf16.gmra.mxu0 %v7822
    %v8669 = vpop.f32.mrf.mxu0
    %v8670 = vadd.f32 %v8657, %v8669
    %v8671 = vpop.f32.mrf.mxu0
    %8672 = vdwg.mxu0
    %8673 = vmatpush.bf16.msra.mxu0 %v8404
    %8674 = vmatpush.bf16.msra.mxu0 %v8403
    %8675 = vmatpush.bf16.msra.mxu0 %v8402
    %8676 = vmatpush.bf16.msra.mxu0 %v8401
    %8677 = vmatpush.bf16.msra.mxu0 %v8400
    %8678 = vmatpush.bf16.msra.mxu0 %v8399
    %8679 = vmatpush.bf16.msra.mxu0 %v8398
    %8680 = vmatpush.bf16.msra.mxu0 %v8397
    %8681 = vmatmul.bf16.gmra.mxu0 %v7823
    %v8682 = vpop.f32.mrf.mxu0
    %v8683 = vadd.f32 %v8670, %v8682
    %v8684 = vpop.f32.mrf.mxu0
    %8685 = vdwg.mxu0
    %8686 = vmatpush.bf16.msra.mxu0 %v8412
    %8687 = vmatpush.bf16.msra.mxu0 %v8411
    %8688 = vmatpush.bf16.msra.mxu0 %v8410
    %8689 = vmatpush.bf16.msra.mxu0 %v8409
    %8690 = vmatpush.bf16.msra.mxu0 %v8408
    %8691 = vmatpush.bf16.msra.mxu0 %v8407
    %8692 = vmatpush.bf16.msra.mxu0 %v8406
    %8693 = vmatpush.bf16.msra.mxu0 %v8405
    %8694 = vmatmul.bf16.gmra.mxu0 %v7824
    %v8695 = vpop.f32.mrf.mxu0
    %v8696 = vadd.f32 %v8683, %v8695
    %v8697 = vpop.f32.mrf.mxu0
    %8698 = vdwg.mxu0
    %8699 = vmatpush.bf16.msra.mxu0 %v8420
    %8700 = vmatpush.bf16.msra.mxu0 %v8419
    %8701 = vmatpush.bf16.msra.mxu0 %v8418
    %8702 = vmatpush.bf16.msra.mxu0 %v8417
    %8703 = vmatpush.bf16.msra.mxu0 %v8416
    %8704 = vmatpush.bf16.msra.mxu0 %v8415
    %8705 = vmatpush.bf16.msra.mxu0 %v8414
    %8706 = vmatpush.bf16.msra.mxu0 %v8413
    %8707 = vmatmul.bf16.gmra.mxu0 %v7825
    %v8708 = vpop.f32.mrf.mxu0
    %v8709 = vadd.f32 %v8696, %v8708
    %v8710 = vpop.f32.mrf.mxu0
    %8711 = vdwg.mxu0
    %8712 = vmatpush.bf16.msra.mxu0 %v8428
    %8713 = vmatpush.bf16.msra.mxu0 %v8427
    %8714 = vmatpush.bf16.msra.mxu0 %v8426
    %8715 = vmatpush.bf16.msra.mxu0 %v8425
    %8716 = vmatpush.bf16.msra.mxu0 %v8424
    %8717 = vmatpush.bf16.msra.mxu0 %v8423
    %8718 = vmatpush.bf16.msra.mxu0 %v8422
    %8719 = vmatpush.bf16.msra.mxu0 %v8421
    %8720 = vmatmul.bf16.gmra.mxu0 %v7826
    %v8721 = vpop.f32.mrf.mxu0
    %v8722 = vadd.f32 %v8709, %v8721
    %v8723 = vpop.f32.mrf.mxu0
    %8724 = vdwg.mxu0
    %8725 = vmatpush.bf16.msra.mxu0 %v8436
    %8726 = vmatpush.bf16.msra.mxu0 %v8435
    %8727 = vmatpush.bf16.msra.mxu0 %v8434
    %8728 = vmatpush.bf16.msra.mxu0 %v8433
    %8729 = vmatpush.bf16.msra.mxu0 %v8432
    %8730 = vmatpush.bf16.msra.mxu0 %v8431
    %8731 = vmatpush.bf16.msra.mxu0 %v8430
    %8732 = vmatpush.bf16.msra.mxu0 %v8429
    %8733 = vmatmul.bf16.gmra.mxu0 %v7829
    %v8734 = vpop.f32.mrf.mxu0
    %v8735 = vadd.f32 %v8722, %v8734
    %v8736 = vpop.f32.mrf.mxu0
    %8737 = vdwg.mxu0
    %8738 = vmatpush.bf16.msra.mxu0 %v8444
    %8739 = vmatpush.bf16.msra.mxu0 %v8443
    %8740 = vmatpush.bf16.msra.mxu0 %v8442
    %8741 = vmatpush.bf16.msra.mxu0 %v8441
    %8742 = vmatpush.bf16.msra.mxu0 %v8440
    %8743 = vmatpush.bf16.msra.mxu0 %v8439
    %8744 = vmatpush.bf16.msra.mxu0 %v8438
    %8745 = vmatpush.bf16.msra.mxu0 %v8437
    %8746 = vmatmul.bf16.gmra.mxu0 %v7830
    %v8747 = vpop.f32.mrf.mxu0
    %v8748 = vadd.f32 %v8735, %v8747
    %v8749 = vpop.f32.mrf.mxu0
    %8750 = vdwg.mxu0
    %8751 = vmatpush.bf16.msra.mxu0 %v8452
    %8752 = vmatpush.bf16.msra.mxu0 %v8451
    %8753 = vmatpush.bf16.msra.mxu0 %v8450
    %8754 = vmatpush.bf16.msra.mxu0 %v8449
    %8755 = vmatpush.bf16.msra.mxu0 %v8448
    %8756 = vmatpush.bf16.msra.mxu0 %v8447
    %8757 = vmatpush.bf16.msra.mxu0 %v8446
    %8758 = vmatpush.bf16.msra.mxu0 %v8445
    %8759 = vmatmul.bf16.gmra.mxu0 %v7831
    %v8760 = vpop.f32.mrf.mxu0
    %v8761 = vadd.f32 %v8748, %v8760
    %v8762 = vpop.f32.mrf.mxu0
    %8763 = vdwg.mxu0
    %8764 = vmatpush.bf16.msra.mxu0 %v8460
    %8765 = vmatpush.bf16.msra.mxu0 %v8459
    %8766 = vmatpush.bf16.msra.mxu0 %v8458
    %8767 = vmatpush.bf16.msra.mxu0 %v8457
    %8768 = vmatpush.bf16.msra.mxu0 %v8456
    %8769 = vmatpush.bf16.msra.mxu0 %v8455
    %8770 = vmatpush.bf16.msra.mxu0 %v8454
    %8771 = vmatpush.bf16.msra.mxu0 %v8453
    %8772 = vmatmul.bf16.gmra.mxu0 %v7832
    %v8773 = vpop.f32.mrf.mxu0
    %v8774 = vadd.f32 %v8761, %v8773
    %v8775 = vpop.f32.mrf.mxu0
    %8776 = vdwg.mxu0
    %8777 = vmatpush.bf16.msra.mxu0 %v8468
    %8778 = vmatpush.bf16.msra.mxu0 %v8467
    %8779 = vmatpush.bf16.msra.mxu0 %v8466
    %8780 = vmatpush.bf16.msra.mxu0 %v8465
    %8781 = vmatpush.bf16.msra.mxu0 %v8464
    %8782 = vmatpush.bf16.msra.mxu0 %v8463
    %8783 = vmatpush.bf16.msra.mxu0 %v8462
    %8784 = vmatpush.bf16.msra.mxu0 %v8461
    %8785 = vmatmul.bf16.gmra.mxu0 %v7833
    %v8786 = vpop.f32.mrf.mxu0
    %v8787 = vadd.f32 %v8774, %v8786
    %v8788 = vpop.f32.mrf.mxu0
    %8789 = vdwg.mxu0
    %8790 = vmatpush.bf16.msra.mxu0 %v8476
    %8791 = vmatpush.bf16.msra.mxu0 %v8475
    %8792 = vmatpush.bf16.msra.mxu0 %v8474
    %8793 = vmatpush.bf16.msra.mxu0 %v8473
    %8794 = vmatpush.bf16.msra.mxu0 %v8472
    %8795 = vmatpush.bf16.msra.mxu0 %v8471
    %8796 = vmatpush.bf16.msra.mxu0 %v8470
    %8797 = vmatpush.bf16.msra.mxu0 %v8469
    %8798 = vmatmul.bf16.gmra.mxu0 %v7834
    %v8799 = vpop.f32.mrf.mxu0
    %v8800 = vadd.f32 %v8787, %v8799
    %v8801 = vpop.f32.mrf.mxu0
    %8802 = vdwg.mxu0
    %8803 = vmatpush.bf16.msra.mxu0 %v8484
    %8804 = vmatpush.bf16.msra.mxu0 %v8483
    %8805 = vmatpush.bf16.msra.mxu0 %v8482
    %8806 = vmatpush.bf16.msra.mxu0 %v8481
    %8807 = vmatpush.bf16.msra.mxu0 %v8480
    %8808 = vmatpush.bf16.msra.mxu0 %v8479
    %8809 = vmatpush.bf16.msra.mxu0 %v8478
    %8810 = vmatpush.bf16.msra.mxu0 %v8477
    %8811 = vmatmul.bf16.gmra.mxu0 %v7835
    %v8812 = vpop.f32.mrf.mxu0
    %v8813 = vadd.f32 %v8800, %v8812
    %v8814 = vpop.f32.mrf.mxu0
    %8815 = vdwg.mxu0
    %8816 = vmatpush.bf16.msra.mxu0 %v8492
    %8817 = vmatpush.bf16.msra.mxu0 %v8491
    %8818 = vmatpush.bf16.msra.mxu0 %v8490
    %8819 = vmatpush.bf16.msra.mxu0 %v8489
    %8820 = vmatpush.bf16.msra.mxu0 %v8488
    %8821 = vmatpush.bf16.msra.mxu0 %v8487
    %8822 = vmatpush.bf16.msra.mxu0 %v8486
    %8823 = vmatpush.bf16.msra.mxu0 %v8485
    %8824 = vmatmul.bf16.gmra.mxu0 %v7836
    %v8825 = vpop.f32.mrf.mxu0
    %v8826 = vadd.f32 %v8813, %v8825
    %v8827 = vpop.f32.mrf.mxu0
    %8828 = vdwg.mxu0
    %v8829 = vmul.f32 %v8826, 0.5
    %v8830 = vmul.f32 %v8826, 0.044715
    %v8831 = vmul.f32 %v8830, %v8826
    %v8832 = vmul.f32 %v8831, %v8826
    %v8833 = vadd.f32 %v8826, %v8832
    %v8834 = vmul.f32 %v8833, 0.7978846
    %v8835 = vtanh.pop %v8834
    %v8836 = vadd.f32 %v8835, 1.0
    %v8837 = vmul.f32 %v8829, %v8836
    %v8838 = vpack.c.bf16 %v8837, %v8837
    %v8839 = vld [vmem:[#allocation8] sm:$0xf]
    %v8840 = vld [vmem:[#allocation8 + $0x4] sm:$0xf]
    %v8841 = vld [vmem:[#allocation8 + $0x8] sm:$0xf]
    %v8842 = vld [vmem:[#allocation8 + $0xc] sm:$0xf]
    %s8843 = scalar_lea.vmem [#allocation11], 1
    %v8844 = vld [vmem:[%s8843] sm:$0x1]
    %v8846 = vperm.slane %v8844, 0
    %v8852 = vunpack.c.l.b16 %v8839
    %v8853 = vunpack.c.l.b16 %v8840
    %v8854 = vunpack.c.l.b16 %v8841
    %v8855 = vunpack.c.l.b16 %v8842
    %v8856 = vpack.c.b16 %v8853, %v8852
    %v8857 = vpack.c.b16 %v8855, %v8854
    %vm8860 = vcmask 261120
    %v8862 = vsel %vm8860, %v8838, 0
    %8864 = vmatpush.bf16.msra.mxu0 0
    %8865 = vmatpush.bf16.msra.mxu0 0
    %8866 = vmatpush.bf16.msra.mxu0 0
    %8867 = vmatpush.bf16.msra.mxu0 0
    %8868 = vmatpush.bf16.msra.mxu0 0
    %8869 = vmatpush.bf16.msra.mxu0 0
    %8870 = vmatpush.bf16.msra.mxu0 %v8857
    %8871 = vmatpush.bf16.msra.mxu0 %v8856
    %8872 = vmatmul.bf16.gmra.mxu0 %v8862
    %v8873 = vpop.f32.mrf.mxu0
    %v8874 = vadd.f32 %v8846, %v8873
    %v8875 = vpop.f32.mrf.mxu0
    %8876 = vdwg.mxu0
    %v8877 = vmul.f32 %v8874, 0.5
    %v8878 = vmul.f32 %v8874, 0.044715
    %v8879 = vmul.f32 %v8878, %v8874
    %v8880 = vmul.f32 %v8879, %v8874
    %v8881 = vadd.f32 %v8874, %v8880
    %v8882 = vmul.f32 %v8881, 0.7978846
    %v8883 = vtanh.pop %v8882
    %v8884 = vadd.f32 %v8883, 1.0
    %v8885 = vmul.f32 %v8877, %v8884
    %v8886 = vpack.c.bf16 %v8885, %v8885
    %v8887 = vld [vmem:[#allocation9] sm:$0xf]
    %v8888 = vld [vmem:[#allocation9 + $0x4] sm:$0xf]
    %v8889 = vld [vmem:[#allocation9 + $0x8] sm:$0xf]
    %v8890 = vld [vmem:[#allocation9 + $0xc] sm:$0xf]
    %s8891 = scalar_lea.vmem [#allocation11], 2
    %v8892 = vld [vmem:[%s8891] sm:$0x1]
    %v8894 = vperm.slane %v8892, 0
    %v8900 = vunpack.c.l.b16 %v8887
    %v8901 = vunpack.c.l.b16 %v8888
    %v8902 = vunpack.c.l.b16 %v8889
    %v8903 = vunpack.c.l.b16 %v8890
    %v8904 = vpack.c.b16 %v8901, %v8900
    %v8905 = vpack.c.b16 %v8903, %v8902
    %v8909 = vsel %vm8860, %v8886, 0
    %8911 = vmatpush.bf16.msra.mxu0 0
    %8912 = vmatpush.bf16.msra.mxu0 0
    %8913 = vmatpush.bf16.msra.mxu0 0
    %8914 = vmatpush.bf16.msra.mxu0 0
    %8915 = vmatpush.bf16.msra.mxu0 0
    %8916 = vmatpush.bf16.msra.mxu0 0
    %8917 = vmatpush.bf16.msra.mxu0 %v8905
    %8918 = vmatpush.bf16.msra.mxu0 %v8904
    %8919 = vmatmul.bf16.gmra.mxu0 %v8909
    %v8920 = vpop.f32.mrf.mxu0
    %v8921 = vadd.f32 %v8894, %v8920
    %v8922 = vpop.f32.mrf.mxu0
    %8923 = vdwg.mxu0
    %v8924 = vmul.f32 %v8921, 0.5
    %v8925 = vmul.f32 %v8921, 0.044715
    %v8926 = vmul.f32 %v8925, %v8921
    %v8927 = vmul.f32 %v8926, %v8921
    %v8928 = vadd.f32 %v8921, %v8927
    %v8929 = vmul.f32 %v8928, 0.7978846
    %v8930 = vtanh.pop %v8929
    %v8931 = vadd.f32 %v8930, 1.0
    %v8932 = vmul.f32 %v8924, %v8931
    %v8933 = vpack.c.bf16 %v8932, %v8932
    %v8934 = vld [vmem:[%s6] sm:$0xf]
    %v8935 = vld [vmem:[%s6 + $0x4] sm:$0xf]
    %v8936 = vld [vmem:[%s6 + $0x8] sm:$0xf]
    %v8937 = vld [vmem:[%s6 + $0xc] sm:$0xf]
    %v8938 = vld [vmem:[#allocation12] sm:$0x1]
    %v8940 = vperm.slane %v8938, 0
    %v8946 = vunpack.c.l.b16 %v8934
    %v8947 = vunpack.c.l.b16 %v8935
    %v8948 = vunpack.c.l.b16 %v8936
    %v8949 = vunpack.c.l.b16 %v8937
    %v8950 = vpack.c.b16 %v8947, %v8946
    %v8951 = vpack.c.b16 %v8949, %v8948
    %v8955 = vsel %vm8860, %v8933, 0
    %8957 = vmatpush.bf16.msra.mxu0 0
    %8958 = vmatpush.bf16.msra.mxu0 0
    %8959 = vmatpush.bf16.msra.mxu0 0
    %8960 = vmatpush.bf16.msra.mxu0 0
    %8961 = vmatpush.bf16.msra.mxu0 0
    %8962 = vmatpush.bf16.msra.mxu0 0
    %8963 = vmatpush.bf16.msra.mxu0 %v8951
    %8964 = vmatpush.bf16.msra.mxu0 %v8950
    %8965 = vmatmul.bf16.gmra.mxu0 %v8955
    %v8966 = vpop.f32.mrf.mxu0
    %v8967 = vadd.f32 %v8940, %v8966
    %v8968 = vpop.f32.mrf.mxu0
    %8969 = vdwg.mxu0
    %vm8970 = vcmask 41984
    %v8971 = vsel %vm8970, %v8967, -inf
    %8972 = vmax.xlane.f32.xlu0 %v8971
    %v8973 = vpop.xlane.xlu0 %8972
    %v8974 = vsub.f32 %v8967, %v8973
    %v8975 = vmul.f32 %v8974, 1.442695
    %v8976 = vpow.pop %v8975
    %v8977 = vsel %vm8970, %v8976, 0.0
    %8978 = vadd.xlane.f32.xlu0 %v8977
    %v8979 = vpop.xlane.xlu0 %8978
    %v8980 = vrcp.pop %v8979
    %v8981 = vmul.f32 %v8979, %v8980
    %v8982 = vsub.f32 1.0, %v8981
    %v8983 = vmul.f32 %v8980, %v8982
    %v8984 = vadd.f32 %v8980, %v8983
    %vm8985 = vweird.f32 %v8979
    %vm8986 = vweird.f32 %v8980
    %vm8987 = vmor %vm8985, %vm8986
    %v8988 = vsel %vm8987, %v8980, %v8984
    %v8989 = vand.u32 2147483647, %v8979
    %vm8990 = vcmp.eq.f32.partialorder %v8989, 8.507059e+37
    %v8991 = vand.u32 %v8979, 2147483648
    %v8992 = vor.u32 1.1754944e-38, %v8991
    %v8993 = vsel %vm8990, %v8992, %v8988
    %v8994 = vmul.f32 %v8976, %v8993
    %8995 = vst.msk [vmem:[%s9] sm:$0x3] %vm8970, %v8994
    %v8996 = vtanh.pop %v8967
    %vm8997 = vcmask 50224
    %8998 = vst.msk [vmem:[%s9] sm:$0x3] %vm8997, %v8996
    // Predicated region
    $region62: #{simple_resnet_forward.1} parent=1 // pred_check
      _
    $region63: #{simple_resnet_forward.1} parent=1 // pred_check_branch
      %9000 = sbr.rel (0) target = $region65
    $region64: #{simple_resnet_forward.1} parent=1 // pred_region
      _
    $region65: #{simple_resnet_forward.1} parent=1 // pred_fallthru
      _
    // Predicated region
    $region66: #{simple_resnet_forward.1} parent=1 // pred_check
      _
    $region67: #{simple_resnet_forward.1} parent=1 // pred_check_branch
      %9002 = sbr.rel (0) target = $region69
    $region68: #{simple_resnet_forward.1} parent=1 // pred_region
      _
    $region69: #{simple_resnet_forward.1} parent=1 // pred_fallthru
      _
    %9003 = vsyncpa [#allocation5], 1
    %9004 = vsyncpa [#allocation7], 1
    %9005 = vsyncpa [#allocation10], 1
    %9006 = vsyncpa [#allocation13], 1

</llo_original>
